<compile_context>
chip_gen: v7x
topology: tpu7x:2x2x1
jax: 0.10.0
libtpu: 0.0.40
codegen_flags: <defaults>
</compile_context>

<pallas_src>
import math
import functools

import jax
import jax.numpy as jnp
from jax.experimental import pallas as pl
from jax.experimental.pallas import tpu as pltpu


# Matmul-operand dtype for the MXU (accumulation is always f32).  bf16 halves operand
# traffic and runs at full MXU rate on v5e/v6e/v7x.  Set to jnp.float32 for exact-f32 debug.
MXU_DTYPE = jnp.bfloat16


def _mx(x):
    return x.astype(MXU_DTYPE)


def _softmax_last(x):
    m = jnp.max(x, axis=-1, keepdims=True)
    e = jnp.exp(x - m)
    s = jnp.sum(e, axis=-1, keepdims=True)
    return e * pl.reciprocal(s, approx=True)      # divide on the (otherwise idle) EUP


def _layernorm(x, g, b, eps=1e-5):
    mu = jnp.mean(x, axis=-1, keepdims=True)
    xc = x - mu
    var = jnp.mean(xc * xc, axis=-1, keepdims=True)
    return xc * jax.lax.rsqrt(var + eps) * g + b


# ---------------------------------------------------------------------------
# Fused kernel: row-attention block -> (row reorder) -> column-attention block -> FFN block
# ---------------------------------------------------------------------------
def grn_kernel(
    # data
    x_ref, net_ref, perm_ref,
    # row-attention block params
    r_lng_ref, r_lnb_ref, r_wqkv_ref, r_bqkv_ref, r_wo_ref, r_bo_ref,
    r_wq1_ref, r_bq1_ref, r_wk1_ref, l_ref,
    # column-attention block params
    c_lng_ref, c_lnb_ref, c_wqkv_ref, c_bqkv_ref, c_wo_ref, c_bo_ref,
    # FFN block params
    f_lng_ref, f_lnb_ref, f_w1_ref, f_b1_ref, f_w2_ref, f_b2_ref,
    # outputs
    xo_ref, row_attn_ref, col_attn_ref,
    *, R, C, H, Dh, scl_row, scl_col):
    E = H * Dh
    T = R * C
    f32 = jnp.float32

    x = x_ref[...]                                           # [T, E], rows = r*C + c

    # ------------------------------------------------------------------
    # 1) Row-attention residual block (r-major layout)
    # ------------------------------------------------------------------
    xn = _layernorm(x, r_lng_ref[...], r_lnb_ref[...])
    qkv = jnp.dot(_mx(xn), r_wqkv_ref[...],
                  preferred_element_type=f32) + r_bqkv_ref[...]        # [T, 3E]
    q = qkv[:, :E] * scl_row
    k = qkv[:, E:2 * E]
    v = qkv[:, 2 * E:]

    aw = []                                                  # per-head [C, C] scores
    vh_l = []
    q2_sum = jnp.zeros((C, C, Dh), f32)                      # sum_{r,h} q*k (network path)
    for h in range(H):
        sl = slice(h * Dh, (h + 1) * Dh)
        qh = q[:, sl].reshape(R, C, Dh)
        kh = k[:, sl].reshape(R, C, Dh)
        vh_l.append(v[:, sl].reshape(R, C, Dh))
        # attn_weights[h,i,j] = sum_{r,d} q[r,i,h,d] k[r,j,h,d]  -> R-batched MXU matmul
        s_r = jnp.einsum('rid,rjd->rij', _mx(qh), _mx(kh),
                         preferred_element_type=f32)          # [R, C, C]
        aw.append(jnp.sum(s_r, axis=0))                       # [C, C]
        # q2[i,j,d] = sum_r q[r,i,h,d] k[r,j,h,d]: small VPU broadcast-reduce (see header)
        q2_sum = q2_sum + jnp.sum(qh[:, :, None, :] * kh[:, None, :, :], axis=0)

    # attention_network_selection (q1_proj is linear -> mean over heads commutes with it)
    qn = jnp.dot((q2_sum * (1.0 / H)).reshape(C * C, Dh), r_wq1_ref[...],
                 preferred_element_type=f32) + r_bq1_ref[...]          # [C*C, 8]
    s1 = jnp.sum(qn * r_wk1_ref[...], axis=-1, keepdims=True)          # [C*C, 1]
    # NOTE: the k1_proj-bias contribution is constant across the softmax axis m -> dropped.
    net3 = net_ref[...]                                                # [C, C, M]
    na = _softmax_last(net3 * s1.reshape(C, C, 1))                     # [C, C, M]
    net_sel = jnp.sum(net3 * na, axis=-1)                              # [C, C]

    rows = jax.lax.broadcasted_iota(jnp.int32, (C, C), 0)
    cols = jax.lax.broadcasted_iota(jnp.int32, (C, C), 1)
    diag = rows == cols

    out_row = jnp.zeros((T, E), f32)
    for h in range(H):
        logits = aw[h] + l_ref[h] * net_sel                            # l[h] from SMEM
        logits = jnp.where(diag, -1e9, logits)                         # masked_fill(eye)
        probs = _softmax_last(logits)                                  # [C, C]
        row_attn_ref[h * C:(h + 1) * C, :] = probs
        # context[r,i,d] = sum_j probs[i,j] v[r,j,d]  -> R-batched MXU matmul
        pb = jnp.broadcast_to(probs[None, :, :], (R, C, C))
        ctx = jnp.einsum('rij,rjd->rid', _mx(pb), _mx(vh_l[h]),
                         preferred_element_type=f32).reshape(T, Dh)
        # out_proj applied per head slice (no head-context concatenate needed)
        out_row = out_row + jnp.dot(_mx(ctx), r_wo_ref[h],
                                    preferred_element_type=f32)
    x = x + out_row + r_bo_ref[...]                                    # residual

    # ------------------------------------------------------------------
    # r-major (r*C+c) -> c-major (c*R+r) row reorder as one exact f32 MXU matmul
    # with a 0/1 permutation matrix (no gather / minor-dim transpose needed).
    # ------------------------------------------------------------------
    xc = jnp.dot(perm_ref[...], x, preferred_element_type=f32)         # [T, E]

    # ------------------------------------------------------------------
    # 2) Column-attention residual block (c-major layout)
    # ------------------------------------------------------------------
    xn = _layernorm(xc, c_lng_ref[...], c_lnb_ref[...])
    qkv = jnp.dot(_mx(xn), c_wqkv_ref[...],
                  preferred_element_type=f32) + c_bqkv_ref[...]
    q = qkv[:, :E] * scl_col
    k = qkv[:, E:2 * E]
    v = qkv[:, 2 * E:]

    out_col = jnp.zeros((T, E), f32)
    for h in range(H):
        sl = slice(h * Dh, (h + 1) * Dh)
        qh = q[:, sl].reshape(C, R, Dh)
        kh = k[:, sl].reshape(C, R, Dh)
        vh = v[:, sl].reshape(C, R, Dh)
        # attn_weights[h,i,j] = sum_{c,d} q[i,c,h,d] k[j,c,h,d]  -> C-batched MXU matmul
        s_c = jnp.einsum('cid,cjd->cij', _mx(qh), _mx(kh),
                         preferred_element_type=f32)                   # [C, R, R]
        probs = _softmax_last(jnp.sum(s_c, axis=0))                    # [R, R]
        col_attn_ref[h * R:(h + 1) * R, :] = probs
        pb = jnp.broadcast_to(probs[None, :, :], (C, R, R))
        ctx = jnp.einsum('cij,cjd->cid', _mx(pb), _mx(vh),
                         preferred_element_type=f32).reshape(T, Dh)
        out_col = out_col + jnp.dot(_mx(ctx), c_wo_ref[h],
                                    preferred_element_type=f32)
    xc = xc + out_col + c_bo_ref[...]

    # ------------------------------------------------------------------
    # 3) FFN residual block (row-wise -> layout independent, stays c-major)
    # ------------------------------------------------------------------
    xn = _layernorm(xc, f_lng_ref[...], f_lnb_ref[...])
    hdn = jnp.dot(_mx(xn), f_w1_ref[...], preferred_element_type=f32) + f_b1_ref[...]
    # TODO(synk): torch nn.GELU default is erf-based; tanh-approx GELU used for a
    #             Mosaic/EUP-friendly lowering (max abs diff ~1e-3).
    hdn = 0.5 * hdn * (1.0 + jnp.tanh(0.7978845608028654 * (hdn + 0.044715 * hdn * hdn * hdn)))
    out = jnp.dot(_mx(hdn), f_w2_ref[...], preferred_element_type=f32) + f_b2_ref[...]
    xo_ref[...] = xc + out                                             # output in c-major


# ---------------------------------------------------------------------------
# Wrapper
# ---------------------------------------------------------------------------
def grn_transformer_forward(x, network, params, H):
    R, C, N, E = x.shape
    assert N == 1, "reference Row_Attention broadcasting requires batch == 1"
    Dh = E // H
    M = network.shape[-1]
    T = R * C

    x2d = x.reshape(T, E).astype(jnp.float32)                # r-major rows (r*C + c)
    net3 = network.reshape(C, C, M).astype(jnp.float32)

    # 0/1 permutation matrix: (perm @ y)[c*R + r, :] = y[r*C + c, :]
    a = jnp.arange(T)
    perm = jax.nn.one_hot((a % R) * C + (a // R), T, dtype=jnp.float32)  # [T, T]

    row, col, ffn = params["row"], params["col"], params["ffn"]
    wmx = lambda w: w.astype(MXU_DTYPE)                      # MXU-side weights in bf16

    scl_row = (Dh ** -0.5) / math.sqrt(R)
    scl_col = (Dh ** -0.5) / math.sqrt(C)

    kern = functools.partial(grn_kernel, R=R, C=C, H=H, Dh=Dh,
                             scl_row=scl_row, scl_col=scl_col)

    inputs = (
        x2d, net3, perm,
        # row block
        row["ln_g"], row["ln_b"], wmx(row["wqkv"]), row["bqkv"],
        wmx(row["wo"].reshape(H, Dh, E)), row["bo"],
        row["wq1"], row["bq1"], row["wk1"], row["l"],
        # column block
        col["ln_g"], col["ln_b"], wmx(col["wqkv"]), col["bqkv"],
        wmx(col["wo"].reshape(H, Dh, E)), col["bo"],
        # ffn block
        ffn["ln_g"], ffn["ln_b"], wmx(ffn["w1"]), ffn["b1"], wmx(ffn["w2"]), ffn["b2"],
    )
    vm = pl.BlockSpec(memory_space=pltpu.MemorySpace.VMEM)
    sm = pl.BlockSpec(memory_space=pltpu.MemorySpace.SMEM)
    in_specs = [vm] * 12 + [sm] + [vm] * 12                  # 'l' scalars -> SMEM

    out_shape = (
        jax.ShapeDtypeStruct((T, E), jnp.float32),           # activations (c-major rows)
        jax.ShapeDtypeStruct((H * C, C), jnp.float32),       # row-attention probs
        jax.ShapeDtypeStruct((H * R, R), jnp.float32),       # column-attention probs
    )
    xc, row_attn, col_attn = pl.pallas_call(
        kern,
        out_shape=out_shape,
        in_specs=in_specs,
        out_specs=(vm, vm, vm),
    )(*inputs)

    x_out = xc.reshape(C, R, E).transpose(1, 0, 2).reshape(R, C, N, E)
    row_attn = row_attn.reshape(H, C, C)[:, None, :, :]      # [H, N, C, C]
    col_attn = col_attn.reshape(H, R, R)[:, None, :, :]      # [H, N, R, R]
    l = params["row"]["l"].reshape(H, 1, 1, 1)
    return x_out, row_attn, col_attn, l


# ---------------------------------------------------------------------------
# deterministic parameter init (weights stored as [in, out] so y = x @ W + b)
# ---------------------------------------------------------------------------
def _lin(key, fan_in, fan_out, scale=0.1):
    k1, k2 = jax.random.split(key)
    w = jax.random.normal(k1, (fan_in, fan_out), jnp.float32) * scale
    b = jax.random.normal(k2, (1, fan_out), jnp.float32) * scale
    return w, b


def init_params(key, E, F, H):
    Dh = E // H
    ks = jax.random.split(key, 16)

    def qkv(kq, kk, kv):
        wq, bq = _lin(kq, E, E)
        wk, bk = _lin(kk, E, E)
        wv, bv = _lin(kv, E, E)
        return (jnp.concatenate([wq, wk, wv], axis=1),
                jnp.concatenate([bq, bk, bv], axis=1))

    row = {}
    row["wqkv"], row["bqkv"] = qkv(ks[0], ks[1], ks[2])
    row["wo"], row["bo"] = _lin(ks[3], E, E)
    row["wq1"], row["bq1"] = _lin(ks[4], Dh, 8)
    wk1, _bk1_unused = _lin(ks[5], 1, 8)     # k1_proj bias cancels in the softmax -> unused
    row["wk1"] = wk1.reshape(1, 8)
    row["l"] = jax.random.normal(ks[6], (H,), jnp.float32)
    row["ln_g"] = jnp.ones((1, E), jnp.float32)
    row["ln_b"] = jnp.zeros((1, E), jnp.float32)

    col = {}
    col["wqkv"], col["bqkv"] = qkv(ks[7], ks[8], ks[9])
    col["wo"], col["bo"] = _lin(ks[10], E, E)
    col["ln_g"] = jnp.ones((1, E), jnp.float32)
    col["ln_b"] = jnp.zeros((1, E), jnp.float32)

    ffn = {}
    ffn["w1"], ffn["b1"] = _lin(ks[11], E, F)
    ffn["w2"], ffn["b2"] = _lin(ks[12], F, E)
    ffn["ln_g"] = jnp.ones((1, E), jnp.float32)
    ffn["ln_b"] = jnp.zeros((1, E), jnp.float32)

    return {"row": row, "col": col, "ffn": ffn}


# ---------------------------------------------------------------------------
if __name__ == "__main__":
    R, C, N, E, H, M, F = 8, 8, 1, 32, 4, 4, 32

    key = jax.random.PRNGKey(0)
    kx, knet, kp = jax.random.split(key, 3)
    x = jax.random.normal(kx, (R, C, N, E), jnp.float32)
    network = jax.random.normal(knet, (N, C, C, M), jnp.float32)
    params = init_params(kp, E, F, H)

    fwd = jax.jit(functools.partial(grn_transformer_forward, H=H))
    x_out, row_attn, col_attn, l = fwd(x, network, params)
    jax.block_until_ready((x_out, row_attn, col_attn, l))

    assert x_out.shape == (R, C, N, E)
    assert row_attn.shape == (H, N, C, C)
    assert col_attn.shape == (H, N, R, R)
    assert l.shape == (H, 1, 1, 1)
    print("KERNEL_OK")
</pallas_src>

<mosaic_0001>
module attributes {stable_mosaic.version = 11 : i64} {
  func.func @grn_kernel(%arg0: memref<64x32xf32, #tpu.memory_space<vmem>>, %arg1: memref<8x8x4xf32, #tpu.memory_space<vmem>>, %arg2: memref<64x64xf32, #tpu.memory_space<vmem>>, %arg3: memref<1x32xf32, #tpu.memory_space<vmem>>, %arg4: memref<1x32xf32, #tpu.memory_space<vmem>>, %arg5: memref<32x96xbf16, #tpu.memory_space<vmem>>, %arg6: memref<1x96xf32, #tpu.memory_space<vmem>>, %arg7: memref<4x8x32xbf16, #tpu.memory_space<vmem>>, %arg8: memref<1x32xf32, #tpu.memory_space<vmem>>, %arg9: memref<8x8xf32, #tpu.memory_space<vmem>>, %arg10: memref<1x8xf32, #tpu.memory_space<vmem>>, %arg11: memref<1x8xf32, #tpu.memory_space<vmem>>, %arg12: memref<4xf32, #tpu.memory_space<smem>>, %arg13: memref<1x32xf32, #tpu.memory_space<vmem>>, %arg14: memref<1x32xf32, #tpu.memory_space<vmem>>, %arg15: memref<32x96xbf16, #tpu.memory_space<vmem>>, %arg16: memref<1x96xf32, #tpu.memory_space<vmem>>, %arg17: memref<4x8x32xbf16, #tpu.memory_space<vmem>>, %arg18: memref<1x32xf32, #tpu.memory_space<vmem>>, %arg19: memref<1x32xf32, #tpu.memory_space<vmem>>, %arg20: memref<1x32xf32, #tpu.memory_space<vmem>>, %arg21: memref<32x32xbf16, #tpu.memory_space<vmem>>, %arg22: memref<1x32xf32, #tpu.memory_space<vmem>>, %arg23: memref<32x32xbf16, #tpu.memory_space<vmem>>, %arg24: memref<1x32xf32, #tpu.memory_space<vmem>>, %arg25: memref<64x32xf32, #tpu.memory_space<vmem>>, %arg26: memref<32x8xf32, #tpu.memory_space<vmem>>, %arg27: memref<32x8xf32, #tpu.memory_space<vmem>>) attributes {dimension_semantics = [], scalar_prefetch = 0 : i64, scratch_operands = 0 : i64, tpu.core_type = #tpu.core_type<tc>} {
    %c0 = arith.constant 0 : index
    %c0_0 = arith.constant 0 : index
    %0 = vector.load %arg0[%c0, %c0_0] : memref<64x32xf32, #tpu.memory_space<vmem>>, vector<64x32xf32>
    %c0_1 = arith.constant 0 : index
    %c0_2 = arith.constant 0 : index
    %1 = vector.load %arg3[%c0_1, %c0_2] : memref<1x32xf32, #tpu.memory_space<vmem>>, vector<1x32xf32>
    %c0_3 = arith.constant 0 : index
    %c0_4 = arith.constant 0 : index
    %2 = vector.load %arg4[%c0_3, %c0_4] : memref<1x32xf32, #tpu.memory_space<vmem>>, vector<1x32xf32>
    %cst = arith.constant dense<0.000000e+00> : vector<64xf32>
    %3 = vector.multi_reduction <add>, %0, %cst [1] : vector<64x32xf32> to vector<64xf32>
    %4 = vector.shape_cast %3 : vector<64xf32> to vector<64x1xf32>
    %cst_5 = arith.constant 3.200000e+01 : f32
    %5 = vector.broadcast %cst_5 : f32 to vector<64x1xf32>
    %6 = arith.divf %4, %5 : vector<64x1xf32>
    %7 = vector.broadcast %6 : vector<64x1xf32> to vector<64x32xf32>
    %8 = arith.subf %0, %7 : vector<64x32xf32>
    %9 = arith.mulf %8, %8 : vector<64x32xf32>
    %cst_6 = arith.constant dense<0.000000e+00> : vector<64xf32>
    %10 = vector.multi_reduction <add>, %9, %cst_6 [1] : vector<64x32xf32> to vector<64xf32>
    %11 = vector.shape_cast %10 : vector<64xf32> to vector<64x1xf32>
    %cst_7 = arith.constant 3.200000e+01 : f32
    %12 = vector.broadcast %cst_7 : f32 to vector<64x1xf32>
    %13 = arith.divf %11, %12 : vector<64x1xf32>
    %cst_8 = arith.constant 9.99999974E-6 : f32
    %14 = vector.broadcast %cst_8 : f32 to vector<64x1xf32>
    %15 = arith.addf %13, %14 : vector<64x1xf32>
    %16 = math.rsqrt %15 : vector<64x1xf32>
    %17 = vector.broadcast %16 : vector<64x1xf32> to vector<64x32xf32>
    %18 = arith.mulf %8, %17 : vector<64x32xf32>
    %19 = vector.broadcast %1 : vector<1x32xf32> to vector<64x32xf32>
    %20 = arith.mulf %18, %19 : vector<64x32xf32>
    %21 = vector.broadcast %2 : vector<1x32xf32> to vector<64x32xf32>
    %22 = arith.addf %20, %21 : vector<64x32xf32>
    %23 = arith.truncf %22 : vector<64x32xf32> to vector<64x32xbf16>
    %c0_9 = arith.constant 0 : index
    %c0_10 = arith.constant 0 : index
    %24 = vector.load %arg5[%c0_9, %c0_10] : memref<32x96xbf16, #tpu.memory_space<vmem>>, vector<32x96xbf16>
    %cst_11 = arith.constant dense<0.000000e+00> : vector<64x96xf32>
    %25 = tpu.matmul %23, %24, %cst_11 {dimension_numbers = #tpu.dot_dimension_numbers<[1], [0], [0], [1], [0, 0, 1, 1], [], []>} : vector<64x32xbf16>, vector<32x96xbf16>, vector<64x96xf32> -> vector<64x96xf32>
    %c0_12 = arith.constant 0 : index
    %c0_13 = arith.constant 0 : index
    %26 = vector.load %arg6[%c0_12, %c0_13] : memref<1x96xf32, #tpu.memory_space<vmem>>, vector<1x96xf32>
    %27 = vector.broadcast %26 : vector<1x96xf32> to vector<64x96xf32>
    %28 = arith.addf %25, %27 : vector<64x96xf32>
    %29 = vector.extract_strided_slice %28 {offsets = [0, 0], sizes = [64, 32], strides = [1, 1]} : vector<64x96xf32> to vector<64x32xf32>
    %cst_14 = arith.constant 1.250000e-01 : f32
    %30 = vector.broadcast %cst_14 : f32 to vector<64x32xf32>
    %31 = arith.mulf %29, %30 : vector<64x32xf32>
    %32 = vector.extract_strided_slice %28 {offsets = [0, 32], sizes = [64, 32], strides = [1, 1]} : vector<64x96xf32> to vector<64x32xf32>
    %33 = vector.extract_strided_slice %28 {offsets = [0, 64], sizes = [64, 32], strides = [1, 1]} : vector<64x96xf32> to vector<64x32xf32>
    %cst_15 = arith.constant 0.000000e+00 : f32
    %34 = vector.broadcast %cst_15 : f32 to vector<8x8x8xf32>
    %35 = vector.extract_strided_slice %31 {offsets = [0, 0], sizes = [64, 8], strides = [1, 1]} : vector<64x32xf32> to vector<64x8xf32>
    %36 = vector.shape_cast %35 : vector<64x8xf32> to vector<8x8x8xf32>
    %37 = vector.extract_strided_slice %32 {offsets = [0, 0], sizes = [64, 8], strides = [1, 1]} : vector<64x32xf32> to vector<64x8xf32>
    %38 = vector.shape_cast %37 : vector<64x8xf32> to vector<8x8x8xf32>
    %39 = vector.extract_strided_slice %33 {offsets = [0, 0], sizes = [64, 8], strides = [1, 1]} : vector<64x32xf32> to vector<64x8xf32>
    %40 = vector.shape_cast %39 : vector<64x8xf32> to vector<8x8x8xf32>
    %41 = arith.truncf %36 : vector<8x8x8xf32> to vector<8x8x8xbf16>
    %42 = arith.truncf %38 : vector<8x8x8xf32> to vector<8x8x8xbf16>
    "tpu.trace_start"() <{level = 10 : i32, message = "rid,rjd->rij"}> : () -> ()
    %cst_16 = arith.constant dense<0.000000e+00> : vector<8x8x8xf32>
    %43 = tpu.matmul %41, %42, %cst_16 {dimension_numbers = #tpu.dot_dimension_numbers<[2], [2], [1], [1], [0, 0, 0, 1, 1, 1], [0], [0]>} : vector<8x8x8xbf16>, vector<8x8x8xbf16>, vector<8x8x8xf32> -> vector<8x8x8xf32>
    "tpu.trace_stop"() : () -> ()
    %cst_17 = arith.constant dense<0.000000e+00> : vector<8x8xf32>
    %44 = vector.multi_reduction <add>, %43, %cst_17 [0] : vector<8x8x8xf32> to vector<8x8xf32>
    %45 = vector.shape_cast %36 : vector<8x8x8xf32> to vector<8x8x1x8xf32>
    %46 = vector.shape_cast %38 : vector<8x8x8xf32> to vector<8x1x8x8xf32>
    %47 = vector.broadcast %45 : vector<8x8x1x8xf32> to vector<8x8x8x8xf32>
    %48 = vector.broadcast %46 : vector<8x1x8x8xf32> to vector<8x8x8x8xf32>
    %49 = arith.mulf %47, %48 : vector<8x8x8x8xf32>
    %cst_18 = arith.constant dense<0.000000e+00> : vector<8x8x8xf32>
    %50 = vector.multi_reduction <add>, %49, %cst_18 [0] : vector<8x8x8x8xf32> to vector<8x8x8xf32>
    %51 = arith.addf %34, %50 : vector<8x8x8xf32>
    %52 = vector.extract_strided_slice %31 {offsets = [0, 8], sizes = [64, 8], strides = [1, 1]} : vector<64x32xf32> to vector<64x8xf32>
    %53 = vector.shape_cast %52 : vector<64x8xf32> to vector<8x8x8xf32>
    %54 = vector.extract_strided_slice %32 {offsets = [0, 8], sizes = [64, 8], strides = [1, 1]} : vector<64x32xf32> to vector<64x8xf32>
    %55 = vector.shape_cast %54 : vector<64x8xf32> to vector<8x8x8xf32>
    %56 = vector.extract_strided_slice %33 {offsets = [0, 8], sizes = [64, 8], strides = [1, 1]} : vector<64x32xf32> to vector<64x8xf32>
    %57 = vector.shape_cast %56 : vector<64x8xf32> to vector<8x8x8xf32>
    %58 = arith.truncf %53 : vector<8x8x8xf32> to vector<8x8x8xbf16>
    %59 = arith.truncf %55 : vector<8x8x8xf32> to vector<8x8x8xbf16>
    "tpu.trace_start"() <{level = 10 : i32, message = "rid,rjd->rij"}> : () -> ()
    %cst_19 = arith.constant dense<0.000000e+00> : vector<8x8x8xf32>
    %60 = tpu.matmul %58, %59, %cst_19 {dimension_numbers = #tpu.dot_dimension_numbers<[2], [2], [1], [1], [0, 0, 0, 1, 1, 1], [0], [0]>} : vector<8x8x8xbf16>, vector<8x8x8xbf16>, vector<8x8x8xf32> -> vector<8x8x8xf32>
    "tpu.trace_stop"() : () -> ()
    %cst_20 = arith.constant dense<0.000000e+00> : vector<8x8xf32>
    %61 = vector.multi_reduction <add>, %60, %cst_20 [0] : vector<8x8x8xf32> to vector<8x8xf32>
    %62 = vector.shape_cast %53 : vector<8x8x8xf32> to vector<8x8x1x8xf32>
    %63 = vector.shape_cast %55 : vector<8x8x8xf32> to vector<8x1x8x8xf32>
    %64 = vector.broadcast %62 : vector<8x8x1x8xf32> to vector<8x8x8x8xf32>
    %65 = vector.broadcast %63 : vector<8x1x8x8xf32> to vector<8x8x8x8xf32>
    %66 = arith.mulf %64, %65 : vector<8x8x8x8xf32>
    %cst_21 = arith.constant dense<0.000000e+00> : vector<8x8x8xf32>
    %67 = vector.multi_reduction <add>, %66, %cst_21 [0] : vector<8x8x8x8xf32> to vector<8x8x8xf32>
    %68 = arith.addf %51, %67 : vector<8x8x8xf32>
    %69 = vector.extract_strided_slice %31 {offsets = [0, 16], sizes = [64, 8], strides = [1, 1]} : vector<64x32xf32> to vector<64x8xf32>
    %70 = vector.shape_cast %69 : vector<64x8xf32> to vector<8x8x8xf32>
    %71 = vector.extract_strided_slice %32 {offsets = [0, 16], sizes = [64, 8], strides = [1, 1]} : vector<64x32xf32> to vector<64x8xf32>
    %72 = vector.shape_cast %71 : vector<64x8xf32> to vector<8x8x8xf32>
    %73 = vector.extract_strided_slice %33 {offsets = [0, 16], sizes = [64, 8], strides = [1, 1]} : vector<64x32xf32> to vector<64x8xf32>
    %74 = vector.shape_cast %73 : vector<64x8xf32> to vector<8x8x8xf32>
    %75 = arith.truncf %70 : vector<8x8x8xf32> to vector<8x8x8xbf16>
    %76 = arith.truncf %72 : vector<8x8x8xf32> to vector<8x8x8xbf16>
    "tpu.trace_start"() <{level = 10 : i32, message = "rid,rjd->rij"}> : () -> ()
    %cst_22 = arith.constant dense<0.000000e+00> : vector<8x8x8xf32>
    %77 = tpu.matmul %75, %76, %cst_22 {dimension_numbers = #tpu.dot_dimension_numbers<[2], [2], [1], [1], [0, 0, 0, 1, 1, 1], [0], [0]>} : vector<8x8x8xbf16>, vector<8x8x8xbf16>, vector<8x8x8xf32> -> vector<8x8x8xf32>
    "tpu.trace_stop"() : () -> ()
    %cst_23 = arith.constant dense<0.000000e+00> : vector<8x8xf32>
    %78 = vector.multi_reduction <add>, %77, %cst_23 [0] : vector<8x8x8xf32> to vector<8x8xf32>
    %79 = vector.shape_cast %70 : vector<8x8x8xf32> to vector<8x8x1x8xf32>
    %80 = vector.shape_cast %72 : vector<8x8x8xf32> to vector<8x1x8x8xf32>
    %81 = vector.broadcast %79 : vector<8x8x1x8xf32> to vector<8x8x8x8xf32>
    %82 = vector.broadcast %80 : vector<8x1x8x8xf32> to vector<8x8x8x8xf32>
    %83 = arith.mulf %81, %82 : vector<8x8x8x8xf32>
    %cst_24 = arith.constant dense<0.000000e+00> : vector<8x8x8xf32>
    %84 = vector.multi_reduction <add>, %83, %cst_24 [0] : vector<8x8x8x8xf32> to vector<8x8x8xf32>
    %85 = arith.addf %68, %84 : vector<8x8x8xf32>
    %86 = vector.extract_strided_slice %31 {offsets = [0, 24], sizes = [64, 8], strides = [1, 1]} : vector<64x32xf32> to vector<64x8xf32>
    %87 = vector.shape_cast %86 : vector<64x8xf32> to vector<8x8x8xf32>
    %88 = vector.extract_strided_slice %32 {offsets = [0, 24], sizes = [64, 8], strides = [1, 1]} : vector<64x32xf32> to vector<64x8xf32>
    %89 = vector.shape_cast %88 : vector<64x8xf32> to vector<8x8x8xf32>
    %90 = vector.extract_strided_slice %33 {offsets = [0, 24], sizes = [64, 8], strides = [1, 1]} : vector<64x32xf32> to vector<64x8xf32>
    %91 = vector.shape_cast %90 : vector<64x8xf32> to vector<8x8x8xf32>
    %92 = arith.truncf %87 : vector<8x8x8xf32> to vector<8x8x8xbf16>
    %93 = arith.truncf %89 : vector<8x8x8xf32> to vector<8x8x8xbf16>
    "tpu.trace_start"() <{level = 10 : i32, message = "rid,rjd->rij"}> : () -> ()
    %cst_25 = arith.constant dense<0.000000e+00> : vector<8x8x8xf32>
    %94 = tpu.matmul %92, %93, %cst_25 {dimension_numbers = #tpu.dot_dimension_numbers<[2], [2], [1], [1], [0, 0, 0, 1, 1, 1], [0], [0]>} : vector<8x8x8xbf16>, vector<8x8x8xbf16>, vector<8x8x8xf32> -> vector<8x8x8xf32>
    "tpu.trace_stop"() : () -> ()
    %cst_26 = arith.constant dense<0.000000e+00> : vector<8x8xf32>
    %95 = vector.multi_reduction <add>, %94, %cst_26 [0] : vector<8x8x8xf32> to vector<8x8xf32>
    %96 = vector.shape_cast %87 : vector<8x8x8xf32> to vector<8x8x1x8xf32>
    %97 = vector.shape_cast %89 : vector<8x8x8xf32> to vector<8x1x8x8xf32>
    %98 = vector.broadcast %96 : vector<8x8x1x8xf32> to vector<8x8x8x8xf32>
    %99 = vector.broadcast %97 : vector<8x1x8x8xf32> to vector<8x8x8x8xf32>
    %100 = arith.mulf %98, %99 : vector<8x8x8x8xf32>
    %cst_27 = arith.constant dense<0.000000e+00> : vector<8x8x8xf32>
    %101 = vector.multi_reduction <add>, %100, %cst_27 [0] : vector<8x8x8x8xf32> to vector<8x8x8xf32>
    %102 = arith.addf %85, %101 : vector<8x8x8xf32>
    %cst_28 = arith.constant 2.500000e-01 : f32
    %103 = vector.broadcast %cst_28 : f32 to vector<8x8x8xf32>
    %104 = arith.mulf %102, %103 : vector<8x8x8xf32>
    %105 = vector.shape_cast %104 : vector<8x8x8xf32> to vector<64x8xf32>
    %c0_29 = arith.constant 0 : index
    %c0_30 = arith.constant 0 : index
    %106 = vector.load %arg9[%c0_29, %c0_30] : memref<8x8xf32, #tpu.memory_space<vmem>>, vector<8x8xf32>
    %cst_31 = arith.constant dense<0.000000e+00> : vector<64x8xf32>
    %107 = tpu.matmul %105, %106, %cst_31 {dimension_numbers = #tpu.dot_dimension_numbers<[1], [0], [0], [1], [0, 0, 1, 1], [], []>} : vector<64x8xf32>, vector<8x8xf32>, vector<64x8xf32> -> vector<64x8xf32>
    %c0_32 = arith.constant 0 : index
    %c0_33 = arith.constant 0 : index
    %108 = vector.load %arg10[%c0_32, %c0_33] : memref<1x8xf32, #tpu.memory_space<vmem>>, vector<1x8xf32>
    %109 = vector.broadcast %108 : vector<1x8xf32> to vector<64x8xf32>
    %110 = arith.addf %107, %109 : vector<64x8xf32>
    %c0_34 = arith.constant 0 : index
    %c0_35 = arith.constant 0 : index
    %111 = vector.load %arg11[%c0_34, %c0_35] : memref<1x8xf32, #tpu.memory_space<vmem>>, vector<1x8xf32>
    %112 = vector.broadcast %111 : vector<1x8xf32> to vector<64x8xf32>
    %113 = arith.mulf %110, %112 : vector<64x8xf32>
    %cst_36 = arith.constant dense<0.000000e+00> : vector<64xf32>
    %114 = vector.multi_reduction <add>, %113, %cst_36 [1] : vector<64x8xf32> to vector<64xf32>
    %115 = vector.shape_cast %114 : vector<64xf32> to vector<64x1xf32>
    %c0_37 = arith.constant 0 : index
    %c0_38 = arith.constant 0 : index
    %c0_39 = arith.constant 0 : index
    %116 = vector.load %arg1[%c0_37, %c0_38, %c0_39] : memref<8x8x4xf32, #tpu.memory_space<vmem>>, vector<8x8x4xf32>
    %117 = vector.shape_cast %115 : vector<64x1xf32> to vector<8x8x1xf32>
    %118 = vector.broadcast %117 : vector<8x8x1xf32> to vector<8x8x4xf32>
    %119 = arith.mulf %116, %118 : vector<8x8x4xf32>
    %cst_40 = arith.constant dense<0xFF800000> : vector<8x8xf32>
    %120 = vector.multi_reduction <maximumf>, %119, %cst_40 [2] : vector<8x8x4xf32> to vector<8x8xf32>
    %121 = vector.shape_cast %120 : vector<8x8xf32> to vector<8x8x1xf32>
    %122 = vector.broadcast %121 : vector<8x8x1xf32> to vector<8x8x4xf32>
    %123 = arith.subf %119, %122 : vector<8x8x4xf32>
    %124 = math.exp %123 : vector<8x8x4xf32>
    %cst_41 = arith.constant dense<0.000000e+00> : vector<8x8xf32>
    %125 = vector.multi_reduction <add>, %124, %cst_41 [2] : vector<8x8x4xf32> to vector<8x8xf32>
    %126 = vector.shape_cast %125 : vector<8x8xf32> to vector<8x8x1xf32>
    %127 = tpu.reciprocal %126 {approx = true} : vector<8x8x1xf32> -> vector<8x8x1xf32>
    %128 = vector.broadcast %127 : vector<8x8x1xf32> to vector<8x8x4xf32>
    %129 = arith.mulf %124, %128 : vector<8x8x4xf32>
    %130 = arith.mulf %116, %129 : vector<8x8x4xf32>
    %cst_42 = arith.constant dense<0.000000e+00> : vector<8x8xf32>
    %131 = vector.multi_reduction <add>, %130, %cst_42 [2] : vector<8x8x4xf32> to vector<8x8xf32>
    %132 = tpu.iota {dimensions = array<i32: 0>} : vector<8x8xi32>
    %133 = tpu.iota {dimensions = array<i32: 1>} : vector<8x8xi32>
    %134 = arith.cmpi eq, %132, %133 : vector<8x8xi32>
    %cst_43 = arith.constant 0.000000e+00 : f32
    %135 = vector.broadcast %cst_43 : f32 to vector<64x32xf32>
    %c0_44 = arith.constant 0 : index
    %136 = memref.load %arg12[%c0_44] : memref<4xf32, #tpu.memory_space<smem>>
    %137 = vector.broadcast %136 : f32 to vector<8x8xf32>
    %138 = arith.mulf %137, %131 : vector<8x8xf32>
    %139 = arith.addf %44, %138 : vector<8x8xf32>
    %cst_45 = arith.constant -1.000000e+09 : f32
    %140 = vector.broadcast %cst_45 : f32 to vector<8x8xf32>
    %141 = arith.select %134, %140, %139 : vector<8x8xi1>, vector<8x8xf32>
    %cst_46 = arith.constant dense<0xFF800000> : vector<8xf32>
    %142 = vector.multi_reduction <maximumf>, %141, %cst_46 [1] : vector<8x8xf32> to vector<8xf32>
    %143 = vector.shape_cast %142 : vector<8xf32> to vector<8x1xf32>
    %144 = vector.broadcast %143 : vector<8x1xf32> to vector<8x8xf32>
    %145 = arith.subf %141, %144 : vector<8x8xf32>
    %146 = math.exp %145 : vector<8x8xf32>
    %cst_47 = arith.constant dense<0.000000e+00> : vector<8xf32>
    %147 = vector.multi_reduction <add>, %146, %cst_47 [1] : vector<8x8xf32> to vector<8xf32>
    %148 = vector.shape_cast %147 : vector<8xf32> to vector<8x1xf32>
    %149 = tpu.reciprocal %148 {approx = true} : vector<8x1xf32> -> vector<8x1xf32>
    %150 = vector.broadcast %149 : vector<8x1xf32> to vector<8x8xf32>
    %151 = arith.mulf %146, %150 : vector<8x8xf32>
    %c0_48 = arith.constant 0 : index
    %c0_49 = arith.constant 0 : index
    %152 = vector.load %arg26[%c0_48, %c0_49] : memref<32x8xf32, #tpu.memory_space<vmem>>, vector<8x8xf32>
    tpu.vector_store %arg26[%c0_48, %c0_49], %151 {strides = array<i32>} : memref<32x8xf32, #tpu.memory_space<vmem>>, vector<8x8xf32>,
    %153 = vector.shape_cast %151 : vector<8x8xf32> to vector<1x8x8xf32>
    %154 = vector.shape_cast %153 : vector<1x8x8xf32> to vector<1x8x8xf32>
    %155 = vector.broadcast %154 : vector<1x8x8xf32> to vector<8x8x8xf32>
    %156 = arith.truncf %155 : vector<8x8x8xf32> to vector<8x8x8xbf16>
    %157 = arith.truncf %40 : vector<8x8x8xf32> to vector<8x8x8xbf16>
    "tpu.trace_start"() <{level = 10 : i32, message = "rij,rjd->rid"}> : () -> ()
    %cst_50 = arith.constant dense<0.000000e+00> : vector<8x8x8xf32>
    %158 = tpu.matmul %156, %157, %cst_50 {dimension_numbers = #tpu.dot_dimension_numbers<[2], [1], [1], [2], [0, 0, 0, 1, 1, 2], [0], [0]>} : vector<8x8x8xbf16>, vector<8x8x8xbf16>, vector<8x8x8xf32> -> vector<8x8x8xf32>
    "tpu.trace_stop"() : () -> ()
    %159 = vector.shape_cast %158 : vector<8x8x8xf32> to vector<64x8xf32>
    %160 = arith.truncf %159 : vector<64x8xf32> to vector<64x8xbf16>
    %c0_51 = arith.constant 0 : index
    %c0_52 = arith.constant 0 : index
    %c0_53 = arith.constant 0 : index
    %161 = vector.load %arg7[%c0_51, %c0_52, %c0_53] : memref<4x8x32xbf16, #tpu.memory_space<vmem>>, vector<1x8x32xbf16>
    %162 = vector.shape_cast %161 : vector<1x8x32xbf16> to vector<8x32xbf16>
    %cst_54 = arith.constant dense<0.000000e+00> : vector<64x32xf32>
    %163 = tpu.matmul %160, %162, %cst_54 {dimension_numbers = #tpu.dot_dimension_numbers<[1], [0], [0], [1], [0, 0, 1, 1], [], []>} : vector<64x8xbf16>, vector<8x32xbf16>, vector<64x32xf32> -> vector<64x32xf32>
    %164 = arith.addf %135, %163 : vector<64x32xf32>
    %c1 = arith.constant 1 : index
    %165 = memref.load %arg12[%c1] : memref<4xf32, #tpu.memory_space<smem>>
    %166 = vector.broadcast %165 : f32 to vector<8x8xf32>
    %167 = arith.mulf %166, %131 : vector<8x8xf32>
    %168 = arith.addf %61, %167 : vector<8x8xf32>
    %cst_55 = arith.constant -1.000000e+09 : f32
    %169 = vector.broadcast %cst_55 : f32 to vector<8x8xf32>
    %170 = arith.select %134, %169, %168 : vector<8x8xi1>, vector<8x8xf32>
    %cst_56 = arith.constant dense<0xFF800000> : vector<8xf32>
    %171 = vector.multi_reduction <maximumf>, %170, %cst_56 [1] : vector<8x8xf32> to vector<8xf32>
    %172 = vector.shape_cast %171 : vector<8xf32> to vector<8x1xf32>
    %173 = vector.broadcast %172 : vector<8x1xf32> to vector<8x8xf32>
    %174 = arith.subf %170, %173 : vector<8x8xf32>
    %175 = math.exp %174 : vector<8x8xf32>
    %cst_57 = arith.constant dense<0.000000e+00> : vector<8xf32>
    %176 = vector.multi_reduction <add>, %175, %cst_57 [1] : vector<8x8xf32> to vector<8xf32>
    %177 = vector.shape_cast %176 : vector<8xf32> to vector<8x1xf32>
    %178 = tpu.reciprocal %177 {approx = true} : vector<8x1xf32> -> vector<8x1xf32>
    %179 = vector.broadcast %178 : vector<8x1xf32> to vector<8x8xf32>
    %180 = arith.mulf %175, %179 : vector<8x8xf32>
    %c8 = arith.constant 8 : index
    %c0_58 = arith.constant 0 : index
    %181 = vector.load %arg26[%c8, %c0_58] : memref<32x8xf32, #tpu.memory_space<vmem>>, vector<8x8xf32>
    tpu.vector_store %arg26[%c8, %c0_58], %180 {strides = array<i32>} : memref<32x8xf32, #tpu.memory_space<vmem>>, vector<8x8xf32>,
    %182 = vector.shape_cast %180 : vector<8x8xf32> to vector<1x8x8xf32>
    %183 = vector.shape_cast %182 : vector<1x8x8xf32> to vector<1x8x8xf32>
    %184 = vector.broadcast %183 : vector<1x8x8xf32> to vector<8x8x8xf32>
    %185 = arith.truncf %184 : vector<8x8x8xf32> to vector<8x8x8xbf16>
    %186 = arith.truncf %57 : vector<8x8x8xf32> to vector<8x8x8xbf16>
    "tpu.trace_start"() <{level = 10 : i32, message = "rij,rjd->rid"}> : () -> ()
    %cst_59 = arith.constant dense<0.000000e+00> : vector<8x8x8xf32>
    %187 = tpu.matmul %185, %186, %cst_59 {dimension_numbers = #tpu.dot_dimension_numbers<[2], [1], [1], [2], [0, 0, 0, 1, 1, 2], [0], [0]>} : vector<8x8x8xbf16>, vector<8x8x8xbf16>, vector<8x8x8xf32> -> vector<8x8x8xf32>
    "tpu.trace_stop"() : () -> ()
    %188 = vector.shape_cast %187 : vector<8x8x8xf32> to vector<64x8xf32>
    %189 = arith.truncf %188 : vector<64x8xf32> to vector<64x8xbf16>
    %c1_60 = arith.constant 1 : index
    %c0_61 = arith.constant 0 : index
    %c0_62 = arith.constant 0 : index
    %190 = vector.load %arg7[%c1_60, %c0_61, %c0_62] : memref<4x8x32xbf16, #tpu.memory_space<vmem>>, vector<1x8x32xbf16>
    %191 = vector.shape_cast %190 : vector<1x8x32xbf16> to vector<8x32xbf16>
    %cst_63 = arith.constant dense<0.000000e+00> : vector<64x32xf32>
    %192 = tpu.matmul %189, %191, %cst_63 {dimension_numbers = #tpu.dot_dimension_numbers<[1], [0], [0], [1], [0, 0, 1, 1], [], []>} : vector<64x8xbf16>, vector<8x32xbf16>, vector<64x32xf32> -> vector<64x32xf32>
    %193 = arith.addf %164, %192 : vector<64x32xf32>
    %c2 = arith.constant 2 : index
    %194 = memref.load %arg12[%c2] : memref<4xf32, #tpu.memory_space<smem>>
    %195 = vector.broadcast %194 : f32 to vector<8x8xf32>
    %196 = arith.mulf %195, %131 : vector<8x8xf32>
    %197 = arith.addf %78, %196 : vector<8x8xf32>
    %cst_64 = arith.constant -1.000000e+09 : f32
    %198 = vector.broadcast %cst_64 : f32 to vector<8x8xf32>
    %199 = arith.select %134, %198, %197 : vector<8x8xi1>, vector<8x8xf32>
    %cst_65 = arith.constant dense<0xFF800000> : vector<8xf32>
    %200 = vector.multi_reduction <maximumf>, %199, %cst_65 [1] : vector<8x8xf32> to vector<8xf32>
    %201 = vector.shape_cast %200 : vector<8xf32> to vector<8x1xf32>
    %202 = vector.broadcast %201 : vector<8x1xf32> to vector<8x8xf32>
    %203 = arith.subf %199, %202 : vector<8x8xf32>
    %204 = math.exp %203 : vector<8x8xf32>
    %cst_66 = arith.constant dense<0.000000e+00> : vector<8xf32>
    %205 = vector.multi_reduction <add>, %204, %cst_66 [1] : vector<8x8xf32> to vector<8xf32>
    %206 = vector.shape_cast %205 : vector<8xf32> to vector<8x1xf32>
    %207 = tpu.reciprocal %206 {approx = true} : vector<8x1xf32> -> vector<8x1xf32>
    %208 = vector.broadcast %207 : vector<8x1xf32> to vector<8x8xf32>
    %209 = arith.mulf %204, %208 : vector<8x8xf32>
    %c16 = arith.constant 16 : index
    %c0_67 = arith.constant 0 : index
    %210 = vector.load %arg26[%c16, %c0_67] : memref<32x8xf32, #tpu.memory_space<vmem>>, vector<8x8xf32>
    tpu.vector_store %arg26[%c16, %c0_67], %209 {strides = array<i32>} : memref<32x8xf32, #tpu.memory_space<vmem>>, vector<8x8xf32>,
    %211 = vector.shape_cast %209 : vector<8x8xf32> to vector<1x8x8xf32>
    %212 = vector.shape_cast %211 : vector<1x8x8xf32> to vector<1x8x8xf32>
    %213 = vector.broadcast %212 : vector<1x8x8xf32> to vector<8x8x8xf32>
    %214 = arith.truncf %213 : vector<8x8x8xf32> to vector<8x8x8xbf16>
    %215 = arith.truncf %74 : vector<8x8x8xf32> to vector<8x8x8xbf16>
    "tpu.trace_start"() <{level = 10 : i32, message = "rij,rjd->rid"}> : () -> ()
    %cst_68 = arith.constant dense<0.000000e+00> : vector<8x8x8xf32>
    %216 = tpu.matmul %214, %215, %cst_68 {dimension_numbers = #tpu.dot_dimension_numbers<[2], [1], [1], [2], [0, 0, 0, 1, 1, 2], [0], [0]>} : vector<8x8x8xbf16>, vector<8x8x8xbf16>, vector<8x8x8xf32> -> vector<8x8x8xf32>
    "tpu.trace_stop"() : () -> ()
    %217 = vector.shape_cast %216 : vector<8x8x8xf32> to vector<64x8xf32>
    %218 = arith.truncf %217 : vector<64x8xf32> to vector<64x8xbf16>
    %c2_69 = arith.constant 2 : index
    %c0_70 = arith.constant 0 : index
    %c0_71 = arith.constant 0 : index
    %219 = vector.load %arg7[%c2_69, %c0_70, %c0_71] : memref<4x8x32xbf16, #tpu.memory_space<vmem>>, vector<1x8x32xbf16>
    %220 = vector.shape_cast %219 : vector<1x8x32xbf16> to vector<8x32xbf16>
    %cst_72 = arith.constant dense<0.000000e+00> : vector<64x32xf32>
    %221 = tpu.matmul %218, %220, %cst_72 {dimension_numbers = #tpu.dot_dimension_numbers<[1], [0], [0], [1], [0, 0, 1, 1], [], []>} : vector<64x8xbf16>, vector<8x32xbf16>, vector<64x32xf32> -> vector<64x32xf32>
    %222 = arith.addf %193, %221 : vector<64x32xf32>
    %c3 = arith.constant 3 : index
    %223 = memref.load %arg12[%c3] : memref<4xf32, #tpu.memory_space<smem>>
    %224 = vector.broadcast %223 : f32 to vector<8x8xf32>
    %225 = arith.mulf %224, %131 : vector<8x8xf32>
    %226 = arith.addf %95, %225 : vector<8x8xf32>
    %cst_73 = arith.constant -1.000000e+09 : f32
    %227 = vector.broadcast %cst_73 : f32 to vector<8x8xf32>
    %228 = arith.select %134, %227, %226 : vector<8x8xi1>, vector<8x8xf32>
    %cst_74 = arith.constant dense<0xFF800000> : vector<8xf32>
    %229 = vector.multi_reduction <maximumf>, %228, %cst_74 [1] : vector<8x8xf32> to vector<8xf32>
    %230 = vector.shape_cast %229 : vector<8xf32> to vector<8x1xf32>
    %231 = vector.broadcast %230 : vector<8x1xf32> to vector<8x8xf32>
    %232 = arith.subf %228, %231 : vector<8x8xf32>
    %233 = math.exp %232 : vector<8x8xf32>
    %cst_75 = arith.constant dense<0.000000e+00> : vector<8xf32>
    %234 = vector.multi_reduction <add>, %233, %cst_75 [1] : vector<8x8xf32> to vector<8xf32>
    %235 = vector.shape_cast %234 : vector<8xf32> to vector<8x1xf32>
    %236 = tpu.reciprocal %235 {approx = true} : vector<8x1xf32> -> vector<8x1xf32>
    %237 = vector.broadcast %236 : vector<8x1xf32> to vector<8x8xf32>
    %238 = arith.mulf %233, %237 : vector<8x8xf32>
    %c24 = arith.constant 24 : index
    %c0_76 = arith.constant 0 : index
    %239 = vector.load %arg26[%c24, %c0_76] : memref<32x8xf32, #tpu.memory_space<vmem>>, vector<8x8xf32>
    tpu.vector_store %arg26[%c24, %c0_76], %238 {strides = array<i32>} : memref<32x8xf32, #tpu.memory_space<vmem>>, vector<8x8xf32>,
    %240 = vector.shape_cast %238 : vector<8x8xf32> to vector<1x8x8xf32>
    %241 = vector.shape_cast %240 : vector<1x8x8xf32> to vector<1x8x8xf32>
    %242 = vector.broadcast %241 : vector<1x8x8xf32> to vector<8x8x8xf32>
    %243 = arith.truncf %242 : vector<8x8x8xf32> to vector<8x8x8xbf16>
    %244 = arith.truncf %91 : vector<8x8x8xf32> to vector<8x8x8xbf16>
    "tpu.trace_start"() <{level = 10 : i32, message = "rij,rjd->rid"}> : () -> ()
    %cst_77 = arith.constant dense<0.000000e+00> : vector<8x8x8xf32>
    %245 = tpu.matmul %243, %244, %cst_77 {dimension_numbers = #tpu.dot_dimension_numbers<[2], [1], [1], [2], [0, 0, 0, 1, 1, 2], [0], [0]>} : vector<8x8x8xbf16>, vector<8x8x8xbf16>, vector<8x8x8xf32> -> vector<8x8x8xf32>
    "tpu.trace_stop"() : () -> ()
    %246 = vector.shape_cast %245 : vector<8x8x8xf32> to vector<64x8xf32>
    %247 = arith.truncf %246 : vector<64x8xf32> to vector<64x8xbf16>
    %c3_78 = arith.constant 3 : index
    %c0_79 = arith.constant 0 : index
    %c0_80 = arith.constant 0 : index
    %248 = vector.load %arg7[%c3_78, %c0_79, %c0_80] : memref<4x8x32xbf16, #tpu.memory_space<vmem>>, vector<1x8x32xbf16>
    %249 = vector.shape_cast %248 : vector<1x8x32xbf16> to vector<8x32xbf16>
    %cst_81 = arith.constant dense<0.000000e+00> : vector<64x32xf32>
    %250 = tpu.matmul %247, %249, %cst_81 {dimension_numbers = #tpu.dot_dimension_numbers<[1], [0], [0], [1], [0, 0, 1, 1], [], []>} : vector<64x8xbf16>, vector<8x32xbf16>, vector<64x32xf32> -> vector<64x32xf32>
    %251 = arith.addf %222, %250 : vector<64x32xf32>
    %252 = arith.addf %0, %251 : vector<64x32xf32>
    %c0_82 = arith.constant 0 : index
    %c0_83 = arith.constant 0 : index
    %253 = vector.load %arg8[%c0_82, %c0_83] : memref<1x32xf32, #tpu.memory_space<vmem>>, vector<1x32xf32>
    %254 = vector.broadcast %253 : vector<1x32xf32> to vector<64x32xf32>
    %255 = arith.addf %252, %254 : vector<64x32xf32>
    %c0_84 = arith.constant 0 : index
    %c0_85 = arith.constant 0 : index
    %256 = vector.load %arg2[%c0_84, %c0_85] : memref<64x64xf32, #tpu.memory_space<vmem>>, vector<64x64xf32>
    %cst_86 = arith.constant dense<0.000000e+00> : vector<64x32xf32>
    %257 = tpu.matmul %256, %255, %cst_86 {dimension_numbers = #tpu.dot_dimension_numbers<[1], [0], [0], [1], [0, 0, 1, 1], [], []>} : vector<64x64xf32>, vector<64x32xf32>, vector<64x32xf32> -> vector<64x32xf32>
    %c0_87 = arith.constant 0 : index
    %c0_88 = arith.constant 0 : index
    %258 = vector.load %arg13[%c0_87, %c0_88] : memref<1x32xf32, #tpu.memory_space<vmem>>, vector<1x32xf32>
    %c0_89 = arith.constant 0 : index
    %c0_90 = arith.constant 0 : index
    %259 = vector.load %arg14[%c0_89, %c0_90] : memref<1x32xf32, #tpu.memory_space<vmem>>, vector<1x32xf32>
    %cst_91 = arith.constant dense<0.000000e+00> : vector<64xf32>
    %260 = vector.multi_reduction <add>, %257, %cst_91 [1] : vector<64x32xf32> to vector<64xf32>
    %261 = vector.shape_cast %260 : vector<64xf32> to vector<64x1xf32>
    %cst_92 = arith.constant 3.200000e+01 : f32
    %262 = vector.broadcast %cst_92 : f32 to vector<64x1xf32>
    %263 = arith.divf %261, %262 : vector<64x1xf32>
    %264 = vector.broadcast %263 : vector<64x1xf32> to vector<64x32xf32>
    %265 = arith.subf %257, %264 : vector<64x32xf32>
    %266 = arith.mulf %265, %265 : vector<64x32xf32>
    %cst_93 = arith.constant dense<0.000000e+00> : vector<64xf32>
    %267 = vector.multi_reduction <add>, %266, %cst_93 [1] : vector<64x32xf32> to vector<64xf32>
    %268 = vector.shape_cast %267 : vector<64xf32> to vector<64x1xf32>
    %cst_94 = arith.constant 3.200000e+01 : f32
    %269 = vector.broadcast %cst_94 : f32 to vector<64x1xf32>
    %270 = arith.divf %268, %269 : vector<64x1xf32>
    %cst_95 = arith.constant 9.99999974E-6 : f32
    %271 = vector.broadcast %cst_95 : f32 to vector<64x1xf32>
    %272 = arith.addf %270, %271 : vector<64x1xf32>
    %273 = math.rsqrt %272 : vector<64x1xf32>
    %274 = vector.broadcast %273 : vector<64x1xf32> to vector<64x32xf32>
    %275 = arith.mulf %265, %274 : vector<64x32xf32>
    %276 = vector.broadcast %258 : vector<1x32xf32> to vector<64x32xf32>
    %277 = arith.mulf %275, %276 : vector<64x32xf32>
    %278 = vector.broadcast %259 : vector<1x32xf32> to vector<64x32xf32>
    %279 = arith.addf %277, %278 : vector<64x32xf32>
    %280 = arith.truncf %279 : vector<64x32xf32> to vector<64x32xbf16>
    %c0_96 = arith.constant 0 : index
    %c0_97 = arith.constant 0 : index
    %281 = vector.load %arg15[%c0_96, %c0_97] : memref<32x96xbf16, #tpu.memory_space<vmem>>, vector<32x96xbf16>
    %cst_98 = arith.constant dense<0.000000e+00> : vector<64x96xf32>
    %282 = tpu.matmul %280, %281, %cst_98 {dimension_numbers = #tpu.dot_dimension_numbers<[1], [0], [0], [1], [0, 0, 1, 1], [], []>} : vector<64x32xbf16>, vector<32x96xbf16>, vector<64x96xf32> -> vector<64x96xf32>
    %c0_99 = arith.constant 0 : index
    %c0_100 = arith.constant 0 : index
    %283 = vector.load %arg16[%c0_99, %c0_100] : memref<1x96xf32, #tpu.memory_space<vmem>>, vector<1x96xf32>
    %284 = vector.broadcast %283 : vector<1x96xf32> to vector<64x96xf32>
    %285 = arith.addf %282, %284 : vector<64x96xf32>
    %286 = vector.extract_strided_slice %285 {offsets = [0, 0], sizes = [64, 32], strides = [1, 1]} : vector<64x96xf32> to vector<64x32xf32>
    %cst_101 = arith.constant 1.250000e-01 : f32
    %287 = vector.broadcast %cst_101 : f32 to vector<64x32xf32>
    %288 = arith.mulf %286, %287 : vector<64x32xf32>
    %289 = vector.extract_strided_slice %285 {offsets = [0, 32], sizes = [64, 32], strides = [1, 1]} : vector<64x96xf32> to vector<64x32xf32>
    %290 = vector.extract_strided_slice %285 {offsets = [0, 64], sizes = [64, 32], strides = [1, 1]} : vector<64x96xf32> to vector<64x32xf32>
    %cst_102 = arith.constant 0.000000e+00 : f32
    %291 = vector.broadcast %cst_102 : f32 to vector<64x32xf32>
    %292 = vector.extract_strided_slice %288 {offsets = [0, 0], sizes = [64, 8], strides = [1, 1]} : vector<64x32xf32> to vector<64x8xf32>
    %293 = vector.shape_cast %292 : vector<64x8xf32> to vector<8x8x8xf32>
    %294 = vector.extract_strided_slice %289 {offsets = [0, 0], sizes = [64, 8], strides = [1, 1]} : vector<64x32xf32> to vector<64x8xf32>
    %295 = vector.shape_cast %294 : vector<64x8xf32> to vector<8x8x8xf32>
    %296 = vector.extract_strided_slice %290 {offsets = [0, 0], sizes = [64, 8], strides = [1, 1]} : vector<64x32xf32> to vector<64x8xf32>
    %297 = vector.shape_cast %296 : vector<64x8xf32> to vector<8x8x8xf32>
    %298 = arith.truncf %293 : vector<8x8x8xf32> to vector<8x8x8xbf16>
    %299 = arith.truncf %295 : vector<8x8x8xf32> to vector<8x8x8xbf16>
    "tpu.trace_start"() <{level = 10 : i32, message = "cid,cjd->cij"}> : () -> ()
    %cst_103 = arith.constant dense<0.000000e+00> : vector<8x8x8xf32>
    %300 = tpu.matmul %298, %299, %cst_103 {dimension_numbers = #tpu.dot_dimension_numbers<[2], [2], [1], [1], [0, 0, 0, 1, 1, 1], [0], [0]>} : vector<8x8x8xbf16>, vector<8x8x8xbf16>, vector<8x8x8xf32> -> vector<8x8x8xf32>
    "tpu.trace_stop"() : () -> ()
    %cst_104 = arith.constant dense<0.000000e+00> : vector<8x8xf32>
    %301 = vector.multi_reduction <add>, %300, %cst_104 [0] : vector<8x8x8xf32> to vector<8x8xf32>
    %cst_105 = arith.constant dense<0xFF800000> : vector<8xf32>
    %302 = vector.multi_reduction <maximumf>, %301, %cst_105 [1] : vector<8x8xf32> to vector<8xf32>
    %303 = vector.shape_cast %302 : vector<8xf32> to vector<8x1xf32>
    %304 = vector.broadcast %303 : vector<8x1xf32> to vector<8x8xf32>
    %305 = arith.subf %301, %304 : vector<8x8xf32>
    %306 = math.exp %305 : vector<8x8xf32>
    %cst_106 = arith.constant dense<0.000000e+00> : vector<8xf32>
    %307 = vector.multi_reduction <add>, %306, %cst_106 [1] : vector<8x8xf32> to vector<8xf32>
    %308 = vector.shape_cast %307 : vector<8xf32> to vector<8x1xf32>
    %309 = tpu.reciprocal %308 {approx = true} : vector<8x1xf32> -> vector<8x1xf32>
    %310 = vector.broadcast %309 : vector<8x1xf32> to vector<8x8xf32>
    %311 = arith.mulf %306, %310 : vector<8x8xf32>
    %c0_107 = arith.constant 0 : index
    %c0_108 = arith.constant 0 : index
    %312 = vector.load %arg27[%c0_107, %c0_108] : memref<32x8xf32, #tpu.memory_space<vmem>>, vector<8x8xf32>
    tpu.vector_store %arg27[%c0_107, %c0_108], %311 {strides = array<i32>} : memref<32x8xf32, #tpu.memory_space<vmem>>, vector<8x8xf32>,
    %313 = vector.shape_cast %311 : vector<8x8xf32> to vector<1x8x8xf32>
    %314 = vector.shape_cast %313 : vector<1x8x8xf32> to vector<1x8x8xf32>
    %315 = vector.broadcast %314 : vector<1x8x8xf32> to vector<8x8x8xf32>
    %316 = arith.truncf %315 : vector<8x8x8xf32> to vector<8x8x8xbf16>
    %317 = arith.truncf %297 : vector<8x8x8xf32> to vector<8x8x8xbf16>
    "tpu.trace_start"() <{level = 10 : i32, message = "cij,cjd->cid"}> : () -> ()
    %cst_109 = arith.constant dense<0.000000e+00> : vector<8x8x8xf32>
    %318 = tpu.matmul %316, %317, %cst_109 {dimension_numbers = #tpu.dot_dimension_numbers<[2], [1], [1], [2], [0, 0, 0, 1, 1, 2], [0], [0]>} : vector<8x8x8xbf16>, vector<8x8x8xbf16>, vector<8x8x8xf32> -> vector<8x8x8xf32>
    "tpu.trace_stop"() : () -> ()
    %319 = vector.shape_cast %318 : vector<8x8x8xf32> to vector<64x8xf32>
    %320 = arith.truncf %319 : vector<64x8xf32> to vector<64x8xbf16>
    %c0_110 = arith.constant 0 : index
    %c0_111 = arith.constant 0 : index
    %c0_112 = arith.constant 0 : index
    %321 = vector.load %arg17[%c0_110, %c0_111, %c0_112] : memref<4x8x32xbf16, #tpu.memory_space<vmem>>, vector<1x8x32xbf16>
    %322 = vector.shape_cast %321 : vector<1x8x32xbf16> to vector<8x32xbf16>
    %cst_113 = arith.constant dense<0.000000e+00> : vector<64x32xf32>
    %323 = tpu.matmul %320, %322, %cst_113 {dimension_numbers = #tpu.dot_dimension_numbers<[1], [0], [0], [1], [0, 0, 1, 1], [], []>} : vector<64x8xbf16>, vector<8x32xbf16>, vector<64x32xf32> -> vector<64x32xf32>
    %324 = arith.addf %291, %323 : vector<64x32xf32>
    %325 = vector.extract_strided_slice %288 {offsets = [0, 8], sizes = [64, 8], strides = [1, 1]} : vector<64x32xf32> to vector<64x8xf32>
    %326 = vector.shape_cast %325 : vector<64x8xf32> to vector<8x8x8xf32>
    %327 = vector.extract_strided_slice %289 {offsets = [0, 8], sizes = [64, 8], strides = [1, 1]} : vector<64x32xf32> to vector<64x8xf32>
    %328 = vector.shape_cast %327 : vector<64x8xf32> to vector<8x8x8xf32>
    %329 = vector.extract_strided_slice %290 {offsets = [0, 8], sizes = [64, 8], strides = [1, 1]} : vector<64x32xf32> to vector<64x8xf32>
    %330 = vector.shape_cast %329 : vector<64x8xf32> to vector<8x8x8xf32>
    %331 = arith.truncf %326 : vector<8x8x8xf32> to vector<8x8x8xbf16>
    %332 = arith.truncf %328 : vector<8x8x8xf32> to vector<8x8x8xbf16>
    "tpu.trace_start"() <{level = 10 : i32, message = "cid,cjd->cij"}> : () -> ()
    %cst_114 = arith.constant dense<0.000000e+00> : vector<8x8x8xf32>
    %333 = tpu.matmul %331, %332, %cst_114 {dimension_numbers = #tpu.dot_dimension_numbers<[2], [2], [1], [1], [0, 0, 0, 1, 1, 1], [0], [0]>} : vector<8x8x8xbf16>, vector<8x8x8xbf16>, vector<8x8x8xf32> -> vector<8x8x8xf32>
    "tpu.trace_stop"() : () -> ()
    %cst_115 = arith.constant dense<0.000000e+00> : vector<8x8xf32>
    %334 = vector.multi_reduction <add>, %333, %cst_115 [0] : vector<8x8x8xf32> to vector<8x8xf32>
    %cst_116 = arith.constant dense<0xFF800000> : vector<8xf32>
    %335 = vector.multi_reduction <maximumf>, %334, %cst_116 [1] : vector<8x8xf32> to vector<8xf32>
    %336 = vector.shape_cast %335 : vector<8xf32> to vector<8x1xf32>
    %337 = vector.broadcast %336 : vector<8x1xf32> to vector<8x8xf32>
    %338 = arith.subf %334, %337 : vector<8x8xf32>
    %339 = math.exp %338 : vector<8x8xf32>
    %cst_117 = arith.constant dense<0.000000e+00> : vector<8xf32>
    %340 = vector.multi_reduction <add>, %339, %cst_117 [1] : vector<8x8xf32> to vector<8xf32>
    %341 = vector.shape_cast %340 : vector<8xf32> to vector<8x1xf32>
    %342 = tpu.reciprocal %341 {approx = true} : vector<8x1xf32> -> vector<8x1xf32>
    %343 = vector.broadcast %342 : vector<8x1xf32> to vector<8x8xf32>
    %344 = arith.mulf %339, %343 : vector<8x8xf32>
    %c8_118 = arith.constant 8 : index
    %c0_119 = arith.constant 0 : index
    %345 = vector.load %arg27[%c8_118, %c0_119] : memref<32x8xf32, #tpu.memory_space<vmem>>, vector<8x8xf32>
    tpu.vector_store %arg27[%c8_118, %c0_119], %344 {strides = array<i32>} : memref<32x8xf32, #tpu.memory_space<vmem>>, vector<8x8xf32>,
    %346 = vector.shape_cast %344 : vector<8x8xf32> to vector<1x8x8xf32>
    %347 = vector.shape_cast %346 : vector<1x8x8xf32> to vector<1x8x8xf32>
    %348 = vector.broadcast %347 : vector<1x8x8xf32> to vector<8x8x8xf32>
    %349 = arith.truncf %348 : vector<8x8x8xf32> to vector<8x8x8xbf16>
    %350 = arith.truncf %330 : vector<8x8x8xf32> to vector<8x8x8xbf16>
    "tpu.trace_start"() <{level = 10 : i32, message = "cij,cjd->cid"}> : () -> ()
    %cst_120 = arith.constant dense<0.000000e+00> : vector<8x8x8xf32>
    %351 = tpu.matmul %349, %350, %cst_120 {dimension_numbers = #tpu.dot_dimension_numbers<[2], [1], [1], [2], [0, 0, 0, 1, 1, 2], [0], [0]>} : vector<8x8x8xbf16>, vector<8x8x8xbf16>, vector<8x8x8xf32> -> vector<8x8x8xf32>
    "tpu.trace_stop"() : () -> ()
    %352 = vector.shape_cast %351 : vector<8x8x8xf32> to vector<64x8xf32>
    %353 = arith.truncf %352 : vector<64x8xf32> to vector<64x8xbf16>
    %c1_121 = arith.constant 1 : index
    %c0_122 = arith.constant 0 : index
    %c0_123 = arith.constant 0 : index
    %354 = vector.load %arg17[%c1_121, %c0_122, %c0_123] : memref<4x8x32xbf16, #tpu.memory_space<vmem>>, vector<1x8x32xbf16>
    %355 = vector.shape_cast %354 : vector<1x8x32xbf16> to vector<8x32xbf16>
    %cst_124 = arith.constant dense<0.000000e+00> : vector<64x32xf32>
    %356 = tpu.matmul %353, %355, %cst_124 {dimension_numbers = #tpu.dot_dimension_numbers<[1], [0], [0], [1], [0, 0, 1, 1], [], []>} : vector<64x8xbf16>, vector<8x32xbf16>, vector<64x32xf32> -> vector<64x32xf32>
    %357 = arith.addf %324, %356 : vector<64x32xf32>
    %358 = vector.extract_strided_slice %288 {offsets = [0, 16], sizes = [64, 8], strides = [1, 1]} : vector<64x32xf32> to vector<64x8xf32>
    %359 = vector.shape_cast %358 : vector<64x8xf32> to vector<8x8x8xf32>
    %360 = vector.extract_strided_slice %289 {offsets = [0, 16], sizes = [64, 8], strides = [1, 1]} : vector<64x32xf32> to vector<64x8xf32>
    %361 = vector.shape_cast %360 : vector<64x8xf32> to vector<8x8x8xf32>
    %362 = vector.extract_strided_slice %290 {offsets = [0, 16], sizes = [64, 8], strides = [1, 1]} : vector<64x32xf32> to vector<64x8xf32>
    %363 = vector.shape_cast %362 : vector<64x8xf32> to vector<8x8x8xf32>
    %364 = arith.truncf %359 : vector<8x8x8xf32> to vector<8x8x8xbf16>
    %365 = arith.truncf %361 : vector<8x8x8xf32> to vector<8x8x8xbf16>
    "tpu.trace_start"() <{level = 10 : i32, message = "cid,cjd->cij"}> : () -> ()
    %cst_125 = arith.constant dense<0.000000e+00> : vector<8x8x8xf32>
    %366 = tpu.matmul %364, %365, %cst_125 {dimension_numbers = #tpu.dot_dimension_numbers<[2], [2], [1], [1], [0, 0, 0, 1, 1, 1], [0], [0]>} : vector<8x8x8xbf16>, vector<8x8x8xbf16>, vector<8x8x8xf32> -> vector<8x8x8xf32>
    "tpu.trace_stop"() : () -> ()
    %cst_126 = arith.constant dense<0.000000e+00> : vector<8x8xf32>
    %367 = vector.multi_reduction <add>, %366, %cst_126 [0] : vector<8x8x8xf32> to vector<8x8xf32>
    %cst_127 = arith.constant dense<0xFF800000> : vector<8xf32>
    %368 = vector.multi_reduction <maximumf>, %367, %cst_127 [1] : vector<8x8xf32> to vector<8xf32>
    %369 = vector.shape_cast %368 : vector<8xf32> to vector<8x1xf32>
    %370 = vector.broadcast %369 : vector<8x1xf32> to vector<8x8xf32>
    %371 = arith.subf %367, %370 : vector<8x8xf32>
    %372 = math.exp %371 : vector<8x8xf32>
    %cst_128 = arith.constant dense<0.000000e+00> : vector<8xf32>
    %373 = vector.multi_reduction <add>, %372, %cst_128 [1] : vector<8x8xf32> to vector<8xf32>
    %374 = vector.shape_cast %373 : vector<8xf32> to vector<8x1xf32>
    %375 = tpu.reciprocal %374 {approx = true} : vector<8x1xf32> -> vector<8x1xf32>
    %376 = vector.broadcast %375 : vector<8x1xf32> to vector<8x8xf32>
    %377 = arith.mulf %372, %376 : vector<8x8xf32>
    %c16_129 = arith.constant 16 : index
    %c0_130 = arith.constant 0 : index
    %378 = vector.load %arg27[%c16_129, %c0_130] : memref<32x8xf32, #tpu.memory_space<vmem>>, vector<8x8xf32>
    tpu.vector_store %arg27[%c16_129, %c0_130], %377 {strides = array<i32>} : memref<32x8xf32, #tpu.memory_space<vmem>>, vector<8x8xf32>,
    %379 = vector.shape_cast %377 : vector<8x8xf32> to vector<1x8x8xf32>
    %380 = vector.shape_cast %379 : vector<1x8x8xf32> to vector<1x8x8xf32>
    %381 = vector.broadcast %380 : vector<1x8x8xf32> to vector<8x8x8xf32>
    %382 = arith.truncf %381 : vector<8x8x8xf32> to vector<8x8x8xbf16>
    %383 = arith.truncf %363 : vector<8x8x8xf32> to vector<8x8x8xbf16>
    "tpu.trace_start"() <{level = 10 : i32, message = "cij,cjd->cid"}> : () -> ()
    %cst_131 = arith.constant dense<0.000000e+00> : vector<8x8x8xf32>
    %384 = tpu.matmul %382, %383, %cst_131 {dimension_numbers = #tpu.dot_dimension_numbers<[2], [1], [1], [2], [0, 0, 0, 1, 1, 2], [0], [0]>} : vector<8x8x8xbf16>, vector<8x8x8xbf16>, vector<8x8x8xf32> -> vector<8x8x8xf32>
    "tpu.trace_stop"() : () -> ()
    %385 = vector.shape_cast %384 : vector<8x8x8xf32> to vector<64x8xf32>
    %386 = arith.truncf %385 : vector<64x8xf32> to vector<64x8xbf16>
    %c2_132 = arith.constant 2 : index
    %c0_133 = arith.constant 0 : index
    %c0_134 = arith.constant 0 : index
    %387 = vector.load %arg17[%c2_132, %c0_133, %c0_134] : memref<4x8x32xbf16, #tpu.memory_space<vmem>>, vector<1x8x32xbf16>
    %388 = vector.shape_cast %387 : vector<1x8x32xbf16> to vector<8x32xbf16>
    %cst_135 = arith.constant dense<0.000000e+00> : vector<64x32xf32>
    %389 = tpu.matmul %386, %388, %cst_135 {dimension_numbers = #tpu.dot_dimension_numbers<[1], [0], [0], [1], [0, 0, 1, 1], [], []>} : vector<64x8xbf16>, vector<8x32xbf16>, vector<64x32xf32> -> vector<64x32xf32>
    %390 = arith.addf %357, %389 : vector<64x32xf32>
    %391 = vector.extract_strided_slice %288 {offsets = [0, 24], sizes = [64, 8], strides = [1, 1]} : vector<64x32xf32> to vector<64x8xf32>
    %392 = vector.shape_cast %391 : vector<64x8xf32> to vector<8x8x8xf32>
    %393 = vector.extract_strided_slice %289 {offsets = [0, 24], sizes = [64, 8], strides = [1, 1]} : vector<64x32xf32> to vector<64x8xf32>
    %394 = vector.shape_cast %393 : vector<64x8xf32> to vector<8x8x8xf32>
    %395 = vector.extract_strided_slice %290 {offsets = [0, 24], sizes = [64, 8], strides = [1, 1]} : vector<64x32xf32> to vector<64x8xf32>
    %396 = vector.shape_cast %395 : vector<64x8xf32> to vector<8x8x8xf32>
    %397 = arith.truncf %392 : vector<8x8x8xf32> to vector<8x8x8xbf16>
    %398 = arith.truncf %394 : vector<8x8x8xf32> to vector<8x8x8xbf16>
    "tpu.trace_start"() <{level = 10 : i32, message = "cid,cjd->cij"}> : () -> ()
    %cst_136 = arith.constant dense<0.000000e+00> : vector<8x8x8xf32>
    %399 = tpu.matmul %397, %398, %cst_136 {dimension_numbers = #tpu.dot_dimension_numbers<[2], [2], [1], [1], [0, 0, 0, 1, 1, 1], [0], [0]>} : vector<8x8x8xbf16>, vector<8x8x8xbf16>, vector<8x8x8xf32> -> vector<8x8x8xf32>
    "tpu.trace_stop"() : () -> ()
    %cst_137 = arith.constant dense<0.000000e+00> : vector<8x8xf32>
    %400 = vector.multi_reduction <add>, %399, %cst_137 [0] : vector<8x8x8xf32> to vector<8x8xf32>
    %cst_138 = arith.constant dense<0xFF800000> : vector<8xf32>
    %401 = vector.multi_reduction <maximumf>, %400, %cst_138 [1] : vector<8x8xf32> to vector<8xf32>
    %402 = vector.shape_cast %401 : vector<8xf32> to vector<8x1xf32>
    %403 = vector.broadcast %402 : vector<8x1xf32> to vector<8x8xf32>
    %404 = arith.subf %400, %403 : vector<8x8xf32>
    %405 = math.exp %404 : vector<8x8xf32>
    %cst_139 = arith.constant dense<0.000000e+00> : vector<8xf32>
    %406 = vector.multi_reduction <add>, %405, %cst_139 [1] : vector<8x8xf32> to vector<8xf32>
    %407 = vector.shape_cast %406 : vector<8xf32> to vector<8x1xf32>
    %408 = tpu.reciprocal %407 {approx = true} : vector<8x1xf32> -> vector<8x1xf32>
    %409 = vector.broadcast %408 : vector<8x1xf32> to vector<8x8xf32>
    %410 = arith.mulf %405, %409 : vector<8x8xf32>
    %c24_140 = arith.constant 24 : index
    %c0_141 = arith.constant 0 : index
    %411 = vector.load %arg27[%c24_140, %c0_141] : memref<32x8xf32, #tpu.memory_space<vmem>>, vector<8x8xf32>
    tpu.vector_store %arg27[%c24_140, %c0_141], %410 {strides = array<i32>} : memref<32x8xf32, #tpu.memory_space<vmem>>, vector<8x8xf32>,
    %412 = vector.shape_cast %410 : vector<8x8xf32> to vector<1x8x8xf32>
    %413 = vector.shape_cast %412 : vector<1x8x8xf32> to vector<1x8x8xf32>
    %414 = vector.broadcast %413 : vector<1x8x8xf32> to vector<8x8x8xf32>
    %415 = arith.truncf %414 : vector<8x8x8xf32> to vector<8x8x8xbf16>
    %416 = arith.truncf %396 : vector<8x8x8xf32> to vector<8x8x8xbf16>
    "tpu.trace_start"() <{level = 10 : i32, message = "cij,cjd->cid"}> : () -> ()
    %cst_142 = arith.constant dense<0.000000e+00> : vector<8x8x8xf32>
    %417 = tpu.matmul %415, %416, %cst_142 {dimension_numbers = #tpu.dot_dimension_numbers<[2], [1], [1], [2], [0, 0, 0, 1, 1, 2], [0], [0]>} : vector<8x8x8xbf16>, vector<8x8x8xbf16>, vector<8x8x8xf32> -> vector<8x8x8xf32>
    "tpu.trace_stop"() : () -> ()
    %418 = vector.shape_cast %417 : vector<8x8x8xf32> to vector<64x8xf32>
    %419 = arith.truncf %418 : vector<64x8xf32> to vector<64x8xbf16>
    %c3_143 = arith.constant 3 : index
    %c0_144 = arith.constant 0 : index
    %c0_145 = arith.constant 0 : index
    %420 = vector.load %arg17[%c3_143, %c0_144, %c0_145] : memref<4x8x32xbf16, #tpu.memory_space<vmem>>, vector<1x8x32xbf16>
    %421 = vector.shape_cast %420 : vector<1x8x32xbf16> to vector<8x32xbf16>
    %cst_146 = arith.constant dense<0.000000e+00> : vector<64x32xf32>
    %422 = tpu.matmul %419, %421, %cst_146 {dimension_numbers = #tpu.dot_dimension_numbers<[1], [0], [0], [1], [0, 0, 1, 1], [], []>} : vector<64x8xbf16>, vector<8x32xbf16>, vector<64x32xf32> -> vector<64x32xf32>
    %423 = arith.addf %390, %422 : vector<64x32xf32>
    %424 = arith.addf %257, %423 : vector<64x32xf32>
    %c0_147 = arith.constant 0 : index
    %c0_148 = arith.constant 0 : index
    %425 = vector.load %arg18[%c0_147, %c0_148] : memref<1x32xf32, #tpu.memory_space<vmem>>, vector<1x32xf32>
    %426 = vector.broadcast %425 : vector<1x32xf32> to vector<64x32xf32>
    %427 = arith.addf %424, %426 : vector<64x32xf32>
    %c0_149 = arith.constant 0 : index
    %c0_150 = arith.constant 0 : index
    %428 = vector.load %arg19[%c0_149, %c0_150] : memref<1x32xf32, #tpu.memory_space<vmem>>, vector<1x32xf32>
    %c0_151 = arith.constant 0 : index
    %c0_152 = arith.constant 0 : index
    %429 = vector.load %arg20[%c0_151, %c0_152] : memref<1x32xf32, #tpu.memory_space<vmem>>, vector<1x32xf32>
    %cst_153 = arith.constant dense<0.000000e+00> : vector<64xf32>
    %430 = vector.multi_reduction <add>, %427, %cst_153 [1] : vector<64x32xf32> to vector<64xf32>
    %431 = vector.shape_cast %430 : vector<64xf32> to vector<64x1xf32>
    %cst_154 = arith.constant 3.200000e+01 : f32
    %432 = vector.broadcast %cst_154 : f32 to vector<64x1xf32>
    %433 = arith.divf %431, %432 : vector<64x1xf32>
    %434 = vector.broadcast %433 : vector<64x1xf32> to vector<64x32xf32>
    %435 = arith.subf %427, %434 : vector<64x32xf32>
    %436 = arith.mulf %435, %435 : vector<64x32xf32>
    %cst_155 = arith.constant dense<0.000000e+00> : vector<64xf32>
    %437 = vector.multi_reduction <add>, %436, %cst_155 [1] : vector<64x32xf32> to vector<64xf32>
    %438 = vector.shape_cast %437 : vector<64xf32> to vector<64x1xf32>
    %cst_156 = arith.constant 3.200000e+01 : f32
    %439 = vector.broadcast %cst_156 : f32 to vector<64x1xf32>
    %440 = arith.divf %438, %439 : vector<64x1xf32>
    %cst_157 = arith.constant 9.99999974E-6 : f32
    %441 = vector.broadcast %cst_157 : f32 to vector<64x1xf32>
    %442 = arith.addf %440, %441 : vector<64x1xf32>
    %443 = math.rsqrt %442 : vector<64x1xf32>
    %444 = vector.broadcast %443 : vector<64x1xf32> to vector<64x32xf32>
    %445 = arith.mulf %435, %444 : vector<64x32xf32>
    %446 = vector.broadcast %428 : vector<1x32xf32> to vector<64x32xf32>
    %447 = arith.mulf %445, %446 : vector<64x32xf32>
    %448 = vector.broadcast %429 : vector<1x32xf32> to vector<64x32xf32>
    %449 = arith.addf %447, %448 : vector<64x32xf32>
    %450 = arith.truncf %449 : vector<64x32xf32> to vector<64x32xbf16>
    %c0_158 = arith.constant 0 : index
    %c0_159 = arith.constant 0 : index
    %451 = vector.load %arg21[%c0_158, %c0_159] : memref<32x32xbf16, #tpu.memory_space<vmem>>, vector<32x32xbf16>
    %cst_160 = arith.constant dense<0.000000e+00> : vector<64x32xf32>
    %452 = tpu.matmul %450, %451, %cst_160 {dimension_numbers = #tpu.dot_dimension_numbers<[1], [0], [0], [1], [0, 0, 1, 1], [], []>} : vector<64x32xbf16>, vector<32x32xbf16>, vector<64x32xf32> -> vector<64x32xf32>
    %c0_161 = arith.constant 0 : index
    %c0_162 = arith.constant 0 : index
    %453 = vector.load %arg22[%c0_161, %c0_162] : memref<1x32xf32, #tpu.memory_space<vmem>>, vector<1x32xf32>
    %454 = vector.broadcast %453 : vector<1x32xf32> to vector<64x32xf32>
    %455 = arith.addf %452, %454 : vector<64x32xf32>
    %cst_163 = arith.constant 5.000000e-01 : f32
    %456 = vector.broadcast %cst_163 : f32 to vector<64x32xf32>
    %457 = arith.mulf %456, %455 : vector<64x32xf32>
    %cst_164 = arith.constant 4.471500e-02 : f32
    %458 = vector.broadcast %cst_164 : f32 to vector<64x32xf32>
    %459 = arith.mulf %458, %455 : vector<64x32xf32>
    %460 = arith.mulf %459, %455 : vector<64x32xf32>
    %461 = arith.mulf %460, %455 : vector<64x32xf32>
    %462 = arith.addf %455, %461 : vector<64x32xf32>
    %cst_165 = arith.constant 0.797884583 : f32
    %463 = vector.broadcast %cst_165 : f32 to vector<64x32xf32>
    %464 = arith.mulf %463, %462 : vector<64x32xf32>
    %465 = math.tanh %464 : vector<64x32xf32>
    %cst_166 = arith.constant 1.000000e+00 : f32
    %466 = vector.broadcast %cst_166 : f32 to vector<64x32xf32>
    %467 = arith.addf %466, %465 : vector<64x32xf32>
    %468 = arith.mulf %457, %467 : vector<64x32xf32>
    %469 = arith.truncf %468 : vector<64x32xf32> to vector<64x32xbf16>
    %c0_167 = arith.constant 0 : index
    %c0_168 = arith.constant 0 : index
    %470 = vector.load %arg23[%c0_167, %c0_168] : memref<32x32xbf16, #tpu.memory_space<vmem>>, vector<32x32xbf16>
    %cst_169 = arith.constant dense<0.000000e+00> : vector<64x32xf32>
    %471 = tpu.matmul %469, %470, %cst_169 {dimension_numbers = #tpu.dot_dimension_numbers<[1], [0], [0], [1], [0, 0, 1, 1], [], []>} : vector<64x32xbf16>, vector<32x32xbf16>, vector<64x32xf32> -> vector<64x32xf32>
    %c0_170 = arith.constant 0 : index
    %c0_171 = arith.constant 0 : index
    %472 = vector.load %arg24[%c0_170, %c0_171] : memref<1x32xf32, #tpu.memory_space<vmem>>, vector<1x32xf32>
    %473 = vector.broadcast %472 : vector<1x32xf32> to vector<64x32xf32>
    %474 = arith.addf %471, %473 : vector<64x32xf32>
    %475 = arith.addf %427, %474 : vector<64x32xf32>
    %c0_172 = arith.constant 0 : index
    %c0_173 = arith.constant 0 : index
    %476 = vector.load %arg25[%c0_172, %c0_173] : memref<64x32xf32, #tpu.memory_space<vmem>>, vector<64x32xf32>
    tpu.vector_store %arg25[%c0_172, %c0_173], %475 {strides = array<i32>} : memref<64x32xf32, #tpu.memory_space<vmem>>, vector<64x32xf32>,
    return
  }
}

</mosaic_0001>

<llo_original>
// kernel: grn_transformer_forward.1
$region0: #{grn_transformer_forward.1}
  #allocation0 [shape = 'u32[]', space=smem, size = 0x4, offset = 0x4, fixed_abs, tag = 'smem constant byte address 0x4 - core index']
  #allocation1 [shape = 'u32[144,128]{1,0:T(1,128)}', space=vmem, size = 0x12000, scoped, tag = 'internal scratch']
  %s0 = inlined_call_operand.vmem [shape: f32[64,32], index: 0, kind: input, shape index: {}]
  %s1 = inlined_call_operand.vmem [shape: f32[8,8,4], index: 1, kind: input, shape index: {}]
  %s2 = inlined_call_operand.vmem [shape: f32[64,64], index: 2, kind: input, shape index: {}]
  %s3 = inlined_call_operand.vmem [shape: f32[1,32], index: 3, kind: input, shape index: {}]
  %s4 = inlined_call_operand.vmem [shape: f32[1,32], index: 4, kind: input, shape index: {}]
  %s5 = inlined_call_operand.vmem [shape: bf16[32,96], index: 5, kind: input, shape index: {}]
  %s6 = inlined_call_operand.vmem [shape: f32[1,96], index: 6, kind: input, shape index: {}]
  %s7 = inlined_call_operand.vmem [shape: bf16[4,8,32], index: 7, kind: input, shape index: {}]
  %s8 = inlined_call_operand.vmem [shape: f32[1,32], index: 8, kind: input, shape index: {}]
  %s9 = inlined_call_operand.vmem [shape: f32[8,8], index: 9, kind: input, shape index: {}]
  %s10 = inlined_call_operand.vmem [shape: f32[1,8], index: 10, kind: input, shape index: {}]
  %s11 = inlined_call_operand.vmem [shape: f32[1,8], index: 11, kind: input, shape index: {}]
  %s12 = inlined_call_operand.vmem [shape: f32[4], index: 12, kind: input, shape index: {}]
  %s13 = inlined_call_operand.vmem [shape: f32[1,32], index: 13, kind: input, shape index: {}]
  %s14 = inlined_call_operand.vmem [shape: f32[1,32], index: 14, kind: input, shape index: {}]
  %s15 = inlined_call_operand.vmem [shape: bf16[32,96], index: 15, kind: input, shape index: {}]
  %s16 = inlined_call_operand.vmem [shape: f32[1,96], index: 16, kind: input, shape index: {}]
  %s17 = inlined_call_operand.vmem [shape: bf16[4,8,32], index: 17, kind: input, shape index: {}]
  %s18 = inlined_call_operand.vmem [shape: f32[1,32], index: 18, kind: input, shape index: {}]
  %s19 = inlined_call_operand.vmem [shape: f32[1,32], index: 19, kind: input, shape index: {}]
  %s20 = inlined_call_operand.vmem [shape: f32[1,32], index: 20, kind: input, shape index: {}]
  %s21 = inlined_call_operand.vmem [shape: bf16[32,32], index: 21, kind: input, shape index: {}]
  %s22 = inlined_call_operand.vmem [shape: f32[1,32], index: 22, kind: input, shape index: {}]
  %s23 = inlined_call_operand.vmem [shape: bf16[32,32], index: 23, kind: input, shape index: {}]
  %s24 = inlined_call_operand.vmem [shape: f32[1,32], index: 24, kind: input, shape index: {}]
  %s25 = inlined_call_operand.vmem [shape: f32[64,32], index: 25, kind: output, shape index: {0}]
  %s26 = inlined_call_operand.hbm [shape: f32[32,8], index: 26, kind: output, shape index: {1}]
  %s27 = inlined_call_operand.hbm [shape: f32[32,8], index: 27, kind: output, shape index: {2}]
  %28 = xla_tuple %s25, %s26, %s27
  %s29 = sld [smem:[#allocation0]]
  $region130: #{grn_transformer_forward.1} parent=0
    _
  %s31 = ssub.s32 1, %s29
  %s32 = scalar_select 0, %s31, %s29
  $region1: #{grn_transformer_forward.1} parent=0
    #allocation2 [shape = 'u8[512]{0}', space=smem, size = 0x200, scoped, tag = 'input window, operand 12, single buffered']
    #allocation3 [shape = 's32[1]{0}', space=sflag, size = 0x4, scoped, tag = 'scoped memory for grn_transformer_forward.1']
    #allocation4 [shape = 's32[1]{0}', space=sflag, size = 0x4, scoped, tag = 'scoped memory for grn_transformer_forward.1']
    #allocation5 [shape = 'u8[16384]{0}', space=vmem, size = 0x4000, scoped, tag = 'output window, operand 1, single buffered']
    #allocation6 [shape = 'u8[16384]{0}', space=vmem, size = 0x4000, scoped, tag = 'output window, operand 2, single buffered']
    #allocation7 [shape = 's32[1]{0}', space=sflag, size = 0x4, scoped, tag = 'scoped memory for grn_transformer_forward.1']
    %33 = vsyncpa [#allocation4], 0
    %34 = vsyncpa [#allocation3], 0
    %35 = vsyncpa [#allocation7], 0
    // Predicated region
    $region2: #{grn_transformer_forward.1} parent=1 // pred_check
      _
    $region3: #{grn_transformer_forward.1} parent=1 // pred_check_branch
      %37 = sbr.rel (0) target = $region5
    $region4: #{grn_transformer_forward.1} parent=1 // pred_region
      _
    $region5: #{grn_transformer_forward.1} parent=1 // pred_fallthru
      _
    // Predicated region
    $region6: #{grn_transformer_forward.1} parent=1 // pred_check
      _
    $region7: #{grn_transformer_forward.1} parent=1 // pred_check_branch
      %39 = sbr.rel (0) target = $region9
    $region8: #{grn_transformer_forward.1} parent=1 // pred_region
      _
    $region9: #{grn_transformer_forward.1} parent=1 // pred_fallthru
      _
    // Predicated region
    $region10: #{grn_transformer_forward.1} parent=1 // pred_check
      _
    $region11: #{grn_transformer_forward.1} parent=1 // pred_check_branch
      %41 = sbr.rel (0) target = $region13
    $region12: #{grn_transformer_forward.1} parent=1 // pred_region
      _
    $region13: #{grn_transformer_forward.1} parent=1 // pred_fallthru
      _
    // Predicated region
    $region14: #{grn_transformer_forward.1} parent=1 // pred_check
      _
    $region15: #{grn_transformer_forward.1} parent=1 // pred_check_branch
      %43 = sbr.rel (0) target = $region17
    $region16: #{grn_transformer_forward.1} parent=1 // pred_region
      _
    $region17: #{grn_transformer_forward.1} parent=1 // pred_fallthru
      _
    // Predicated region
    $region18: #{grn_transformer_forward.1} parent=1 // pred_check
      _
    $region19: #{grn_transformer_forward.1} parent=1 // pred_check_branch
      %45 = sbr.rel (0) target = $region21
    $region20: #{grn_transformer_forward.1} parent=1 // pred_region
      _
    $region21: #{grn_transformer_forward.1} parent=1 // pred_fallthru
      _
    // Predicated region
    $region22: #{grn_transformer_forward.1} parent=1 // pred_check
      _
    $region23: #{grn_transformer_forward.1} parent=1 // pred_check_branch
      %47 = sbr.rel (0) target = $region25
    $region24: #{grn_transformer_forward.1} parent=1 // pred_region
      _
    $region25: #{grn_transformer_forward.1} parent=1 // pred_fallthru
      _
    // Predicated region
    $region26: #{grn_transformer_forward.1} parent=1 // pred_check
      _
    $region27: #{grn_transformer_forward.1} parent=1 // pred_check_branch
      %49 = sbr.rel (0) target = $region29
    $region28: #{grn_transformer_forward.1} parent=1 // pred_region
      _
    $region29: #{grn_transformer_forward.1} parent=1 // pred_fallthru
      _
    // Predicated region
    $region30: #{grn_transformer_forward.1} parent=1 // pred_check
      _
    $region31: #{grn_transformer_forward.1} parent=1 // pred_check_branch
      %51 = sbr.rel (0) target = $region33
    $region32: #{grn_transformer_forward.1} parent=1 // pred_region
      _
    $region33: #{grn_transformer_forward.1} parent=1 // pred_fallthru
      _
    // Predicated region
    $region34: #{grn_transformer_forward.1} parent=1 // pred_check
      _
    $region35: #{grn_transformer_forward.1} parent=1 // pred_check_branch
      %53 = sbr.rel (0) target = $region37
    $region36: #{grn_transformer_forward.1} parent=1 // pred_region
      _
    $region37: #{grn_transformer_forward.1} parent=1 // pred_fallthru
      _
    // Predicated region
    $region38: #{grn_transformer_forward.1} parent=1 // pred_check
      _
    $region39: #{grn_transformer_forward.1} parent=1 // pred_check_branch
      %55 = sbr.rel (0) target = $region41
    $region40: #{grn_transformer_forward.1} parent=1 // pred_region
      _
    $region41: #{grn_transformer_forward.1} parent=1 // pred_fallthru
      _
    // Predicated region
    $region42: #{grn_transformer_forward.1} parent=1 // pred_check
      _
    $region43: #{grn_transformer_forward.1} parent=1 // pred_check_branch
      %57 = sbr.rel (0) target = $region45
    $region44: #{grn_transformer_forward.1} parent=1 // pred_region
      _
    $region45: #{grn_transformer_forward.1} parent=1 // pred_fallthru
      _
    // Predicated region
    $region46: #{grn_transformer_forward.1} parent=1 // pred_check
      _
    $region47: #{grn_transformer_forward.1} parent=1 // pred_check_branch
      %59 = sbr.rel (0) target = $region49
    $region48: #{grn_transformer_forward.1} parent=1 // pred_region
      _
    $region49: #{grn_transformer_forward.1} parent=1 // pred_fallthru
      _
    // Predicated region
    $region50: #{grn_transformer_forward.1} parent=1 // pred_check
      _
    $region51: #{grn_transformer_forward.1} parent=1 // pred_check_branch
      %61 = sbr.rel (0) target = $region53
    $region52: #{grn_transformer_forward.1} parent=1 // pred_region
      %s63 = ssub.s32 16, 16
      %64 = vsyncadd [#allocation4], %s63
      %s66 = sshll.u32 %s12, 4
      %s67 = int_to_ptr.vmem [resolvable:$true] %s66
      %69 = dma.vmem_to_smem %s67, 16, [#allocation2], [#allocation4]
    $region53: #{grn_transformer_forward.1} parent=1 // pred_fallthru
      _
    // Predicated region
    $region54: #{grn_transformer_forward.1} parent=1 // pred_check
      _
    $region55: #{grn_transformer_forward.1} parent=1 // pred_check_branch
      %71 = sbr.rel (0) target = $region57
    $region56: #{grn_transformer_forward.1} parent=1 // pred_region
      _
    $region57: #{grn_transformer_forward.1} parent=1 // pred_fallthru
      _
    // Predicated region
    $region58: #{grn_transformer_forward.1} parent=1 // pred_check
      _
    $region59: #{grn_transformer_forward.1} parent=1 // pred_check_branch
      %73 = sbr.rel (0) target = $region61
    $region60: #{grn_transformer_forward.1} parent=1 // pred_region
      _
    $region61: #{grn_transformer_forward.1} parent=1 // pred_fallthru
      _
    // Predicated region
    $region62: #{grn_transformer_forward.1} parent=1 // pred_check
      _
    $region63: #{grn_transformer_forward.1} parent=1 // pred_check_branch
      %75 = sbr.rel (0) target = $region65
    $region64: #{grn_transformer_forward.1} parent=1 // pred_region
      _
    $region65: #{grn_transformer_forward.1} parent=1 // pred_fallthru
      _
    // Predicated region
    $region66: #{grn_transformer_forward.1} parent=1 // pred_check
      _
    $region67: #{grn_transformer_forward.1} parent=1 // pred_check_branch
      %77 = sbr.rel (0) target = $region69
    $region68: #{grn_transformer_forward.1} parent=1 // pred_region
      _
    $region69: #{grn_transformer_forward.1} parent=1 // pred_fallthru
      _
    // Predicated region
    $region70: #{grn_transformer_forward.1} parent=1 // pred_check
      _
    $region71: #{grn_transformer_forward.1} parent=1 // pred_check_branch
      %79 = sbr.rel (0) target = $region73
    $region72: #{grn_transformer_forward.1} parent=1 // pred_region
      _
    $region73: #{grn_transformer_forward.1} parent=1 // pred_fallthru
      _
    // Predicated region
    $region74: #{grn_transformer_forward.1} parent=1 // pred_check
      _
    $region75: #{grn_transformer_forward.1} parent=1 // pred_check_branch
      %81 = sbr.rel (0) target = $region77
    $region76: #{grn_transformer_forward.1} parent=1 // pred_region
      _
    $region77: #{grn_transformer_forward.1} parent=1 // pred_fallthru
      _
    // Predicated region
    $region78: #{grn_transformer_forward.1} parent=1 // pred_check
      _
    $region79: #{grn_transformer_forward.1} parent=1 // pred_check_branch
      %83 = sbr.rel (0) target = $region81
    $region80: #{grn_transformer_forward.1} parent=1 // pred_region
      _
    $region81: #{grn_transformer_forward.1} parent=1 // pred_fallthru
      _
    // Predicated region
    $region82: #{grn_transformer_forward.1} parent=1 // pred_check
      _
    $region83: #{grn_transformer_forward.1} parent=1 // pred_check_branch
      %85 = sbr.rel (0) target = $region85
    $region84: #{grn_transformer_forward.1} parent=1 // pred_region
      _
    $region85: #{grn_transformer_forward.1} parent=1 // pred_fallthru
      _
    // Predicated region
    $region86: #{grn_transformer_forward.1} parent=1 // pred_check
      _
    $region87: #{grn_transformer_forward.1} parent=1 // pred_check_branch
      %87 = sbr.rel (0) target = $region89
    $region88: #{grn_transformer_forward.1} parent=1 // pred_region
      _
    $region89: #{grn_transformer_forward.1} parent=1 // pred_fallthru
      _
    // Predicated region
    $region90: #{grn_transformer_forward.1} parent=1 // pred_check
      _
    $region91: #{grn_transformer_forward.1} parent=1 // pred_check_branch
      %89 = sbr.rel (0) target = $region93
    $region92: #{grn_transformer_forward.1} parent=1 // pred_region
      _
    $region93: #{grn_transformer_forward.1} parent=1 // pred_fallthru
      _
    // Predicated region
    $region94: #{grn_transformer_forward.1} parent=1 // pred_check
      _
    $region95: #{grn_transformer_forward.1} parent=1 // pred_check_branch
      %91 = sbr.rel (0) target = $region97
    $region96: #{grn_transformer_forward.1} parent=1 // pred_region
      _
    $region97: #{grn_transformer_forward.1} parent=1 // pred_fallthru
      _
    // Predicated region
    $region98: #{grn_transformer_forward.1} parent=1 // pred_check
      _
    $region99: #{grn_transformer_forward.1} parent=1 // pred_check_branch
      %93 = sbr.rel (0) target = $region101
    $region100: #{grn_transformer_forward.1} parent=1 // pred_region
      _
    $region101: #{grn_transformer_forward.1} parent=1 // pred_fallthru
      _
    // Predicated region
    $region102: #{grn_transformer_forward.1} parent=1 // pred_check
      _
    $region103: #{grn_transformer_forward.1} parent=1 // pred_check_branch
      %95 = sbr.rel (0) target = $region105
    $region104: #{grn_transformer_forward.1} parent=1 // pred_region
      %96 = dma.done [#allocation4], 16
    $region105: #{grn_transformer_forward.1} parent=1 // pred_fallthru
      _
    %97 = sfence
    %v99 = vld [vmem:[%s0] sm:$0xff]
    %v100 = vld [vmem:[%s0 + $0x8] sm:$0xff]
    %v101 = vld [vmem:[%s0 + $0x10] sm:$0xff]
    %v102 = vld [vmem:[%s0 + $0x18] sm:$0xff]
    %v103 = vld [vmem:[%s0 + $0x20] sm:$0xff]
    %v104 = vld [vmem:[%s0 + $0x28] sm:$0xff]
    %v105 = vld [vmem:[%s0 + $0x30] sm:$0xff]
    %v106 = vld [vmem:[%s0 + $0x38] sm:$0xff]
    %v107 = vld [vmem:[%s3] sm:$0x1]
    %v108 = vld [vmem:[%s4] sm:$0x1]
    %vm109 = vcmask 261120
    %v110 = vsel %vm109, %v99, 0.0
    %111 = vadd.xlane.f32.xlu0 %v110
    %v112 = vpop.xlane.xlu0 %111
    %v113 = vsel %vm109, %v100, 0.0
    %114 = vadd.xlane.f32.xlu0 %v113
    %v115 = vpop.xlane.xlu0 %114
    %v116 = vsel %vm109, %v101, 0.0
    %117 = vadd.xlane.f32.xlu0 %v116
    %v118 = vpop.xlane.xlu0 %117
    %v119 = vsel %vm109, %v102, 0.0
    %120 = vadd.xlane.f32.xlu0 %v119
    %v121 = vpop.xlane.xlu0 %120
    %v122 = vsel %vm109, %v103, 0.0
    %123 = vadd.xlane.f32.xlu0 %v122
    %v124 = vpop.xlane.xlu0 %123
    %v125 = vsel %vm109, %v104, 0.0
    %126 = vadd.xlane.f32.xlu0 %v125
    %v127 = vpop.xlane.xlu0 %126
    %v128 = vsel %vm109, %v105, 0.0
    %129 = vadd.xlane.f32.xlu0 %v128
    %v130 = vpop.xlane.xlu0 %129
    %v131 = vsel %vm109, %v106, 0.0
    %132 = vadd.xlane.f32.xlu0 %v131
    %v133 = vpop.xlane.xlu0 %132
    %v134 = vrcp.pop 32.0
    %v135 = vmul.f32 %v112, %v134
    %v136 = vmul.f32 %v115, %v134
    %v137 = vmul.f32 %v118, %v134
    %v138 = vmul.f32 %v121, %v134
    %v139 = vmul.f32 %v124, %v134
    %v140 = vmul.f32 %v127, %v134
    %v141 = vmul.f32 %v130, %v134
    %v142 = vmul.f32 %v133, %v134
    %v143 = vsub.f32 %v99, %v135
    %v144 = vsub.f32 %v100, %v136
    %v145 = vsub.f32 %v101, %v137
    %v146 = vsub.f32 %v102, %v138
    %v147 = vsub.f32 %v103, %v139
    %v148 = vsub.f32 %v104, %v140
    %v149 = vsub.f32 %v105, %v141
    %v150 = vsub.f32 %v106, %v142
    %v151 = vmul.f32 %v143, %v143
    %v152 = vmul.f32 %v144, %v144
    %v153 = vmul.f32 %v145, %v145
    %v154 = vmul.f32 %v146, %v146
    %v155 = vmul.f32 %v147, %v147
    %v156 = vmul.f32 %v148, %v148
    %v157 = vmul.f32 %v149, %v149
    %v158 = vmul.f32 %v150, %v150
    %v159 = vsel %vm109, %v151, 0.0
    %160 = vadd.xlane.f32.xlu0 %v159
    %v161 = vpop.xlane.xlu0 %160
    %v162 = vsel %vm109, %v152, 0.0
    %163 = vadd.xlane.f32.xlu0 %v162
    %v164 = vpop.xlane.xlu0 %163
    %v165 = vsel %vm109, %v153, 0.0
    %166 = vadd.xlane.f32.xlu0 %v165
    %v167 = vpop.xlane.xlu0 %166
    %v168 = vsel %vm109, %v154, 0.0
    %169 = vadd.xlane.f32.xlu0 %v168
    %v170 = vpop.xlane.xlu0 %169
    %v171 = vsel %vm109, %v155, 0.0
    %172 = vadd.xlane.f32.xlu0 %v171
    %v173 = vpop.xlane.xlu0 %172
    %v174 = vsel %vm109, %v156, 0.0
    %175 = vadd.xlane.f32.xlu0 %v174
    %v176 = vpop.xlane.xlu0 %175
    %v177 = vsel %vm109, %v157, 0.0
    %178 = vadd.xlane.f32.xlu0 %v177
    %v179 = vpop.xlane.xlu0 %178
    %v180 = vsel %vm109, %v158, 0.0
    %181 = vadd.xlane.f32.xlu0 %v180
    %v182 = vpop.xlane.xlu0 %181
    %v183 = vmul.f32 %v161, %v134
    %v184 = vmul.f32 %v164, %v134
    %v185 = vmul.f32 %v167, %v134
    %v186 = vmul.f32 %v170, %v134
    %v187 = vmul.f32 %v173, %v134
    %v188 = vmul.f32 %v176, %v134
    %v189 = vmul.f32 %v179, %v134
    %v190 = vmul.f32 %v182, %v134
    %v191 = vadd.f32 %v183, 1e-05
    %v192 = vadd.f32 %v184, 1e-05
    %v193 = vadd.f32 %v185, 1e-05
    %v194 = vadd.f32 %v186, 1e-05
    %v195 = vadd.f32 %v187, 1e-05
    %v196 = vadd.f32 %v188, 1e-05
    %v197 = vadd.f32 %v189, 1e-05
    %v198 = vadd.f32 %v190, 1e-05
    %v199 = vrsqrt.pop %v191
    %v200 = vrsqrt.pop %v192
    %v201 = vrsqrt.pop %v193
    %v202 = vrsqrt.pop %v194
    %v203 = vrsqrt.pop %v195
    %v204 = vrsqrt.pop %v196
    %v205 = vrsqrt.pop %v197
    %v206 = vrsqrt.pop %v198
    %v207 = vmul.f32 %v143, %v199
    %v208 = vmul.f32 %v144, %v200
    %v209 = vmul.f32 %v145, %v201
    %v210 = vmul.f32 %v146, %v202
    %v211 = vmul.f32 %v147, %v203
    %v212 = vmul.f32 %v148, %v204
    %v213 = vmul.f32 %v149, %v205
    %v214 = vmul.f32 %v150, %v206
    %v216 = vlaneseq
    %v217 = vshrl.u32 %v216, 7
    %v218 = vsub.s32 0, %v217
    %v219 = vrot.slane %v107, %v218
    %v221 = vmul.f32 %v207, %v219
    %v222 = vmul.f32 %v208, %v219
    %v223 = vmul.f32 %v209, %v219
    %v224 = vmul.f32 %v210, %v219
    %v225 = vmul.f32 %v211, %v219
    %v226 = vmul.f32 %v212, %v219
    %v227 = vmul.f32 %v213, %v219
    %v228 = vmul.f32 %v214, %v219
    %v230 = vlaneseq
    %v231 = vshrl.u32 %v230, 7
    %v232 = vsub.s32 0, %v231
    %v233 = vrot.slane %v108, %v232
    %v235 = vadd.f32 %v221, %v233
    %v236 = vadd.f32 %v222, %v233
    %v237 = vadd.f32 %v223, %v233
    %v238 = vadd.f32 %v224, %v233
    %v239 = vadd.f32 %v225, %v233
    %v240 = vadd.f32 %v226, %v233
    %v241 = vadd.f32 %v227, %v233
    %v242 = vadd.f32 %v228, %v233
    %v243 = vpack.c.bf16 %v236, %v235
    %v244 = vpack.c.bf16 %v238, %v237
    %v245 = vpack.c.bf16 %v240, %v239
    %v246 = vpack.c.bf16 %v242, %v241
    %v247 = vld [vmem:[%s5] sm:$0xf]
    %v248 = vld [vmem:[%s5 + $0x4] sm:$0xf]
    %v249 = vld [vmem:[%s5 + $0x8] sm:$0xf]
    %v250 = vld [vmem:[%s5 + $0xc] sm:$0xf]
    %v251 = vld [vmem:[%s6] sm:$0x1]
    %v253 = vlaneseq
    %v254 = vshrl.u32 %v253, 7
    %v255 = vsub.s32 0, %v254
    %v256 = vrot.slane %v251, %v255
    %v262 = vunpack.c.l.b16 %v247
    %v263 = vunpack.c.l.b16 %v248
    %v264 = vunpack.c.l.b16 %v249
    %v265 = vunpack.c.l.b16 %v250
    %v266 = vpack.c.b16 %v263, %v262
    %v267 = vpack.c.b16 %v265, %v264
    %v271 = vsel %vm109, %v243, 0
    %v274 = vsel %vm109, %v244, 0
    %v277 = vsel %vm109, %v245, 0
    %v280 = vsel %vm109, %v246, 0
    %282 = vmatprep.subr.bf16.mxu0 0
    %283 = vmatpush1.bf16.msra.mxu0 %v266
    %284 = vmatprep.subr.bf16.mxu0 0
    %285 = vmatpush1.bf16.msra.mxu0 %v267
    %286 = vmatprep.subr.bf16.mxu0 0
    %287 = vmatpush1.bf16.msra.mxu0 0
    %288 = vmatprep.subr.bf16.mxu0 0
    %289 = vmatpush1.bf16.msra.mxu0 0
    %290 = vmatprep.subr.bf16.mxu0 0
    %291 = vmatpush1.bf16.msra.mxu0 0
    %292 = vmatprep.subr.bf16.mxu0 0
    %293 = vmatpush1.bf16.msra.mxu0 0
    %294 = vmatprep.subr.bf16.mxu0 0
    %295 = vmatpush1.bf16.msra.mxu0 0
    %296 = vmatprep.subr.bf16.mxu0 0
    %297 = vmatpush1.bf16.msra.mxu0 0
    %298 = vmatprep.subr.bf16.mxu0 0
    %299 = vmatpush1.bf16.msra.mxu0 0
    %300 = vmatprep.subr.bf16.mxu0 0
    %301 = vmatpush1.bf16.msra.mxu0 0
    %302 = vmatprep.subr.bf16.mxu0 0
    %303 = vmatpush1.bf16.msra.mxu0 0
    %304 = vmatprep.subr.bf16.mxu0 0
    %305 = vmatpush1.bf16.msra.mxu0 0
    %306 = vmatprep.subr.bf16.mxu0 0
    %307 = vmatpush1.bf16.msra.mxu0 0
    %308 = vmatprep.subr.bf16.mxu0 0
    %309 = vmatpush1.bf16.msra.mxu0 0
    %310 = vmatprep.subr.bf16.mxu0 0
    %311 = vmatpush1.bf16.msra.mxu0 0
    %312 = vmatprep.subr.bf16.mxu0 0
    %313 = vmatpush1.bf16.msra.mxu0 0
    %314 = vmatprep.mubr.bf16.mxu0 0
    %315 = vmatmul.mubr.bf16.gmra.mrb[0].mxu0 %v271
    %v316 = vpop.f32.mrb[0].mxu0
    %v317 = vadd.f32 %v256, %v316
    %v318 = vpop.f32.mrb[0].mxu0
    %v319 = vpop.f32.mrb[0].mxu0
    %v320 = vadd.f32 %v256, %v319
    %v321 = vpop.f32.mrb[0].mxu0
    %322 = vmatprep.mubr.bf16.mxu0 0
    %323 = vmatmul.mubr.bf16.gmra.mrb[0].mxu0 %v274
    %v324 = vpop.f32.mrb[0].mxu0
    %v325 = vadd.f32 %v256, %v324
    %v326 = vpop.f32.mrb[0].mxu0
    %v327 = vpop.f32.mrb[0].mxu0
    %v328 = vadd.f32 %v256, %v327
    %v329 = vpop.f32.mrb[0].mxu0
    %330 = vmatprep.mubr.bf16.mxu0 0
    %331 = vmatmul.mubr.bf16.gmra.mrb[0].mxu0 %v277
    %v332 = vpop.f32.mrb[0].mxu0
    %v333 = vadd.f32 %v256, %v332
    %v334 = vpop.f32.mrb[0].mxu0
    %v335 = vpop.f32.mrb[0].mxu0
    %v336 = vadd.f32 %v256, %v335
    %v337 = vpop.f32.mrb[0].mxu0
    %338 = vmatprep.mubr.bf16.mxu0 0
    %339 = vmatmul.mubr.bf16.gmra.mrb[0].mxu0 %v280
    %v340 = vpop.f32.mrb[0].mxu0
    %v341 = vadd.f32 %v256, %v340
    %v342 = vpop.f32.mrb[0].mxu0
    %v343 = vpop.f32.mrb[0].mxu0
    %v344 = vadd.f32 %v256, %v343
    %v345 = vpop.f32.mrb[0].mxu0
    %346 = vdwg.mxu0
    %v347 = vmul.f32 %v317, 0.125
    %v348 = vmul.f32 %v320, 0.125
    %v349 = vmul.f32 %v325, 0.125
    %v350 = vmul.f32 %v328, 0.125
    %v351 = vmul.f32 %v333, 0.125
    %v352 = vmul.f32 %v336, 0.125
    %v353 = vmul.f32 %v341, 0.125
    %v354 = vmul.f32 %v344, 0.125
    %v355 = vpack.c.bf16 %v347, %v347
    %v356 = vpack.c.bf16 %v348, %v348
    %v357 = vpack.c.bf16 %v349, %v349
    %v358 = vpack.c.bf16 %v350, %v350
    %v359 = vpack.c.bf16 %v351, %v351
    %v360 = vpack.c.bf16 %v352, %v352
    %v361 = vpack.c.bf16 %v353, %v353
    %v362 = vpack.c.bf16 %v354, %v354
    %v363 = vpack.c.bf16 %v317, %v317
    %v364 = vpack.c.bf16 %v320, %v320
    %v365 = vpack.c.bf16 %v325, %v325
    %v366 = vpack.c.bf16 %v328, %v328
    %v367 = vpack.c.bf16 %v333, %v333
    %v368 = vpack.c.bf16 %v336, %v336
    %v369 = vpack.c.bf16 %v341, %v341
    %v370 = vpack.c.bf16 %v344, %v344
    %372 = vrot.lane.b32.xlu0 %v363, 96
    %v373 = vpop.permute.xlu0 %372
    %vm374 = vcmask 64512
    %v376 = vsel %vm374, %v355, 0
    %v379 = vsel %vm374, %v373, 0
    %381 = vmatprep.subr.bf16.mxu0 0
    %382 = vmatpush1.bf16.xpose.msra.mxu0 %v379
    %383 = vmatprep.subr.bf16.mxu0 0
    %384 = vmatpush1.bf16.xpose.msra.mxu0 0
    %385 = vmatprep.subr.bf16.mxu0 0
    %386 = vmatpush1.bf16.xpose.msra.mxu0 0
    %387 = vmatprep.subr.bf16.mxu0 0
    %388 = vmatpush1.bf16.xpose.msra.mxu0 0
    %389 = vmatprep.subr.bf16.mxu0 0
    %390 = vmatpush1.bf16.xpose.msra.mxu0 0
    %391 = vmatprep.subr.bf16.mxu0 0
    %392 = vmatpush1.bf16.xpose.msra.mxu0 0
    %393 = vmatprep.subr.bf16.mxu0 0
    %394 = vmatpush1.bf16.xpose.msra.mxu0 0
    %395 = vmatprep.subr.bf16.mxu0 0
    %396 = vmatpush1.bf16.xpose.msra.mxu0 0
    %397 = vmatprep.subr.bf16.mxu0 0
    %398 = vmatpush1.bf16.xpose.msra.mxu0 0
    %399 = vmatprep.subr.bf16.mxu0 0
    %400 = vmatpush1.bf16.xpose.msra.mxu0 0
    %401 = vmatprep.subr.bf16.mxu0 0
    %402 = vmatpush1.bf16.xpose.msra.mxu0 0
    %403 = vmatprep.subr.bf16.mxu0 0
    %404 = vmatpush1.bf16.xpose.msra.mxu0 0
    %405 = vmatprep.subr.bf16.mxu0 0
    %406 = vmatpush1.bf16.xpose.msra.mxu0 0
    %407 = vmatprep.subr.bf16.mxu0 0
    %408 = vmatpush1.bf16.xpose.msra.mxu0 0
    %409 = vmatprep.subr.bf16.mxu0 0
    %410 = vmatpush1.bf16.xpose.msra.mxu0 0
    %411 = vmatprep.subr.bf16.mxu0 0
    %412 = vmatpush1.bf16.xpose.msra.mxu0 0
    %413 = vmatprep.mubr.bf16.mxu0 0
    %414 = vmatmul.mubr.bf16.gmra.mrb[0].mxu0 %v376
    %v415 = vpop.f32.mrb[0].mxu0
    %v416 = vadd.f32 0.0, %v415
    %v417 = vpop.f32.mrb[0].mxu0
    %v418 = vpop.f32.mrb[0].mxu0
    %v419 = vpop.f32.mrb[0].mxu0
    %420 = vdwg.mxu0
    %422 = vrot.lane.b32.xlu0 %v364, 96
    %v423 = vpop.permute.xlu0 %422
    %v425 = vsel %vm374, %v356, 0
    %v428 = vsel %vm374, %v423, 0
    %430 = vmatprep.subr.bf16.mxu0 0
    %431 = vmatpush1.bf16.xpose.msra.mxu0 %v428
    %432 = vmatprep.subr.bf16.mxu0 0
    %433 = vmatpush1.bf16.xpose.msra.mxu0 0
    %434 = vmatprep.subr.bf16.mxu0 0
    %435 = vmatpush1.bf16.xpose.msra.mxu0 0
    %436 = vmatprep.subr.bf16.mxu0 0
    %437 = vmatpush1.bf16.xpose.msra.mxu0 0
    %438 = vmatprep.subr.bf16.mxu0 0
    %439 = vmatpush1.bf16.xpose.msra.mxu0 0
    %440 = vmatprep.subr.bf16.mxu0 0
    %441 = vmatpush1.bf16.xpose.msra.mxu0 0
    %442 = vmatprep.subr.bf16.mxu0 0
    %443 = vmatpush1.bf16.xpose.msra.mxu0 0
    %444 = vmatprep.subr.bf16.mxu0 0
    %445 = vmatpush1.bf16.xpose.msra.mxu0 0
    %446 = vmatprep.subr.bf16.mxu0 0
    %447 = vmatpush1.bf16.xpose.msra.mxu0 0
    %448 = vmatprep.subr.bf16.mxu0 0
    %449 = vmatpush1.bf16.xpose.msra.mxu0 0
    %450 = vmatprep.subr.bf16.mxu0 0
    %451 = vmatpush1.bf16.xpose.msra.mxu0 0
    %452 = vmatprep.subr.bf16.mxu0 0
    %453 = vmatpush1.bf16.xpose.msra.mxu0 0
    %454 = vmatprep.subr.bf16.mxu0 0
    %455 = vmatpush1.bf16.xpose.msra.mxu0 0
    %456 = vmatprep.subr.bf16.mxu0 0
    %457 = vmatpush1.bf16.xpose.msra.mxu0 0
    %458 = vmatprep.subr.bf16.mxu0 0
    %459 = vmatpush1.bf16.xpose.msra.mxu0 0
    %460 = vmatprep.subr.bf16.mxu0 0
    %461 = vmatpush1.bf16.xpose.msra.mxu0 0
    %462 = vmatprep.mubr.bf16.mxu0 0
    %463 = vmatmul.mubr.bf16.gmra.mrb[0].mxu0 %v425
    %v464 = vpop.f32.mrb[0].mxu0
    %v465 = vadd.f32 0.0, %v464
    %v466 = vpop.f32.mrb[0].mxu0
    %v467 = vpop.f32.mrb[0].mxu0
    %v468 = vpop.f32.mrb[0].mxu0
    %469 = vdwg.mxu0
    %471 = vrot.lane.b32.xlu0 %v365, 96
    %v472 = vpop.permute.xlu0 %471
    %v474 = vsel %vm374, %v357, 0
    %v477 = vsel %vm374, %v472, 0
    %479 = vmatprep.subr.bf16.mxu0 0
    %480 = vmatpush1.bf16.xpose.msra.mxu0 %v477
    %481 = vmatprep.subr.bf16.mxu0 0
    %482 = vmatpush1.bf16.xpose.msra.mxu0 0
    %483 = vmatprep.subr.bf16.mxu0 0
    %484 = vmatpush1.bf16.xpose.msra.mxu0 0
    %485 = vmatprep.subr.bf16.mxu0 0
    %486 = vmatpush1.bf16.xpose.msra.mxu0 0
    %487 = vmatprep.subr.bf16.mxu0 0
    %488 = vmatpush1.bf16.xpose.msra.mxu0 0
    %489 = vmatprep.subr.bf16.mxu0 0
    %490 = vmatpush1.bf16.xpose.msra.mxu0 0
    %491 = vmatprep.subr.bf16.mxu0 0
    %492 = vmatpush1.bf16.xpose.msra.mxu0 0
    %493 = vmatprep.subr.bf16.mxu0 0
    %494 = vmatpush1.bf16.xpose.msra.mxu0 0
    %495 = vmatprep.subr.bf16.mxu0 0
    %496 = vmatpush1.bf16.xpose.msra.mxu0 0
    %497 = vmatprep.subr.bf16.mxu0 0
    %498 = vmatpush1.bf16.xpose.msra.mxu0 0
    %499 = vmatprep.subr.bf16.mxu0 0
    %500 = vmatpush1.bf16.xpose.msra.mxu0 0
    %501 = vmatprep.subr.bf16.mxu0 0
    %502 = vmatpush1.bf16.xpose.msra.mxu0 0
    %503 = vmatprep.subr.bf16.mxu0 0
    %504 = vmatpush1.bf16.xpose.msra.mxu0 0
    %505 = vmatprep.subr.bf16.mxu0 0
    %506 = vmatpush1.bf16.xpose.msra.mxu0 0
    %507 = vmatprep.subr.bf16.mxu0 0
    %508 = vmatpush1.bf16.xpose.msra.mxu0 0
    %509 = vmatprep.subr.bf16.mxu0 0
    %510 = vmatpush1.bf16.xpose.msra.mxu0 0
    %511 = vmatprep.mubr.bf16.mxu0 0
    %512 = vmatmul.mubr.bf16.gmra.mrb[0].mxu0 %v474
    %v513 = vpop.f32.mrb[0].mxu0
    %v514 = vadd.f32 0.0, %v513
    %v515 = vpop.f32.mrb[0].mxu0
    %v516 = vpop.f32.mrb[0].mxu0
    %v517 = vpop.f32.mrb[0].mxu0
    %518 = vdwg.mxu0
    %520 = vrot.lane.b32.xlu0 %v366, 96
    %v521 = vpop.permute.xlu0 %520
    %v523 = vsel %vm374, %v358, 0
    %v526 = vsel %vm374, %v521, 0
    %528 = vmatprep.subr.bf16.mxu0 0
    %529 = vmatpush1.bf16.xpose.msra.mxu0 %v526
    %530 = vmatprep.subr.bf16.mxu0 0
    %531 = vmatpush1.bf16.xpose.msra.mxu0 0
    %532 = vmatprep.subr.bf16.mxu0 0
    %533 = vmatpush1.bf16.xpose.msra.mxu0 0
    %534 = vmatprep.subr.bf16.mxu0 0
    %535 = vmatpush1.bf16.xpose.msra.mxu0 0
    %536 = vmatprep.subr.bf16.mxu0 0
    %537 = vmatpush1.bf16.xpose.msra.mxu0 0
    %538 = vmatprep.subr.bf16.mxu0 0
    %539 = vmatpush1.bf16.xpose.msra.mxu0 0
    %540 = vmatprep.subr.bf16.mxu0 0
    %541 = vmatpush1.bf16.xpose.msra.mxu0 0
    %542 = vmatprep.subr.bf16.mxu0 0
    %543 = vmatpush1.bf16.xpose.msra.mxu0 0
    %544 = vmatprep.subr.bf16.mxu0 0
    %545 = vmatpush1.bf16.xpose.msra.mxu0 0
    %546 = vmatprep.subr.bf16.mxu0 0
    %547 = vmatpush1.bf16.xpose.msra.mxu0 0
    %548 = vmatprep.subr.bf16.mxu0 0
    %549 = vmatpush1.bf16.xpose.msra.mxu0 0
    %550 = vmatprep.subr.bf16.mxu0 0
    %551 = vmatpush1.bf16.xpose.msra.mxu0 0
    %552 = vmatprep.subr.bf16.mxu0 0
    %553 = vmatpush1.bf16.xpose.msra.mxu0 0
    %554 = vmatprep.subr.bf16.mxu0 0
    %555 = vmatpush1.bf16.xpose.msra.mxu0 0
    %556 = vmatprep.subr.bf16.mxu0 0
    %557 = vmatpush1.bf16.xpose.msra.mxu0 0
    %558 = vmatprep.subr.bf16.mxu0 0
    %559 = vmatpush1.bf16.xpose.msra.mxu0 0
    %560 = vmatprep.mubr.bf16.mxu0 0
    %561 = vmatmul.mubr.bf16.gmra.mrb[0].mxu0 %v523
    %v562 = vpop.f32.mrb[0].mxu0
    %v563 = vadd.f32 0.0, %v562
    %v564 = vpop.f32.mrb[0].mxu0
    %v565 = vpop.f32.mrb[0].mxu0
    %v566 = vpop.f32.mrb[0].mxu0
    %567 = vdwg.mxu0
    %569 = vrot.lane.b32.xlu0 %v367, 96
    %v570 = vpop.permute.xlu0 %569
    %v572 = vsel %vm374, %v359, 0
    %v575 = vsel %vm374, %v570, 0
    %577 = vmatprep.subr.bf16.mxu0 0
    %578 = vmatpush1.bf16.xpose.msra.mxu0 %v575
    %579 = vmatprep.subr.bf16.mxu0 0
    %580 = vmatpush1.bf16.xpose.msra.mxu0 0
    %581 = vmatprep.subr.bf16.mxu0 0
    %582 = vmatpush1.bf16.xpose.msra.mxu0 0
    %583 = vmatprep.subr.bf16.mxu0 0
    %584 = vmatpush1.bf16.xpose.msra.mxu0 0
    %585 = vmatprep.subr.bf16.mxu0 0
    %586 = vmatpush1.bf16.xpose.msra.mxu0 0
    %587 = vmatprep.subr.bf16.mxu0 0
    %588 = vmatpush1.bf16.xpose.msra.mxu0 0
    %589 = vmatprep.subr.bf16.mxu0 0
    %590 = vmatpush1.bf16.xpose.msra.mxu0 0
    %591 = vmatprep.subr.bf16.mxu0 0
    %592 = vmatpush1.bf16.xpose.msra.mxu0 0
    %593 = vmatprep.subr.bf16.mxu0 0
    %594 = vmatpush1.bf16.xpose.msra.mxu0 0
    %595 = vmatprep.subr.bf16.mxu0 0
    %596 = vmatpush1.bf16.xpose.msra.mxu0 0
    %597 = vmatprep.subr.bf16.mxu0 0
    %598 = vmatpush1.bf16.xpose.msra.mxu0 0
    %599 = vmatprep.subr.bf16.mxu0 0
    %600 = vmatpush1.bf16.xpose.msra.mxu0 0
    %601 = vmatprep.subr.bf16.mxu0 0
    %602 = vmatpush1.bf16.xpose.msra.mxu0 0
    %603 = vmatprep.subr.bf16.mxu0 0
    %604 = vmatpush1.bf16.xpose.msra.mxu0 0
    %605 = vmatprep.subr.bf16.mxu0 0
    %606 = vmatpush1.bf16.xpose.msra.mxu0 0
    %607 = vmatprep.subr.bf16.mxu0 0
    %608 = vmatpush1.bf16.xpose.msra.mxu0 0
    %609 = vmatprep.mubr.bf16.mxu0 0
    %610 = vmatmul.mubr.bf16.gmra.mrb[0].mxu0 %v572
    %v611 = vpop.f32.mrb[0].mxu0
    %v612 = vadd.f32 0.0, %v611
    %v613 = vpop.f32.mrb[0].mxu0
    %v614 = vpop.f32.mrb[0].mxu0
    %v615 = vpop.f32.mrb[0].mxu0
    %616 = vdwg.mxu0
    %618 = vrot.lane.b32.xlu0 %v368, 96
    %v619 = vpop.permute.xlu0 %618
    %v621 = vsel %vm374, %v360, 0
    %v624 = vsel %vm374, %v619, 0
    %626 = vmatprep.subr.bf16.mxu0 0
    %627 = vmatpush1.bf16.xpose.msra.mxu0 %v624
    %628 = vmatprep.subr.bf16.mxu0 0
    %629 = vmatpush1.bf16.xpose.msra.mxu0 0
    %630 = vmatprep.subr.bf16.mxu0 0
    %631 = vmatpush1.bf16.xpose.msra.mxu0 0
    %632 = vmatprep.subr.bf16.mxu0 0
    %633 = vmatpush1.bf16.xpose.msra.mxu0 0
    %634 = vmatprep.subr.bf16.mxu0 0
    %635 = vmatpush1.bf16.xpose.msra.mxu0 0
    %636 = vmatprep.subr.bf16.mxu0 0
    %637 = vmatpush1.bf16.xpose.msra.mxu0 0
    %638 = vmatprep.subr.bf16.mxu0 0
    %639 = vmatpush1.bf16.xpose.msra.mxu0 0
    %640 = vmatprep.subr.bf16.mxu0 0
    %641 = vmatpush1.bf16.xpose.msra.mxu0 0
    %642 = vmatprep.subr.bf16.mxu0 0
    %643 = vmatpush1.bf16.xpose.msra.mxu0 0
    %644 = vmatprep.subr.bf16.mxu0 0
    %645 = vmatpush1.bf16.xpose.msra.mxu0 0
    %646 = vmatprep.subr.bf16.mxu0 0
    %647 = vmatpush1.bf16.xpose.msra.mxu0 0
    %648 = vmatprep.subr.bf16.mxu0 0
    %649 = vmatpush1.bf16.xpose.msra.mxu0 0
    %650 = vmatprep.subr.bf16.mxu0 0
    %651 = vmatpush1.bf16.xpose.msra.mxu0 0
    %652 = vmatprep.subr.bf16.mxu0 0
    %653 = vmatpush1.bf16.xpose.msra.mxu0 0
    %654 = vmatprep.subr.bf16.mxu0 0
    %655 = vmatpush1.bf16.xpose.msra.mxu0 0
    %656 = vmatprep.subr.bf16.mxu0 0
    %657 = vmatpush1.bf16.xpose.msra.mxu0 0
    %658 = vmatprep.mubr.bf16.mxu0 0
    %659 = vmatmul.mubr.bf16.gmra.mrb[0].mxu0 %v621
    %v660 = vpop.f32.mrb[0].mxu0
    %v661 = vadd.f32 0.0, %v660
    %v662 = vpop.f32.mrb[0].mxu0
    %v663 = vpop.f32.mrb[0].mxu0
    %v664 = vpop.f32.mrb[0].mxu0
    %665 = vdwg.mxu0
    %667 = vrot.lane.b32.xlu0 %v369, 96
    %v668 = vpop.permute.xlu0 %667
    %v670 = vsel %vm374, %v361, 0
    %v673 = vsel %vm374, %v668, 0
    %675 = vmatprep.subr.bf16.mxu0 0
    %676 = vmatpush1.bf16.xpose.msra.mxu0 %v673
    %677 = vmatprep.subr.bf16.mxu0 0
    %678 = vmatpush1.bf16.xpose.msra.mxu0 0
    %679 = vmatprep.subr.bf16.mxu0 0
    %680 = vmatpush1.bf16.xpose.msra.mxu0 0
    %681 = vmatprep.subr.bf16.mxu0 0
    %682 = vmatpush1.bf16.xpose.msra.mxu0 0
    %683 = vmatprep.subr.bf16.mxu0 0
    %684 = vmatpush1.bf16.xpose.msra.mxu0 0
    %685 = vmatprep.subr.bf16.mxu0 0
    %686 = vmatpush1.bf16.xpose.msra.mxu0 0
    %687 = vmatprep.subr.bf16.mxu0 0
    %688 = vmatpush1.bf16.xpose.msra.mxu0 0
    %689 = vmatprep.subr.bf16.mxu0 0
    %690 = vmatpush1.bf16.xpose.msra.mxu0 0
    %691 = vmatprep.subr.bf16.mxu0 0
    %692 = vmatpush1.bf16.xpose.msra.mxu0 0
    %693 = vmatprep.subr.bf16.mxu0 0
    %694 = vmatpush1.bf16.xpose.msra.mxu0 0
    %695 = vmatprep.subr.bf16.mxu0 0
    %696 = vmatpush1.bf16.xpose.msra.mxu0 0
    %697 = vmatprep.subr.bf16.mxu0 0
    %698 = vmatpush1.bf16.xpose.msra.mxu0 0
    %699 = vmatprep.subr.bf16.mxu0 0
    %700 = vmatpush1.bf16.xpose.msra.mxu0 0
    %701 = vmatprep.subr.bf16.mxu0 0
    %702 = vmatpush1.bf16.xpose.msra.mxu0 0
    %703 = vmatprep.subr.bf16.mxu0 0
    %704 = vmatpush1.bf16.xpose.msra.mxu0 0
    %705 = vmatprep.subr.bf16.mxu0 0
    %706 = vmatpush1.bf16.xpose.msra.mxu0 0
    %707 = vmatprep.mubr.bf16.mxu0 0
    %708 = vmatmul.mubr.bf16.gmra.mrb[0].mxu0 %v670
    %v709 = vpop.f32.mrb[0].mxu0
    %v710 = vadd.f32 0.0, %v709
    %v711 = vpop.f32.mrb[0].mxu0
    %v712 = vpop.f32.mrb[0].mxu0
    %v713 = vpop.f32.mrb[0].mxu0
    %714 = vdwg.mxu0
    %716 = vrot.lane.b32.xlu0 %v370, 96
    %v717 = vpop.permute.xlu0 %716
    %v719 = vsel %vm374, %v362, 0
    %v722 = vsel %vm374, %v717, 0
    %724 = vmatprep.subr.bf16.mxu0 0
    %725 = vmatpush1.bf16.xpose.msra.mxu0 %v722
    %726 = vmatprep.subr.bf16.mxu0 0
    %727 = vmatpush1.bf16.xpose.msra.mxu0 0
    %728 = vmatprep.subr.bf16.mxu0 0
    %729 = vmatpush1.bf16.xpose.msra.mxu0 0
    %730 = vmatprep.subr.bf16.mxu0 0
    %731 = vmatpush1.bf16.xpose.msra.mxu0 0
    %732 = vmatprep.subr.bf16.mxu0 0
    %733 = vmatpush1.bf16.xpose.msra.mxu0 0
    %734 = vmatprep.subr.bf16.mxu0 0
    %735 = vmatpush1.bf16.xpose.msra.mxu0 0
    %736 = vmatprep.subr.bf16.mxu0 0
    %737 = vmatpush1.bf16.xpose.msra.mxu0 0
    %738 = vmatprep.subr.bf16.mxu0 0
    %739 = vmatpush1.bf16.xpose.msra.mxu0 0
    %740 = vmatprep.subr.bf16.mxu0 0
    %741 = vmatpush1.bf16.xpose.msra.mxu0 0
    %742 = vmatprep.subr.bf16.mxu0 0
    %743 = vmatpush1.bf16.xpose.msra.mxu0 0
    %744 = vmatprep.subr.bf16.mxu0 0
    %745 = vmatpush1.bf16.xpose.msra.mxu0 0
    %746 = vmatprep.subr.bf16.mxu0 0
    %747 = vmatpush1.bf16.xpose.msra.mxu0 0
    %748 = vmatprep.subr.bf16.mxu0 0
    %749 = vmatpush1.bf16.xpose.msra.mxu0 0
    %750 = vmatprep.subr.bf16.mxu0 0
    %751 = vmatpush1.bf16.xpose.msra.mxu0 0
    %752 = vmatprep.subr.bf16.mxu0 0
    %753 = vmatpush1.bf16.xpose.msra.mxu0 0
    %754 = vmatprep.subr.bf16.mxu0 0
    %755 = vmatpush1.bf16.xpose.msra.mxu0 0
    %756 = vmatprep.mubr.bf16.mxu0 0
    %757 = vmatmul.mubr.bf16.gmra.mrb[0].mxu0 %v719
    %v758 = vpop.f32.mrb[0].mxu0
    %v759 = vadd.f32 0.0, %v758
    %v760 = vpop.f32.mrb[0].mxu0
    %v761 = vpop.f32.mrb[0].mxu0
    %v762 = vpop.f32.mrb[0].mxu0
    %763 = vdwg.mxu0
    %v764 = vsel %vm374, %v416, 0.0
    %v765 = vsel %vm374, %v465, 0.0
    %v766 = vadd.f32 %v764, %v765
    %v767 = vsel %vm374, %v514, 0.0
    %v768 = vadd.f32 %v766, %v767
    %v769 = vsel %vm374, %v563, 0.0
    %v770 = vadd.f32 %v768, %v769
    %v771 = vsel %vm374, %v612, 0.0
    %v772 = vadd.f32 %v770, %v771
    %v773 = vsel %vm374, %v661, 0.0
    %v774 = vadd.f32 %v772, %v773
    %v775 = vsel %vm374, %v710, 0.0
    %v776 = vadd.f32 %v774, %v775
    %v777 = vsel %vm374, %v759, 0.0
    %v778 = vadd.f32 %v776, %v777
    %v787 = vcombine.high %v347, %v347
    %v789 = vunpack.c.l.s4 1966171168
    %v790 = vunpack.c.0.s8 %v789
    %v791 = vlaneseq
    %v792 = vshrl.u32 %v791, 7
    %v793 = vsub.s32 %v790, %v792
    %v794 = vrot.slane %v347, %v793
    %v796 = vunpack.c.l.s4 1966171168
    %v797 = vunpack.c.0.s8 %v796
    %v798 = vlaneseq
    %v799 = vshrl.u32 %v798, 7
    %v800 = vsub.s32 %v797, %v799
    %v801 = vrot.slane %v787, %v800
    %v802 = vcombine.high %v794, %v794
    %v803 = vcombine.high %v801, %v801
    %v805 = vunpack.c.l.s4 1966171168
    %v806 = vunpack.c.0.s8 %v805
    %v807 = vlaneseq
    %v808 = vshrl.u32 %v807, 7
    %v809 = vsub.s32 %v806, %v808
    %v810 = vrot.slane %v794, %v809
    %v812 = vunpack.c.l.s4 1966171168
    %v813 = vunpack.c.0.s8 %v812
    %v814 = vlaneseq
    %v815 = vshrl.u32 %v814, 7
    %v816 = vsub.s32 %v813, %v815
    %v817 = vrot.slane %v801, %v816
    %v819 = vunpack.c.l.s4 1966171168
    %v820 = vunpack.c.0.s8 %v819
    %v821 = vlaneseq
    %v822 = vshrl.u32 %v821, 7
    %v823 = vsub.s32 %v820, %v822
    %v824 = vrot.slane %v802, %v823
    %v826 = vunpack.c.l.s4 1966171168
    %v827 = vunpack.c.0.s8 %v826
    %v828 = vlaneseq
    %v829 = vshrl.u32 %v828, 7
    %v830 = vsub.s32 %v827, %v829
    %v831 = vrot.slane %v803, %v830
    %v832 = vcombine.high %v810, %v810
    %v833 = vcombine.high %v817, %v817
    %v834 = vcombine.high %v824, %v824
    %v835 = vcombine.high %v831, %v831
    %v836 = vcombine.high %v348, %v348
    %v838 = vunpack.c.l.s4 1966171168
    %v839 = vunpack.c.0.s8 %v838
    %v840 = vlaneseq
    %v841 = vshrl.u32 %v840, 7
    %v842 = vsub.s32 %v839, %v841
    %v843 = vrot.slane %v348, %v842
    %v845 = vunpack.c.l.s4 1966171168
    %v846 = vunpack.c.0.s8 %v845
    %v847 = vlaneseq
    %v848 = vshrl.u32 %v847, 7
    %v849 = vsub.s32 %v846, %v848
    %v850 = vrot.slane %v836, %v849
    %v851 = vcombine.high %v843, %v843
    %v852 = vcombine.high %v850, %v850
    %v854 = vunpack.c.l.s4 1966171168
    %v855 = vunpack.c.0.s8 %v854
    %v856 = vlaneseq
    %v857 = vshrl.u32 %v856, 7
    %v858 = vsub.s32 %v855, %v857
    %v859 = vrot.slane %v843, %v858
    %v861 = vunpack.c.l.s4 1966171168
    %v862 = vunpack.c.0.s8 %v861
    %v863 = vlaneseq
    %v864 = vshrl.u32 %v863, 7
    %v865 = vsub.s32 %v862, %v864
    %v866 = vrot.slane %v850, %v865
    %v868 = vunpack.c.l.s4 1966171168
    %v869 = vunpack.c.0.s8 %v868
    %v870 = vlaneseq
    %v871 = vshrl.u32 %v870, 7
    %v872 = vsub.s32 %v869, %v871
    %v873 = vrot.slane %v851, %v872
    %v875 = vunpack.c.l.s4 1966171168
    %v876 = vunpack.c.0.s8 %v875
    %v877 = vlaneseq
    %v878 = vshrl.u32 %v877, 7
    %v879 = vsub.s32 %v876, %v878
    %v880 = vrot.slane %v852, %v879
    %v881 = vcombine.high %v859, %v859
    %v882 = vcombine.high %v866, %v866
    %v883 = vcombine.high %v873, %v873
    %v884 = vcombine.high %v880, %v880
    %v885 = vcombine.high %v349, %v349
    %v887 = vunpack.c.l.s4 1966171168
    %v888 = vunpack.c.0.s8 %v887
    %v889 = vlaneseq
    %v890 = vshrl.u32 %v889, 7
    %v891 = vsub.s32 %v888, %v890
    %v892 = vrot.slane %v349, %v891
    %v894 = vunpack.c.l.s4 1966171168
    %v895 = vunpack.c.0.s8 %v894
    %v896 = vlaneseq
    %v897 = vshrl.u32 %v896, 7
    %v898 = vsub.s32 %v895, %v897
    %v899 = vrot.slane %v885, %v898
    %v900 = vcombine.high %v892, %v892
    %v901 = vcombine.high %v899, %v899
    %v903 = vunpack.c.l.s4 1966171168
    %v904 = vunpack.c.0.s8 %v903
    %v905 = vlaneseq
    %v906 = vshrl.u32 %v905, 7
    %v907 = vsub.s32 %v904, %v906
    %v908 = vrot.slane %v892, %v907
    %v910 = vunpack.c.l.s4 1966171168
    %v911 = vunpack.c.0.s8 %v910
    %v912 = vlaneseq
    %v913 = vshrl.u32 %v912, 7
    %v914 = vsub.s32 %v911, %v913
    %v915 = vrot.slane %v899, %v914
    %v917 = vunpack.c.l.s4 1966171168
    %v918 = vunpack.c.0.s8 %v917
    %v919 = vlaneseq
    %v920 = vshrl.u32 %v919, 7
    %v921 = vsub.s32 %v918, %v920
    %v922 = vrot.slane %v900, %v921
    %v924 = vunpack.c.l.s4 1966171168
    %v925 = vunpack.c.0.s8 %v924
    %v926 = vlaneseq
    %v927 = vshrl.u32 %v926, 7
    %v928 = vsub.s32 %v925, %v927
    %v929 = vrot.slane %v901, %v928
    %v930 = vcombine.high %v908, %v908
    %v931 = vcombine.high %v915, %v915
    %v932 = vcombine.high %v922, %v922
    %v933 = vcombine.high %v929, %v929
    %v934 = vcombine.high %v350, %v350
    %v936 = vunpack.c.l.s4 1966171168
    %v937 = vunpack.c.0.s8 %v936
    %v938 = vlaneseq
    %v939 = vshrl.u32 %v938, 7
    %v940 = vsub.s32 %v937, %v939
    %v941 = vrot.slane %v350, %v940
    %v943 = vunpack.c.l.s4 1966171168
    %v944 = vunpack.c.0.s8 %v943
    %v945 = vlaneseq
    %v946 = vshrl.u32 %v945, 7
    %v947 = vsub.s32 %v944, %v946
    %v948 = vrot.slane %v934, %v947
    %v949 = vcombine.high %v941, %v941
    %v950 = vcombine.high %v948, %v948
    %v952 = vunpack.c.l.s4 1966171168
    %v953 = vunpack.c.0.s8 %v952
    %v954 = vlaneseq
    %v955 = vshrl.u32 %v954, 7
    %v956 = vsub.s32 %v953, %v955
    %v957 = vrot.slane %v941, %v956
    %v959 = vunpack.c.l.s4 1966171168
    %v960 = vunpack.c.0.s8 %v959
    %v961 = vlaneseq
    %v962 = vshrl.u32 %v961, 7
    %v963 = vsub.s32 %v960, %v962
    %v964 = vrot.slane %v948, %v963
    %v966 = vunpack.c.l.s4 1966171168
    %v967 = vunpack.c.0.s8 %v966
    %v968 = vlaneseq
    %v969 = vshrl.u32 %v968, 7
    %v970 = vsub.s32 %v967, %v969
    %v971 = vrot.slane %v949, %v970
    %v973 = vunpack.c.l.s4 1966171168
    %v974 = vunpack.c.0.s8 %v973
    %v975 = vlaneseq
    %v976 = vshrl.u32 %v975, 7
    %v977 = vsub.s32 %v974, %v976
    %v978 = vrot.slane %v950, %v977
    %v979 = vcombine.high %v957, %v957
    %v980 = vcombine.high %v964, %v964
    %v981 = vcombine.high %v971, %v971
    %v982 = vcombine.high %v978, %v978
    %v983 = vcombine.high %v351, %v351
    %v985 = vunpack.c.l.s4 1966171168
    %v986 = vunpack.c.0.s8 %v985
    %v987 = vlaneseq
    %v988 = vshrl.u32 %v987, 7
    %v989 = vsub.s32 %v986, %v988
    %v990 = vrot.slane %v351, %v989
    %v992 = vunpack.c.l.s4 1966171168
    %v993 = vunpack.c.0.s8 %v992
    %v994 = vlaneseq
    %v995 = vshrl.u32 %v994, 7
    %v996 = vsub.s32 %v993, %v995
    %v997 = vrot.slane %v983, %v996
    %v998 = vcombine.high %v990, %v990
    %v999 = vcombine.high %v997, %v997
    %v1001 = vunpack.c.l.s4 1966171168
    %v1002 = vunpack.c.0.s8 %v1001
    %v1003 = vlaneseq
    %v1004 = vshrl.u32 %v1003, 7
    %v1005 = vsub.s32 %v1002, %v1004
    %v1006 = vrot.slane %v990, %v1005
    %v1008 = vunpack.c.l.s4 1966171168
    %v1009 = vunpack.c.0.s8 %v1008
    %v1010 = vlaneseq
    %v1011 = vshrl.u32 %v1010, 7
    %v1012 = vsub.s32 %v1009, %v1011
    %v1013 = vrot.slane %v997, %v1012
    %v1015 = vunpack.c.l.s4 1966171168
    %v1016 = vunpack.c.0.s8 %v1015
    %v1017 = vlaneseq
    %v1018 = vshrl.u32 %v1017, 7
    %v1019 = vsub.s32 %v1016, %v1018
    %v1020 = vrot.slane %v998, %v1019
    %v1022 = vunpack.c.l.s4 1966171168
    %v1023 = vunpack.c.0.s8 %v1022
    %v1024 = vlaneseq
    %v1025 = vshrl.u32 %v1024, 7
    %v1026 = vsub.s32 %v1023, %v1025
    %v1027 = vrot.slane %v999, %v1026
    %v1028 = vcombine.high %v1006, %v1006
    %v1029 = vcombine.high %v1013, %v1013
    %v1030 = vcombine.high %v1020, %v1020
    %v1031 = vcombine.high %v1027, %v1027
    %v1032 = vcombine.high %v352, %v352
    %v1034 = vunpack.c.l.s4 1966171168
    %v1035 = vunpack.c.0.s8 %v1034
    %v1036 = vlaneseq
    %v1037 = vshrl.u32 %v1036, 7
    %v1038 = vsub.s32 %v1035, %v1037
    %v1039 = vrot.slane %v352, %v1038
    %v1041 = vunpack.c.l.s4 1966171168
    %v1042 = vunpack.c.0.s8 %v1041
    %v1043 = vlaneseq
    %v1044 = vshrl.u32 %v1043, 7
    %v1045 = vsub.s32 %v1042, %v1044
    %v1046 = vrot.slane %v1032, %v1045
    %v1047 = vcombine.high %v1039, %v1039
    %v1048 = vcombine.high %v1046, %v1046
    %v1050 = vunpack.c.l.s4 1966171168
    %v1051 = vunpack.c.0.s8 %v1050
    %v1052 = vlaneseq
    %v1053 = vshrl.u32 %v1052, 7
    %v1054 = vsub.s32 %v1051, %v1053
    %v1055 = vrot.slane %v1039, %v1054
    %v1057 = vunpack.c.l.s4 1966171168
    %v1058 = vunpack.c.0.s8 %v1057
    %v1059 = vlaneseq
    %v1060 = vshrl.u32 %v1059, 7
    %v1061 = vsub.s32 %v1058, %v1060
    %v1062 = vrot.slane %v1046, %v1061
    %v1064 = vunpack.c.l.s4 1966171168
    %v1065 = vunpack.c.0.s8 %v1064
    %v1066 = vlaneseq
    %v1067 = vshrl.u32 %v1066, 7
    %v1068 = vsub.s32 %v1065, %v1067
    %v1069 = vrot.slane %v1047, %v1068
    %v1071 = vunpack.c.l.s4 1966171168
    %v1072 = vunpack.c.0.s8 %v1071
    %v1073 = vlaneseq
    %v1074 = vshrl.u32 %v1073, 7
    %v1075 = vsub.s32 %v1072, %v1074
    %v1076 = vrot.slane %v1048, %v1075
    %v1077 = vcombine.high %v1055, %v1055
    %v1078 = vcombine.high %v1062, %v1062
    %v1079 = vcombine.high %v1069, %v1069
    %v1080 = vcombine.high %v1076, %v1076
    %v1081 = vcombine.high %v353, %v353
    %v1083 = vunpack.c.l.s4 1966171168
    %v1084 = vunpack.c.0.s8 %v1083
    %v1085 = vlaneseq
    %v1086 = vshrl.u32 %v1085, 7
    %v1087 = vsub.s32 %v1084, %v1086
    %v1088 = vrot.slane %v353, %v1087
    %v1090 = vunpack.c.l.s4 1966171168
    %v1091 = vunpack.c.0.s8 %v1090
    %v1092 = vlaneseq
    %v1093 = vshrl.u32 %v1092, 7
    %v1094 = vsub.s32 %v1091, %v1093
    %v1095 = vrot.slane %v1081, %v1094
    %v1096 = vcombine.high %v1088, %v1088
    %v1097 = vcombine.high %v1095, %v1095
    %v1099 = vunpack.c.l.s4 1966171168
    %v1100 = vunpack.c.0.s8 %v1099
    %v1101 = vlaneseq
    %v1102 = vshrl.u32 %v1101, 7
    %v1103 = vsub.s32 %v1100, %v1102
    %v1104 = vrot.slane %v1088, %v1103
    %v1106 = vunpack.c.l.s4 1966171168
    %v1107 = vunpack.c.0.s8 %v1106
    %v1108 = vlaneseq
    %v1109 = vshrl.u32 %v1108, 7
    %v1110 = vsub.s32 %v1107, %v1109
    %v1111 = vrot.slane %v1095, %v1110
    %v1113 = vunpack.c.l.s4 1966171168
    %v1114 = vunpack.c.0.s8 %v1113
    %v1115 = vlaneseq
    %v1116 = vshrl.u32 %v1115, 7
    %v1117 = vsub.s32 %v1114, %v1116
    %v1118 = vrot.slane %v1096, %v1117
    %v1120 = vunpack.c.l.s4 1966171168
    %v1121 = vunpack.c.0.s8 %v1120
    %v1122 = vlaneseq
    %v1123 = vshrl.u32 %v1122, 7
    %v1124 = vsub.s32 %v1121, %v1123
    %v1125 = vrot.slane %v1097, %v1124
    %v1126 = vcombine.high %v1104, %v1104
    %v1127 = vcombine.high %v1111, %v1111
    %v1128 = vcombine.high %v1118, %v1118
    %v1129 = vcombine.high %v1125, %v1125
    %v1130 = vcombine.high %v354, %v354
    %v1132 = vunpack.c.l.s4 1966171168
    %v1133 = vunpack.c.0.s8 %v1132
    %v1134 = vlaneseq
    %v1135 = vshrl.u32 %v1134, 7
    %v1136 = vsub.s32 %v1133, %v1135
    %v1137 = vrot.slane %v354, %v1136
    %v1139 = vunpack.c.l.s4 1966171168
    %v1140 = vunpack.c.0.s8 %v1139
    %v1141 = vlaneseq
    %v1142 = vshrl.u32 %v1141, 7
    %v1143 = vsub.s32 %v1140, %v1142
    %v1144 = vrot.slane %v1130, %v1143
    %v1145 = vcombine.high %v1137, %v1137
    %v1146 = vcombine.high %v1144, %v1144
    %v1148 = vunpack.c.l.s4 1966171168
    %v1149 = vunpack.c.0.s8 %v1148
    %v1150 = vlaneseq
    %v1151 = vshrl.u32 %v1150, 7
    %v1152 = vsub.s32 %v1149, %v1151
    %v1153 = vrot.slane %v1137, %v1152
    %v1155 = vunpack.c.l.s4 1966171168
    %v1156 = vunpack.c.0.s8 %v1155
    %v1157 = vlaneseq
    %v1158 = vshrl.u32 %v1157, 7
    %v1159 = vsub.s32 %v1156, %v1158
    %v1160 = vrot.slane %v1144, %v1159
    %v1162 = vunpack.c.l.s4 1966171168
    %v1163 = vunpack.c.0.s8 %v1162
    %v1164 = vlaneseq
    %v1165 = vshrl.u32 %v1164, 7
    %v1166 = vsub.s32 %v1163, %v1165
    %v1167 = vrot.slane %v1145, %v1166
    %v1169 = vunpack.c.l.s4 1966171168
    %v1170 = vunpack.c.0.s8 %v1169
    %v1171 = vlaneseq
    %v1172 = vshrl.u32 %v1171, 7
    %v1173 = vsub.s32 %v1170, %v1172
    %v1174 = vrot.slane %v1146, %v1173
    %v1175 = vcombine.high %v1153, %v1153
    %v1176 = vcombine.high %v1160, %v1160
    %v1177 = vcombine.high %v1167, %v1167
    %v1178 = vcombine.high %v1174, %v1174
    %v1179 = vlaneseq
    %v1180 = vshrl.u32 %v1179, 7
    %v1181 = vsub.s32 0, %v1180
    %v1182 = vrot.slane %v810, %v1181
    %v1183 = vlaneseq
    %v1184 = vshrl.u32 %v1183, 7
    %v1185 = vsub.s32 0, %v1184
    %v1186 = vrot.slane %v824, %v1185
    %v1187 = vlaneseq
    %v1188 = vshrl.u32 %v1187, 7
    %v1189 = vsub.s32 0, %v1188
    %v1190 = vrot.slane %v832, %v1189
    %v1191 = vlaneseq
    %v1192 = vshrl.u32 %v1191, 7
    %v1193 = vsub.s32 0, %v1192
    %v1194 = vrot.slane %v834, %v1193
    %v1195 = vlaneseq
    %v1196 = vshrl.u32 %v1195, 7
    %v1197 = vsub.s32 0, %v1196
    %v1198 = vrot.slane %v817, %v1197
    %v1199 = vlaneseq
    %v1200 = vshrl.u32 %v1199, 7
    %v1201 = vsub.s32 0, %v1200
    %v1202 = vrot.slane %v831, %v1201
    %v1203 = vlaneseq
    %v1204 = vshrl.u32 %v1203, 7
    %v1205 = vsub.s32 0, %v1204
    %v1206 = vrot.slane %v833, %v1205
    %v1207 = vlaneseq
    %v1208 = vshrl.u32 %v1207, 7
    %v1209 = vsub.s32 0, %v1208
    %v1210 = vrot.slane %v835, %v1209
    %v1211 = vlaneseq
    %v1212 = vshrl.u32 %v1211, 7
    %v1213 = vsub.s32 0, %v1212
    %v1214 = vrot.slane %v859, %v1213
    %v1215 = vlaneseq
    %v1216 = vshrl.u32 %v1215, 7
    %v1217 = vsub.s32 0, %v1216
    %v1218 = vrot.slane %v873, %v1217
    %v1219 = vlaneseq
    %v1220 = vshrl.u32 %v1219, 7
    %v1221 = vsub.s32 0, %v1220
    %v1222 = vrot.slane %v881, %v1221
    %v1223 = vlaneseq
    %v1224 = vshrl.u32 %v1223, 7
    %v1225 = vsub.s32 0, %v1224
    %v1226 = vrot.slane %v883, %v1225
    %v1227 = vlaneseq
    %v1228 = vshrl.u32 %v1227, 7
    %v1229 = vsub.s32 0, %v1228
    %v1230 = vrot.slane %v866, %v1229
    %v1231 = vlaneseq
    %v1232 = vshrl.u32 %v1231, 7
    %v1233 = vsub.s32 0, %v1232
    %v1234 = vrot.slane %v880, %v1233
    %v1235 = vlaneseq
    %v1236 = vshrl.u32 %v1235, 7
    %v1237 = vsub.s32 0, %v1236
    %v1238 = vrot.slane %v882, %v1237
    %v1239 = vlaneseq
    %v1240 = vshrl.u32 %v1239, 7
    %v1241 = vsub.s32 0, %v1240
    %v1242 = vrot.slane %v884, %v1241
    %v1243 = vlaneseq
    %v1244 = vshrl.u32 %v1243, 7
    %v1245 = vsub.s32 0, %v1244
    %v1246 = vrot.slane %v908, %v1245
    %v1247 = vlaneseq
    %v1248 = vshrl.u32 %v1247, 7
    %v1249 = vsub.s32 0, %v1248
    %v1250 = vrot.slane %v922, %v1249
    %v1251 = vlaneseq
    %v1252 = vshrl.u32 %v1251, 7
    %v1253 = vsub.s32 0, %v1252
    %v1254 = vrot.slane %v930, %v1253
    %v1255 = vlaneseq
    %v1256 = vshrl.u32 %v1255, 7
    %v1257 = vsub.s32 0, %v1256
    %v1258 = vrot.slane %v932, %v1257
    %v1259 = vlaneseq
    %v1260 = vshrl.u32 %v1259, 7
    %v1261 = vsub.s32 0, %v1260
    %v1262 = vrot.slane %v915, %v1261
    %v1263 = vlaneseq
    %v1264 = vshrl.u32 %v1263, 7
    %v1265 = vsub.s32 0, %v1264
    %v1266 = vrot.slane %v929, %v1265
    %v1267 = vlaneseq
    %v1268 = vshrl.u32 %v1267, 7
    %v1269 = vsub.s32 0, %v1268
    %v1270 = vrot.slane %v931, %v1269
    %v1271 = vlaneseq
    %v1272 = vshrl.u32 %v1271, 7
    %v1273 = vsub.s32 0, %v1272
    %v1274 = vrot.slane %v933, %v1273
    %v1275 = vlaneseq
    %v1276 = vshrl.u32 %v1275, 7
    %v1277 = vsub.s32 0, %v1276
    %v1278 = vrot.slane %v957, %v1277
    %v1279 = vlaneseq
    %v1280 = vshrl.u32 %v1279, 7
    %v1281 = vsub.s32 0, %v1280
    %v1282 = vrot.slane %v971, %v1281
    %v1283 = vlaneseq
    %v1284 = vshrl.u32 %v1283, 7
    %v1285 = vsub.s32 0, %v1284
    %v1286 = vrot.slane %v979, %v1285
    %v1287 = vlaneseq
    %v1288 = vshrl.u32 %v1287, 7
    %v1289 = vsub.s32 0, %v1288
    %v1290 = vrot.slane %v981, %v1289
    %v1291 = vlaneseq
    %v1292 = vshrl.u32 %v1291, 7
    %v1293 = vsub.s32 0, %v1292
    %v1294 = vrot.slane %v964, %v1293
    %v1295 = vlaneseq
    %v1296 = vshrl.u32 %v1295, 7
    %v1297 = vsub.s32 0, %v1296
    %v1298 = vrot.slane %v978, %v1297
    %v1299 = vlaneseq
    %v1300 = vshrl.u32 %v1299, 7
    %v1301 = vsub.s32 0, %v1300
    %v1302 = vrot.slane %v980, %v1301
    %v1303 = vlaneseq
    %v1304 = vshrl.u32 %v1303, 7
    %v1305 = vsub.s32 0, %v1304
    %v1306 = vrot.slane %v982, %v1305
    %v1307 = vlaneseq
    %v1308 = vshrl.u32 %v1307, 7
    %v1309 = vsub.s32 0, %v1308
    %v1310 = vrot.slane %v1006, %v1309
    %v1311 = vlaneseq
    %v1312 = vshrl.u32 %v1311, 7
    %v1313 = vsub.s32 0, %v1312
    %v1314 = vrot.slane %v1020, %v1313
    %v1315 = vlaneseq
    %v1316 = vshrl.u32 %v1315, 7
    %v1317 = vsub.s32 0, %v1316
    %v1318 = vrot.slane %v1028, %v1317
    %v1319 = vlaneseq
    %v1320 = vshrl.u32 %v1319, 7
    %v1321 = vsub.s32 0, %v1320
    %v1322 = vrot.slane %v1030, %v1321
    %v1323 = vlaneseq
    %v1324 = vshrl.u32 %v1323, 7
    %v1325 = vsub.s32 0, %v1324
    %v1326 = vrot.slane %v1013, %v1325
    %v1327 = vlaneseq
    %v1328 = vshrl.u32 %v1327, 7
    %v1329 = vsub.s32 0, %v1328
    %v1330 = vrot.slane %v1027, %v1329
    %v1331 = vlaneseq
    %v1332 = vshrl.u32 %v1331, 7
    %v1333 = vsub.s32 0, %v1332
    %v1334 = vrot.slane %v1029, %v1333
    %v1335 = vlaneseq
    %v1336 = vshrl.u32 %v1335, 7
    %v1337 = vsub.s32 0, %v1336
    %v1338 = vrot.slane %v1031, %v1337
    %v1339 = vlaneseq
    %v1340 = vshrl.u32 %v1339, 7
    %v1341 = vsub.s32 0, %v1340
    %v1342 = vrot.slane %v1055, %v1341
    %v1343 = vlaneseq
    %v1344 = vshrl.u32 %v1343, 7
    %v1345 = vsub.s32 0, %v1344
    %v1346 = vrot.slane %v1069, %v1345
    %v1347 = vlaneseq
    %v1348 = vshrl.u32 %v1347, 7
    %v1349 = vsub.s32 0, %v1348
    %v1350 = vrot.slane %v1077, %v1349
    %v1351 = vlaneseq
    %v1352 = vshrl.u32 %v1351, 7
    %v1353 = vsub.s32 0, %v1352
    %v1354 = vrot.slane %v1079, %v1353
    %v1355 = vlaneseq
    %v1356 = vshrl.u32 %v1355, 7
    %v1357 = vsub.s32 0, %v1356
    %v1358 = vrot.slane %v1062, %v1357
    %v1359 = vlaneseq
    %v1360 = vshrl.u32 %v1359, 7
    %v1361 = vsub.s32 0, %v1360
    %v1362 = vrot.slane %v1076, %v1361
    %v1363 = vlaneseq
    %v1364 = vshrl.u32 %v1363, 7
    %v1365 = vsub.s32 0, %v1364
    %v1366 = vrot.slane %v1078, %v1365
    %v1367 = vlaneseq
    %v1368 = vshrl.u32 %v1367, 7
    %v1369 = vsub.s32 0, %v1368
    %v1370 = vrot.slane %v1080, %v1369
    %v1371 = vlaneseq
    %v1372 = vshrl.u32 %v1371, 7
    %v1373 = vsub.s32 0, %v1372
    %v1374 = vrot.slane %v1104, %v1373
    %v1375 = vlaneseq
    %v1376 = vshrl.u32 %v1375, 7
    %v1377 = vsub.s32 0, %v1376
    %v1378 = vrot.slane %v1118, %v1377
    %v1379 = vlaneseq
    %v1380 = vshrl.u32 %v1379, 7
    %v1381 = vsub.s32 0, %v1380
    %v1382 = vrot.slane %v1126, %v1381
    %v1383 = vlaneseq
    %v1384 = vshrl.u32 %v1383, 7
    %v1385 = vsub.s32 0, %v1384
    %v1386 = vrot.slane %v1128, %v1385
    %v1387 = vlaneseq
    %v1388 = vshrl.u32 %v1387, 7
    %v1389 = vsub.s32 0, %v1388
    %v1390 = vrot.slane %v1111, %v1389
    %v1391 = vlaneseq
    %v1392 = vshrl.u32 %v1391, 7
    %v1393 = vsub.s32 0, %v1392
    %v1394 = vrot.slane %v1125, %v1393
    %v1395 = vlaneseq
    %v1396 = vshrl.u32 %v1395, 7
    %v1397 = vsub.s32 0, %v1396
    %v1398 = vrot.slane %v1127, %v1397
    %v1399 = vlaneseq
    %v1400 = vshrl.u32 %v1399, 7
    %v1401 = vsub.s32 0, %v1400
    %v1402 = vrot.slane %v1129, %v1401
    %v1403 = vlaneseq
    %v1404 = vshrl.u32 %v1403, 7
    %v1405 = vsub.s32 0, %v1404
    %v1406 = vrot.slane %v1153, %v1405
    %v1407 = vlaneseq
    %v1408 = vshrl.u32 %v1407, 7
    %v1409 = vsub.s32 0, %v1408
    %v1410 = vrot.slane %v1167, %v1409
    %v1411 = vlaneseq
    %v1412 = vshrl.u32 %v1411, 7
    %v1413 = vsub.s32 0, %v1412
    %v1414 = vrot.slane %v1175, %v1413
    %v1415 = vlaneseq
    %v1416 = vshrl.u32 %v1415, 7
    %v1417 = vsub.s32 0, %v1416
    %v1418 = vrot.slane %v1177, %v1417
    %v1419 = vlaneseq
    %v1420 = vshrl.u32 %v1419, 7
    %v1421 = vsub.s32 0, %v1420
    %v1422 = vrot.slane %v1160, %v1421
    %v1423 = vlaneseq
    %v1424 = vshrl.u32 %v1423, 7
    %v1425 = vsub.s32 0, %v1424
    %v1426 = vrot.slane %v1174, %v1425
    %v1427 = vlaneseq
    %v1428 = vshrl.u32 %v1427, 7
    %v1429 = vsub.s32 0, %v1428
    %v1430 = vrot.slane %v1176, %v1429
    %v1431 = vlaneseq
    %v1432 = vshrl.u32 %v1431, 7
    %v1433 = vsub.s32 0, %v1432
    %v1434 = vrot.slane %v1178, %v1433
    %1507 = vrot.lane.b32.xlu0 %v317, 96
    %v1508 = vpop.permute.xlu0 %1507
    %1509 = vrot.lane.b32.xlu0 %v320, 96
    %v1510 = vpop.permute.xlu0 %1509
    %1511 = vrot.lane.b32.xlu0 %v325, 96
    %v1512 = vpop.permute.xlu0 %1511
    %1513 = vrot.lane.b32.xlu0 %v328, 96
    %v1514 = vpop.permute.xlu0 %1513
    %1515 = vrot.lane.b32.xlu0 %v333, 96
    %v1516 = vpop.permute.xlu0 %1515
    %1517 = vrot.lane.b32.xlu0 %v336, 96
    %v1518 = vpop.permute.xlu0 %1517
    %1519 = vrot.lane.b32.xlu0 %v341, 96
    %v1520 = vpop.permute.xlu0 %1519
    %1521 = vrot.lane.b32.xlu0 %v344, 96
    %v1522 = vpop.permute.xlu0 %1521
    %v1531 = vmul.f32 %v1182, %v1508
    %v1532 = vmul.f32 %v1186, %v1508
    %v1533 = vmul.f32 %v1190, %v1508
    %v1534 = vmul.f32 %v1194, %v1508
    %v1535 = vmul.f32 %v1198, %v1508
    %v1536 = vmul.f32 %v1202, %v1508
    %v1537 = vmul.f32 %v1206, %v1508
    %v1538 = vmul.f32 %v1210, %v1508
    %v1539 = vmul.f32 %v1214, %v1510
    %v1540 = vmul.f32 %v1218, %v1510
    %v1541 = vmul.f32 %v1222, %v1510
    %v1542 = vmul.f32 %v1226, %v1510
    %v1543 = vmul.f32 %v1230, %v1510
    %v1544 = vmul.f32 %v1234, %v1510
    %v1545 = vmul.f32 %v1238, %v1510
    %v1546 = vmul.f32 %v1242, %v1510
    %v1547 = vmul.f32 %v1246, %v1512
    %v1548 = vmul.f32 %v1250, %v1512
    %v1549 = vmul.f32 %v1254, %v1512
    %v1550 = vmul.f32 %v1258, %v1512
    %v1551 = vmul.f32 %v1262, %v1512
    %v1552 = vmul.f32 %v1266, %v1512
    %v1553 = vmul.f32 %v1270, %v1512
    %v1554 = vmul.f32 %v1274, %v1512
    %v1555 = vmul.f32 %v1278, %v1514
    %v1556 = vmul.f32 %v1282, %v1514
    %v1557 = vmul.f32 %v1286, %v1514
    %v1558 = vmul.f32 %v1290, %v1514
    %v1559 = vmul.f32 %v1294, %v1514
    %v1560 = vmul.f32 %v1298, %v1514
    %v1561 = vmul.f32 %v1302, %v1514
    %v1562 = vmul.f32 %v1306, %v1514
    %v1563 = vmul.f32 %v1310, %v1516
    %v1564 = vmul.f32 %v1314, %v1516
    %v1565 = vmul.f32 %v1318, %v1516
    %v1566 = vmul.f32 %v1322, %v1516
    %v1567 = vmul.f32 %v1326, %v1516
    %v1568 = vmul.f32 %v1330, %v1516
    %v1569 = vmul.f32 %v1334, %v1516
    %v1570 = vmul.f32 %v1338, %v1516
    %v1571 = vmul.f32 %v1342, %v1518
    %v1572 = vmul.f32 %v1346, %v1518
    %v1573 = vmul.f32 %v1350, %v1518
    %v1574 = vmul.f32 %v1354, %v1518
    %v1575 = vmul.f32 %v1358, %v1518
    %v1576 = vmul.f32 %v1362, %v1518
    %v1577 = vmul.f32 %v1366, %v1518
    %v1578 = vmul.f32 %v1370, %v1518
    %v1579 = vmul.f32 %v1374, %v1520
    %v1580 = vmul.f32 %v1378, %v1520
    %v1581 = vmul.f32 %v1382, %v1520
    %v1582 = vmul.f32 %v1386, %v1520
    %v1583 = vmul.f32 %v1390, %v1520
    %v1584 = vmul.f32 %v1394, %v1520
    %v1585 = vmul.f32 %v1398, %v1520
    %v1586 = vmul.f32 %v1402, %v1520
    %v1587 = vmul.f32 %v1406, %v1522
    %v1588 = vmul.f32 %v1410, %v1522
    %v1589 = vmul.f32 %v1414, %v1522
    %v1590 = vmul.f32 %v1418, %v1522
    %v1591 = vmul.f32 %v1422, %v1522
    %v1592 = vmul.f32 %v1426, %v1522
    %v1593 = vmul.f32 %v1430, %v1522
    %v1594 = vmul.f32 %v1434, %v1522
    %v1595 = vsel %vm374, %v1531, 0.0
    %v1596 = vsel %vm374, %v1539, 0.0
    %v1597 = vadd.f32 %v1595, %v1596
    %v1598 = vsel %vm374, %v1547, 0.0
    %v1599 = vadd.f32 %v1597, %v1598
    %v1600 = vsel %vm374, %v1555, 0.0
    %v1601 = vadd.f32 %v1599, %v1600
    %v1602 = vsel %vm374, %v1563, 0.0
    %v1603 = vadd.f32 %v1601, %v1602
    %v1604 = vsel %vm374, %v1571, 0.0
    %v1605 = vadd.f32 %v1603, %v1604
    %v1606 = vsel %vm374, %v1579, 0.0
    %v1607 = vadd.f32 %v1605, %v1606
    %v1608 = vsel %vm374, %v1587, 0.0
    %v1609 = vadd.f32 %v1607, %v1608
    %v1610 = vsel %vm374, %v1532, 0.0
    %v1611 = vsel %vm374, %v1540, 0.0
    %v1612 = vadd.f32 %v1610, %v1611
    %v1613 = vsel %vm374, %v1548, 0.0
    %v1614 = vadd.f32 %v1612, %v1613
    %v1615 = vsel %vm374, %v1556, 0.0
    %v1616 = vadd.f32 %v1614, %v1615
    %v1617 = vsel %vm374, %v1564, 0.0
    %v1618 = vadd.f32 %v1616, %v1617
    %v1619 = vsel %vm374, %v1572, 0.0
    %v1620 = vadd.f32 %v1618, %v1619
    %v1621 = vsel %vm374, %v1580, 0.0
    %v1622 = vadd.f32 %v1620, %v1621
    %v1623 = vsel %vm374, %v1588, 0.0
    %v1624 = vadd.f32 %v1622, %v1623
    %v1625 = vsel %vm374, %v1533, 0.0
    %v1626 = vsel %vm374, %v1541, 0.0
    %v1627 = vadd.f32 %v1625, %v1626
    %v1628 = vsel %vm374, %v1549, 0.0
    %v1629 = vadd.f32 %v1627, %v1628
    %v1630 = vsel %vm374, %v1557, 0.0
    %v1631 = vadd.f32 %v1629, %v1630
    %v1632 = vsel %vm374, %v1565, 0.0
    %v1633 = vadd.f32 %v1631, %v1632
    %v1634 = vsel %vm374, %v1573, 0.0
    %v1635 = vadd.f32 %v1633, %v1634
    %v1636 = vsel %vm374, %v1581, 0.0
    %v1637 = vadd.f32 %v1635, %v1636
    %v1638 = vsel %vm374, %v1589, 0.0
    %v1639 = vadd.f32 %v1637, %v1638
    %v1640 = vsel %vm374, %v1534, 0.0
    %v1641 = vsel %vm374, %v1542, 0.0
    %v1642 = vadd.f32 %v1640, %v1641
    %v1643 = vsel %vm374, %v1550, 0.0
    %v1644 = vadd.f32 %v1642, %v1643
    %v1645 = vsel %vm374, %v1558, 0.0
    %v1646 = vadd.f32 %v1644, %v1645
    %v1647 = vsel %vm374, %v1566, 0.0
    %v1648 = vadd.f32 %v1646, %v1647
    %v1649 = vsel %vm374, %v1574, 0.0
    %v1650 = vadd.f32 %v1648, %v1649
    %v1651 = vsel %vm374, %v1582, 0.0
    %v1652 = vadd.f32 %v1650, %v1651
    %v1653 = vsel %vm374, %v1590, 0.0
    %v1654 = vadd.f32 %v1652, %v1653
    %v1655 = vsel %vm374, %v1535, 0.0
    %v1656 = vsel %vm374, %v1543, 0.0
    %v1657 = vadd.f32 %v1655, %v1656
    %v1658 = vsel %vm374, %v1551, 0.0
    %v1659 = vadd.f32 %v1657, %v1658
    %v1660 = vsel %vm374, %v1559, 0.0
    %v1661 = vadd.f32 %v1659, %v1660
    %v1662 = vsel %vm374, %v1567, 0.0
    %v1663 = vadd.f32 %v1661, %v1662
    %v1664 = vsel %vm374, %v1575, 0.0
    %v1665 = vadd.f32 %v1663, %v1664
    %v1666 = vsel %vm374, %v1583, 0.0
    %v1667 = vadd.f32 %v1665, %v1666
    %v1668 = vsel %vm374, %v1591, 0.0
    %v1669 = vadd.f32 %v1667, %v1668
    %v1670 = vsel %vm374, %v1536, 0.0
    %v1671 = vsel %vm374, %v1544, 0.0
    %v1672 = vadd.f32 %v1670, %v1671
    %v1673 = vsel %vm374, %v1552, 0.0
    %v1674 = vadd.f32 %v1672, %v1673
    %v1675 = vsel %vm374, %v1560, 0.0
    %v1676 = vadd.f32 %v1674, %v1675
    %v1677 = vsel %vm374, %v1568, 0.0
    %v1678 = vadd.f32 %v1676, %v1677
    %v1679 = vsel %vm374, %v1576, 0.0
    %v1680 = vadd.f32 %v1678, %v1679
    %v1681 = vsel %vm374, %v1584, 0.0
    %v1682 = vadd.f32 %v1680, %v1681
    %v1683 = vsel %vm374, %v1592, 0.0
    %v1684 = vadd.f32 %v1682, %v1683
    %v1685 = vsel %vm374, %v1537, 0.0
    %v1686 = vsel %vm374, %v1545, 0.0
    %v1687 = vadd.f32 %v1685, %v1686
    %v1688 = vsel %vm374, %v1553, 0.0
    %v1689 = vadd.f32 %v1687, %v1688
    %v1690 = vsel %vm374, %v1561, 0.0
    %v1691 = vadd.f32 %v1689, %v1690
    %v1692 = vsel %vm374, %v1569, 0.0
    %v1693 = vadd.f32 %v1691, %v1692
    %v1694 = vsel %vm374, %v1577, 0.0
    %v1695 = vadd.f32 %v1693, %v1694
    %v1696 = vsel %vm374, %v1585, 0.0
    %v1697 = vadd.f32 %v1695, %v1696
    %v1698 = vsel %vm374, %v1593, 0.0
    %v1699 = vadd.f32 %v1697, %v1698
    %v1700 = vsel %vm374, %v1538, 0.0
    %v1701 = vsel %vm374, %v1546, 0.0
    %v1702 = vadd.f32 %v1700, %v1701
    %v1703 = vsel %vm374, %v1554, 0.0
    %v1704 = vadd.f32 %v1702, %v1703
    %v1705 = vsel %vm374, %v1562, 0.0
    %v1706 = vadd.f32 %v1704, %v1705
    %v1707 = vsel %vm374, %v1570, 0.0
    %v1708 = vadd.f32 %v1706, %v1707
    %v1709 = vsel %vm374, %v1578, 0.0
    %v1710 = vadd.f32 %v1708, %v1709
    %v1711 = vsel %vm374, %v1586, 0.0
    %v1712 = vadd.f32 %v1710, %v1711
    %v1713 = vsel %vm374, %v1594, 0.0
    %v1714 = vadd.f32 %v1712, %v1713
    %v1715 = vadd.f32 %v1609, 0.0
    %v1716 = vadd.f32 %v1624, 0.0
    %v1717 = vadd.f32 %v1639, 0.0
    %v1718 = vadd.f32 %v1654, 0.0
    %v1719 = vadd.f32 %v1669, 0.0
    %v1720 = vadd.f32 %v1684, 0.0
    %v1721 = vadd.f32 %v1699, 0.0
    %v1722 = vadd.f32 %v1714, 0.0
    %1724 = vrot.lane.b32.xlu0 %v355, 120
    %v1725 = vpop.permute.xlu0 %1724
    %1726 = vrot.lane.b32.xlu0 %v363, 88
    %v1727 = vpop.permute.xlu0 %1726
    %v1729 = vsel %vm374, %v1725, 0
    %v1732 = vsel %vm374, %v1727, 0
    %1734 = vmatprep.subr.bf16.mxu0 0
    %1735 = vmatpush1.bf16.xpose.msra.mxu0 %v1732
    %1736 = vmatprep.subr.bf16.mxu0 0
    %1737 = vmatpush1.bf16.xpose.msra.mxu0 0
    %1738 = vmatprep.subr.bf16.mxu0 0
    %1739 = vmatpush1.bf16.xpose.msra.mxu0 0
    %1740 = vmatprep.subr.bf16.mxu0 0
    %1741 = vmatpush1.bf16.xpose.msra.mxu0 0
    %1742 = vmatprep.subr.bf16.mxu0 0
    %1743 = vmatpush1.bf16.xpose.msra.mxu0 0
    %1744 = vmatprep.subr.bf16.mxu0 0
    %1745 = vmatpush1.bf16.xpose.msra.mxu0 0
    %1746 = vmatprep.subr.bf16.mxu0 0
    %1747 = vmatpush1.bf16.xpose.msra.mxu0 0
    %1748 = vmatprep.subr.bf16.mxu0 0
    %1749 = vmatpush1.bf16.xpose.msra.mxu0 0
    %1750 = vmatprep.subr.bf16.mxu0 0
    %1751 = vmatpush1.bf16.xpose.msra.mxu0 0
    %1752 = vmatprep.subr.bf16.mxu0 0
    %1753 = vmatpush1.bf16.xpose.msra.mxu0 0
    %1754 = vmatprep.subr.bf16.mxu0 0
    %1755 = vmatpush1.bf16.xpose.msra.mxu0 0
    %1756 = vmatprep.subr.bf16.mxu0 0
    %1757 = vmatpush1.bf16.xpose.msra.mxu0 0
    %1758 = vmatprep.subr.bf16.mxu0 0
    %1759 = vmatpush1.bf16.xpose.msra.mxu0 0
    %1760 = vmatprep.subr.bf16.mxu0 0
    %1761 = vmatpush1.bf16.xpose.msra.mxu0 0
    %1762 = vmatprep.subr.bf16.mxu0 0
    %1763 = vmatpush1.bf16.xpose.msra.mxu0 0
    %1764 = vmatprep.subr.bf16.mxu0 0
    %1765 = vmatpush1.bf16.xpose.msra.mxu0 0
    %1766 = vmatprep.mubr.bf16.mxu0 0
    %1767 = vmatmul.mubr.bf16.gmra.mrb[0].mxu0 %v1729
    %v1768 = vpop.f32.mrb[0].mxu0
    %v1769 = vadd.f32 0.0, %v1768
    %v1770 = vpop.f32.mrb[0].mxu0
    %v1771 = vpop.f32.mrb[0].mxu0
    %v1772 = vpop.f32.mrb[0].mxu0
    %1773 = vdwg.mxu0
    %1775 = vrot.lane.b32.xlu0 %v356, 120
    %v1776 = vpop.permute.xlu0 %1775
    %1777 = vrot.lane.b32.xlu0 %v364, 88
    %v1778 = vpop.permute.xlu0 %1777
    %v1780 = vsel %vm374, %v1776, 0
    %v1783 = vsel %vm374, %v1778, 0
    %1785 = vmatprep.subr.bf16.mxu0 0
    %1786 = vmatpush1.bf16.xpose.msra.mxu0 %v1783
    %1787 = vmatprep.subr.bf16.mxu0 0
    %1788 = vmatpush1.bf16.xpose.msra.mxu0 0
    %1789 = vmatprep.subr.bf16.mxu0 0
    %1790 = vmatpush1.bf16.xpose.msra.mxu0 0
    %1791 = vmatprep.subr.bf16.mxu0 0
    %1792 = vmatpush1.bf16.xpose.msra.mxu0 0
    %1793 = vmatprep.subr.bf16.mxu0 0
    %1794 = vmatpush1.bf16.xpose.msra.mxu0 0
    %1795 = vmatprep.subr.bf16.mxu0 0
    %1796 = vmatpush1.bf16.xpose.msra.mxu0 0
    %1797 = vmatprep.subr.bf16.mxu0 0
    %1798 = vmatpush1.bf16.xpose.msra.mxu0 0
    %1799 = vmatprep.subr.bf16.mxu0 0
    %1800 = vmatpush1.bf16.xpose.msra.mxu0 0
    %1801 = vmatprep.subr.bf16.mxu0 0
    %1802 = vmatpush1.bf16.xpose.msra.mxu0 0
    %1803 = vmatprep.subr.bf16.mxu0 0
    %1804 = vmatpush1.bf16.xpose.msra.mxu0 0
    %1805 = vmatprep.subr.bf16.mxu0 0
    %1806 = vmatpush1.bf16.xpose.msra.mxu0 0
    %1807 = vmatprep.subr.bf16.mxu0 0
    %1808 = vmatpush1.bf16.xpose.msra.mxu0 0
    %1809 = vmatprep.subr.bf16.mxu0 0
    %1810 = vmatpush1.bf16.xpose.msra.mxu0 0
    %1811 = vmatprep.subr.bf16.mxu0 0
    %1812 = vmatpush1.bf16.xpose.msra.mxu0 0
    %1813 = vmatprep.subr.bf16.mxu0 0
    %1814 = vmatpush1.bf16.xpose.msra.mxu0 0
    %1815 = vmatprep.subr.bf16.mxu0 0
    %1816 = vmatpush1.bf16.xpose.msra.mxu0 0
    %1817 = vmatprep.mubr.bf16.mxu0 0
    %1818 = vmatmul.mubr.bf16.gmra.mrb[0].mxu0 %v1780
    %v1819 = vpop.f32.mrb[0].mxu0
    %v1820 = vadd.f32 0.0, %v1819
    %v1821 = vpop.f32.mrb[0].mxu0
    %v1822 = vpop.f32.mrb[0].mxu0
    %v1823 = vpop.f32.mrb[0].mxu0
    %1824 = vdwg.mxu0
    %1826 = vrot.lane.b32.xlu0 %v357, 120
    %v1827 = vpop.permute.xlu0 %1826
    %1828 = vrot.lane.b32.xlu0 %v365, 88
    %v1829 = vpop.permute.xlu0 %1828
    %v1831 = vsel %vm374, %v1827, 0
    %v1834 = vsel %vm374, %v1829, 0
    %1836 = vmatprep.subr.bf16.mxu0 0
    %1837 = vmatpush1.bf16.xpose.msra.mxu0 %v1834
    %1838 = vmatprep.subr.bf16.mxu0 0
    %1839 = vmatpush1.bf16.xpose.msra.mxu0 0
    %1840 = vmatprep.subr.bf16.mxu0 0
    %1841 = vmatpush1.bf16.xpose.msra.mxu0 0
    %1842 = vmatprep.subr.bf16.mxu0 0
    %1843 = vmatpush1.bf16.xpose.msra.mxu0 0
    %1844 = vmatprep.subr.bf16.mxu0 0
    %1845 = vmatpush1.bf16.xpose.msra.mxu0 0
    %1846 = vmatprep.subr.bf16.mxu0 0
    %1847 = vmatpush1.bf16.xpose.msra.mxu0 0
    %1848 = vmatprep.subr.bf16.mxu0 0
    %1849 = vmatpush1.bf16.xpose.msra.mxu0 0
    %1850 = vmatprep.subr.bf16.mxu0 0
    %1851 = vmatpush1.bf16.xpose.msra.mxu0 0
    %1852 = vmatprep.subr.bf16.mxu0 0
    %1853 = vmatpush1.bf16.xpose.msra.mxu0 0
    %1854 = vmatprep.subr.bf16.mxu0 0
    %1855 = vmatpush1.bf16.xpose.msra.mxu0 0
    %1856 = vmatprep.subr.bf16.mxu0 0
    %1857 = vmatpush1.bf16.xpose.msra.mxu0 0
    %1858 = vmatprep.subr.bf16.mxu0 0
    %1859 = vmatpush1.bf16.xpose.msra.mxu0 0
    %1860 = vmatprep.subr.bf16.mxu0 0
    %1861 = vmatpush1.bf16.xpose.msra.mxu0 0
    %1862 = vmatprep.subr.bf16.mxu0 0
    %1863 = vmatpush1.bf16.xpose.msra.mxu0 0
    %1864 = vmatprep.subr.bf16.mxu0 0
    %1865 = vmatpush1.bf16.xpose.msra.mxu0 0
    %1866 = vmatprep.subr.bf16.mxu0 0
    %1867 = vmatpush1.bf16.xpose.msra.mxu0 0
    %1868 = vmatprep.mubr.bf16.mxu0 0
    %1869 = vmatmul.mubr.bf16.gmra.mrb[0].mxu0 %v1831
    %v1870 = vpop.f32.mrb[0].mxu0
    %v1871 = vadd.f32 0.0, %v1870
    %v1872 = vpop.f32.mrb[0].mxu0
    %v1873 = vpop.f32.mrb[0].mxu0
    %v1874 = vpop.f32.mrb[0].mxu0
    %1875 = vdwg.mxu0
    %1877 = vrot.lane.b32.xlu0 %v358, 120
    %v1878 = vpop.permute.xlu0 %1877
    %1879 = vrot.lane.b32.xlu0 %v366, 88
    %v1880 = vpop.permute.xlu0 %1879
    %v1882 = vsel %vm374, %v1878, 0
    %v1885 = vsel %vm374, %v1880, 0
    %1887 = vmatprep.subr.bf16.mxu0 0
    %1888 = vmatpush1.bf16.xpose.msra.mxu0 %v1885
    %1889 = vmatprep.subr.bf16.mxu0 0
    %1890 = vmatpush1.bf16.xpose.msra.mxu0 0
    %1891 = vmatprep.subr.bf16.mxu0 0
    %1892 = vmatpush1.bf16.xpose.msra.mxu0 0
    %1893 = vmatprep.subr.bf16.mxu0 0
    %1894 = vmatpush1.bf16.xpose.msra.mxu0 0
    %1895 = vmatprep.subr.bf16.mxu0 0
    %1896 = vmatpush1.bf16.xpose.msra.mxu0 0
    %1897 = vmatprep.subr.bf16.mxu0 0
    %1898 = vmatpush1.bf16.xpose.msra.mxu0 0
    %1899 = vmatprep.subr.bf16.mxu0 0
    %1900 = vmatpush1.bf16.xpose.msra.mxu0 0
    %1901 = vmatprep.subr.bf16.mxu0 0
    %1902 = vmatpush1.bf16.xpose.msra.mxu0 0
    %1903 = vmatprep.subr.bf16.mxu0 0
    %1904 = vmatpush1.bf16.xpose.msra.mxu0 0
    %1905 = vmatprep.subr.bf16.mxu0 0
    %1906 = vmatpush1.bf16.xpose.msra.mxu0 0
    %1907 = vmatprep.subr.bf16.mxu0 0
    %1908 = vmatpush1.bf16.xpose.msra.mxu0 0
    %1909 = vmatprep.subr.bf16.mxu0 0
    %1910 = vmatpush1.bf16.xpose.msra.mxu0 0
    %1911 = vmatprep.subr.bf16.mxu0 0
    %1912 = vmatpush1.bf16.xpose.msra.mxu0 0
    %1913 = vmatprep.subr.bf16.mxu0 0
    %1914 = vmatpush1.bf16.xpose.msra.mxu0 0
    %1915 = vmatprep.subr.bf16.mxu0 0
    %1916 = vmatpush1.bf16.xpose.msra.mxu0 0
    %1917 = vmatprep.subr.bf16.mxu0 0
    %1918 = vmatpush1.bf16.xpose.msra.mxu0 0
    %1919 = vmatprep.mubr.bf16.mxu0 0
    %1920 = vmatmul.mubr.bf16.gmra.mrb[0].mxu0 %v1882
    %v1921 = vpop.f32.mrb[0].mxu0
    %v1922 = vadd.f32 0.0, %v1921
    %v1923 = vpop.f32.mrb[0].mxu0
    %v1924 = vpop.f32.mrb[0].mxu0
    %v1925 = vpop.f32.mrb[0].mxu0
    %1926 = vdwg.mxu0
    %1928 = vrot.lane.b32.xlu0 %v359, 120
    %v1929 = vpop.permute.xlu0 %1928
    %1930 = vrot.lane.b32.xlu0 %v367, 88
    %v1931 = vpop.permute.xlu0 %1930
    %v1933 = vsel %vm374, %v1929, 0
    %v1936 = vsel %vm374, %v1931, 0
    %1938 = vmatprep.subr.bf16.mxu0 0
    %1939 = vmatpush1.bf16.xpose.msra.mxu0 %v1936
    %1940 = vmatprep.subr.bf16.mxu0 0
    %1941 = vmatpush1.bf16.xpose.msra.mxu0 0
    %1942 = vmatprep.subr.bf16.mxu0 0
    %1943 = vmatpush1.bf16.xpose.msra.mxu0 0
    %1944 = vmatprep.subr.bf16.mxu0 0
    %1945 = vmatpush1.bf16.xpose.msra.mxu0 0
    %1946 = vmatprep.subr.bf16.mxu0 0
    %1947 = vmatpush1.bf16.xpose.msra.mxu0 0
    %1948 = vmatprep.subr.bf16.mxu0 0
    %1949 = vmatpush1.bf16.xpose.msra.mxu0 0
    %1950 = vmatprep.subr.bf16.mxu0 0
    %1951 = vmatpush1.bf16.xpose.msra.mxu0 0
    %1952 = vmatprep.subr.bf16.mxu0 0
    %1953 = vmatpush1.bf16.xpose.msra.mxu0 0
    %1954 = vmatprep.subr.bf16.mxu0 0
    %1955 = vmatpush1.bf16.xpose.msra.mxu0 0
    %1956 = vmatprep.subr.bf16.mxu0 0
    %1957 = vmatpush1.bf16.xpose.msra.mxu0 0
    %1958 = vmatprep.subr.bf16.mxu0 0
    %1959 = vmatpush1.bf16.xpose.msra.mxu0 0
    %1960 = vmatprep.subr.bf16.mxu0 0
    %1961 = vmatpush1.bf16.xpose.msra.mxu0 0
    %1962 = vmatprep.subr.bf16.mxu0 0
    %1963 = vmatpush1.bf16.xpose.msra.mxu0 0
    %1964 = vmatprep.subr.bf16.mxu0 0
    %1965 = vmatpush1.bf16.xpose.msra.mxu0 0
    %1966 = vmatprep.subr.bf16.mxu0 0
    %1967 = vmatpush1.bf16.xpose.msra.mxu0 0
    %1968 = vmatprep.subr.bf16.mxu0 0
    %1969 = vmatpush1.bf16.xpose.msra.mxu0 0
    %1970 = vmatprep.mubr.bf16.mxu0 0
    %1971 = vmatmul.mubr.bf16.gmra.mrb[0].mxu0 %v1933
    %v1972 = vpop.f32.mrb[0].mxu0
    %v1973 = vadd.f32 0.0, %v1972
    %v1974 = vpop.f32.mrb[0].mxu0
    %v1975 = vpop.f32.mrb[0].mxu0
    %v1976 = vpop.f32.mrb[0].mxu0
    %1977 = vdwg.mxu0
    %1979 = vrot.lane.b32.xlu0 %v360, 120
    %v1980 = vpop.permute.xlu0 %1979
    %1981 = vrot.lane.b32.xlu0 %v368, 88
    %v1982 = vpop.permute.xlu0 %1981
    %v1984 = vsel %vm374, %v1980, 0
    %v1987 = vsel %vm374, %v1982, 0
    %1989 = vmatprep.subr.bf16.mxu0 0
    %1990 = vmatpush1.bf16.xpose.msra.mxu0 %v1987
    %1991 = vmatprep.subr.bf16.mxu0 0
    %1992 = vmatpush1.bf16.xpose.msra.mxu0 0
    %1993 = vmatprep.subr.bf16.mxu0 0
    %1994 = vmatpush1.bf16.xpose.msra.mxu0 0
    %1995 = vmatprep.subr.bf16.mxu0 0
    %1996 = vmatpush1.bf16.xpose.msra.mxu0 0
    %1997 = vmatprep.subr.bf16.mxu0 0
    %1998 = vmatpush1.bf16.xpose.msra.mxu0 0
    %1999 = vmatprep.subr.bf16.mxu0 0
    %2000 = vmatpush1.bf16.xpose.msra.mxu0 0
    %2001 = vmatprep.subr.bf16.mxu0 0
    %2002 = vmatpush1.bf16.xpose.msra.mxu0 0
    %2003 = vmatprep.subr.bf16.mxu0 0
    %2004 = vmatpush1.bf16.xpose.msra.mxu0 0
    %2005 = vmatprep.subr.bf16.mxu0 0
    %2006 = vmatpush1.bf16.xpose.msra.mxu0 0
    %2007 = vmatprep.subr.bf16.mxu0 0
    %2008 = vmatpush1.bf16.xpose.msra.mxu0 0
    %2009 = vmatprep.subr.bf16.mxu0 0
    %2010 = vmatpush1.bf16.xpose.msra.mxu0 0
    %2011 = vmatprep.subr.bf16.mxu0 0
    %2012 = vmatpush1.bf16.xpose.msra.mxu0 0
    %2013 = vmatprep.subr.bf16.mxu0 0
    %2014 = vmatpush1.bf16.xpose.msra.mxu0 0
    %2015 = vmatprep.subr.bf16.mxu0 0
    %2016 = vmatpush1.bf16.xpose.msra.mxu0 0
    %2017 = vmatprep.subr.bf16.mxu0 0
    %2018 = vmatpush1.bf16.xpose.msra.mxu0 0
    %2019 = vmatprep.subr.bf16.mxu0 0
    %2020 = vmatpush1.bf16.xpose.msra.mxu0 0
    %2021 = vmatprep.mubr.bf16.mxu0 0
    %2022 = vmatmul.mubr.bf16.gmra.mrb[0].mxu0 %v1984
    %v2023 = vpop.f32.mrb[0].mxu0
    %v2024 = vadd.f32 0.0, %v2023
    %v2025 = vpop.f32.mrb[0].mxu0
    %v2026 = vpop.f32.mrb[0].mxu0
    %v2027 = vpop.f32.mrb[0].mxu0
    %2028 = vdwg.mxu0
    %2030 = vrot.lane.b32.xlu0 %v361, 120
    %v2031 = vpop.permute.xlu0 %2030
    %2032 = vrot.lane.b32.xlu0 %v369, 88
    %v2033 = vpop.permute.xlu0 %2032
    %v2035 = vsel %vm374, %v2031, 0
    %v2038 = vsel %vm374, %v2033, 0
    %2040 = vmatprep.subr.bf16.mxu0 0
    %2041 = vmatpush1.bf16.xpose.msra.mxu0 %v2038
    %2042 = vmatprep.subr.bf16.mxu0 0
    %2043 = vmatpush1.bf16.xpose.msra.mxu0 0
    %2044 = vmatprep.subr.bf16.mxu0 0
    %2045 = vmatpush1.bf16.xpose.msra.mxu0 0
    %2046 = vmatprep.subr.bf16.mxu0 0
    %2047 = vmatpush1.bf16.xpose.msra.mxu0 0
    %2048 = vmatprep.subr.bf16.mxu0 0
    %2049 = vmatpush1.bf16.xpose.msra.mxu0 0
    %2050 = vmatprep.subr.bf16.mxu0 0
    %2051 = vmatpush1.bf16.xpose.msra.mxu0 0
    %2052 = vmatprep.subr.bf16.mxu0 0
    %2053 = vmatpush1.bf16.xpose.msra.mxu0 0
    %2054 = vmatprep.subr.bf16.mxu0 0
    %2055 = vmatpush1.bf16.xpose.msra.mxu0 0
    %2056 = vmatprep.subr.bf16.mxu0 0
    %2057 = vmatpush1.bf16.xpose.msra.mxu0 0
    %2058 = vmatprep.subr.bf16.mxu0 0
    %2059 = vmatpush1.bf16.xpose.msra.mxu0 0
    %2060 = vmatprep.subr.bf16.mxu0 0
    %2061 = vmatpush1.bf16.xpose.msra.mxu0 0
    %2062 = vmatprep.subr.bf16.mxu0 0
    %2063 = vmatpush1.bf16.xpose.msra.mxu0 0
    %2064 = vmatprep.subr.bf16.mxu0 0
    %2065 = vmatpush1.bf16.xpose.msra.mxu0 0
    %2066 = vmatprep.subr.bf16.mxu0 0
    %2067 = vmatpush1.bf16.xpose.msra.mxu0 0
    %2068 = vmatprep.subr.bf16.mxu0 0
    %2069 = vmatpush1.bf16.xpose.msra.mxu0 0
    %2070 = vmatprep.subr.bf16.mxu0 0
    %2071 = vmatpush1.bf16.xpose.msra.mxu0 0
    %2072 = vmatprep.mubr.bf16.mxu0 0
    %2073 = vmatmul.mubr.bf16.gmra.mrb[0].mxu0 %v2035
    %v2074 = vpop.f32.mrb[0].mxu0
    %v2075 = vadd.f32 0.0, %v2074
    %v2076 = vpop.f32.mrb[0].mxu0
    %v2077 = vpop.f32.mrb[0].mxu0
    %v2078 = vpop.f32.mrb[0].mxu0
    %2079 = vdwg.mxu0
    %2081 = vrot.lane.b32.xlu0 %v362, 120
    %v2082 = vpop.permute.xlu0 %2081
    %2083 = vrot.lane.b32.xlu0 %v370, 88
    %v2084 = vpop.permute.xlu0 %2083
    %v2086 = vsel %vm374, %v2082, 0
    %v2089 = vsel %vm374, %v2084, 0
    %2091 = vmatprep.subr.bf16.mxu0 0
    %2092 = vmatpush1.bf16.xpose.msra.mxu0 %v2089
    %2093 = vmatprep.subr.bf16.mxu0 0
    %2094 = vmatpush1.bf16.xpose.msra.mxu0 0
    %2095 = vmatprep.subr.bf16.mxu0 0
    %2096 = vmatpush1.bf16.xpose.msra.mxu0 0
    %2097 = vmatprep.subr.bf16.mxu0 0
    %2098 = vmatpush1.bf16.xpose.msra.mxu0 0
    %2099 = vmatprep.subr.bf16.mxu0 0
    %2100 = vmatpush1.bf16.xpose.msra.mxu0 0
    %2101 = vmatprep.subr.bf16.mxu0 0
    %2102 = vmatpush1.bf16.xpose.msra.mxu0 0
    %2103 = vmatprep.subr.bf16.mxu0 0
    %2104 = vmatpush1.bf16.xpose.msra.mxu0 0
    %2105 = vmatprep.subr.bf16.mxu0 0
    %2106 = vmatpush1.bf16.xpose.msra.mxu0 0
    %2107 = vmatprep.subr.bf16.mxu0 0
    %2108 = vmatpush1.bf16.xpose.msra.mxu0 0
    %2109 = vmatprep.subr.bf16.mxu0 0
    %2110 = vmatpush1.bf16.xpose.msra.mxu0 0
    %2111 = vmatprep.subr.bf16.mxu0 0
    %2112 = vmatpush1.bf16.xpose.msra.mxu0 0
    %2113 = vmatprep.subr.bf16.mxu0 0
    %2114 = vmatpush1.bf16.xpose.msra.mxu0 0
    %2115 = vmatprep.subr.bf16.mxu0 0
    %2116 = vmatpush1.bf16.xpose.msra.mxu0 0
    %2117 = vmatprep.subr.bf16.mxu0 0
    %2118 = vmatpush1.bf16.xpose.msra.mxu0 0
    %2119 = vmatprep.subr.bf16.mxu0 0
    %2120 = vmatpush1.bf16.xpose.msra.mxu0 0
    %2121 = vmatprep.subr.bf16.mxu0 0
    %2122 = vmatpush1.bf16.xpose.msra.mxu0 0
    %2123 = vmatprep.mubr.bf16.mxu0 0
    %2124 = vmatmul.mubr.bf16.gmra.mrb[0].mxu0 %v2086
    %v2125 = vpop.f32.mrb[0].mxu0
    %v2126 = vadd.f32 0.0, %v2125
    %v2127 = vpop.f32.mrb[0].mxu0
    %v2128 = vpop.f32.mrb[0].mxu0
    %v2129 = vpop.f32.mrb[0].mxu0
    %2130 = vdwg.mxu0
    %v2131 = vsel %vm374, %v1769, 0.0
    %v2132 = vsel %vm374, %v1820, 0.0
    %v2133 = vadd.f32 %v2131, %v2132
    %v2134 = vsel %vm374, %v1871, 0.0
    %v2135 = vadd.f32 %v2133, %v2134
    %v2136 = vsel %vm374, %v1922, 0.0
    %v2137 = vadd.f32 %v2135, %v2136
    %v2138 = vsel %vm374, %v1973, 0.0
    %v2139 = vadd.f32 %v2137, %v2138
    %v2140 = vsel %vm374, %v2024, 0.0
    %v2141 = vadd.f32 %v2139, %v2140
    %v2142 = vsel %vm374, %v2075, 0.0
    %v2143 = vadd.f32 %v2141, %v2142
    %v2144 = vsel %vm374, %v2126, 0.0
    %v2145 = vadd.f32 %v2143, %v2144
    %vm2146 = vcmask 130112
    %v2147 = vsel %vm2146, %v1531, 0.0
    %v2148 = vsel %vm2146, %v1539, 0.0
    %v2149 = vadd.f32 %v2147, %v2148
    %v2150 = vsel %vm2146, %v1547, 0.0
    %v2151 = vadd.f32 %v2149, %v2150
    %v2152 = vsel %vm2146, %v1555, 0.0
    %v2153 = vadd.f32 %v2151, %v2152
    %v2154 = vsel %vm2146, %v1563, 0.0
    %v2155 = vadd.f32 %v2153, %v2154
    %v2156 = vsel %vm2146, %v1571, 0.0
    %v2157 = vadd.f32 %v2155, %v2156
    %v2158 = vsel %vm2146, %v1579, 0.0
    %v2159 = vadd.f32 %v2157, %v2158
    %v2160 = vsel %vm2146, %v1587, 0.0
    %v2161 = vadd.f32 %v2159, %v2160
    %v2162 = vsel %vm2146, %v1532, 0.0
    %v2163 = vsel %vm2146, %v1540, 0.0
    %v2164 = vadd.f32 %v2162, %v2163
    %v2165 = vsel %vm2146, %v1548, 0.0
    %v2166 = vadd.f32 %v2164, %v2165
    %v2167 = vsel %vm2146, %v1556, 0.0
    %v2168 = vadd.f32 %v2166, %v2167
    %v2169 = vsel %vm2146, %v1564, 0.0
    %v2170 = vadd.f32 %v2168, %v2169
    %v2171 = vsel %vm2146, %v1572, 0.0
    %v2172 = vadd.f32 %v2170, %v2171
    %v2173 = vsel %vm2146, %v1580, 0.0
    %v2174 = vadd.f32 %v2172, %v2173
    %v2175 = vsel %vm2146, %v1588, 0.0
    %v2176 = vadd.f32 %v2174, %v2175
    %v2177 = vsel %vm2146, %v1533, 0.0
    %v2178 = vsel %vm2146, %v1541, 0.0
    %v2179 = vadd.f32 %v2177, %v2178
    %v2180 = vsel %vm2146, %v1549, 0.0
    %v2181 = vadd.f32 %v2179, %v2180
    %v2182 = vsel %vm2146, %v1557, 0.0
    %v2183 = vadd.f32 %v2181, %v2182
    %v2184 = vsel %vm2146, %v1565, 0.0
    %v2185 = vadd.f32 %v2183, %v2184
    %v2186 = vsel %vm2146, %v1573, 0.0
    %v2187 = vadd.f32 %v2185, %v2186
    %v2188 = vsel %vm2146, %v1581, 0.0
    %v2189 = vadd.f32 %v2187, %v2188
    %v2190 = vsel %vm2146, %v1589, 0.0
    %v2191 = vadd.f32 %v2189, %v2190
    %v2192 = vsel %vm2146, %v1534, 0.0
    %v2193 = vsel %vm2146, %v1542, 0.0
    %v2194 = vadd.f32 %v2192, %v2193
    %v2195 = vsel %vm2146, %v1550, 0.0
    %v2196 = vadd.f32 %v2194, %v2195
    %v2197 = vsel %vm2146, %v1558, 0.0
    %v2198 = vadd.f32 %v2196, %v2197
    %v2199 = vsel %vm2146, %v1566, 0.0
    %v2200 = vadd.f32 %v2198, %v2199
    %v2201 = vsel %vm2146, %v1574, 0.0
    %v2202 = vadd.f32 %v2200, %v2201
    %v2203 = vsel %vm2146, %v1582, 0.0
    %v2204 = vadd.f32 %v2202, %v2203
    %v2205 = vsel %vm2146, %v1590, 0.0
    %v2206 = vadd.f32 %v2204, %v2205
    %v2207 = vsel %vm2146, %v1535, 0.0
    %v2208 = vsel %vm2146, %v1543, 0.0
    %v2209 = vadd.f32 %v2207, %v2208
    %v2210 = vsel %vm2146, %v1551, 0.0
    %v2211 = vadd.f32 %v2209, %v2210
    %v2212 = vsel %vm2146, %v1559, 0.0
    %v2213 = vadd.f32 %v2211, %v2212
    %v2214 = vsel %vm2146, %v1567, 0.0
    %v2215 = vadd.f32 %v2213, %v2214
    %v2216 = vsel %vm2146, %v1575, 0.0
    %v2217 = vadd.f32 %v2215, %v2216
    %v2218 = vsel %vm2146, %v1583, 0.0
    %v2219 = vadd.f32 %v2217, %v2218
    %v2220 = vsel %vm2146, %v1591, 0.0
    %v2221 = vadd.f32 %v2219, %v2220
    %v2222 = vsel %vm2146, %v1536, 0.0
    %v2223 = vsel %vm2146, %v1544, 0.0
    %v2224 = vadd.f32 %v2222, %v2223
    %v2225 = vsel %vm2146, %v1552, 0.0
    %v2226 = vadd.f32 %v2224, %v2225
    %v2227 = vsel %vm2146, %v1560, 0.0
    %v2228 = vadd.f32 %v2226, %v2227
    %v2229 = vsel %vm2146, %v1568, 0.0
    %v2230 = vadd.f32 %v2228, %v2229
    %v2231 = vsel %vm2146, %v1576, 0.0
    %v2232 = vadd.f32 %v2230, %v2231
    %v2233 = vsel %vm2146, %v1584, 0.0
    %v2234 = vadd.f32 %v2232, %v2233
    %v2235 = vsel %vm2146, %v1592, 0.0
    %v2236 = vadd.f32 %v2234, %v2235
    %v2237 = vsel %vm2146, %v1537, 0.0
    %v2238 = vsel %vm2146, %v1545, 0.0
    %v2239 = vadd.f32 %v2237, %v2238
    %v2240 = vsel %vm2146, %v1553, 0.0
    %v2241 = vadd.f32 %v2239, %v2240
    %v2242 = vsel %vm2146, %v1561, 0.0
    %v2243 = vadd.f32 %v2241, %v2242
    %v2244 = vsel %vm2146, %v1569, 0.0
    %v2245 = vadd.f32 %v2243, %v2244
    %v2246 = vsel %vm2146, %v1577, 0.0
    %v2247 = vadd.f32 %v2245, %v2246
    %v2248 = vsel %vm2146, %v1585, 0.0
    %v2249 = vadd.f32 %v2247, %v2248
    %v2250 = vsel %vm2146, %v1593, 0.0
    %v2251 = vadd.f32 %v2249, %v2250
    %v2252 = vsel %vm2146, %v1538, 0.0
    %v2253 = vsel %vm2146, %v1546, 0.0
    %v2254 = vadd.f32 %v2252, %v2253
    %v2255 = vsel %vm2146, %v1554, 0.0
    %v2256 = vadd.f32 %v2254, %v2255
    %v2257 = vsel %vm2146, %v1562, 0.0
    %v2258 = vadd.f32 %v2256, %v2257
    %v2259 = vsel %vm2146, %v1570, 0.0
    %v2260 = vadd.f32 %v2258, %v2259
    %v2261 = vsel %vm2146, %v1578, 0.0
    %v2262 = vadd.f32 %v2260, %v2261
    %v2263 = vsel %vm2146, %v1586, 0.0
    %v2264 = vadd.f32 %v2262, %v2263
    %v2265 = vsel %vm2146, %v1594, 0.0
    %v2266 = vadd.f32 %v2264, %v2265
    %2275 = vrot.lane.b32.xlu0 %v2161, 120
    %v2276 = vpop.permute.xlu0 %2275
    %2277 = vrot.lane.b32.xlu0 %v2176, 120
    %v2278 = vpop.permute.xlu0 %2277
    %2279 = vrot.lane.b32.xlu0 %v2191, 120
    %v2280 = vpop.permute.xlu0 %2279
    %2281 = vrot.lane.b32.xlu0 %v2206, 120
    %v2282 = vpop.permute.xlu0 %2281
    %2283 = vrot.lane.b32.xlu0 %v2221, 120
    %v2284 = vpop.permute.xlu0 %2283
    %2285 = vrot.lane.b32.xlu0 %v2236, 120
    %v2286 = vpop.permute.xlu0 %2285
    %2287 = vrot.lane.b32.xlu0 %v2251, 120
    %v2288 = vpop.permute.xlu0 %2287
    %2289 = vrot.lane.b32.xlu0 %v2266, 120
    %v2290 = vpop.permute.xlu0 %2289
    %v2299 = vadd.f32 %v1715, %v2276
    %v2300 = vadd.f32 %v1716, %v2278
    %v2301 = vadd.f32 %v1717, %v2280
    %v2302 = vadd.f32 %v1718, %v2282
    %v2303 = vadd.f32 %v1719, %v2284
    %v2304 = vadd.f32 %v1720, %v2286
    %v2305 = vadd.f32 %v1721, %v2288
    %v2306 = vadd.f32 %v1722, %v2290
    %2307 = vrot.lane.b32.xlu0 %v355, 112
    %v2308 = vpop.permute.xlu0 %2307
    %2309 = vrot.lane.b32.xlu0 %v363, 80
    %v2310 = vpop.permute.xlu0 %2309
    %v2312 = vsel %vm374, %v2308, 0
    %v2315 = vsel %vm374, %v2310, 0
    %2317 = vmatprep.subr.bf16.mxu0 0
    %2318 = vmatpush1.bf16.xpose.msra.mxu0 %v2315
    %2319 = vmatprep.subr.bf16.mxu0 0
    %2320 = vmatpush1.bf16.xpose.msra.mxu0 0
    %2321 = vmatprep.subr.bf16.mxu0 0
    %2322 = vmatpush1.bf16.xpose.msra.mxu0 0
    %2323 = vmatprep.subr.bf16.mxu0 0
    %2324 = vmatpush1.bf16.xpose.msra.mxu0 0
    %2325 = vmatprep.subr.bf16.mxu0 0
    %2326 = vmatpush1.bf16.xpose.msra.mxu0 0
    %2327 = vmatprep.subr.bf16.mxu0 0
    %2328 = vmatpush1.bf16.xpose.msra.mxu0 0
    %2329 = vmatprep.subr.bf16.mxu0 0
    %2330 = vmatpush1.bf16.xpose.msra.mxu0 0
    %2331 = vmatprep.subr.bf16.mxu0 0
    %2332 = vmatpush1.bf16.xpose.msra.mxu0 0
    %2333 = vmatprep.subr.bf16.mxu0 0
    %2334 = vmatpush1.bf16.xpose.msra.mxu0 0
    %2335 = vmatprep.subr.bf16.mxu0 0
    %2336 = vmatpush1.bf16.xpose.msra.mxu0 0
    %2337 = vmatprep.subr.bf16.mxu0 0
    %2338 = vmatpush1.bf16.xpose.msra.mxu0 0
    %2339 = vmatprep.subr.bf16.mxu0 0
    %2340 = vmatpush1.bf16.xpose.msra.mxu0 0
    %2341 = vmatprep.subr.bf16.mxu0 0
    %2342 = vmatpush1.bf16.xpose.msra.mxu0 0
    %2343 = vmatprep.subr.bf16.mxu0 0
    %2344 = vmatpush1.bf16.xpose.msra.mxu0 0
    %2345 = vmatprep.subr.bf16.mxu0 0
    %2346 = vmatpush1.bf16.xpose.msra.mxu0 0
    %2347 = vmatprep.subr.bf16.mxu0 0
    %2348 = vmatpush1.bf16.xpose.msra.mxu0 0
    %2349 = vmatprep.mubr.bf16.mxu0 0
    %2350 = vmatmul.mubr.bf16.gmra.mrb[0].mxu0 %v2312
    %v2351 = vpop.f32.mrb[0].mxu0
    %v2352 = vadd.f32 0.0, %v2351
    %v2353 = vpop.f32.mrb[0].mxu0
    %v2354 = vpop.f32.mrb[0].mxu0
    %v2355 = vpop.f32.mrb[0].mxu0
    %2356 = vdwg.mxu0
    %2357 = vrot.lane.b32.xlu0 %v356, 112
    %v2358 = vpop.permute.xlu0 %2357
    %2359 = vrot.lane.b32.xlu0 %v364, 80
    %v2360 = vpop.permute.xlu0 %2359
    %v2362 = vsel %vm374, %v2358, 0
    %v2365 = vsel %vm374, %v2360, 0
    %2367 = vmatprep.subr.bf16.mxu0 0
    %2368 = vmatpush1.bf16.xpose.msra.mxu0 %v2365
    %2369 = vmatprep.subr.bf16.mxu0 0
    %2370 = vmatpush1.bf16.xpose.msra.mxu0 0
    %2371 = vmatprep.subr.bf16.mxu0 0
    %2372 = vmatpush1.bf16.xpose.msra.mxu0 0
    %2373 = vmatprep.subr.bf16.mxu0 0
    %2374 = vmatpush1.bf16.xpose.msra.mxu0 0
    %2375 = vmatprep.subr.bf16.mxu0 0
    %2376 = vmatpush1.bf16.xpose.msra.mxu0 0
    %2377 = vmatprep.subr.bf16.mxu0 0
    %2378 = vmatpush1.bf16.xpose.msra.mxu0 0
    %2379 = vmatprep.subr.bf16.mxu0 0
    %2380 = vmatpush1.bf16.xpose.msra.mxu0 0
    %2381 = vmatprep.subr.bf16.mxu0 0
    %2382 = vmatpush1.bf16.xpose.msra.mxu0 0
    %2383 = vmatprep.subr.bf16.mxu0 0
    %2384 = vmatpush1.bf16.xpose.msra.mxu0 0
    %2385 = vmatprep.subr.bf16.mxu0 0
    %2386 = vmatpush1.bf16.xpose.msra.mxu0 0
    %2387 = vmatprep.subr.bf16.mxu0 0
    %2388 = vmatpush1.bf16.xpose.msra.mxu0 0
    %2389 = vmatprep.subr.bf16.mxu0 0
    %2390 = vmatpush1.bf16.xpose.msra.mxu0 0
    %2391 = vmatprep.subr.bf16.mxu0 0
    %2392 = vmatpush1.bf16.xpose.msra.mxu0 0
    %2393 = vmatprep.subr.bf16.mxu0 0
    %2394 = vmatpush1.bf16.xpose.msra.mxu0 0
    %2395 = vmatprep.subr.bf16.mxu0 0
    %2396 = vmatpush1.bf16.xpose.msra.mxu0 0
    %2397 = vmatprep.subr.bf16.mxu0 0
    %2398 = vmatpush1.bf16.xpose.msra.mxu0 0
    %2399 = vmatprep.mubr.bf16.mxu0 0
    %2400 = vmatmul.mubr.bf16.gmra.mrb[0].mxu0 %v2362
    %v2401 = vpop.f32.mrb[0].mxu0
    %v2402 = vadd.f32 0.0, %v2401
    %v2403 = vpop.f32.mrb[0].mxu0
    %v2404 = vpop.f32.mrb[0].mxu0
    %v2405 = vpop.f32.mrb[0].mxu0
    %2406 = vdwg.mxu0
    %2407 = vrot.lane.b32.xlu0 %v357, 112
    %v2408 = vpop.permute.xlu0 %2407
    %2409 = vrot.lane.b32.xlu0 %v365, 80
    %v2410 = vpop.permute.xlu0 %2409
    %v2412 = vsel %vm374, %v2408, 0
    %v2415 = vsel %vm374, %v2410, 0
    %2417 = vmatprep.subr.bf16.mxu0 0
    %2418 = vmatpush1.bf16.xpose.msra.mxu0 %v2415
    %2419 = vmatprep.subr.bf16.mxu0 0
    %2420 = vmatpush1.bf16.xpose.msra.mxu0 0
    %2421 = vmatprep.subr.bf16.mxu0 0
    %2422 = vmatpush1.bf16.xpose.msra.mxu0 0
    %2423 = vmatprep.subr.bf16.mxu0 0
    %2424 = vmatpush1.bf16.xpose.msra.mxu0 0
    %2425 = vmatprep.subr.bf16.mxu0 0
    %2426 = vmatpush1.bf16.xpose.msra.mxu0 0
    %2427 = vmatprep.subr.bf16.mxu0 0
    %2428 = vmatpush1.bf16.xpose.msra.mxu0 0
    %2429 = vmatprep.subr.bf16.mxu0 0
    %2430 = vmatpush1.bf16.xpose.msra.mxu0 0
    %2431 = vmatprep.subr.bf16.mxu0 0
    %2432 = vmatpush1.bf16.xpose.msra.mxu0 0
    %2433 = vmatprep.subr.bf16.mxu0 0
    %2434 = vmatpush1.bf16.xpose.msra.mxu0 0
    %2435 = vmatprep.subr.bf16.mxu0 0
    %2436 = vmatpush1.bf16.xpose.msra.mxu0 0
    %2437 = vmatprep.subr.bf16.mxu0 0
    %2438 = vmatpush1.bf16.xpose.msra.mxu0 0
    %2439 = vmatprep.subr.bf16.mxu0 0
    %2440 = vmatpush1.bf16.xpose.msra.mxu0 0
    %2441 = vmatprep.subr.bf16.mxu0 0
    %2442 = vmatpush1.bf16.xpose.msra.mxu0 0
    %2443 = vmatprep.subr.bf16.mxu0 0
    %2444 = vmatpush1.bf16.xpose.msra.mxu0 0
    %2445 = vmatprep.subr.bf16.mxu0 0
    %2446 = vmatpush1.bf16.xpose.msra.mxu0 0
    %2447 = vmatprep.subr.bf16.mxu0 0
    %2448 = vmatpush1.bf16.xpose.msra.mxu0 0
    %2449 = vmatprep.mubr.bf16.mxu0 0
    %2450 = vmatmul.mubr.bf16.gmra.mrb[0].mxu0 %v2412
    %v2451 = vpop.f32.mrb[0].mxu0
    %v2452 = vadd.f32 0.0, %v2451
    %v2453 = vpop.f32.mrb[0].mxu0
    %v2454 = vpop.f32.mrb[0].mxu0
    %v2455 = vpop.f32.mrb[0].mxu0
    %2456 = vdwg.mxu0
    %2457 = vrot.lane.b32.xlu0 %v358, 112
    %v2458 = vpop.permute.xlu0 %2457
    %2459 = vrot.lane.b32.xlu0 %v366, 80
    %v2460 = vpop.permute.xlu0 %2459
    %v2462 = vsel %vm374, %v2458, 0
    %v2465 = vsel %vm374, %v2460, 0
    %2467 = vmatprep.subr.bf16.mxu0 0
    %2468 = vmatpush1.bf16.xpose.msra.mxu0 %v2465
    %2469 = vmatprep.subr.bf16.mxu0 0
    %2470 = vmatpush1.bf16.xpose.msra.mxu0 0
    %2471 = vmatprep.subr.bf16.mxu0 0
    %2472 = vmatpush1.bf16.xpose.msra.mxu0 0
    %2473 = vmatprep.subr.bf16.mxu0 0
    %2474 = vmatpush1.bf16.xpose.msra.mxu0 0
    %2475 = vmatprep.subr.bf16.mxu0 0
    %2476 = vmatpush1.bf16.xpose.msra.mxu0 0
    %2477 = vmatprep.subr.bf16.mxu0 0
    %2478 = vmatpush1.bf16.xpose.msra.mxu0 0
    %2479 = vmatprep.subr.bf16.mxu0 0
    %2480 = vmatpush1.bf16.xpose.msra.mxu0 0
    %2481 = vmatprep.subr.bf16.mxu0 0
    %2482 = vmatpush1.bf16.xpose.msra.mxu0 0
    %2483 = vmatprep.subr.bf16.mxu0 0
    %2484 = vmatpush1.bf16.xpose.msra.mxu0 0
    %2485 = vmatprep.subr.bf16.mxu0 0
    %2486 = vmatpush1.bf16.xpose.msra.mxu0 0
    %2487 = vmatprep.subr.bf16.mxu0 0
    %2488 = vmatpush1.bf16.xpose.msra.mxu0 0
    %2489 = vmatprep.subr.bf16.mxu0 0
    %2490 = vmatpush1.bf16.xpose.msra.mxu0 0
    %2491 = vmatprep.subr.bf16.mxu0 0
    %2492 = vmatpush1.bf16.xpose.msra.mxu0 0
    %2493 = vmatprep.subr.bf16.mxu0 0
    %2494 = vmatpush1.bf16.xpose.msra.mxu0 0
    %2495 = vmatprep.subr.bf16.mxu0 0
    %2496 = vmatpush1.bf16.xpose.msra.mxu0 0
    %2497 = vmatprep.subr.bf16.mxu0 0
    %2498 = vmatpush1.bf16.xpose.msra.mxu0 0
    %2499 = vmatprep.mubr.bf16.mxu0 0
    %2500 = vmatmul.mubr.bf16.gmra.mrb[0].mxu0 %v2462
    %v2501 = vpop.f32.mrb[0].mxu0
    %v2502 = vadd.f32 0.0, %v2501
    %v2503 = vpop.f32.mrb[0].mxu0
    %v2504 = vpop.f32.mrb[0].mxu0
    %v2505 = vpop.f32.mrb[0].mxu0
    %2506 = vdwg.mxu0
    %2507 = vrot.lane.b32.xlu0 %v359, 112
    %v2508 = vpop.permute.xlu0 %2507
    %2509 = vrot.lane.b32.xlu0 %v367, 80
    %v2510 = vpop.permute.xlu0 %2509
    %v2512 = vsel %vm374, %v2508, 0
    %v2515 = vsel %vm374, %v2510, 0
    %2517 = vmatprep.subr.bf16.mxu0 0
    %2518 = vmatpush1.bf16.xpose.msra.mxu0 %v2515
    %2519 = vmatprep.subr.bf16.mxu0 0
    %2520 = vmatpush1.bf16.xpose.msra.mxu0 0
    %2521 = vmatprep.subr.bf16.mxu0 0
    %2522 = vmatpush1.bf16.xpose.msra.mxu0 0
    %2523 = vmatprep.subr.bf16.mxu0 0
    %2524 = vmatpush1.bf16.xpose.msra.mxu0 0
    %2525 = vmatprep.subr.bf16.mxu0 0
    %2526 = vmatpush1.bf16.xpose.msra.mxu0 0
    %2527 = vmatprep.subr.bf16.mxu0 0
    %2528 = vmatpush1.bf16.xpose.msra.mxu0 0
    %2529 = vmatprep.subr.bf16.mxu0 0
    %2530 = vmatpush1.bf16.xpose.msra.mxu0 0
    %2531 = vmatprep.subr.bf16.mxu0 0
    %2532 = vmatpush1.bf16.xpose.msra.mxu0 0
    %2533 = vmatprep.subr.bf16.mxu0 0
    %2534 = vmatpush1.bf16.xpose.msra.mxu0 0
    %2535 = vmatprep.subr.bf16.mxu0 0
    %2536 = vmatpush1.bf16.xpose.msra.mxu0 0
    %2537 = vmatprep.subr.bf16.mxu0 0
    %2538 = vmatpush1.bf16.xpose.msra.mxu0 0
    %2539 = vmatprep.subr.bf16.mxu0 0
    %2540 = vmatpush1.bf16.xpose.msra.mxu0 0
    %2541 = vmatprep.subr.bf16.mxu0 0
    %2542 = vmatpush1.bf16.xpose.msra.mxu0 0
    %2543 = vmatprep.subr.bf16.mxu0 0
    %2544 = vmatpush1.bf16.xpose.msra.mxu0 0
    %2545 = vmatprep.subr.bf16.mxu0 0
    %2546 = vmatpush1.bf16.xpose.msra.mxu0 0
    %2547 = vmatprep.subr.bf16.mxu0 0
    %2548 = vmatpush1.bf16.xpose.msra.mxu0 0
    %2549 = vmatprep.mubr.bf16.mxu0 0
    %2550 = vmatmul.mubr.bf16.gmra.mrb[0].mxu0 %v2512
    %v2551 = vpop.f32.mrb[0].mxu0
    %v2552 = vadd.f32 0.0, %v2551
    %v2553 = vpop.f32.mrb[0].mxu0
    %v2554 = vpop.f32.mrb[0].mxu0
    %v2555 = vpop.f32.mrb[0].mxu0
    %2556 = vdwg.mxu0
    %2557 = vrot.lane.b32.xlu0 %v360, 112
    %v2558 = vpop.permute.xlu0 %2557
    %2559 = vrot.lane.b32.xlu0 %v368, 80
    %v2560 = vpop.permute.xlu0 %2559
    %v2562 = vsel %vm374, %v2558, 0
    %v2565 = vsel %vm374, %v2560, 0
    %2567 = vmatprep.subr.bf16.mxu0 0
    %2568 = vmatpush1.bf16.xpose.msra.mxu0 %v2565
    %2569 = vmatprep.subr.bf16.mxu0 0
    %2570 = vmatpush1.bf16.xpose.msra.mxu0 0
    %2571 = vmatprep.subr.bf16.mxu0 0
    %2572 = vmatpush1.bf16.xpose.msra.mxu0 0
    %2573 = vmatprep.subr.bf16.mxu0 0
    %2574 = vmatpush1.bf16.xpose.msra.mxu0 0
    %2575 = vmatprep.subr.bf16.mxu0 0
    %2576 = vmatpush1.bf16.xpose.msra.mxu0 0
    %2577 = vmatprep.subr.bf16.mxu0 0
    %2578 = vmatpush1.bf16.xpose.msra.mxu0 0
    %2579 = vmatprep.subr.bf16.mxu0 0
    %2580 = vmatpush1.bf16.xpose.msra.mxu0 0
    %2581 = vmatprep.subr.bf16.mxu0 0
    %2582 = vmatpush1.bf16.xpose.msra.mxu0 0
    %2583 = vmatprep.subr.bf16.mxu0 0
    %2584 = vmatpush1.bf16.xpose.msra.mxu0 0
    %2585 = vmatprep.subr.bf16.mxu0 0
    %2586 = vmatpush1.bf16.xpose.msra.mxu0 0
    %2587 = vmatprep.subr.bf16.mxu0 0
    %2588 = vmatpush1.bf16.xpose.msra.mxu0 0
    %2589 = vmatprep.subr.bf16.mxu0 0
    %2590 = vmatpush1.bf16.xpose.msra.mxu0 0
    %2591 = vmatprep.subr.bf16.mxu0 0
    %2592 = vmatpush1.bf16.xpose.msra.mxu0 0
    %2593 = vmatprep.subr.bf16.mxu0 0
    %2594 = vmatpush1.bf16.xpose.msra.mxu0 0
    %2595 = vmatprep.subr.bf16.mxu0 0
    %2596 = vmatpush1.bf16.xpose.msra.mxu0 0
    %2597 = vmatprep.subr.bf16.mxu0 0
    %2598 = vmatpush1.bf16.xpose.msra.mxu0 0
    %2599 = vmatprep.mubr.bf16.mxu0 0
    %2600 = vmatmul.mubr.bf16.gmra.mrb[0].mxu0 %v2562
    %v2601 = vpop.f32.mrb[0].mxu0
    %v2602 = vadd.f32 0.0, %v2601
    %v2603 = vpop.f32.mrb[0].mxu0
    %v2604 = vpop.f32.mrb[0].mxu0
    %v2605 = vpop.f32.mrb[0].mxu0
    %2606 = vdwg.mxu0
    %2607 = vrot.lane.b32.xlu0 %v361, 112
    %v2608 = vpop.permute.xlu0 %2607
    %2609 = vrot.lane.b32.xlu0 %v369, 80
    %v2610 = vpop.permute.xlu0 %2609
    %v2612 = vsel %vm374, %v2608, 0
    %v2615 = vsel %vm374, %v2610, 0
    %2617 = vmatprep.subr.bf16.mxu0 0
    %2618 = vmatpush1.bf16.xpose.msra.mxu0 %v2615
    %2619 = vmatprep.subr.bf16.mxu0 0
    %2620 = vmatpush1.bf16.xpose.msra.mxu0 0
    %2621 = vmatprep.subr.bf16.mxu0 0
    %2622 = vmatpush1.bf16.xpose.msra.mxu0 0
    %2623 = vmatprep.subr.bf16.mxu0 0
    %2624 = vmatpush1.bf16.xpose.msra.mxu0 0
    %2625 = vmatprep.subr.bf16.mxu0 0
    %2626 = vmatpush1.bf16.xpose.msra.mxu0 0
    %2627 = vmatprep.subr.bf16.mxu0 0
    %2628 = vmatpush1.bf16.xpose.msra.mxu0 0
    %2629 = vmatprep.subr.bf16.mxu0 0
    %2630 = vmatpush1.bf16.xpose.msra.mxu0 0
    %2631 = vmatprep.subr.bf16.mxu0 0
    %2632 = vmatpush1.bf16.xpose.msra.mxu0 0
    %2633 = vmatprep.subr.bf16.mxu0 0
    %2634 = vmatpush1.bf16.xpose.msra.mxu0 0
    %2635 = vmatprep.subr.bf16.mxu0 0
    %2636 = vmatpush1.bf16.xpose.msra.mxu0 0
    %2637 = vmatprep.subr.bf16.mxu0 0
    %2638 = vmatpush1.bf16.xpose.msra.mxu0 0
    %2639 = vmatprep.subr.bf16.mxu0 0
    %2640 = vmatpush1.bf16.xpose.msra.mxu0 0
    %2641 = vmatprep.subr.bf16.mxu0 0
    %2642 = vmatpush1.bf16.xpose.msra.mxu0 0
    %2643 = vmatprep.subr.bf16.mxu0 0
    %2644 = vmatpush1.bf16.xpose.msra.mxu0 0
    %2645 = vmatprep.subr.bf16.mxu0 0
    %2646 = vmatpush1.bf16.xpose.msra.mxu0 0
    %2647 = vmatprep.subr.bf16.mxu0 0
    %2648 = vmatpush1.bf16.xpose.msra.mxu0 0
    %2649 = vmatprep.mubr.bf16.mxu0 0
    %2650 = vmatmul.mubr.bf16.gmra.mrb[0].mxu0 %v2612
    %v2651 = vpop.f32.mrb[0].mxu0
    %v2652 = vadd.f32 0.0, %v2651
    %v2653 = vpop.f32.mrb[0].mxu0
    %v2654 = vpop.f32.mrb[0].mxu0
    %v2655 = vpop.f32.mrb[0].mxu0
    %2656 = vdwg.mxu0
    %2657 = vrot.lane.b32.xlu0 %v362, 112
    %v2658 = vpop.permute.xlu0 %2657
    %2659 = vrot.lane.b32.xlu0 %v370, 80
    %v2660 = vpop.permute.xlu0 %2659
    %v2662 = vsel %vm374, %v2658, 0
    %v2665 = vsel %vm374, %v2660, 0
    %2667 = vmatprep.subr.bf16.mxu0 0
    %2668 = vmatpush1.bf16.xpose.msra.mxu0 %v2665
    %2669 = vmatprep.subr.bf16.mxu0 0
    %2670 = vmatpush1.bf16.xpose.msra.mxu0 0
    %2671 = vmatprep.subr.bf16.mxu0 0
    %2672 = vmatpush1.bf16.xpose.msra.mxu0 0
    %2673 = vmatprep.subr.bf16.mxu0 0
    %2674 = vmatpush1.bf16.xpose.msra.mxu0 0
    %2675 = vmatprep.subr.bf16.mxu0 0
    %2676 = vmatpush1.bf16.xpose.msra.mxu0 0
    %2677 = vmatprep.subr.bf16.mxu0 0
    %2678 = vmatpush1.bf16.xpose.msra.mxu0 0
    %2679 = vmatprep.subr.bf16.mxu0 0
    %2680 = vmatpush1.bf16.xpose.msra.mxu0 0
    %2681 = vmatprep.subr.bf16.mxu0 0
    %2682 = vmatpush1.bf16.xpose.msra.mxu0 0
    %2683 = vmatprep.subr.bf16.mxu0 0
    %2684 = vmatpush1.bf16.xpose.msra.mxu0 0
    %2685 = vmatprep.subr.bf16.mxu0 0
    %2686 = vmatpush1.bf16.xpose.msra.mxu0 0
    %2687 = vmatprep.subr.bf16.mxu0 0
    %2688 = vmatpush1.bf16.xpose.msra.mxu0 0
    %2689 = vmatprep.subr.bf16.mxu0 0
    %2690 = vmatpush1.bf16.xpose.msra.mxu0 0
    %2691 = vmatprep.subr.bf16.mxu0 0
    %2692 = vmatpush1.bf16.xpose.msra.mxu0 0
    %2693 = vmatprep.subr.bf16.mxu0 0
    %2694 = vmatpush1.bf16.xpose.msra.mxu0 0
    %2695 = vmatprep.subr.bf16.mxu0 0
    %2696 = vmatpush1.bf16.xpose.msra.mxu0 0
    %2697 = vmatprep.subr.bf16.mxu0 0
    %2698 = vmatpush1.bf16.xpose.msra.mxu0 0
    %2699 = vmatprep.mubr.bf16.mxu0 0
    %2700 = vmatmul.mubr.bf16.gmra.mrb[0].mxu0 %v2662
    %v2701 = vpop.f32.mrb[0].mxu0
    %v2702 = vadd.f32 0.0, %v2701
    %v2703 = vpop.f32.mrb[0].mxu0
    %v2704 = vpop.f32.mrb[0].mxu0
    %v2705 = vpop.f32.mrb[0].mxu0
    %2706 = vdwg.mxu0
    %v2707 = vsel %vm374, %v2352, 0.0
    %v2708 = vsel %vm374, %v2402, 0.0
    %v2709 = vadd.f32 %v2707, %v2708
    %v2710 = vsel %vm374, %v2452, 0.0
    %v2711 = vadd.f32 %v2709, %v2710
    %v2712 = vsel %vm374, %v2502, 0.0
    %v2713 = vadd.f32 %v2711, %v2712
    %v2714 = vsel %vm374, %v2552, 0.0
    %v2715 = vadd.f32 %v2713, %v2714
    %v2716 = vsel %vm374, %v2602, 0.0
    %v2717 = vadd.f32 %v2715, %v2716
    %v2718 = vsel %vm374, %v2652, 0.0
    %v2719 = vadd.f32 %v2717, %v2718
    %v2720 = vsel %vm374, %v2702, 0.0
    %v2721 = vadd.f32 %v2719, %v2720
    %vm2722 = vcmask 195712
    %v2723 = vsel %vm2722, %v1531, 0.0
    %v2724 = vsel %vm2722, %v1539, 0.0
    %v2725 = vadd.f32 %v2723, %v2724
    %v2726 = vsel %vm2722, %v1547, 0.0
    %v2727 = vadd.f32 %v2725, %v2726
    %v2728 = vsel %vm2722, %v1555, 0.0
    %v2729 = vadd.f32 %v2727, %v2728
    %v2730 = vsel %vm2722, %v1563, 0.0
    %v2731 = vadd.f32 %v2729, %v2730
    %v2732 = vsel %vm2722, %v1571, 0.0
    %v2733 = vadd.f32 %v2731, %v2732
    %v2734 = vsel %vm2722, %v1579, 0.0
    %v2735 = vadd.f32 %v2733, %v2734
    %v2736 = vsel %vm2722, %v1587, 0.0
    %v2737 = vadd.f32 %v2735, %v2736
    %v2738 = vsel %vm2722, %v1532, 0.0
    %v2739 = vsel %vm2722, %v1540, 0.0
    %v2740 = vadd.f32 %v2738, %v2739
    %v2741 = vsel %vm2722, %v1548, 0.0
    %v2742 = vadd.f32 %v2740, %v2741
    %v2743 = vsel %vm2722, %v1556, 0.0
    %v2744 = vadd.f32 %v2742, %v2743
    %v2745 = vsel %vm2722, %v1564, 0.0
    %v2746 = vadd.f32 %v2744, %v2745
    %v2747 = vsel %vm2722, %v1572, 0.0
    %v2748 = vadd.f32 %v2746, %v2747
    %v2749 = vsel %vm2722, %v1580, 0.0
    %v2750 = vadd.f32 %v2748, %v2749
    %v2751 = vsel %vm2722, %v1588, 0.0
    %v2752 = vadd.f32 %v2750, %v2751
    %v2753 = vsel %vm2722, %v1533, 0.0
    %v2754 = vsel %vm2722, %v1541, 0.0
    %v2755 = vadd.f32 %v2753, %v2754
    %v2756 = vsel %vm2722, %v1549, 0.0
    %v2757 = vadd.f32 %v2755, %v2756
    %v2758 = vsel %vm2722, %v1557, 0.0
    %v2759 = vadd.f32 %v2757, %v2758
    %v2760 = vsel %vm2722, %v1565, 0.0
    %v2761 = vadd.f32 %v2759, %v2760
    %v2762 = vsel %vm2722, %v1573, 0.0
    %v2763 = vadd.f32 %v2761, %v2762
    %v2764 = vsel %vm2722, %v1581, 0.0
    %v2765 = vadd.f32 %v2763, %v2764
    %v2766 = vsel %vm2722, %v1589, 0.0
    %v2767 = vadd.f32 %v2765, %v2766
    %v2768 = vsel %vm2722, %v1534, 0.0
    %v2769 = vsel %vm2722, %v1542, 0.0
    %v2770 = vadd.f32 %v2768, %v2769
    %v2771 = vsel %vm2722, %v1550, 0.0
    %v2772 = vadd.f32 %v2770, %v2771
    %v2773 = vsel %vm2722, %v1558, 0.0
    %v2774 = vadd.f32 %v2772, %v2773
    %v2775 = vsel %vm2722, %v1566, 0.0
    %v2776 = vadd.f32 %v2774, %v2775
    %v2777 = vsel %vm2722, %v1574, 0.0
    %v2778 = vadd.f32 %v2776, %v2777
    %v2779 = vsel %vm2722, %v1582, 0.0
    %v2780 = vadd.f32 %v2778, %v2779
    %v2781 = vsel %vm2722, %v1590, 0.0
    %v2782 = vadd.f32 %v2780, %v2781
    %v2783 = vsel %vm2722, %v1535, 0.0
    %v2784 = vsel %vm2722, %v1543, 0.0
    %v2785 = vadd.f32 %v2783, %v2784
    %v2786 = vsel %vm2722, %v1551, 0.0
    %v2787 = vadd.f32 %v2785, %v2786
    %v2788 = vsel %vm2722, %v1559, 0.0
    %v2789 = vadd.f32 %v2787, %v2788
    %v2790 = vsel %vm2722, %v1567, 0.0
    %v2791 = vadd.f32 %v2789, %v2790
    %v2792 = vsel %vm2722, %v1575, 0.0
    %v2793 = vadd.f32 %v2791, %v2792
    %v2794 = vsel %vm2722, %v1583, 0.0
    %v2795 = vadd.f32 %v2793, %v2794
    %v2796 = vsel %vm2722, %v1591, 0.0
    %v2797 = vadd.f32 %v2795, %v2796
    %v2798 = vsel %vm2722, %v1536, 0.0
    %v2799 = vsel %vm2722, %v1544, 0.0
    %v2800 = vadd.f32 %v2798, %v2799
    %v2801 = vsel %vm2722, %v1552, 0.0
    %v2802 = vadd.f32 %v2800, %v2801
    %v2803 = vsel %vm2722, %v1560, 0.0
    %v2804 = vadd.f32 %v2802, %v2803
    %v2805 = vsel %vm2722, %v1568, 0.0
    %v2806 = vadd.f32 %v2804, %v2805
    %v2807 = vsel %vm2722, %v1576, 0.0
    %v2808 = vadd.f32 %v2806, %v2807
    %v2809 = vsel %vm2722, %v1584, 0.0
    %v2810 = vadd.f32 %v2808, %v2809
    %v2811 = vsel %vm2722, %v1592, 0.0
    %v2812 = vadd.f32 %v2810, %v2811
    %v2813 = vsel %vm2722, %v1537, 0.0
    %v2814 = vsel %vm2722, %v1545, 0.0
    %v2815 = vadd.f32 %v2813, %v2814
    %v2816 = vsel %vm2722, %v1553, 0.0
    %v2817 = vadd.f32 %v2815, %v2816
    %v2818 = vsel %vm2722, %v1561, 0.0
    %v2819 = vadd.f32 %v2817, %v2818
    %v2820 = vsel %vm2722, %v1569, 0.0
    %v2821 = vadd.f32 %v2819, %v2820
    %v2822 = vsel %vm2722, %v1577, 0.0
    %v2823 = vadd.f32 %v2821, %v2822
    %v2824 = vsel %vm2722, %v1585, 0.0
    %v2825 = vadd.f32 %v2823, %v2824
    %v2826 = vsel %vm2722, %v1593, 0.0
    %v2827 = vadd.f32 %v2825, %v2826
    %v2828 = vsel %vm2722, %v1538, 0.0
    %v2829 = vsel %vm2722, %v1546, 0.0
    %v2830 = vadd.f32 %v2828, %v2829
    %v2831 = vsel %vm2722, %v1554, 0.0
    %v2832 = vadd.f32 %v2830, %v2831
    %v2833 = vsel %vm2722, %v1562, 0.0
    %v2834 = vadd.f32 %v2832, %v2833
    %v2835 = vsel %vm2722, %v1570, 0.0
    %v2836 = vadd.f32 %v2834, %v2835
    %v2837 = vsel %vm2722, %v1578, 0.0
    %v2838 = vadd.f32 %v2836, %v2837
    %v2839 = vsel %vm2722, %v1586, 0.0
    %v2840 = vadd.f32 %v2838, %v2839
    %v2841 = vsel %vm2722, %v1594, 0.0
    %v2842 = vadd.f32 %v2840, %v2841
    %2851 = vrot.lane.b32.xlu0 %v2737, 112
    %v2852 = vpop.permute.xlu0 %2851
    %2853 = vrot.lane.b32.xlu0 %v2752, 112
    %v2854 = vpop.permute.xlu0 %2853
    %2855 = vrot.lane.b32.xlu0 %v2767, 112
    %v2856 = vpop.permute.xlu0 %2855
    %2857 = vrot.lane.b32.xlu0 %v2782, 112
    %v2858 = vpop.permute.xlu0 %2857
    %2859 = vrot.lane.b32.xlu0 %v2797, 112
    %v2860 = vpop.permute.xlu0 %2859
    %2861 = vrot.lane.b32.xlu0 %v2812, 112
    %v2862 = vpop.permute.xlu0 %2861
    %2863 = vrot.lane.b32.xlu0 %v2827, 112
    %v2864 = vpop.permute.xlu0 %2863
    %2865 = vrot.lane.b32.xlu0 %v2842, 112
    %v2866 = vpop.permute.xlu0 %2865
    %v2875 = vadd.f32 %v2299, %v2852
    %v2876 = vadd.f32 %v2300, %v2854
    %v2877 = vadd.f32 %v2301, %v2856
    %v2878 = vadd.f32 %v2302, %v2858
    %v2879 = vadd.f32 %v2303, %v2860
    %v2880 = vadd.f32 %v2304, %v2862
    %v2881 = vadd.f32 %v2305, %v2864
    %v2882 = vadd.f32 %v2306, %v2866
    %2883 = vrot.lane.b32.xlu0 %v355, 104
    %v2884 = vpop.permute.xlu0 %2883
    %2885 = vrot.lane.b32.xlu0 %v363, 72
    %v2886 = vpop.permute.xlu0 %2885
    %v2888 = vsel %vm374, %v2884, 0
    %v2891 = vsel %vm374, %v2886, 0
    %2893 = vmatprep.subr.bf16.mxu0 0
    %2894 = vmatpush1.bf16.xpose.msra.mxu0 %v2891
    %2895 = vmatprep.subr.bf16.mxu0 0
    %2896 = vmatpush1.bf16.xpose.msra.mxu0 0
    %2897 = vmatprep.subr.bf16.mxu0 0
    %2898 = vmatpush1.bf16.xpose.msra.mxu0 0
    %2899 = vmatprep.subr.bf16.mxu0 0
    %2900 = vmatpush1.bf16.xpose.msra.mxu0 0
    %2901 = vmatprep.subr.bf16.mxu0 0
    %2902 = vmatpush1.bf16.xpose.msra.mxu0 0
    %2903 = vmatprep.subr.bf16.mxu0 0
    %2904 = vmatpush1.bf16.xpose.msra.mxu0 0
    %2905 = vmatprep.subr.bf16.mxu0 0
    %2906 = vmatpush1.bf16.xpose.msra.mxu0 0
    %2907 = vmatprep.subr.bf16.mxu0 0
    %2908 = vmatpush1.bf16.xpose.msra.mxu0 0
    %2909 = vmatprep.subr.bf16.mxu0 0
    %2910 = vmatpush1.bf16.xpose.msra.mxu0 0
    %2911 = vmatprep.subr.bf16.mxu0 0
    %2912 = vmatpush1.bf16.xpose.msra.mxu0 0
    %2913 = vmatprep.subr.bf16.mxu0 0
    %2914 = vmatpush1.bf16.xpose.msra.mxu0 0
    %2915 = vmatprep.subr.bf16.mxu0 0
    %2916 = vmatpush1.bf16.xpose.msra.mxu0 0
    %2917 = vmatprep.subr.bf16.mxu0 0
    %2918 = vmatpush1.bf16.xpose.msra.mxu0 0
    %2919 = vmatprep.subr.bf16.mxu0 0
    %2920 = vmatpush1.bf16.xpose.msra.mxu0 0
    %2921 = vmatprep.subr.bf16.mxu0 0
    %2922 = vmatpush1.bf16.xpose.msra.mxu0 0
    %2923 = vmatprep.subr.bf16.mxu0 0
    %2924 = vmatpush1.bf16.xpose.msra.mxu0 0
    %2925 = vmatprep.mubr.bf16.mxu0 0
    %2926 = vmatmul.mubr.bf16.gmra.mrb[0].mxu0 %v2888
    %v2927 = vpop.f32.mrb[0].mxu0
    %v2928 = vadd.f32 0.0, %v2927
    %v2929 = vpop.f32.mrb[0].mxu0
    %v2930 = vpop.f32.mrb[0].mxu0
    %v2931 = vpop.f32.mrb[0].mxu0
    %2932 = vdwg.mxu0
    %2933 = vrot.lane.b32.xlu0 %v356, 104
    %v2934 = vpop.permute.xlu0 %2933
    %2935 = vrot.lane.b32.xlu0 %v364, 72
    %v2936 = vpop.permute.xlu0 %2935
    %v2938 = vsel %vm374, %v2934, 0
    %v2941 = vsel %vm374, %v2936, 0
    %2943 = vmatprep.subr.bf16.mxu0 0
    %2944 = vmatpush1.bf16.xpose.msra.mxu0 %v2941
    %2945 = vmatprep.subr.bf16.mxu0 0
    %2946 = vmatpush1.bf16.xpose.msra.mxu0 0
    %2947 = vmatprep.subr.bf16.mxu0 0
    %2948 = vmatpush1.bf16.xpose.msra.mxu0 0
    %2949 = vmatprep.subr.bf16.mxu0 0
    %2950 = vmatpush1.bf16.xpose.msra.mxu0 0
    %2951 = vmatprep.subr.bf16.mxu0 0
    %2952 = vmatpush1.bf16.xpose.msra.mxu0 0
    %2953 = vmatprep.subr.bf16.mxu0 0
    %2954 = vmatpush1.bf16.xpose.msra.mxu0 0
    %2955 = vmatprep.subr.bf16.mxu0 0
    %2956 = vmatpush1.bf16.xpose.msra.mxu0 0
    %2957 = vmatprep.subr.bf16.mxu0 0
    %2958 = vmatpush1.bf16.xpose.msra.mxu0 0
    %2959 = vmatprep.subr.bf16.mxu0 0
    %2960 = vmatpush1.bf16.xpose.msra.mxu0 0
    %2961 = vmatprep.subr.bf16.mxu0 0
    %2962 = vmatpush1.bf16.xpose.msra.mxu0 0
    %2963 = vmatprep.subr.bf16.mxu0 0
    %2964 = vmatpush1.bf16.xpose.msra.mxu0 0
    %2965 = vmatprep.subr.bf16.mxu0 0
    %2966 = vmatpush1.bf16.xpose.msra.mxu0 0
    %2967 = vmatprep.subr.bf16.mxu0 0
    %2968 = vmatpush1.bf16.xpose.msra.mxu0 0
    %2969 = vmatprep.subr.bf16.mxu0 0
    %2970 = vmatpush1.bf16.xpose.msra.mxu0 0
    %2971 = vmatprep.subr.bf16.mxu0 0
    %2972 = vmatpush1.bf16.xpose.msra.mxu0 0
    %2973 = vmatprep.subr.bf16.mxu0 0
    %2974 = vmatpush1.bf16.xpose.msra.mxu0 0
    %2975 = vmatprep.mubr.bf16.mxu0 0
    %2976 = vmatmul.mubr.bf16.gmra.mrb[0].mxu0 %v2938
    %v2977 = vpop.f32.mrb[0].mxu0
    %v2978 = vadd.f32 0.0, %v2977
    %v2979 = vpop.f32.mrb[0].mxu0
    %v2980 = vpop.f32.mrb[0].mxu0
    %v2981 = vpop.f32.mrb[0].mxu0
    %2982 = vdwg.mxu0
    %2983 = vrot.lane.b32.xlu0 %v357, 104
    %v2984 = vpop.permute.xlu0 %2983
    %2985 = vrot.lane.b32.xlu0 %v365, 72
    %v2986 = vpop.permute.xlu0 %2985
    %v2988 = vsel %vm374, %v2984, 0
    %v2991 = vsel %vm374, %v2986, 0
    %2993 = vmatprep.subr.bf16.mxu0 0
    %2994 = vmatpush1.bf16.xpose.msra.mxu0 %v2991
    %2995 = vmatprep.subr.bf16.mxu0 0
    %2996 = vmatpush1.bf16.xpose.msra.mxu0 0
    %2997 = vmatprep.subr.bf16.mxu0 0
    %2998 = vmatpush1.bf16.xpose.msra.mxu0 0
    %2999 = vmatprep.subr.bf16.mxu0 0
    %3000 = vmatpush1.bf16.xpose.msra.mxu0 0
    %3001 = vmatprep.subr.bf16.mxu0 0
    %3002 = vmatpush1.bf16.xpose.msra.mxu0 0
    %3003 = vmatprep.subr.bf16.mxu0 0
    %3004 = vmatpush1.bf16.xpose.msra.mxu0 0
    %3005 = vmatprep.subr.bf16.mxu0 0
    %3006 = vmatpush1.bf16.xpose.msra.mxu0 0
    %3007 = vmatprep.subr.bf16.mxu0 0
    %3008 = vmatpush1.bf16.xpose.msra.mxu0 0
    %3009 = vmatprep.subr.bf16.mxu0 0
    %3010 = vmatpush1.bf16.xpose.msra.mxu0 0
    %3011 = vmatprep.subr.bf16.mxu0 0
    %3012 = vmatpush1.bf16.xpose.msra.mxu0 0
    %3013 = vmatprep.subr.bf16.mxu0 0
    %3014 = vmatpush1.bf16.xpose.msra.mxu0 0
    %3015 = vmatprep.subr.bf16.mxu0 0
    %3016 = vmatpush1.bf16.xpose.msra.mxu0 0
    %3017 = vmatprep.subr.bf16.mxu0 0
    %3018 = vmatpush1.bf16.xpose.msra.mxu0 0
    %3019 = vmatprep.subr.bf16.mxu0 0
    %3020 = vmatpush1.bf16.xpose.msra.mxu0 0
    %3021 = vmatprep.subr.bf16.mxu0 0
    %3022 = vmatpush1.bf16.xpose.msra.mxu0 0
    %3023 = vmatprep.subr.bf16.mxu0 0
    %3024 = vmatpush1.bf16.xpose.msra.mxu0 0
    %3025 = vmatprep.mubr.bf16.mxu0 0
    %3026 = vmatmul.mubr.bf16.gmra.mrb[0].mxu0 %v2988
    %v3027 = vpop.f32.mrb[0].mxu0
    %v3028 = vadd.f32 0.0, %v3027
    %v3029 = vpop.f32.mrb[0].mxu0
    %v3030 = vpop.f32.mrb[0].mxu0
    %v3031 = vpop.f32.mrb[0].mxu0
    %3032 = vdwg.mxu0
    %3033 = vrot.lane.b32.xlu0 %v358, 104
    %v3034 = vpop.permute.xlu0 %3033
    %3035 = vrot.lane.b32.xlu0 %v366, 72
    %v3036 = vpop.permute.xlu0 %3035
    %v3038 = vsel %vm374, %v3034, 0
    %v3041 = vsel %vm374, %v3036, 0
    %3043 = vmatprep.subr.bf16.mxu0 0
    %3044 = vmatpush1.bf16.xpose.msra.mxu0 %v3041
    %3045 = vmatprep.subr.bf16.mxu0 0
    %3046 = vmatpush1.bf16.xpose.msra.mxu0 0
    %3047 = vmatprep.subr.bf16.mxu0 0
    %3048 = vmatpush1.bf16.xpose.msra.mxu0 0
    %3049 = vmatprep.subr.bf16.mxu0 0
    %3050 = vmatpush1.bf16.xpose.msra.mxu0 0
    %3051 = vmatprep.subr.bf16.mxu0 0
    %3052 = vmatpush1.bf16.xpose.msra.mxu0 0
    %3053 = vmatprep.subr.bf16.mxu0 0
    %3054 = vmatpush1.bf16.xpose.msra.mxu0 0
    %3055 = vmatprep.subr.bf16.mxu0 0
    %3056 = vmatpush1.bf16.xpose.msra.mxu0 0
    %3057 = vmatprep.subr.bf16.mxu0 0
    %3058 = vmatpush1.bf16.xpose.msra.mxu0 0
    %3059 = vmatprep.subr.bf16.mxu0 0
    %3060 = vmatpush1.bf16.xpose.msra.mxu0 0
    %3061 = vmatprep.subr.bf16.mxu0 0
    %3062 = vmatpush1.bf16.xpose.msra.mxu0 0
    %3063 = vmatprep.subr.bf16.mxu0 0
    %3064 = vmatpush1.bf16.xpose.msra.mxu0 0
    %3065 = vmatprep.subr.bf16.mxu0 0
    %3066 = vmatpush1.bf16.xpose.msra.mxu0 0
    %3067 = vmatprep.subr.bf16.mxu0 0
    %3068 = vmatpush1.bf16.xpose.msra.mxu0 0
    %3069 = vmatprep.subr.bf16.mxu0 0
    %3070 = vmatpush1.bf16.xpose.msra.mxu0 0
    %3071 = vmatprep.subr.bf16.mxu0 0
    %3072 = vmatpush1.bf16.xpose.msra.mxu0 0
    %3073 = vmatprep.subr.bf16.mxu0 0
    %3074 = vmatpush1.bf16.xpose.msra.mxu0 0
    %3075 = vmatprep.mubr.bf16.mxu0 0
    %3076 = vmatmul.mubr.bf16.gmra.mrb[0].mxu0 %v3038
    %v3077 = vpop.f32.mrb[0].mxu0
    %v3078 = vadd.f32 0.0, %v3077
    %v3079 = vpop.f32.mrb[0].mxu0
    %v3080 = vpop.f32.mrb[0].mxu0
    %v3081 = vpop.f32.mrb[0].mxu0
    %3082 = vdwg.mxu0
    %3083 = vrot.lane.b32.xlu0 %v359, 104
    %v3084 = vpop.permute.xlu0 %3083
    %3085 = vrot.lane.b32.xlu0 %v367, 72
    %v3086 = vpop.permute.xlu0 %3085
    %v3088 = vsel %vm374, %v3084, 0
    %v3091 = vsel %vm374, %v3086, 0
    %3093 = vmatprep.subr.bf16.mxu0 0
    %3094 = vmatpush1.bf16.xpose.msra.mxu0 %v3091
    %3095 = vmatprep.subr.bf16.mxu0 0
    %3096 = vmatpush1.bf16.xpose.msra.mxu0 0
    %3097 = vmatprep.subr.bf16.mxu0 0
    %3098 = vmatpush1.bf16.xpose.msra.mxu0 0
    %3099 = vmatprep.subr.bf16.mxu0 0
    %3100 = vmatpush1.bf16.xpose.msra.mxu0 0
    %3101 = vmatprep.subr.bf16.mxu0 0
    %3102 = vmatpush1.bf16.xpose.msra.mxu0 0
    %3103 = vmatprep.subr.bf16.mxu0 0
    %3104 = vmatpush1.bf16.xpose.msra.mxu0 0
    %3105 = vmatprep.subr.bf16.mxu0 0
    %3106 = vmatpush1.bf16.xpose.msra.mxu0 0
    %3107 = vmatprep.subr.bf16.mxu0 0
    %3108 = vmatpush1.bf16.xpose.msra.mxu0 0
    %3109 = vmatprep.subr.bf16.mxu0 0
    %3110 = vmatpush1.bf16.xpose.msra.mxu0 0
    %3111 = vmatprep.subr.bf16.mxu0 0
    %3112 = vmatpush1.bf16.xpose.msra.mxu0 0
    %3113 = vmatprep.subr.bf16.mxu0 0
    %3114 = vmatpush1.bf16.xpose.msra.mxu0 0
    %3115 = vmatprep.subr.bf16.mxu0 0
    %3116 = vmatpush1.bf16.xpose.msra.mxu0 0
    %3117 = vmatprep.subr.bf16.mxu0 0
    %3118 = vmatpush1.bf16.xpose.msra.mxu0 0
    %3119 = vmatprep.subr.bf16.mxu0 0
    %3120 = vmatpush1.bf16.xpose.msra.mxu0 0
    %3121 = vmatprep.subr.bf16.mxu0 0
    %3122 = vmatpush1.bf16.xpose.msra.mxu0 0
    %3123 = vmatprep.subr.bf16.mxu0 0
    %3124 = vmatpush1.bf16.xpose.msra.mxu0 0
    %3125 = vmatprep.mubr.bf16.mxu0 0
    %3126 = vmatmul.mubr.bf16.gmra.mrb[0].mxu0 %v3088
    %v3127 = vpop.f32.mrb[0].mxu0
    %v3128 = vadd.f32 0.0, %v3127
    %v3129 = vpop.f32.mrb[0].mxu0
    %v3130 = vpop.f32.mrb[0].mxu0
    %v3131 = vpop.f32.mrb[0].mxu0
    %3132 = vdwg.mxu0
    %3133 = vrot.lane.b32.xlu0 %v360, 104
    %v3134 = vpop.permute.xlu0 %3133
    %3135 = vrot.lane.b32.xlu0 %v368, 72
    %v3136 = vpop.permute.xlu0 %3135
    %v3138 = vsel %vm374, %v3134, 0
    %v3141 = vsel %vm374, %v3136, 0
    %3143 = vmatprep.subr.bf16.mxu0 0
    %3144 = vmatpush1.bf16.xpose.msra.mxu0 %v3141
    %3145 = vmatprep.subr.bf16.mxu0 0
    %3146 = vmatpush1.bf16.xpose.msra.mxu0 0
    %3147 = vmatprep.subr.bf16.mxu0 0
    %3148 = vmatpush1.bf16.xpose.msra.mxu0 0
    %3149 = vmatprep.subr.bf16.mxu0 0
    %3150 = vmatpush1.bf16.xpose.msra.mxu0 0
    %3151 = vmatprep.subr.bf16.mxu0 0
    %3152 = vmatpush1.bf16.xpose.msra.mxu0 0
    %3153 = vmatprep.subr.bf16.mxu0 0
    %3154 = vmatpush1.bf16.xpose.msra.mxu0 0
    %3155 = vmatprep.subr.bf16.mxu0 0
    %3156 = vmatpush1.bf16.xpose.msra.mxu0 0
    %3157 = vmatprep.subr.bf16.mxu0 0
    %3158 = vmatpush1.bf16.xpose.msra.mxu0 0
    %3159 = vmatprep.subr.bf16.mxu0 0
    %3160 = vmatpush1.bf16.xpose.msra.mxu0 0
    %3161 = vmatprep.subr.bf16.mxu0 0
    %3162 = vmatpush1.bf16.xpose.msra.mxu0 0
    %3163 = vmatprep.subr.bf16.mxu0 0
    %3164 = vmatpush1.bf16.xpose.msra.mxu0 0
    %3165 = vmatprep.subr.bf16.mxu0 0
    %3166 = vmatpush1.bf16.xpose.msra.mxu0 0
    %3167 = vmatprep.subr.bf16.mxu0 0
    %3168 = vmatpush1.bf16.xpose.msra.mxu0 0
    %3169 = vmatprep.subr.bf16.mxu0 0
    %3170 = vmatpush1.bf16.xpose.msra.mxu0 0
    %3171 = vmatprep.subr.bf16.mxu0 0
    %3172 = vmatpush1.bf16.xpose.msra.mxu0 0
    %3173 = vmatprep.subr.bf16.mxu0 0
    %3174 = vmatpush1.bf16.xpose.msra.mxu0 0
    %3175 = vmatprep.mubr.bf16.mxu0 0
    %3176 = vmatmul.mubr.bf16.gmra.mrb[0].mxu0 %v3138
    %v3177 = vpop.f32.mrb[0].mxu0
    %v3178 = vadd.f32 0.0, %v3177
    %v3179 = vpop.f32.mrb[0].mxu0
    %v3180 = vpop.f32.mrb[0].mxu0
    %v3181 = vpop.f32.mrb[0].mxu0
    %3182 = vdwg.mxu0
    %3183 = vrot.lane.b32.xlu0 %v361, 104
    %v3184 = vpop.permute.xlu0 %3183
    %3185 = vrot.lane.b32.xlu0 %v369, 72
    %v3186 = vpop.permute.xlu0 %3185
    %v3188 = vsel %vm374, %v3184, 0
    %v3191 = vsel %vm374, %v3186, 0
    %3193 = vmatprep.subr.bf16.mxu0 0
    %3194 = vmatpush1.bf16.xpose.msra.mxu0 %v3191
    %3195 = vmatprep.subr.bf16.mxu0 0
    %3196 = vmatpush1.bf16.xpose.msra.mxu0 0
    %3197 = vmatprep.subr.bf16.mxu0 0
    %3198 = vmatpush1.bf16.xpose.msra.mxu0 0
    %3199 = vmatprep.subr.bf16.mxu0 0
    %3200 = vmatpush1.bf16.xpose.msra.mxu0 0
    %3201 = vmatprep.subr.bf16.mxu0 0
    %3202 = vmatpush1.bf16.xpose.msra.mxu0 0
    %3203 = vmatprep.subr.bf16.mxu0 0
    %3204 = vmatpush1.bf16.xpose.msra.mxu0 0
    %3205 = vmatprep.subr.bf16.mxu0 0
    %3206 = vmatpush1.bf16.xpose.msra.mxu0 0
    %3207 = vmatprep.subr.bf16.mxu0 0
    %3208 = vmatpush1.bf16.xpose.msra.mxu0 0
    %3209 = vmatprep.subr.bf16.mxu0 0
    %3210 = vmatpush1.bf16.xpose.msra.mxu0 0
    %3211 = vmatprep.subr.bf16.mxu0 0
    %3212 = vmatpush1.bf16.xpose.msra.mxu0 0
    %3213 = vmatprep.subr.bf16.mxu0 0
    %3214 = vmatpush1.bf16.xpose.msra.mxu0 0
    %3215 = vmatprep.subr.bf16.mxu0 0
    %3216 = vmatpush1.bf16.xpose.msra.mxu0 0
    %3217 = vmatprep.subr.bf16.mxu0 0
    %3218 = vmatpush1.bf16.xpose.msra.mxu0 0
    %3219 = vmatprep.subr.bf16.mxu0 0
    %3220 = vmatpush1.bf16.xpose.msra.mxu0 0
    %3221 = vmatprep.subr.bf16.mxu0 0
    %3222 = vmatpush1.bf16.xpose.msra.mxu0 0
    %3223 = vmatprep.subr.bf16.mxu0 0
    %3224 = vmatpush1.bf16.xpose.msra.mxu0 0
    %3225 = vmatprep.mubr.bf16.mxu0 0
    %3226 = vmatmul.mubr.bf16.gmra.mrb[0].mxu0 %v3188
    %v3227 = vpop.f32.mrb[0].mxu0
    %v3228 = vadd.f32 0.0, %v3227
    %v3229 = vpop.f32.mrb[0].mxu0
    %v3230 = vpop.f32.mrb[0].mxu0
    %v3231 = vpop.f32.mrb[0].mxu0
    %3232 = vdwg.mxu0
    %3233 = vrot.lane.b32.xlu0 %v362, 104
    %v3234 = vpop.permute.xlu0 %3233
    %3235 = vrot.lane.b32.xlu0 %v370, 72
    %v3236 = vpop.permute.xlu0 %3235
    %v3238 = vsel %vm374, %v3234, 0
    %v3241 = vsel %vm374, %v3236, 0
    %3243 = vmatprep.subr.bf16.mxu0 0
    %3244 = vmatpush1.bf16.xpose.msra.mxu0 %v3241
    %3245 = vmatprep.subr.bf16.mxu0 0
    %3246 = vmatpush1.bf16.xpose.msra.mxu0 0
    %3247 = vmatprep.subr.bf16.mxu0 0
    %3248 = vmatpush1.bf16.xpose.msra.mxu0 0
    %3249 = vmatprep.subr.bf16.mxu0 0
    %3250 = vmatpush1.bf16.xpose.msra.mxu0 0
    %3251 = vmatprep.subr.bf16.mxu0 0
    %3252 = vmatpush1.bf16.xpose.msra.mxu0 0
    %3253 = vmatprep.subr.bf16.mxu0 0
    %3254 = vmatpush1.bf16.xpose.msra.mxu0 0
    %3255 = vmatprep.subr.bf16.mxu0 0
    %3256 = vmatpush1.bf16.xpose.msra.mxu0 0
    %3257 = vmatprep.subr.bf16.mxu0 0
    %3258 = vmatpush1.bf16.xpose.msra.mxu0 0
    %3259 = vmatprep.subr.bf16.mxu0 0
    %3260 = vmatpush1.bf16.xpose.msra.mxu0 0
    %3261 = vmatprep.subr.bf16.mxu0 0
    %3262 = vmatpush1.bf16.xpose.msra.mxu0 0
    %3263 = vmatprep.subr.bf16.mxu0 0
    %3264 = vmatpush1.bf16.xpose.msra.mxu0 0
    %3265 = vmatprep.subr.bf16.mxu0 0
    %3266 = vmatpush1.bf16.xpose.msra.mxu0 0
    %3267 = vmatprep.subr.bf16.mxu0 0
    %3268 = vmatpush1.bf16.xpose.msra.mxu0 0
    %3269 = vmatprep.subr.bf16.mxu0 0
    %3270 = vmatpush1.bf16.xpose.msra.mxu0 0
    %3271 = vmatprep.subr.bf16.mxu0 0
    %3272 = vmatpush1.bf16.xpose.msra.mxu0 0
    %3273 = vmatprep.subr.bf16.mxu0 0
    %3274 = vmatpush1.bf16.xpose.msra.mxu0 0
    %3275 = vmatprep.mubr.bf16.mxu0 0
    %3276 = vmatmul.mubr.bf16.gmra.mrb[0].mxu0 %v3238
    %v3277 = vpop.f32.mrb[0].mxu0
    %v3278 = vadd.f32 0.0, %v3277
    %v3279 = vpop.f32.mrb[0].mxu0
    %v3280 = vpop.f32.mrb[0].mxu0
    %v3281 = vpop.f32.mrb[0].mxu0
    %3282 = vdwg.mxu0
    %v3283 = vsel %vm374, %v2928, 0.0
    %v3284 = vsel %vm374, %v2978, 0.0
    %v3285 = vadd.f32 %v3283, %v3284
    %v3286 = vsel %vm374, %v3028, 0.0
    %v3287 = vadd.f32 %v3285, %v3286
    %v3288 = vsel %vm374, %v3078, 0.0
    %v3289 = vadd.f32 %v3287, %v3288
    %v3290 = vsel %vm374, %v3128, 0.0
    %v3291 = vadd.f32 %v3289, %v3290
    %v3292 = vsel %vm374, %v3178, 0.0
    %v3293 = vadd.f32 %v3291, %v3292
    %v3294 = vsel %vm374, %v3228, 0.0
    %v3295 = vadd.f32 %v3293, %v3294
    %v3296 = vsel %vm374, %v3278, 0.0
    %v3297 = vadd.f32 %v3295, %v3296
    %vm3298 = vcmask 261312
    %v3299 = vsel %vm3298, %v1531, 0.0
    %v3300 = vsel %vm3298, %v1539, 0.0
    %v3301 = vadd.f32 %v3299, %v3300
    %v3302 = vsel %vm3298, %v1547, 0.0
    %v3303 = vadd.f32 %v3301, %v3302
    %v3304 = vsel %vm3298, %v1555, 0.0
    %v3305 = vadd.f32 %v3303, %v3304
    %v3306 = vsel %vm3298, %v1563, 0.0
    %v3307 = vadd.f32 %v3305, %v3306
    %v3308 = vsel %vm3298, %v1571, 0.0
    %v3309 = vadd.f32 %v3307, %v3308
    %v3310 = vsel %vm3298, %v1579, 0.0
    %v3311 = vadd.f32 %v3309, %v3310
    %v3312 = vsel %vm3298, %v1587, 0.0
    %v3313 = vadd.f32 %v3311, %v3312
    %v3314 = vsel %vm3298, %v1532, 0.0
    %v3315 = vsel %vm3298, %v1540, 0.0
    %v3316 = vadd.f32 %v3314, %v3315
    %v3317 = vsel %vm3298, %v1548, 0.0
    %v3318 = vadd.f32 %v3316, %v3317
    %v3319 = vsel %vm3298, %v1556, 0.0
    %v3320 = vadd.f32 %v3318, %v3319
    %v3321 = vsel %vm3298, %v1564, 0.0
    %v3322 = vadd.f32 %v3320, %v3321
    %v3323 = vsel %vm3298, %v1572, 0.0
    %v3324 = vadd.f32 %v3322, %v3323
    %v3325 = vsel %vm3298, %v1580, 0.0
    %v3326 = vadd.f32 %v3324, %v3325
    %v3327 = vsel %vm3298, %v1588, 0.0
    %v3328 = vadd.f32 %v3326, %v3327
    %v3329 = vsel %vm3298, %v1533, 0.0
    %v3330 = vsel %vm3298, %v1541, 0.0
    %v3331 = vadd.f32 %v3329, %v3330
    %v3332 = vsel %vm3298, %v1549, 0.0
    %v3333 = vadd.f32 %v3331, %v3332
    %v3334 = vsel %vm3298, %v1557, 0.0
    %v3335 = vadd.f32 %v3333, %v3334
    %v3336 = vsel %vm3298, %v1565, 0.0
    %v3337 = vadd.f32 %v3335, %v3336
    %v3338 = vsel %vm3298, %v1573, 0.0
    %v3339 = vadd.f32 %v3337, %v3338
    %v3340 = vsel %vm3298, %v1581, 0.0
    %v3341 = vadd.f32 %v3339, %v3340
    %v3342 = vsel %vm3298, %v1589, 0.0
    %v3343 = vadd.f32 %v3341, %v3342
    %v3344 = vsel %vm3298, %v1534, 0.0
    %v3345 = vsel %vm3298, %v1542, 0.0
    %v3346 = vadd.f32 %v3344, %v3345
    %v3347 = vsel %vm3298, %v1550, 0.0
    %v3348 = vadd.f32 %v3346, %v3347
    %v3349 = vsel %vm3298, %v1558, 0.0
    %v3350 = vadd.f32 %v3348, %v3349
    %v3351 = vsel %vm3298, %v1566, 0.0
    %v3352 = vadd.f32 %v3350, %v3351
    %v3353 = vsel %vm3298, %v1574, 0.0
    %v3354 = vadd.f32 %v3352, %v3353
    %v3355 = vsel %vm3298, %v1582, 0.0
    %v3356 = vadd.f32 %v3354, %v3355
    %v3357 = vsel %vm3298, %v1590, 0.0
    %v3358 = vadd.f32 %v3356, %v3357
    %v3359 = vsel %vm3298, %v1535, 0.0
    %v3360 = vsel %vm3298, %v1543, 0.0
    %v3361 = vadd.f32 %v3359, %v3360
    %v3362 = vsel %vm3298, %v1551, 0.0
    %v3363 = vadd.f32 %v3361, %v3362
    %v3364 = vsel %vm3298, %v1559, 0.0
    %v3365 = vadd.f32 %v3363, %v3364
    %v3366 = vsel %vm3298, %v1567, 0.0
    %v3367 = vadd.f32 %v3365, %v3366
    %v3368 = vsel %vm3298, %v1575, 0.0
    %v3369 = vadd.f32 %v3367, %v3368
    %v3370 = vsel %vm3298, %v1583, 0.0
    %v3371 = vadd.f32 %v3369, %v3370
    %v3372 = vsel %vm3298, %v1591, 0.0
    %v3373 = vadd.f32 %v3371, %v3372
    %v3374 = vsel %vm3298, %v1536, 0.0
    %v3375 = vsel %vm3298, %v1544, 0.0
    %v3376 = vadd.f32 %v3374, %v3375
    %v3377 = vsel %vm3298, %v1552, 0.0
    %v3378 = vadd.f32 %v3376, %v3377
    %v3379 = vsel %vm3298, %v1560, 0.0
    %v3380 = vadd.f32 %v3378, %v3379
    %v3381 = vsel %vm3298, %v1568, 0.0
    %v3382 = vadd.f32 %v3380, %v3381
    %v3383 = vsel %vm3298, %v1576, 0.0
    %v3384 = vadd.f32 %v3382, %v3383
    %v3385 = vsel %vm3298, %v1584, 0.0
    %v3386 = vadd.f32 %v3384, %v3385
    %v3387 = vsel %vm3298, %v1592, 0.0
    %v3388 = vadd.f32 %v3386, %v3387
    %v3389 = vsel %vm3298, %v1537, 0.0
    %v3390 = vsel %vm3298, %v1545, 0.0
    %v3391 = vadd.f32 %v3389, %v3390
    %v3392 = vsel %vm3298, %v1553, 0.0
    %v3393 = vadd.f32 %v3391, %v3392
    %v3394 = vsel %vm3298, %v1561, 0.0
    %v3395 = vadd.f32 %v3393, %v3394
    %v3396 = vsel %vm3298, %v1569, 0.0
    %v3397 = vadd.f32 %v3395, %v3396
    %v3398 = vsel %vm3298, %v1577, 0.0
    %v3399 = vadd.f32 %v3397, %v3398
    %v3400 = vsel %vm3298, %v1585, 0.0
    %v3401 = vadd.f32 %v3399, %v3400
    %v3402 = vsel %vm3298, %v1593, 0.0
    %v3403 = vadd.f32 %v3401, %v3402
    %v3404 = vsel %vm3298, %v1538, 0.0
    %v3405 = vsel %vm3298, %v1546, 0.0
    %v3406 = vadd.f32 %v3404, %v3405
    %v3407 = vsel %vm3298, %v1554, 0.0
    %v3408 = vadd.f32 %v3406, %v3407
    %v3409 = vsel %vm3298, %v1562, 0.0
    %v3410 = vadd.f32 %v3408, %v3409
    %v3411 = vsel %vm3298, %v1570, 0.0
    %v3412 = vadd.f32 %v3410, %v3411
    %v3413 = vsel %vm3298, %v1578, 0.0
    %v3414 = vadd.f32 %v3412, %v3413
    %v3415 = vsel %vm3298, %v1586, 0.0
    %v3416 = vadd.f32 %v3414, %v3415
    %v3417 = vsel %vm3298, %v1594, 0.0
    %v3418 = vadd.f32 %v3416, %v3417
    %3427 = vrot.lane.b32.xlu0 %v3313, 104
    %v3428 = vpop.permute.xlu0 %3427
    %3429 = vrot.lane.b32.xlu0 %v3328, 104
    %v3430 = vpop.permute.xlu0 %3429
    %3431 = vrot.lane.b32.xlu0 %v3343, 104
    %v3432 = vpop.permute.xlu0 %3431
    %3433 = vrot.lane.b32.xlu0 %v3358, 104
    %v3434 = vpop.permute.xlu0 %3433
    %3435 = vrot.lane.b32.xlu0 %v3373, 104
    %v3436 = vpop.permute.xlu0 %3435
    %3437 = vrot.lane.b32.xlu0 %v3388, 104
    %v3438 = vpop.permute.xlu0 %3437
    %3439 = vrot.lane.b32.xlu0 %v3403, 104
    %v3440 = vpop.permute.xlu0 %3439
    %3441 = vrot.lane.b32.xlu0 %v3418, 104
    %v3442 = vpop.permute.xlu0 %3441
    %v3451 = vadd.f32 %v2875, %v3428
    %v3452 = vadd.f32 %v2876, %v3430
    %v3453 = vadd.f32 %v2877, %v3432
    %v3454 = vadd.f32 %v2878, %v3434
    %v3455 = vadd.f32 %v2879, %v3436
    %v3456 = vadd.f32 %v2880, %v3438
    %v3457 = vadd.f32 %v2881, %v3440
    %v3458 = vadd.f32 %v2882, %v3442
    %v3459 = vmul.f32 %v3451, 0.25
    %v3460 = vmul.f32 %v3452, 0.25
    %v3461 = vmul.f32 %v3453, 0.25
    %v3462 = vmul.f32 %v3454, 0.25
    %v3463 = vmul.f32 %v3455, 0.25
    %v3464 = vmul.f32 %v3456, 0.25
    %v3465 = vmul.f32 %v3457, 0.25
    %v3466 = vmul.f32 %v3458, 0.25
    %v3467 = vld [vmem:[%s9] sm:$0xff]
    %v3468 = vld [vmem:[%s10] sm:$0x1]
    %v3470 = vlaneseq
    %v3471 = vshrl.u32 %v3470, 7
    %v3472 = vsub.s32 0, %v3471
    %v3473 = vrot.slane %v3468, %v3472
    %v3476 = vsel %vm374, %v3459, 0
    %v3479 = vsel %vm374, %v3460, 0
    %v3482 = vsel %vm374, %v3461, 0
    %v3485 = vsel %vm374, %v3462, 0
    %v3488 = vsel %vm374, %v3463, 0
    %v3491 = vsel %vm374, %v3464, 0
    %v3494 = vsel %vm374, %v3465, 0
    %v3497 = vsel %vm374, %v3466, 0
    %3499 = vmatprep.subr.mxu0 0.0
    %3500 = vmatpush1.msra.mxu0 %v3467
    %3501 = vmatprep.subr.mxu0 0.0
    %3502 = vmatpush1.msra.mxu0 0.0
    %3503 = vmatprep.subr.mxu0 0.0
    %3504 = vmatpush1.msra.mxu0 0.0
    %3505 = vmatprep.subr.mxu0 0.0
    %3506 = vmatpush1.msra.mxu0 0.0
    %3507 = vmatprep.subr.mxu0 0.0
    %3508 = vmatpush1.msra.mxu0 0.0
    %3509 = vmatprep.subr.mxu0 0.0
    %3510 = vmatpush1.msra.mxu0 0.0
    %3511 = vmatprep.subr.mxu0 0.0
    %3512 = vmatpush1.msra.mxu0 0.0
    %3513 = vmatprep.subr.mxu0 0.0
    %3514 = vmatpush1.msra.mxu0 0.0
    %3515 = vmatprep.subr.mxu0 0.0
    %3516 = vmatpush1.msra.mxu0 0.0
    %3517 = vmatprep.subr.mxu0 0.0
    %3518 = vmatpush1.msra.mxu0 0.0
    %3519 = vmatprep.subr.mxu0 0.0
    %3520 = vmatpush1.msra.mxu0 0.0
    %3521 = vmatprep.subr.mxu0 0.0
    %3522 = vmatpush1.msra.mxu0 0.0
    %3523 = vmatprep.subr.mxu0 0.0
    %3524 = vmatpush1.msra.mxu0 0.0
    %3525 = vmatprep.subr.mxu0 0.0
    %3526 = vmatpush1.msra.mxu0 0.0
    %3527 = vmatprep.subr.mxu0 0.0
    %3528 = vmatpush1.msra.mxu0 0.0
    %3529 = vmatprep.subr.mxu0 0.0
    %3530 = vmatpush1.msra.mxu0 0.0
    %3531 = vmatprep.subr.mxu0 0.0
    %3532 = vmatpush1.msra.mxu0 0.0
    %3533 = vmatprep.subr.mxu0 0.0
    %3534 = vmatpush1.msra.mxu0 0.0
    %3535 = vmatprep.subr.mxu0 0.0
    %3536 = vmatpush1.msra.mxu0 0.0
    %3537 = vmatprep.subr.mxu0 0.0
    %3538 = vmatpush1.msra.mxu0 0.0
    %3539 = vmatprep.subr.mxu0 0.0
    %3540 = vmatpush1.msra.mxu0 0.0
    %3541 = vmatprep.subr.mxu0 0.0
    %3542 = vmatpush1.msra.mxu0 0.0
    %3543 = vmatprep.subr.mxu0 0.0
    %3544 = vmatpush1.msra.mxu0 0.0
    %3545 = vmatprep.subr.mxu0 0.0
    %3546 = vmatpush1.msra.mxu0 0.0
    %3547 = vmatprep.subr.mxu0 0.0
    %3548 = vmatpush1.msra.mxu0 0.0
    %3549 = vmatprep.subr.mxu0 0.0
    %3550 = vmatpush1.msra.mxu0 0.0
    %3551 = vmatprep.subr.mxu0 0.0
    %3552 = vmatpush1.msra.mxu0 0.0
    %3553 = vmatprep.subr.mxu0 0.0
    %3554 = vmatpush1.msra.mxu0 0.0
    %3555 = vmatprep.subr.mxu0 0.0
    %3556 = vmatpush1.msra.mxu0 0.0
    %3557 = vmatprep.subr.mxu0 0.0
    %3558 = vmatpush1.msra.mxu0 0.0
    %3559 = vmatprep.subr.mxu0 0.0
    %3560 = vmatpush1.msra.mxu0 0.0
    %3561 = vmatprep.subr.mxu0 0.0
    %3562 = vmatpush1.msra.mxu0 0.0
    %3563 = vmatprep.mubr.f32.mxu0 0.0
    %3564 = vmatmul.mubr.f32.gmra.mrb[0].mxu0 %v3476
    %v3565 = vpop.f32.mrb[0].mxu0
    %v3566 = vadd.f32 %v3473, %v3565
    %v3567 = vpop.f32.mrb[0].mxu0
    %3568 = vmatprep.mubr.f32.mxu0 0.0
    %3569 = vmatmul.mubr.f32.gmra.mrb[0].mxu0 %v3479
    %v3570 = vpop.f32.mrb[0].mxu0
    %v3571 = vadd.f32 %v3473, %v3570
    %v3572 = vpop.f32.mrb[0].mxu0
    %3573 = vmatprep.mubr.f32.mxu0 0.0
    %3574 = vmatmul.mubr.f32.gmra.mrb[0].mxu0 %v3482
    %v3575 = vpop.f32.mrb[0].mxu0
    %v3576 = vadd.f32 %v3473, %v3575
    %v3577 = vpop.f32.mrb[0].mxu0
    %3578 = vmatprep.mubr.f32.mxu0 0.0
    %3579 = vmatmul.mubr.f32.gmra.mrb[0].mxu0 %v3485
    %v3580 = vpop.f32.mrb[0].mxu0
    %v3581 = vadd.f32 %v3473, %v3580
    %v3582 = vpop.f32.mrb[0].mxu0
    %3583 = vmatprep.mubr.f32.mxu0 0.0
    %3584 = vmatmul.mubr.f32.gmra.mrb[0].mxu0 %v3488
    %v3585 = vpop.f32.mrb[0].mxu0
    %v3586 = vadd.f32 %v3473, %v3585
    %v3587 = vpop.f32.mrb[0].mxu0
    %3588 = vmatprep.mubr.f32.mxu0 0.0
    %3589 = vmatmul.mubr.f32.gmra.mrb[0].mxu0 %v3491
    %v3590 = vpop.f32.mrb[0].mxu0
    %v3591 = vadd.f32 %v3473, %v3590
    %v3592 = vpop.f32.mrb[0].mxu0
    %3593 = vmatprep.mubr.f32.mxu0 0.0
    %3594 = vmatmul.mubr.f32.gmra.mrb[0].mxu0 %v3494
    %v3595 = vpop.f32.mrb[0].mxu0
    %v3596 = vadd.f32 %v3473, %v3595
    %v3597 = vpop.f32.mrb[0].mxu0
    %3598 = vmatprep.mubr.f32.mxu0 0.0
    %3599 = vmatmul.mubr.f32.gmra.mrb[0].mxu0 %v3497
    %v3600 = vpop.f32.mrb[0].mxu0
    %v3601 = vadd.f32 %v3473, %v3600
    %v3602 = vpop.f32.mrb[0].mxu0
    %3603 = vdwg.mxu0
    %v3604 = vld [vmem:[%s11] sm:$0x1]
    %v3606 = vlaneseq
    %v3607 = vshrl.u32 %v3606, 7
    %v3608 = vsub.s32 0, %v3607
    %v3609 = vrot.slane %v3604, %v3608
    %v3611 = vmul.f32 %v3566, %v3609
    %v3612 = vmul.f32 %v3571, %v3609
    %v3613 = vmul.f32 %v3576, %v3609
    %v3614 = vmul.f32 %v3581, %v3609
    %v3615 = vmul.f32 %v3586, %v3609
    %v3616 = vmul.f32 %v3591, %v3609
    %v3617 = vmul.f32 %v3596, %v3609
    %v3618 = vmul.f32 %v3601, %v3609
    %v3619 = vsel %vm374, %v3611, 0.0
    %3620 = vadd.xlane.f32.xlu0 %v3619
    %v3621 = vpop.xlane.xlu0 %3620
    %v3622 = vsel %vm374, %v3612, 0.0
    %3623 = vadd.xlane.f32.xlu0 %v3622
    %v3624 = vpop.xlane.xlu0 %3623
    %v3625 = vsel %vm374, %v3613, 0.0
    %3626 = vadd.xlane.f32.xlu0 %v3625
    %v3627 = vpop.xlane.xlu0 %3626
    %v3628 = vsel %vm374, %v3614, 0.0
    %3629 = vadd.xlane.f32.xlu0 %v3628
    %v3630 = vpop.xlane.xlu0 %3629
    %v3631 = vsel %vm374, %v3615, 0.0
    %3632 = vadd.xlane.f32.xlu0 %v3631
    %v3633 = vpop.xlane.xlu0 %3632
    %v3634 = vsel %vm374, %v3616, 0.0
    %3635 = vadd.xlane.f32.xlu0 %v3634
    %v3636 = vpop.xlane.xlu0 %3635
    %v3637 = vsel %vm374, %v3617, 0.0
    %3638 = vadd.xlane.f32.xlu0 %v3637
    %v3639 = vpop.xlane.xlu0 %3638
    %v3640 = vsel %vm374, %v3618, 0.0
    %3641 = vadd.xlane.f32.xlu0 %v3640
    %v3642 = vpop.xlane.xlu0 %3641
    %v3643 = vld [vmem:[%s1] sm:$0xff]
    %v3644 = vld [vmem:[%s1 + $0x8] sm:$0xff]
    %v3645 = vld [vmem:[%s1 + $0x10] sm:$0xff]
    %v3646 = vld [vmem:[%s1 + $0x18] sm:$0xff]
    %v3647 = vld [vmem:[%s1 + $0x20] sm:$0xff]
    %v3648 = vld [vmem:[%s1 + $0x28] sm:$0xff]
    %v3649 = vld [vmem:[%s1 + $0x30] sm:$0xff]
    %v3650 = vld [vmem:[%s1 + $0x38] sm:$0xff]
    %v3651 = vmul.f32 %v3643, %v3621
    %v3652 = vmul.f32 %v3644, %v3624
    %v3653 = vmul.f32 %v3645, %v3627
    %v3654 = vmul.f32 %v3646, %v3630
    %v3655 = vmul.f32 %v3647, %v3633
    %v3656 = vmul.f32 %v3648, %v3636
    %v3657 = vmul.f32 %v3649, %v3639
    %v3658 = vmul.f32 %v3650, %v3642
    %vm3659 = vcmask 31744
    %v3660 = vsel %vm3659, %v3651, -inf
    %3661 = vmax.xlane.f32.xlu0 %v3660
    %v3662 = vpop.xlane.xlu0 %3661
    %v3663 = vsel %vm3659, %v3652, -inf
    %3664 = vmax.xlane.f32.xlu0 %v3663
    %v3665 = vpop.xlane.xlu0 %3664
    %v3666 = vsel %vm3659, %v3653, -inf
    %3667 = vmax.xlane.f32.xlu0 %v3666
    %v3668 = vpop.xlane.xlu0 %3667
    %v3669 = vsel %vm3659, %v3654, -inf
    %3670 = vmax.xlane.f32.xlu0 %v3669
    %v3671 = vpop.xlane.xlu0 %3670
    %v3672 = vsel %vm3659, %v3655, -inf
    %3673 = vmax.xlane.f32.xlu0 %v3672
    %v3674 = vpop.xlane.xlu0 %3673
    %v3675 = vsel %vm3659, %v3656, -inf
    %3676 = vmax.xlane.f32.xlu0 %v3675
    %v3677 = vpop.xlane.xlu0 %3676
    %v3678 = vsel %vm3659, %v3657, -inf
    %3679 = vmax.xlane.f32.xlu0 %v3678
    %v3680 = vpop.xlane.xlu0 %3679
    %v3681 = vsel %vm3659, %v3658, -inf
    %3682 = vmax.xlane.f32.xlu0 %v3681
    %v3683 = vpop.xlane.xlu0 %3682
    %v3684 = vsub.f32 %v3651, %v3662
    %v3685 = vsub.f32 %v3652, %v3665
    %v3686 = vsub.f32 %v3653, %v3668
    %v3687 = vsub.f32 %v3654, %v3671
    %v3688 = vsub.f32 %v3655, %v3674
    %v3689 = vsub.f32 %v3656, %v3677
    %v3690 = vsub.f32 %v3657, %v3680
    %v3691 = vsub.f32 %v3658, %v3683
    %v3692 = vmul.f32 %v3684, 1.442695
    %v3693 = vpow.pop %v3692
    %v3694 = vmul.f32 %v3685, 1.442695
    %v3695 = vpow.pop %v3694
    %v3696 = vmul.f32 %v3686, 1.442695
    %v3697 = vpow.pop %v3696
    %v3698 = vmul.f32 %v3687, 1.442695
    %v3699 = vpow.pop %v3698
    %v3700 = vmul.f32 %v3688, 1.442695
    %v3701 = vpow.pop %v3700
    %v3702 = vmul.f32 %v3689, 1.442695
    %v3703 = vpow.pop %v3702
    %v3704 = vmul.f32 %v3690, 1.442695
    %v3705 = vpow.pop %v3704
    %v3706 = vmul.f32 %v3691, 1.442695
    %v3707 = vpow.pop %v3706
    %v3708 = vsel %vm3659, %v3693, 0.0
    %3709 = vadd.xlane.f32.xlu0 %v3708
    %v3710 = vpop.xlane.xlu0 %3709
    %v3711 = vsel %vm3659, %v3695, 0.0
    %3712 = vadd.xlane.f32.xlu0 %v3711
    %v3713 = vpop.xlane.xlu0 %3712
    %v3714 = vsel %vm3659, %v3697, 0.0
    %3715 = vadd.xlane.f32.xlu0 %v3714
    %v3716 = vpop.xlane.xlu0 %3715
    %v3717 = vsel %vm3659, %v3699, 0.0
    %3718 = vadd.xlane.f32.xlu0 %v3717
    %v3719 = vpop.xlane.xlu0 %3718
    %v3720 = vsel %vm3659, %v3701, 0.0
    %3721 = vadd.xlane.f32.xlu0 %v3720
    %v3722 = vpop.xlane.xlu0 %3721
    %v3723 = vsel %vm3659, %v3703, 0.0
    %3724 = vadd.xlane.f32.xlu0 %v3723
    %v3725 = vpop.xlane.xlu0 %3724
    %v3726 = vsel %vm3659, %v3705, 0.0
    %3727 = vadd.xlane.f32.xlu0 %v3726
    %v3728 = vpop.xlane.xlu0 %3727
    %v3729 = vsel %vm3659, %v3707, 0.0
    %3730 = vadd.xlane.f32.xlu0 %v3729
    %v3731 = vpop.xlane.xlu0 %3730
    %v3732 = vrcp.pop %v3710
    %v3733 = vrcp.pop %v3713
    %v3734 = vrcp.pop %v3716
    %v3735 = vrcp.pop %v3719
    %v3736 = vrcp.pop %v3722
    %v3737 = vrcp.pop %v3725
    %v3738 = vrcp.pop %v3728
    %v3739 = vrcp.pop %v3731
    %v3740 = vmul.f32 %v3693, %v3732
    %v3741 = vmul.f32 %v3695, %v3733
    %v3742 = vmul.f32 %v3697, %v3734
    %v3743 = vmul.f32 %v3699, %v3735
    %v3744 = vmul.f32 %v3701, %v3736
    %v3745 = vmul.f32 %v3703, %v3737
    %v3746 = vmul.f32 %v3705, %v3738
    %v3747 = vmul.f32 %v3707, %v3739
    %v3748 = vmul.f32 %v3643, %v3740
    %v3749 = vmul.f32 %v3644, %v3741
    %v3750 = vmul.f32 %v3645, %v3742
    %v3751 = vmul.f32 %v3646, %v3743
    %v3752 = vmul.f32 %v3647, %v3744
    %v3753 = vmul.f32 %v3648, %v3745
    %v3754 = vmul.f32 %v3649, %v3746
    %v3755 = vmul.f32 %v3650, %v3747
    %v3756 = vsel %vm3659, %v3748, 0.0
    %3757 = vadd.xlane.f32.xlu0 %v3756
    %v3758 = vpop.xlane.xlu0 %3757
    %v3759 = vsel %vm3659, %v3749, 0.0
    %3760 = vadd.xlane.f32.xlu0 %v3759
    %v3761 = vpop.xlane.xlu0 %3760
    %v3762 = vsel %vm3659, %v3750, 0.0
    %3763 = vadd.xlane.f32.xlu0 %v3762
    %v3764 = vpop.xlane.xlu0 %3763
    %v3765 = vsel %vm3659, %v3751, 0.0
    %3766 = vadd.xlane.f32.xlu0 %v3765
    %v3767 = vpop.xlane.xlu0 %3766
    %v3768 = vsel %vm3659, %v3752, 0.0
    %3769 = vadd.xlane.f32.xlu0 %v3768
    %v3770 = vpop.xlane.xlu0 %3769
    %v3771 = vsel %vm3659, %v3753, 0.0
    %3772 = vadd.xlane.f32.xlu0 %v3771
    %v3773 = vpop.xlane.xlu0 %3772
    %v3774 = vsel %vm3659, %v3754, 0.0
    %3775 = vadd.xlane.f32.xlu0 %v3774
    %v3776 = vpop.xlane.xlu0 %3775
    %v3777 = vsel %vm3659, %v3755, 0.0
    %3778 = vadd.xlane.f32.xlu0 %v3777
    %v3779 = vpop.xlane.xlu0 %3778
    %v3780 = vlaneseq
    %v3781 = vshrl.u32 %v3780, 7
    %v3782 = vlaneseq
    %v3783 = vand.u32 %v3782, 127
    %vm3784 = vcmp.eq.s32.totalorder %v3781, %v3783
    %s3785 = sld [smem:[#allocation2]]
    %v3786 = vstv %s3785
    %v3787 = vmul.f32 %v3786, %v3758
    %v3788 = vmul.f32 %v3786, %v3761
    %v3789 = vmul.f32 %v3786, %v3764
    %v3790 = vmul.f32 %v3786, %v3767
    %v3791 = vmul.f32 %v3786, %v3770
    %v3792 = vmul.f32 %v3786, %v3773
    %v3793 = vmul.f32 %v3786, %v3776
    %v3794 = vmul.f32 %v3786, %v3779
    %v3803 = vlaneseq
    %v3804 = vshrl.u32 %v3803, 7
    %v3805 = vsub.s32 %v3783, %v3804
    %v3806 = vrot.slane %v3787, %v3805
    %v3807 = vlaneseq
    %v3808 = vshrl.u32 %v3807, 7
    %v3809 = vsub.s32 %v3783, %v3808
    %v3810 = vrot.slane %v3788, %v3809
    %v3811 = vlaneseq
    %v3812 = vshrl.u32 %v3811, 7
    %v3813 = vsub.s32 %v3783, %v3812
    %v3814 = vrot.slane %v3789, %v3813
    %v3815 = vlaneseq
    %v3816 = vshrl.u32 %v3815, 7
    %v3817 = vsub.s32 %v3783, %v3816
    %v3818 = vrot.slane %v3790, %v3817
    %v3819 = vlaneseq
    %v3820 = vshrl.u32 %v3819, 7
    %v3821 = vsub.s32 %v3783, %v3820
    %v3822 = vrot.slane %v3791, %v3821
    %v3823 = vlaneseq
    %v3824 = vshrl.u32 %v3823, 7
    %v3825 = vsub.s32 %v3783, %v3824
    %v3826 = vrot.slane %v3792, %v3825
    %v3827 = vlaneseq
    %v3828 = vshrl.u32 %v3827, 7
    %v3829 = vsub.s32 %v3783, %v3828
    %v3830 = vrot.slane %v3793, %v3829
    %v3831 = vlaneseq
    %v3832 = vshrl.u32 %v3831, 7
    %v3833 = vsub.s32 %v3783, %v3832
    %v3834 = vrot.slane %v3794, %v3833
    %vm3835 = vcmask 1041409
    %v3836 = vsel %vm3835, %v3810, %v3806
    %vm3837 = vcmask 1042434
    %v3838 = vsel %vm3837, %v3814, %v3836
    %vm3839 = vcmask 1043459
    %v3840 = vsel %vm3839, %v3818, %v3838
    %vm3841 = vcmask 1044484
    %v3842 = vsel %vm3841, %v3822, %v3840
    %vm3843 = vcmask 1045509
    %v3844 = vsel %vm3843, %v3826, %v3842
    %vm3845 = vcmask 1046534
    %v3846 = vsel %vm3845, %v3830, %v3844
    %vm3847 = vcmask 1047559
    %v3848 = vsel %vm3847, %v3834, %v3846
    %v3850 = vadd.f32 %v778, %v3848
    %v3851 = vsel %vm3784, -1e+09, %v3850
    %v3852 = vsel %vm374, %v3851, -inf
    %3853 = vmax.xlane.f32.xlu0 %v3852
    %v3854 = vpop.xlane.xlu0 %3853
    %v3855 = vsub.f32 %v3851, %v3854
    %v3856 = vmul.f32 %v3855, 1.442695
    %v3857 = vpow.pop %v3856
    %v3858 = vsel %vm374, %v3857, 0.0
    %3859 = vadd.xlane.f32.xlu0 %v3858
    %v3860 = vpop.xlane.xlu0 %3859
    %v3861 = vrcp.pop %v3860
    %v3862 = vmul.f32 %v3857, %v3861
    %3863 = vst.msk [vmem:[#allocation5] sm:$0xff] %vm374, %v3862
    %v3864 = vpack.c.bf16 %v3862, %v3862
    %3865 = vrot.lane.b32.xlu0 %v363, 64
    %v3866 = vpop.permute.xlu0 %3865
    %v3868 = vsel %vm374, %v3864, 0
    %vm3870 = vcmask 1043456
    %v3872 = vsel %vm3870, %v3866, 0
    %3874 = vmatprep.subr.bf16.mxu0 0
    %3875 = vmatpush1.bf16.msra.mxu0 %v3872
    %3876 = vmatprep.subr.bf16.mxu0 0
    %3877 = vmatpush1.bf16.msra.mxu0 0
    %3878 = vmatprep.subr.bf16.mxu0 0
    %3879 = vmatpush1.bf16.msra.mxu0 0
    %3880 = vmatprep.subr.bf16.mxu0 0
    %3881 = vmatpush1.bf16.msra.mxu0 0
    %3882 = vmatprep.subr.bf16.mxu0 0
    %3883 = vmatpush1.bf16.msra.mxu0 0
    %3884 = vmatprep.subr.bf16.mxu0 0
    %3885 = vmatpush1.bf16.msra.mxu0 0
    %3886 = vmatprep.subr.bf16.mxu0 0
    %3887 = vmatpush1.bf16.msra.mxu0 0
    %3888 = vmatprep.subr.bf16.mxu0 0
    %3889 = vmatpush1.bf16.msra.mxu0 0
    %3890 = vmatprep.subr.bf16.mxu0 0
    %3891 = vmatpush1.bf16.msra.mxu0 0
    %3892 = vmatprep.subr.bf16.mxu0 0
    %3893 = vmatpush1.bf16.msra.mxu0 0
    %3894 = vmatprep.subr.bf16.mxu0 0
    %3895 = vmatpush1.bf16.msra.mxu0 0
    %3896 = vmatprep.subr.bf16.mxu0 0
    %3897 = vmatpush1.bf16.msra.mxu0 0
    %3898 = vmatprep.subr.bf16.mxu0 0
    %3899 = vmatpush1.bf16.msra.mxu0 0
    %3900 = vmatprep.subr.bf16.mxu0 0
    %3901 = vmatpush1.bf16.msra.mxu0 0
    %3902 = vmatprep.subr.bf16.mxu0 0
    %3903 = vmatpush1.bf16.msra.mxu0 0
    %3904 = vmatprep.subr.bf16.mxu0 0
    %3905 = vmatpush1.bf16.msra.mxu0 0
    %3906 = vmatprep.mubr.bf16.mxu0 0
    %3907 = vmatmul.mubr.bf16.gmra.mrb[0].mxu0 %v3868
    %v3908 = vpop.f32.mrb[0].mxu0
    %v3909 = vadd.f32 0.0, %v3908
    %v3910 = vpop.f32.mrb[0].mxu0
    %v3911 = vpop.f32.mrb[0].mxu0
    %v3912 = vpop.f32.mrb[0].mxu0
    %3913 = vdwg.mxu0
    %3914 = vrot.lane.b32.xlu0 %v364, 64
    %v3915 = vpop.permute.xlu0 %3914
    %v3917 = vsel %vm3870, %v3915, 0
    %3919 = vmatprep.subr.bf16.mxu0 0
    %3920 = vmatpush1.bf16.msra.mxu0 %v3917
    %3921 = vmatprep.subr.bf16.mxu0 0
    %3922 = vmatpush1.bf16.msra.mxu0 0
    %3923 = vmatprep.subr.bf16.mxu0 0
    %3924 = vmatpush1.bf16.msra.mxu0 0
    %3925 = vmatprep.subr.bf16.mxu0 0
    %3926 = vmatpush1.bf16.msra.mxu0 0
    %3927 = vmatprep.subr.bf16.mxu0 0
    %3928 = vmatpush1.bf16.msra.mxu0 0
    %3929 = vmatprep.subr.bf16.mxu0 0
    %3930 = vmatpush1.bf16.msra.mxu0 0
    %3931 = vmatprep.subr.bf16.mxu0 0
    %3932 = vmatpush1.bf16.msra.mxu0 0
    %3933 = vmatprep.subr.bf16.mxu0 0
    %3934 = vmatpush1.bf16.msra.mxu0 0
    %3935 = vmatprep.subr.bf16.mxu0 0
    %3936 = vmatpush1.bf16.msra.mxu0 0
    %3937 = vmatprep.subr.bf16.mxu0 0
    %3938 = vmatpush1.bf16.msra.mxu0 0
    %3939 = vmatprep.subr.bf16.mxu0 0
    %3940 = vmatpush1.bf16.msra.mxu0 0
    %3941 = vmatprep.subr.bf16.mxu0 0
    %3942 = vmatpush1.bf16.msra.mxu0 0
    %3943 = vmatprep.subr.bf16.mxu0 0
    %3944 = vmatpush1.bf16.msra.mxu0 0
    %3945 = vmatprep.subr.bf16.mxu0 0
    %3946 = vmatpush1.bf16.msra.mxu0 0
    %3947 = vmatprep.subr.bf16.mxu0 0
    %3948 = vmatpush1.bf16.msra.mxu0 0
    %3949 = vmatprep.subr.bf16.mxu0 0
    %3950 = vmatpush1.bf16.msra.mxu0 0
    %3951 = vmatprep.mubr.bf16.mxu0 0
    %3952 = vmatmul.mubr.bf16.gmra.mrb[0].mxu0 %v3868
    %v3953 = vpop.f32.mrb[0].mxu0
    %v3954 = vadd.f32 0.0, %v3953
    %v3955 = vpop.f32.mrb[0].mxu0
    %v3956 = vpop.f32.mrb[0].mxu0
    %v3957 = vpop.f32.mrb[0].mxu0
    %3958 = vdwg.mxu0
    %3959 = vrot.lane.b32.xlu0 %v365, 64
    %v3960 = vpop.permute.xlu0 %3959
    %v3962 = vsel %vm3870, %v3960, 0
    %3964 = vmatprep.subr.bf16.mxu0 0
    %3965 = vmatpush1.bf16.msra.mxu0 %v3962
    %3966 = vmatprep.subr.bf16.mxu0 0
    %3967 = vmatpush1.bf16.msra.mxu0 0
    %3968 = vmatprep.subr.bf16.mxu0 0
    %3969 = vmatpush1.bf16.msra.mxu0 0
    %3970 = vmatprep.subr.bf16.mxu0 0
    %3971 = vmatpush1.bf16.msra.mxu0 0
    %3972 = vmatprep.subr.bf16.mxu0 0
    %3973 = vmatpush1.bf16.msra.mxu0 0
    %3974 = vmatprep.subr.bf16.mxu0 0
    %3975 = vmatpush1.bf16.msra.mxu0 0
    %3976 = vmatprep.subr.bf16.mxu0 0
    %3977 = vmatpush1.bf16.msra.mxu0 0
    %3978 = vmatprep.subr.bf16.mxu0 0
    %3979 = vmatpush1.bf16.msra.mxu0 0
    %3980 = vmatprep.subr.bf16.mxu0 0
    %3981 = vmatpush1.bf16.msra.mxu0 0
    %3982 = vmatprep.subr.bf16.mxu0 0
    %3983 = vmatpush1.bf16.msra.mxu0 0
    %3984 = vmatprep.subr.bf16.mxu0 0
    %3985 = vmatpush1.bf16.msra.mxu0 0
    %3986 = vmatprep.subr.bf16.mxu0 0
    %3987 = vmatpush1.bf16.msra.mxu0 0
    %3988 = vmatprep.subr.bf16.mxu0 0
    %3989 = vmatpush1.bf16.msra.mxu0 0
    %3990 = vmatprep.subr.bf16.mxu0 0
    %3991 = vmatpush1.bf16.msra.mxu0 0
    %3992 = vmatprep.subr.bf16.mxu0 0
    %3993 = vmatpush1.bf16.msra.mxu0 0
    %3994 = vmatprep.subr.bf16.mxu0 0
    %3995 = vmatpush1.bf16.msra.mxu0 0
    %3996 = vmatprep.mubr.bf16.mxu0 0
    %3997 = vmatmul.mubr.bf16.gmra.mrb[0].mxu0 %v3868
    %v3998 = vpop.f32.mrb[0].mxu0
    %v3999 = vadd.f32 0.0, %v3998
    %v4000 = vpop.f32.mrb[0].mxu0
    %v4001 = vpop.f32.mrb[0].mxu0
    %v4002 = vpop.f32.mrb[0].mxu0
    %4003 = vdwg.mxu0
    %4004 = vrot.lane.b32.xlu0 %v366, 64
    %v4005 = vpop.permute.xlu0 %4004
    %v4007 = vsel %vm3870, %v4005, 0
    %4009 = vmatprep.subr.bf16.mxu0 0
    %4010 = vmatpush1.bf16.msra.mxu0 %v4007
    %4011 = vmatprep.subr.bf16.mxu0 0
    %4012 = vmatpush1.bf16.msra.mxu0 0
    %4013 = vmatprep.subr.bf16.mxu0 0
    %4014 = vmatpush1.bf16.msra.mxu0 0
    %4015 = vmatprep.subr.bf16.mxu0 0
    %4016 = vmatpush1.bf16.msra.mxu0 0
    %4017 = vmatprep.subr.bf16.mxu0 0
    %4018 = vmatpush1.bf16.msra.mxu0 0
    %4019 = vmatprep.subr.bf16.mxu0 0
    %4020 = vmatpush1.bf16.msra.mxu0 0
    %4021 = vmatprep.subr.bf16.mxu0 0
    %4022 = vmatpush1.bf16.msra.mxu0 0
    %4023 = vmatprep.subr.bf16.mxu0 0
    %4024 = vmatpush1.bf16.msra.mxu0 0
    %4025 = vmatprep.subr.bf16.mxu0 0
    %4026 = vmatpush1.bf16.msra.mxu0 0
    %4027 = vmatprep.subr.bf16.mxu0 0
    %4028 = vmatpush1.bf16.msra.mxu0 0
    %4029 = vmatprep.subr.bf16.mxu0 0
    %4030 = vmatpush1.bf16.msra.mxu0 0
    %4031 = vmatprep.subr.bf16.mxu0 0
    %4032 = vmatpush1.bf16.msra.mxu0 0
    %4033 = vmatprep.subr.bf16.mxu0 0
    %4034 = vmatpush1.bf16.msra.mxu0 0
    %4035 = vmatprep.subr.bf16.mxu0 0
    %4036 = vmatpush1.bf16.msra.mxu0 0
    %4037 = vmatprep.subr.bf16.mxu0 0
    %4038 = vmatpush1.bf16.msra.mxu0 0
    %4039 = vmatprep.subr.bf16.mxu0 0
    %4040 = vmatpush1.bf16.msra.mxu0 0
    %4041 = vmatprep.mubr.bf16.mxu0 0
    %4042 = vmatmul.mubr.bf16.gmra.mrb[0].mxu0 %v3868
    %v4043 = vpop.f32.mrb[0].mxu0
    %v4044 = vadd.f32 0.0, %v4043
    %v4045 = vpop.f32.mrb[0].mxu0
    %v4046 = vpop.f32.mrb[0].mxu0
    %v4047 = vpop.f32.mrb[0].mxu0
    %4048 = vdwg.mxu0
    %4049 = vrot.lane.b32.xlu0 %v367, 64
    %v4050 = vpop.permute.xlu0 %4049
    %v4052 = vsel %vm3870, %v4050, 0
    %4054 = vmatprep.subr.bf16.mxu0 0
    %4055 = vmatpush1.bf16.msra.mxu0 %v4052
    %4056 = vmatprep.subr.bf16.mxu0 0
    %4057 = vmatpush1.bf16.msra.mxu0 0
    %4058 = vmatprep.subr.bf16.mxu0 0
    %4059 = vmatpush1.bf16.msra.mxu0 0
    %4060 = vmatprep.subr.bf16.mxu0 0
    %4061 = vmatpush1.bf16.msra.mxu0 0
    %4062 = vmatprep.subr.bf16.mxu0 0
    %4063 = vmatpush1.bf16.msra.mxu0 0
    %4064 = vmatprep.subr.bf16.mxu0 0
    %4065 = vmatpush1.bf16.msra.mxu0 0
    %4066 = vmatprep.subr.bf16.mxu0 0
    %4067 = vmatpush1.bf16.msra.mxu0 0
    %4068 = vmatprep.subr.bf16.mxu0 0
    %4069 = vmatpush1.bf16.msra.mxu0 0
    %4070 = vmatprep.subr.bf16.mxu0 0
    %4071 = vmatpush1.bf16.msra.mxu0 0
    %4072 = vmatprep.subr.bf16.mxu0 0
    %4073 = vmatpush1.bf16.msra.mxu0 0
    %4074 = vmatprep.subr.bf16.mxu0 0
    %4075 = vmatpush1.bf16.msra.mxu0 0
    %4076 = vmatprep.subr.bf16.mxu0 0
    %4077 = vmatpush1.bf16.msra.mxu0 0
    %4078 = vmatprep.subr.bf16.mxu0 0
    %4079 = vmatpush1.bf16.msra.mxu0 0
    %4080 = vmatprep.subr.bf16.mxu0 0
    %4081 = vmatpush1.bf16.msra.mxu0 0
    %4082 = vmatprep.subr.bf16.mxu0 0
    %4083 = vmatpush1.bf16.msra.mxu0 0
    %4084 = vmatprep.subr.bf16.mxu0 0
    %4085 = vmatpush1.bf16.msra.mxu0 0
    %4086 = vmatprep.mubr.bf16.mxu0 0
    %4087 = vmatmul.mubr.bf16.gmra.mrb[0].mxu0 %v3868
    %v4088 = vpop.f32.mrb[0].mxu0
    %v4089 = vadd.f32 0.0, %v4088
    %v4090 = vpop.f32.mrb[0].mxu0
    %v4091 = vpop.f32.mrb[0].mxu0
    %v4092 = vpop.f32.mrb[0].mxu0
    %4093 = vdwg.mxu0
    %4094 = vrot.lane.b32.xlu0 %v368, 64
    %v4095 = vpop.permute.xlu0 %4094
    %v4097 = vsel %vm3870, %v4095, 0
    %4099 = vmatprep.subr.bf16.mxu0 0
    %4100 = vmatpush1.bf16.msra.mxu0 %v4097
    %4101 = vmatprep.subr.bf16.mxu0 0
    %4102 = vmatpush1.bf16.msra.mxu0 0
    %4103 = vmatprep.subr.bf16.mxu0 0
    %4104 = vmatpush1.bf16.msra.mxu0 0
    %4105 = vmatprep.subr.bf16.mxu0 0
    %4106 = vmatpush1.bf16.msra.mxu0 0
    %4107 = vmatprep.subr.bf16.mxu0 0
    %4108 = vmatpush1.bf16.msra.mxu0 0
    %4109 = vmatprep.subr.bf16.mxu0 0
    %4110 = vmatpush1.bf16.msra.mxu0 0
    %4111 = vmatprep.subr.bf16.mxu0 0
    %4112 = vmatpush1.bf16.msra.mxu0 0
    %4113 = vmatprep.subr.bf16.mxu0 0
    %4114 = vmatpush1.bf16.msra.mxu0 0
    %4115 = vmatprep.subr.bf16.mxu0 0
    %4116 = vmatpush1.bf16.msra.mxu0 0
    %4117 = vmatprep.subr.bf16.mxu0 0
    %4118 = vmatpush1.bf16.msra.mxu0 0
    %4119 = vmatprep.subr.bf16.mxu0 0
    %4120 = vmatpush1.bf16.msra.mxu0 0
    %4121 = vmatprep.subr.bf16.mxu0 0
    %4122 = vmatpush1.bf16.msra.mxu0 0
    %4123 = vmatprep.subr.bf16.mxu0 0
    %4124 = vmatpush1.bf16.msra.mxu0 0
    %4125 = vmatprep.subr.bf16.mxu0 0
    %4126 = vmatpush1.bf16.msra.mxu0 0
    %4127 = vmatprep.subr.bf16.mxu0 0
    %4128 = vmatpush1.bf16.msra.mxu0 0
    %4129 = vmatprep.subr.bf16.mxu0 0
    %4130 = vmatpush1.bf16.msra.mxu0 0
    %4131 = vmatprep.mubr.bf16.mxu0 0
    %4132 = vmatmul.mubr.bf16.gmra.mrb[0].mxu0 %v3868
    %v4133 = vpop.f32.mrb[0].mxu0
    %v4134 = vadd.f32 0.0, %v4133
    %v4135 = vpop.f32.mrb[0].mxu0
    %v4136 = vpop.f32.mrb[0].mxu0
    %v4137 = vpop.f32.mrb[0].mxu0
    %4138 = vdwg.mxu0
    %4139 = vrot.lane.b32.xlu0 %v369, 64
    %v4140 = vpop.permute.xlu0 %4139
    %v4142 = vsel %vm3870, %v4140, 0
    %4144 = vmatprep.subr.bf16.mxu0 0
    %4145 = vmatpush1.bf16.msra.mxu0 %v4142
    %4146 = vmatprep.subr.bf16.mxu0 0
    %4147 = vmatpush1.bf16.msra.mxu0 0
    %4148 = vmatprep.subr.bf16.mxu0 0
    %4149 = vmatpush1.bf16.msra.mxu0 0
    %4150 = vmatprep.subr.bf16.mxu0 0
    %4151 = vmatpush1.bf16.msra.mxu0 0
    %4152 = vmatprep.subr.bf16.mxu0 0
    %4153 = vmatpush1.bf16.msra.mxu0 0
    %4154 = vmatprep.subr.bf16.mxu0 0
    %4155 = vmatpush1.bf16.msra.mxu0 0
    %4156 = vmatprep.subr.bf16.mxu0 0
    %4157 = vmatpush1.bf16.msra.mxu0 0
    %4158 = vmatprep.subr.bf16.mxu0 0
    %4159 = vmatpush1.bf16.msra.mxu0 0
    %4160 = vmatprep.subr.bf16.mxu0 0
    %4161 = vmatpush1.bf16.msra.mxu0 0
    %4162 = vmatprep.subr.bf16.mxu0 0
    %4163 = vmatpush1.bf16.msra.mxu0 0
    %4164 = vmatprep.subr.bf16.mxu0 0
    %4165 = vmatpush1.bf16.msra.mxu0 0
    %4166 = vmatprep.subr.bf16.mxu0 0
    %4167 = vmatpush1.bf16.msra.mxu0 0
    %4168 = vmatprep.subr.bf16.mxu0 0
    %4169 = vmatpush1.bf16.msra.mxu0 0
    %4170 = vmatprep.subr.bf16.mxu0 0
    %4171 = vmatpush1.bf16.msra.mxu0 0
    %4172 = vmatprep.subr.bf16.mxu0 0
    %4173 = vmatpush1.bf16.msra.mxu0 0
    %4174 = vmatprep.subr.bf16.mxu0 0
    %4175 = vmatpush1.bf16.msra.mxu0 0
    %4176 = vmatprep.mubr.bf16.mxu0 0
    %4177 = vmatmul.mubr.bf16.gmra.mrb[0].mxu0 %v3868
    %v4178 = vpop.f32.mrb[0].mxu0
    %v4179 = vadd.f32 0.0, %v4178
    %v4180 = vpop.f32.mrb[0].mxu0
    %v4181 = vpop.f32.mrb[0].mxu0
    %v4182 = vpop.f32.mrb[0].mxu0
    %4183 = vdwg.mxu0
    %4184 = vrot.lane.b32.xlu0 %v370, 64
    %v4185 = vpop.permute.xlu0 %4184
    %v4187 = vsel %vm3870, %v4185, 0
    %4189 = vmatprep.subr.bf16.mxu0 0
    %4190 = vmatpush1.bf16.msra.mxu0 %v4187
    %4191 = vmatprep.subr.bf16.mxu0 0
    %4192 = vmatpush1.bf16.msra.mxu0 0
    %4193 = vmatprep.subr.bf16.mxu0 0
    %4194 = vmatpush1.bf16.msra.mxu0 0
    %4195 = vmatprep.subr.bf16.mxu0 0
    %4196 = vmatpush1.bf16.msra.mxu0 0
    %4197 = vmatprep.subr.bf16.mxu0 0
    %4198 = vmatpush1.bf16.msra.mxu0 0
    %4199 = vmatprep.subr.bf16.mxu0 0
    %4200 = vmatpush1.bf16.msra.mxu0 0
    %4201 = vmatprep.subr.bf16.mxu0 0
    %4202 = vmatpush1.bf16.msra.mxu0 0
    %4203 = vmatprep.subr.bf16.mxu0 0
    %4204 = vmatpush1.bf16.msra.mxu0 0
    %4205 = vmatprep.subr.bf16.mxu0 0
    %4206 = vmatpush1.bf16.msra.mxu0 0
    %4207 = vmatprep.subr.bf16.mxu0 0
    %4208 = vmatpush1.bf16.msra.mxu0 0
    %4209 = vmatprep.subr.bf16.mxu0 0
    %4210 = vmatpush1.bf16.msra.mxu0 0
    %4211 = vmatprep.subr.bf16.mxu0 0
    %4212 = vmatpush1.bf16.msra.mxu0 0
    %4213 = vmatprep.subr.bf16.mxu0 0
    %4214 = vmatpush1.bf16.msra.mxu0 0
    %4215 = vmatprep.subr.bf16.mxu0 0
    %4216 = vmatpush1.bf16.msra.mxu0 0
    %4217 = vmatprep.subr.bf16.mxu0 0
    %4218 = vmatpush1.bf16.msra.mxu0 0
    %4219 = vmatprep.subr.bf16.mxu0 0
    %4220 = vmatpush1.bf16.msra.mxu0 0
    %4221 = vmatprep.mubr.bf16.mxu0 0
    %4222 = vmatmul.mubr.bf16.gmra.mrb[0].mxu0 %v3868
    %v4223 = vpop.f32.mrb[0].mxu0
    %v4224 = vadd.f32 0.0, %v4223
    %v4225 = vpop.f32.mrb[0].mxu0
    %v4226 = vpop.f32.mrb[0].mxu0
    %v4227 = vpop.f32.mrb[0].mxu0
    %4228 = vdwg.mxu0
    %v4229 = vpack.c.bf16 %v3954, %v3909
    %v4230 = vpack.c.bf16 %v4044, %v3999
    %v4231 = vpack.c.bf16 %v4134, %v4089
    %v4232 = vpack.c.bf16 %v4224, %v4179
    %v4233 = vld [vmem:[%s7] sm:$0xf]
    %s4234 = sld [smem:[#allocation2 + $0x1]]
    %v4235 = vstv %s4234
    %v4236 = vmul.f32 %v4235, %v3758
    %v4237 = vmul.f32 %v4235, %v3761
    %v4238 = vmul.f32 %v4235, %v3764
    %v4239 = vmul.f32 %v4235, %v3767
    %v4240 = vmul.f32 %v4235, %v3770
    %v4241 = vmul.f32 %v4235, %v3773
    %v4242 = vmul.f32 %v4235, %v3776
    %v4243 = vmul.f32 %v4235, %v3779
    %v4252 = vlaneseq
    %v4253 = vshrl.u32 %v4252, 7
    %v4254 = vsub.s32 %v3783, %v4253
    %v4255 = vrot.slane %v4236, %v4254
    %v4256 = vlaneseq
    %v4257 = vshrl.u32 %v4256, 7
    %v4258 = vsub.s32 %v3783, %v4257
    %v4259 = vrot.slane %v4237, %v4258
    %v4260 = vlaneseq
    %v4261 = vshrl.u32 %v4260, 7
    %v4262 = vsub.s32 %v3783, %v4261
    %v4263 = vrot.slane %v4238, %v4262
    %v4264 = vlaneseq
    %v4265 = vshrl.u32 %v4264, 7
    %v4266 = vsub.s32 %v3783, %v4265
    %v4267 = vrot.slane %v4239, %v4266
    %v4268 = vlaneseq
    %v4269 = vshrl.u32 %v4268, 7
    %v4270 = vsub.s32 %v3783, %v4269
    %v4271 = vrot.slane %v4240, %v4270
    %v4272 = vlaneseq
    %v4273 = vshrl.u32 %v4272, 7
    %v4274 = vsub.s32 %v3783, %v4273
    %v4275 = vrot.slane %v4241, %v4274
    %v4276 = vlaneseq
    %v4277 = vshrl.u32 %v4276, 7
    %v4278 = vsub.s32 %v3783, %v4277
    %v4279 = vrot.slane %v4242, %v4278
    %v4280 = vlaneseq
    %v4281 = vshrl.u32 %v4280, 7
    %v4282 = vsub.s32 %v3783, %v4281
    %v4283 = vrot.slane %v4243, %v4282
    %v4284 = vsel %vm3835, %v4259, %v4255
    %v4285 = vsel %vm3837, %v4263, %v4284
    %v4286 = vsel %vm3839, %v4267, %v4285
    %v4287 = vsel %vm3841, %v4271, %v4286
    %v4288 = vsel %vm3843, %v4275, %v4287
    %v4289 = vsel %vm3845, %v4279, %v4288
    %v4290 = vsel %vm3847, %v4283, %v4289
    %v4292 = vadd.f32 %v2145, %v4290
    %v4293 = vsel %vm3784, -1e+09, %v4292
    %v4294 = vsel %vm374, %v4293, -inf
    %4295 = vmax.xlane.f32.xlu0 %v4294
    %v4296 = vpop.xlane.xlu0 %4295
    %v4297 = vsub.f32 %v4293, %v4296
    %v4298 = vmul.f32 %v4297, 1.442695
    %v4299 = vpow.pop %v4298
    %v4300 = vsel %vm374, %v4299, 0.0
    %4301 = vadd.xlane.f32.xlu0 %v4300
    %v4302 = vpop.xlane.xlu0 %4301
    %v4303 = vrcp.pop %v4302
    %v4304 = vmul.f32 %v4299, %v4303
    %4305 = vst.msk [vmem:[#allocation5 + $0x8] sm:$0xff] %vm374, %v4304
    %v4306 = vpack.c.bf16 %v4304, %v4304
    %4307 = vrot.lane.b32.xlu0 %v363, 56
    %v4308 = vpop.permute.xlu0 %4307
    %v4310 = vsel %vm374, %v4306, 0
    %v4313 = vsel %vm3870, %v4308, 0
    %4315 = vmatprep.subr.bf16.mxu0 0
    %4316 = vmatpush1.bf16.msra.mxu0 %v4313
    %4317 = vmatprep.subr.bf16.mxu0 0
    %4318 = vmatpush1.bf16.msra.mxu0 0
    %4319 = vmatprep.subr.bf16.mxu0 0
    %4320 = vmatpush1.bf16.msra.mxu0 0
    %4321 = vmatprep.subr.bf16.mxu0 0
    %4322 = vmatpush1.bf16.msra.mxu0 0
    %4323 = vmatprep.subr.bf16.mxu0 0
    %4324 = vmatpush1.bf16.msra.mxu0 0
    %4325 = vmatprep.subr.bf16.mxu0 0
    %4326 = vmatpush1.bf16.msra.mxu0 0
    %4327 = vmatprep.subr.bf16.mxu0 0
    %4328 = vmatpush1.bf16.msra.mxu0 0
    %4329 = vmatprep.subr.bf16.mxu0 0
    %4330 = vmatpush1.bf16.msra.mxu0 0
    %4331 = vmatprep.subr.bf16.mxu0 0
    %4332 = vmatpush1.bf16.msra.mxu0 0
    %4333 = vmatprep.subr.bf16.mxu0 0
    %4334 = vmatpush1.bf16.msra.mxu0 0
    %4335 = vmatprep.subr.bf16.mxu0 0
    %4336 = vmatpush1.bf16.msra.mxu0 0
    %4337 = vmatprep.subr.bf16.mxu0 0
    %4338 = vmatpush1.bf16.msra.mxu0 0
    %4339 = vmatprep.subr.bf16.mxu0 0
    %4340 = vmatpush1.bf16.msra.mxu0 0
    %4341 = vmatprep.subr.bf16.mxu0 0
    %4342 = vmatpush1.bf16.msra.mxu0 0
    %4343 = vmatprep.subr.bf16.mxu0 0
    %4344 = vmatpush1.bf16.msra.mxu0 0
    %4345 = vmatprep.subr.bf16.mxu0 0
    %4346 = vmatpush1.bf16.msra.mxu0 0
    %4347 = vmatprep.mubr.bf16.mxu0 0
    %4348 = vmatmul.mubr.bf16.gmra.mrb[0].mxu0 %v4310
    %v4349 = vpop.f32.mrb[0].mxu0
    %v4350 = vadd.f32 0.0, %v4349
    %v4351 = vpop.f32.mrb[0].mxu0
    %v4352 = vpop.f32.mrb[0].mxu0
    %v4353 = vpop.f32.mrb[0].mxu0
    %4354 = vdwg.mxu0
    %4355 = vrot.lane.b32.xlu0 %v364, 56
    %v4356 = vpop.permute.xlu0 %4355
    %v4358 = vsel %vm3870, %v4356, 0
    %4360 = vmatprep.subr.bf16.mxu0 0
    %4361 = vmatpush1.bf16.msra.mxu0 %v4358
    %4362 = vmatprep.subr.bf16.mxu0 0
    %4363 = vmatpush1.bf16.msra.mxu0 0
    %4364 = vmatprep.subr.bf16.mxu0 0
    %4365 = vmatpush1.bf16.msra.mxu0 0
    %4366 = vmatprep.subr.bf16.mxu0 0
    %4367 = vmatpush1.bf16.msra.mxu0 0
    %4368 = vmatprep.subr.bf16.mxu0 0
    %4369 = vmatpush1.bf16.msra.mxu0 0
    %4370 = vmatprep.subr.bf16.mxu0 0
    %4371 = vmatpush1.bf16.msra.mxu0 0
    %4372 = vmatprep.subr.bf16.mxu0 0
    %4373 = vmatpush1.bf16.msra.mxu0 0
    %4374 = vmatprep.subr.bf16.mxu0 0
    %4375 = vmatpush1.bf16.msra.mxu0 0
    %4376 = vmatprep.subr.bf16.mxu0 0
    %4377 = vmatpush1.bf16.msra.mxu0 0
    %4378 = vmatprep.subr.bf16.mxu0 0
    %4379 = vmatpush1.bf16.msra.mxu0 0
    %4380 = vmatprep.subr.bf16.mxu0 0
    %4381 = vmatpush1.bf16.msra.mxu0 0
    %4382 = vmatprep.subr.bf16.mxu0 0
    %4383 = vmatpush1.bf16.msra.mxu0 0
    %4384 = vmatprep.subr.bf16.mxu0 0
    %4385 = vmatpush1.bf16.msra.mxu0 0
    %4386 = vmatprep.subr.bf16.mxu0 0
    %4387 = vmatpush1.bf16.msra.mxu0 0
    %4388 = vmatprep.subr.bf16.mxu0 0
    %4389 = vmatpush1.bf16.msra.mxu0 0
    %4390 = vmatprep.subr.bf16.mxu0 0
    %4391 = vmatpush1.bf16.msra.mxu0 0
    %4392 = vmatprep.mubr.bf16.mxu0 0
    %4393 = vmatmul.mubr.bf16.gmra.mrb[0].mxu0 %v4310
    %v4394 = vpop.f32.mrb[0].mxu0
    %v4395 = vadd.f32 0.0, %v4394
    %v4396 = vpop.f32.mrb[0].mxu0
    %v4397 = vpop.f32.mrb[0].mxu0
    %v4398 = vpop.f32.mrb[0].mxu0
    %4399 = vdwg.mxu0
    %4400 = vrot.lane.b32.xlu0 %v365, 56
    %v4401 = vpop.permute.xlu0 %4400
    %v4403 = vsel %vm3870, %v4401, 0
    %4405 = vmatprep.subr.bf16.mxu0 0
    %4406 = vmatpush1.bf16.msra.mxu0 %v4403
    %4407 = vmatprep.subr.bf16.mxu0 0
    %4408 = vmatpush1.bf16.msra.mxu0 0
    %4409 = vmatprep.subr.bf16.mxu0 0
    %4410 = vmatpush1.bf16.msra.mxu0 0
    %4411 = vmatprep.subr.bf16.mxu0 0
    %4412 = vmatpush1.bf16.msra.mxu0 0
    %4413 = vmatprep.subr.bf16.mxu0 0
    %4414 = vmatpush1.bf16.msra.mxu0 0
    %4415 = vmatprep.subr.bf16.mxu0 0
    %4416 = vmatpush1.bf16.msra.mxu0 0
    %4417 = vmatprep.subr.bf16.mxu0 0
    %4418 = vmatpush1.bf16.msra.mxu0 0
    %4419 = vmatprep.subr.bf16.mxu0 0
    %4420 = vmatpush1.bf16.msra.mxu0 0
    %4421 = vmatprep.subr.bf16.mxu0 0
    %4422 = vmatpush1.bf16.msra.mxu0 0
    %4423 = vmatprep.subr.bf16.mxu0 0
    %4424 = vmatpush1.bf16.msra.mxu0 0
    %4425 = vmatprep.subr.bf16.mxu0 0
    %4426 = vmatpush1.bf16.msra.mxu0 0
    %4427 = vmatprep.subr.bf16.mxu0 0
    %4428 = vmatpush1.bf16.msra.mxu0 0
    %4429 = vmatprep.subr.bf16.mxu0 0
    %4430 = vmatpush1.bf16.msra.mxu0 0
    %4431 = vmatprep.subr.bf16.mxu0 0
    %4432 = vmatpush1.bf16.msra.mxu0 0
    %4433 = vmatprep.subr.bf16.mxu0 0
    %4434 = vmatpush1.bf16.msra.mxu0 0
    %4435 = vmatprep.subr.bf16.mxu0 0
    %4436 = vmatpush1.bf16.msra.mxu0 0
    %4437 = vmatprep.mubr.bf16.mxu0 0
    %4438 = vmatmul.mubr.bf16.gmra.mrb[0].mxu0 %v4310
    %v4439 = vpop.f32.mrb[0].mxu0
    %v4440 = vadd.f32 0.0, %v4439
    %v4441 = vpop.f32.mrb[0].mxu0
    %v4442 = vpop.f32.mrb[0].mxu0
    %v4443 = vpop.f32.mrb[0].mxu0
    %4444 = vdwg.mxu0
    %4445 = vrot.lane.b32.xlu0 %v366, 56
    %v4446 = vpop.permute.xlu0 %4445
    %v4448 = vsel %vm3870, %v4446, 0
    %4450 = vmatprep.subr.bf16.mxu0 0
    %4451 = vmatpush1.bf16.msra.mxu0 %v4448
    %4452 = vmatprep.subr.bf16.mxu0 0
    %4453 = vmatpush1.bf16.msra.mxu0 0
    %4454 = vmatprep.subr.bf16.mxu0 0
    %4455 = vmatpush1.bf16.msra.mxu0 0
    %4456 = vmatprep.subr.bf16.mxu0 0
    %4457 = vmatpush1.bf16.msra.mxu0 0
    %4458 = vmatprep.subr.bf16.mxu0 0
    %4459 = vmatpush1.bf16.msra.mxu0 0
    %4460 = vmatprep.subr.bf16.mxu0 0
    %4461 = vmatpush1.bf16.msra.mxu0 0
    %4462 = vmatprep.subr.bf16.mxu0 0
    %4463 = vmatpush1.bf16.msra.mxu0 0
    %4464 = vmatprep.subr.bf16.mxu0 0
    %4465 = vmatpush1.bf16.msra.mxu0 0
    %4466 = vmatprep.subr.bf16.mxu0 0
    %4467 = vmatpush1.bf16.msra.mxu0 0
    %4468 = vmatprep.subr.bf16.mxu0 0
    %4469 = vmatpush1.bf16.msra.mxu0 0
    %4470 = vmatprep.subr.bf16.mxu0 0
    %4471 = vmatpush1.bf16.msra.mxu0 0
    %4472 = vmatprep.subr.bf16.mxu0 0
    %4473 = vmatpush1.bf16.msra.mxu0 0
    %4474 = vmatprep.subr.bf16.mxu0 0
    %4475 = vmatpush1.bf16.msra.mxu0 0
    %4476 = vmatprep.subr.bf16.mxu0 0
    %4477 = vmatpush1.bf16.msra.mxu0 0
    %4478 = vmatprep.subr.bf16.mxu0 0
    %4479 = vmatpush1.bf16.msra.mxu0 0
    %4480 = vmatprep.subr.bf16.mxu0 0
    %4481 = vmatpush1.bf16.msra.mxu0 0
    %4482 = vmatprep.mubr.bf16.mxu0 0
    %4483 = vmatmul.mubr.bf16.gmra.mrb[0].mxu0 %v4310
    %v4484 = vpop.f32.mrb[0].mxu0
    %v4485 = vadd.f32 0.0, %v4484
    %v4486 = vpop.f32.mrb[0].mxu0
    %v4487 = vpop.f32.mrb[0].mxu0
    %v4488 = vpop.f32.mrb[0].mxu0
    %4489 = vdwg.mxu0
    %4490 = vrot.lane.b32.xlu0 %v367, 56
    %v4491 = vpop.permute.xlu0 %4490
    %v4493 = vsel %vm3870, %v4491, 0
    %4495 = vmatprep.subr.bf16.mxu0 0
    %4496 = vmatpush1.bf16.msra.mxu0 %v4493
    %4497 = vmatprep.subr.bf16.mxu0 0
    %4498 = vmatpush1.bf16.msra.mxu0 0
    %4499 = vmatprep.subr.bf16.mxu0 0
    %4500 = vmatpush1.bf16.msra.mxu0 0
    %4501 = vmatprep.subr.bf16.mxu0 0
    %4502 = vmatpush1.bf16.msra.mxu0 0
    %4503 = vmatprep.subr.bf16.mxu0 0
    %4504 = vmatpush1.bf16.msra.mxu0 0
    %4505 = vmatprep.subr.bf16.mxu0 0
    %4506 = vmatpush1.bf16.msra.mxu0 0
    %4507 = vmatprep.subr.bf16.mxu0 0
    %4508 = vmatpush1.bf16.msra.mxu0 0
    %4509 = vmatprep.subr.bf16.mxu0 0
    %4510 = vmatpush1.bf16.msra.mxu0 0
    %4511 = vmatprep.subr.bf16.mxu0 0
    %4512 = vmatpush1.bf16.msra.mxu0 0
    %4513 = vmatprep.subr.bf16.mxu0 0
    %4514 = vmatpush1.bf16.msra.mxu0 0
    %4515 = vmatprep.subr.bf16.mxu0 0
    %4516 = vmatpush1.bf16.msra.mxu0 0
    %4517 = vmatprep.subr.bf16.mxu0 0
    %4518 = vmatpush1.bf16.msra.mxu0 0
    %4519 = vmatprep.subr.bf16.mxu0 0
    %4520 = vmatpush1.bf16.msra.mxu0 0
    %4521 = vmatprep.subr.bf16.mxu0 0
    %4522 = vmatpush1.bf16.msra.mxu0 0
    %4523 = vmatprep.subr.bf16.mxu0 0
    %4524 = vmatpush1.bf16.msra.mxu0 0
    %4525 = vmatprep.subr.bf16.mxu0 0
    %4526 = vmatpush1.bf16.msra.mxu0 0
    %4527 = vmatprep.mubr.bf16.mxu0 0
    %4528 = vmatmul.mubr.bf16.gmra.mrb[0].mxu0 %v4310
    %v4529 = vpop.f32.mrb[0].mxu0
    %v4530 = vadd.f32 0.0, %v4529
    %v4531 = vpop.f32.mrb[0].mxu0
    %v4532 = vpop.f32.mrb[0].mxu0
    %v4533 = vpop.f32.mrb[0].mxu0
    %4534 = vdwg.mxu0
    %4535 = vrot.lane.b32.xlu0 %v368, 56
    %v4536 = vpop.permute.xlu0 %4535
    %v4538 = vsel %vm3870, %v4536, 0
    %4540 = vmatprep.subr.bf16.mxu0 0
    %4541 = vmatpush1.bf16.msra.mxu0 %v4538
    %4542 = vmatprep.subr.bf16.mxu0 0
    %4543 = vmatpush1.bf16.msra.mxu0 0
    %4544 = vmatprep.subr.bf16.mxu0 0
    %4545 = vmatpush1.bf16.msra.mxu0 0
    %4546 = vmatprep.subr.bf16.mxu0 0
    %4547 = vmatpush1.bf16.msra.mxu0 0
    %4548 = vmatprep.subr.bf16.mxu0 0
    %4549 = vmatpush1.bf16.msra.mxu0 0
    %4550 = vmatprep.subr.bf16.mxu0 0
    %4551 = vmatpush1.bf16.msra.mxu0 0
    %4552 = vmatprep.subr.bf16.mxu0 0
    %4553 = vmatpush1.bf16.msra.mxu0 0
    %4554 = vmatprep.subr.bf16.mxu0 0
    %4555 = vmatpush1.bf16.msra.mxu0 0
    %4556 = vmatprep.subr.bf16.mxu0 0
    %4557 = vmatpush1.bf16.msra.mxu0 0
    %4558 = vmatprep.subr.bf16.mxu0 0
    %4559 = vmatpush1.bf16.msra.mxu0 0
    %4560 = vmatprep.subr.bf16.mxu0 0
    %4561 = vmatpush1.bf16.msra.mxu0 0
    %4562 = vmatprep.subr.bf16.mxu0 0
    %4563 = vmatpush1.bf16.msra.mxu0 0
    %4564 = vmatprep.subr.bf16.mxu0 0
    %4565 = vmatpush1.bf16.msra.mxu0 0
    %4566 = vmatprep.subr.bf16.mxu0 0
    %4567 = vmatpush1.bf16.msra.mxu0 0
    %4568 = vmatprep.subr.bf16.mxu0 0
    %4569 = vmatpush1.bf16.msra.mxu0 0
    %4570 = vmatprep.subr.bf16.mxu0 0
    %4571 = vmatpush1.bf16.msra.mxu0 0
    %4572 = vmatprep.mubr.bf16.mxu0 0
    %4573 = vmatmul.mubr.bf16.gmra.mrb[0].mxu0 %v4310
    %v4574 = vpop.f32.mrb[0].mxu0
    %v4575 = vadd.f32 0.0, %v4574
    %v4576 = vpop.f32.mrb[0].mxu0
    %v4577 = vpop.f32.mrb[0].mxu0
    %v4578 = vpop.f32.mrb[0].mxu0
    %4579 = vdwg.mxu0
    %4580 = vrot.lane.b32.xlu0 %v369, 56
    %v4581 = vpop.permute.xlu0 %4580
    %v4583 = vsel %vm3870, %v4581, 0
    %4585 = vmatprep.subr.bf16.mxu0 0
    %4586 = vmatpush1.bf16.msra.mxu0 %v4583
    %4587 = vmatprep.subr.bf16.mxu0 0
    %4588 = vmatpush1.bf16.msra.mxu0 0
    %4589 = vmatprep.subr.bf16.mxu0 0
    %4590 = vmatpush1.bf16.msra.mxu0 0
    %4591 = vmatprep.subr.bf16.mxu0 0
    %4592 = vmatpush1.bf16.msra.mxu0 0
    %4593 = vmatprep.subr.bf16.mxu0 0
    %4594 = vmatpush1.bf16.msra.mxu0 0
    %4595 = vmatprep.subr.bf16.mxu0 0
    %4596 = vmatpush1.bf16.msra.mxu0 0
    %4597 = vmatprep.subr.bf16.mxu0 0
    %4598 = vmatpush1.bf16.msra.mxu0 0
    %4599 = vmatprep.subr.bf16.mxu0 0
    %4600 = vmatpush1.bf16.msra.mxu0 0
    %4601 = vmatprep.subr.bf16.mxu0 0
    %4602 = vmatpush1.bf16.msra.mxu0 0
    %4603 = vmatprep.subr.bf16.mxu0 0
    %4604 = vmatpush1.bf16.msra.mxu0 0
    %4605 = vmatprep.subr.bf16.mxu0 0
    %4606 = vmatpush1.bf16.msra.mxu0 0
    %4607 = vmatprep.subr.bf16.mxu0 0
    %4608 = vmatpush1.bf16.msra.mxu0 0
    %4609 = vmatprep.subr.bf16.mxu0 0
    %4610 = vmatpush1.bf16.msra.mxu0 0
    %4611 = vmatprep.subr.bf16.mxu0 0
    %4612 = vmatpush1.bf16.msra.mxu0 0
    %4613 = vmatprep.subr.bf16.mxu0 0
    %4614 = vmatpush1.bf16.msra.mxu0 0
    %4615 = vmatprep.subr.bf16.mxu0 0
    %4616 = vmatpush1.bf16.msra.mxu0 0
    %4617 = vmatprep.mubr.bf16.mxu0 0
    %4618 = vmatmul.mubr.bf16.gmra.mrb[0].mxu0 %v4310
    %v4619 = vpop.f32.mrb[0].mxu0
    %v4620 = vadd.f32 0.0, %v4619
    %v4621 = vpop.f32.mrb[0].mxu0
    %v4622 = vpop.f32.mrb[0].mxu0
    %v4623 = vpop.f32.mrb[0].mxu0
    %4624 = vdwg.mxu0
    %4625 = vrot.lane.b32.xlu0 %v370, 56
    %v4626 = vpop.permute.xlu0 %4625
    %v4628 = vsel %vm3870, %v4626, 0
    %4630 = vmatprep.subr.bf16.mxu0 0
    %4631 = vmatpush1.bf16.msra.mxu0 %v4628
    %4632 = vmatprep.subr.bf16.mxu0 0
    %4633 = vmatpush1.bf16.msra.mxu0 0
    %4634 = vmatprep.subr.bf16.mxu0 0
    %4635 = vmatpush1.bf16.msra.mxu0 0
    %4636 = vmatprep.subr.bf16.mxu0 0
    %4637 = vmatpush1.bf16.msra.mxu0 0
    %4638 = vmatprep.subr.bf16.mxu0 0
    %4639 = vmatpush1.bf16.msra.mxu0 0
    %4640 = vmatprep.subr.bf16.mxu0 0
    %4641 = vmatpush1.bf16.msra.mxu0 0
    %4642 = vmatprep.subr.bf16.mxu0 0
    %4643 = vmatpush1.bf16.msra.mxu0 0
    %4644 = vmatprep.subr.bf16.mxu0 0
    %4645 = vmatpush1.bf16.msra.mxu0 0
    %4646 = vmatprep.subr.bf16.mxu0 0
    %4647 = vmatpush1.bf16.msra.mxu0 0
    %4648 = vmatprep.subr.bf16.mxu0 0
    %4649 = vmatpush1.bf16.msra.mxu0 0
    %4650 = vmatprep.subr.bf16.mxu0 0
    %4651 = vmatpush1.bf16.msra.mxu0 0
    %4652 = vmatprep.subr.bf16.mxu0 0
    %4653 = vmatpush1.bf16.msra.mxu0 0
    %4654 = vmatprep.subr.bf16.mxu0 0
    %4655 = vmatpush1.bf16.msra.mxu0 0
    %4656 = vmatprep.subr.bf16.mxu0 0
    %4657 = vmatpush1.bf16.msra.mxu0 0
    %4658 = vmatprep.subr.bf16.mxu0 0
    %4659 = vmatpush1.bf16.msra.mxu0 0
    %4660 = vmatprep.subr.bf16.mxu0 0
    %4661 = vmatpush1.bf16.msra.mxu0 0
    %4662 = vmatprep.mubr.bf16.mxu0 0
    %4663 = vmatmul.mubr.bf16.gmra.mrb[0].mxu0 %v4310
    %v4664 = vpop.f32.mrb[0].mxu0
    %v4665 = vadd.f32 0.0, %v4664
    %v4666 = vpop.f32.mrb[0].mxu0
    %v4667 = vpop.f32.mrb[0].mxu0
    %v4668 = vpop.f32.mrb[0].mxu0
    %4669 = vdwg.mxu0
    %v4670 = vpack.c.bf16 %v4395, %v4350
    %v4671 = vpack.c.bf16 %v4485, %v4440
    %v4672 = vpack.c.bf16 %v4575, %v4530
    %v4673 = vpack.c.bf16 %v4665, %v4620
    %s4674 = scalar_lea.vmem %s7, 4
    %v4675 = vld [vmem:[%s4674] sm:$0xf]
    %v4677 = vsel %vm374, %v4670, 0
    %v4680 = vsel %vm374, %v4671, 0
    %v4683 = vsel %vm374, %v4672, 0
    %v4686 = vsel %vm374, %v4673, 0
    %v4689 = vsel %vm3870, %v4675, 0
    %4691 = vmatprep.subr.bf16.mxu0 0
    %4692 = vmatpush1.bf16.msra.mxu0 %v4689
    %4693 = vmatprep.subr.bf16.mxu0 0
    %4694 = vmatpush1.bf16.msra.mxu0 0
    %4695 = vmatprep.subr.bf16.mxu0 0
    %4696 = vmatpush1.bf16.msra.mxu0 0
    %4697 = vmatprep.subr.bf16.mxu0 0
    %4698 = vmatpush1.bf16.msra.mxu0 0
    %4699 = vmatprep.subr.bf16.mxu0 0
    %4700 = vmatpush1.bf16.msra.mxu0 0
    %4701 = vmatprep.subr.bf16.mxu0 0
    %4702 = vmatpush1.bf16.msra.mxu0 0
    %4703 = vmatprep.subr.bf16.mxu0 0
    %4704 = vmatpush1.bf16.msra.mxu0 0
    %4705 = vmatprep.subr.bf16.mxu0 0
    %4706 = vmatpush1.bf16.msra.mxu0 0
    %4707 = vmatprep.subr.bf16.mxu0 0
    %4708 = vmatpush1.bf16.msra.mxu0 0
    %4709 = vmatprep.subr.bf16.mxu0 0
    %4710 = vmatpush1.bf16.msra.mxu0 0
    %4711 = vmatprep.subr.bf16.mxu0 0
    %4712 = vmatpush1.bf16.msra.mxu0 0
    %4713 = vmatprep.subr.bf16.mxu0 0
    %4714 = vmatpush1.bf16.msra.mxu0 0
    %4715 = vmatprep.subr.bf16.mxu0 0
    %4716 = vmatpush1.bf16.msra.mxu0 0
    %4717 = vmatprep.subr.bf16.mxu0 0
    %4718 = vmatpush1.bf16.msra.mxu0 0
    %4719 = vmatprep.subr.bf16.mxu0 0
    %4720 = vmatpush1.bf16.msra.mxu0 0
    %4721 = vmatprep.subr.bf16.mxu0 0
    %4722 = vmatpush1.bf16.msra.mxu0 0
    %4723 = vmatprep.mubr.bf16.mxu0 0
    %4724 = vmatmul.mubr.bf16.gmra.mrb[0].mxu0 %v4677
    %v4725 = vpop.f32.mrb[0].mxu0
    %v4726 = vadd.f32 0.0, %v4725
    %v4727 = vpop.f32.mrb[0].mxu0
    %v4728 = vpop.f32.mrb[0].mxu0
    %v4729 = vadd.f32 0.0, %v4728
    %v4730 = vpop.f32.mrb[0].mxu0
    %4731 = vmatprep.mubr.bf16.mxu0 0
    %4732 = vmatmul.mubr.bf16.gmra.mrb[0].mxu0 %v4680
    %v4733 = vpop.f32.mrb[0].mxu0
    %v4734 = vadd.f32 0.0, %v4733
    %v4735 = vpop.f32.mrb[0].mxu0
    %v4736 = vpop.f32.mrb[0].mxu0
    %v4737 = vadd.f32 0.0, %v4736
    %v4738 = vpop.f32.mrb[0].mxu0
    %4739 = vmatprep.mubr.bf16.mxu0 0
    %4740 = vmatmul.mubr.bf16.gmra.mrb[0].mxu0 %v4683
    %v4741 = vpop.f32.mrb[0].mxu0
    %v4742 = vadd.f32 0.0, %v4741
    %v4743 = vpop.f32.mrb[0].mxu0
    %v4744 = vpop.f32.mrb[0].mxu0
    %v4745 = vadd.f32 0.0, %v4744
    %v4746 = vpop.f32.mrb[0].mxu0
    %4747 = vmatprep.mubr.bf16.mxu0 0
    %4748 = vmatmul.mubr.bf16.gmra.mrb[0].mxu0 %v4686
    %v4749 = vpop.f32.mrb[0].mxu0
    %v4750 = vadd.f32 0.0, %v4749
    %v4751 = vpop.f32.mrb[0].mxu0
    %v4752 = vpop.f32.mrb[0].mxu0
    %v4753 = vadd.f32 0.0, %v4752
    %v4754 = vpop.f32.mrb[0].mxu0
    %4755 = vdwg.mxu0
    %v4757 = vsel %vm374, %v4229, 0
    %v4760 = vsel %vm374, %v4230, 0
    %v4763 = vsel %vm374, %v4231, 0
    %v4766 = vsel %vm374, %v4232, 0
    %v4769 = vsel %vm3870, %v4233, 0
    %4771 = vmatprep.subr.bf16.mxu0 0
    %4772 = vmatpush1.bf16.msra.mxu0 %v4769
    %4773 = vmatprep.subr.bf16.mxu0 0
    %4774 = vmatpush1.bf16.msra.mxu0 0
    %4775 = vmatprep.subr.bf16.mxu0 0
    %4776 = vmatpush1.bf16.msra.mxu0 0
    %4777 = vmatprep.subr.bf16.mxu0 0
    %4778 = vmatpush1.bf16.msra.mxu0 0
    %4779 = vmatprep.subr.bf16.mxu0 0
    %4780 = vmatpush1.bf16.msra.mxu0 0
    %4781 = vmatprep.subr.bf16.mxu0 0
    %4782 = vmatpush1.bf16.msra.mxu0 0
    %4783 = vmatprep.subr.bf16.mxu0 0
    %4784 = vmatpush1.bf16.msra.mxu0 0
    %4785 = vmatprep.subr.bf16.mxu0 0
    %4786 = vmatpush1.bf16.msra.mxu0 0
    %4787 = vmatprep.subr.bf16.mxu0 0
    %4788 = vmatpush1.bf16.msra.mxu0 0
    %4789 = vmatprep.subr.bf16.mxu0 0
    %4790 = vmatpush1.bf16.msra.mxu0 0
    %4791 = vmatprep.subr.bf16.mxu0 0
    %4792 = vmatpush1.bf16.msra.mxu0 0
    %4793 = vmatprep.subr.bf16.mxu0 0
    %4794 = vmatpush1.bf16.msra.mxu0 0
    %4795 = vmatprep.subr.bf16.mxu0 0
    %4796 = vmatpush1.bf16.msra.mxu0 0
    %4797 = vmatprep.subr.bf16.mxu0 0
    %4798 = vmatpush1.bf16.msra.mxu0 0
    %4799 = vmatprep.subr.bf16.mxu0 0
    %4800 = vmatpush1.bf16.msra.mxu0 0
    %4801 = vmatprep.subr.bf16.mxu0 0
    %4802 = vmatpush1.bf16.msra.mxu0 0
    %4803 = vmatprep.mubr.bf16.mxu0 0
    %4804 = vmatmul.mubr.bf16.gmra.mrb[0].mxu0 %v4757
    %v4805 = vpop.f32.mrb[0].mxu0
    %v4806 = vadd.f32 %v4726, %v4805
    %v4807 = vpop.f32.mrb[0].mxu0
    %v4808 = vpop.f32.mrb[0].mxu0
    %v4809 = vadd.f32 %v4729, %v4808
    %v4810 = vpop.f32.mrb[0].mxu0
    %4811 = vmatprep.mubr.bf16.mxu0 0
    %4812 = vmatmul.mubr.bf16.gmra.mrb[0].mxu0 %v4760
    %v4813 = vpop.f32.mrb[0].mxu0
    %v4814 = vadd.f32 %v4734, %v4813
    %v4815 = vpop.f32.mrb[0].mxu0
    %v4816 = vpop.f32.mrb[0].mxu0
    %v4817 = vadd.f32 %v4737, %v4816
    %v4818 = vpop.f32.mrb[0].mxu0
    %4819 = vmatprep.mubr.bf16.mxu0 0
    %4820 = vmatmul.mubr.bf16.gmra.mrb[0].mxu0 %v4763
    %v4821 = vpop.f32.mrb[0].mxu0
    %v4822 = vadd.f32 %v4742, %v4821
    %v4823 = vpop.f32.mrb[0].mxu0
    %v4824 = vpop.f32.mrb[0].mxu0
    %v4825 = vadd.f32 %v4745, %v4824
    %v4826 = vpop.f32.mrb[0].mxu0
    %4827 = vmatprep.mubr.bf16.mxu0 0
    %4828 = vmatmul.mubr.bf16.gmra.mrb[0].mxu0 %v4766
    %v4829 = vpop.f32.mrb[0].mxu0
    %v4830 = vadd.f32 %v4750, %v4829
    %v4831 = vpop.f32.mrb[0].mxu0
    %v4832 = vpop.f32.mrb[0].mxu0
    %v4833 = vadd.f32 %v4753, %v4832
    %v4834 = vpop.f32.mrb[0].mxu0
    %4835 = vdwg.mxu0
    %s4836 = sld [smem:[#allocation2 + $0x2]]
    %v4837 = vstv %s4836
    %v4838 = vmul.f32 %v4837, %v3758
    %v4839 = vmul.f32 %v4837, %v3761
    %v4840 = vmul.f32 %v4837, %v3764
    %v4841 = vmul.f32 %v4837, %v3767
    %v4842 = vmul.f32 %v4837, %v3770
    %v4843 = vmul.f32 %v4837, %v3773
    %v4844 = vmul.f32 %v4837, %v3776
    %v4845 = vmul.f32 %v4837, %v3779
    %v4854 = vlaneseq
    %v4855 = vshrl.u32 %v4854, 7
    %v4856 = vsub.s32 %v3783, %v4855
    %v4857 = vrot.slane %v4838, %v4856
    %v4858 = vlaneseq
    %v4859 = vshrl.u32 %v4858, 7
    %v4860 = vsub.s32 %v3783, %v4859
    %v4861 = vrot.slane %v4839, %v4860
    %v4862 = vlaneseq
    %v4863 = vshrl.u32 %v4862, 7
    %v4864 = vsub.s32 %v3783, %v4863
    %v4865 = vrot.slane %v4840, %v4864
    %v4866 = vlaneseq
    %v4867 = vshrl.u32 %v4866, 7
    %v4868 = vsub.s32 %v3783, %v4867
    %v4869 = vrot.slane %v4841, %v4868
    %v4870 = vlaneseq
    %v4871 = vshrl.u32 %v4870, 7
    %v4872 = vsub.s32 %v3783, %v4871
    %v4873 = vrot.slane %v4842, %v4872
    %v4874 = vlaneseq
    %v4875 = vshrl.u32 %v4874, 7
    %v4876 = vsub.s32 %v3783, %v4875
    %v4877 = vrot.slane %v4843, %v4876
    %v4878 = vlaneseq
    %v4879 = vshrl.u32 %v4878, 7
    %v4880 = vsub.s32 %v3783, %v4879
    %v4881 = vrot.slane %v4844, %v4880
    %v4882 = vlaneseq
    %v4883 = vshrl.u32 %v4882, 7
    %v4884 = vsub.s32 %v3783, %v4883
    %v4885 = vrot.slane %v4845, %v4884
    %v4886 = vsel %vm3835, %v4861, %v4857
    %v4887 = vsel %vm3837, %v4865, %v4886
    %v4888 = vsel %vm3839, %v4869, %v4887
    %v4889 = vsel %vm3841, %v4873, %v4888
    %v4890 = vsel %vm3843, %v4877, %v4889
    %v4891 = vsel %vm3845, %v4881, %v4890
    %v4892 = vsel %vm3847, %v4885, %v4891
    %v4894 = vadd.f32 %v2721, %v4892
    %v4895 = vsel %vm3784, -1e+09, %v4894
    %v4896 = vsel %vm374, %v4895, -inf
    %4897 = vmax.xlane.f32.xlu0 %v4896
    %v4898 = vpop.xlane.xlu0 %4897
    %v4899 = vsub.f32 %v4895, %v4898
    %v4900 = vmul.f32 %v4899, 1.442695
    %v4901 = vpow.pop %v4900
    %v4902 = vsel %vm374, %v4901, 0.0
    %4903 = vadd.xlane.f32.xlu0 %v4902
    %v4904 = vpop.xlane.xlu0 %4903
    %v4905 = vrcp.pop %v4904
    %v4906 = vmul.f32 %v4901, %v4905
    %4907 = vst.msk [vmem:[#allocation5 + $0x10] sm:$0xff] %vm374, %v4906
    %v4908 = vpack.c.bf16 %v4906, %v4906
    %4909 = vrot.lane.b32.xlu0 %v363, 48
    %v4910 = vpop.permute.xlu0 %4909
    %v4912 = vsel %vm374, %v4908, 0
    %v4915 = vsel %vm3870, %v4910, 0
    %4917 = vmatprep.subr.bf16.mxu0 0
    %4918 = vmatpush1.bf16.msra.mxu0 %v4915
    %4919 = vmatprep.subr.bf16.mxu0 0
    %4920 = vmatpush1.bf16.msra.mxu0 0
    %4921 = vmatprep.subr.bf16.mxu0 0
    %4922 = vmatpush1.bf16.msra.mxu0 0
    %4923 = vmatprep.subr.bf16.mxu0 0
    %4924 = vmatpush1.bf16.msra.mxu0 0
    %4925 = vmatprep.subr.bf16.mxu0 0
    %4926 = vmatpush1.bf16.msra.mxu0 0
    %4927 = vmatprep.subr.bf16.mxu0 0
    %4928 = vmatpush1.bf16.msra.mxu0 0
    %4929 = vmatprep.subr.bf16.mxu0 0
    %4930 = vmatpush1.bf16.msra.mxu0 0
    %4931 = vmatprep.subr.bf16.mxu0 0
    %4932 = vmatpush1.bf16.msra.mxu0 0
    %4933 = vmatprep.subr.bf16.mxu0 0
    %4934 = vmatpush1.bf16.msra.mxu0 0
    %4935 = vmatprep.subr.bf16.mxu0 0
    %4936 = vmatpush1.bf16.msra.mxu0 0
    %4937 = vmatprep.subr.bf16.mxu0 0
    %4938 = vmatpush1.bf16.msra.mxu0 0
    %4939 = vmatprep.subr.bf16.mxu0 0
    %4940 = vmatpush1.bf16.msra.mxu0 0
    %4941 = vmatprep.subr.bf16.mxu0 0
    %4942 = vmatpush1.bf16.msra.mxu0 0
    %4943 = vmatprep.subr.bf16.mxu0 0
    %4944 = vmatpush1.bf16.msra.mxu0 0
    %4945 = vmatprep.subr.bf16.mxu0 0
    %4946 = vmatpush1.bf16.msra.mxu0 0
    %4947 = vmatprep.subr.bf16.mxu0 0
    %4948 = vmatpush1.bf16.msra.mxu0 0
    %4949 = vmatprep.mubr.bf16.mxu0 0
    %4950 = vmatmul.mubr.bf16.gmra.mrb[0].mxu0 %v4912
    %v4951 = vpop.f32.mrb[0].mxu0
    %v4952 = vadd.f32 0.0, %v4951
    %v4953 = vpop.f32.mrb[0].mxu0
    %v4954 = vpop.f32.mrb[0].mxu0
    %v4955 = vpop.f32.mrb[0].mxu0
    %4956 = vdwg.mxu0
    %4957 = vrot.lane.b32.xlu0 %v364, 48
    %v4958 = vpop.permute.xlu0 %4957
    %v4960 = vsel %vm3870, %v4958, 0
    %4962 = vmatprep.subr.bf16.mxu0 0
    %4963 = vmatpush1.bf16.msra.mxu0 %v4960
    %4964 = vmatprep.subr.bf16.mxu0 0
    %4965 = vmatpush1.bf16.msra.mxu0 0
    %4966 = vmatprep.subr.bf16.mxu0 0
    %4967 = vmatpush1.bf16.msra.mxu0 0
    %4968 = vmatprep.subr.bf16.mxu0 0
    %4969 = vmatpush1.bf16.msra.mxu0 0
    %4970 = vmatprep.subr.bf16.mxu0 0
    %4971 = vmatpush1.bf16.msra.mxu0 0
    %4972 = vmatprep.subr.bf16.mxu0 0
    %4973 = vmatpush1.bf16.msra.mxu0 0
    %4974 = vmatprep.subr.bf16.mxu0 0
    %4975 = vmatpush1.bf16.msra.mxu0 0
    %4976 = vmatprep.subr.bf16.mxu0 0
    %4977 = vmatpush1.bf16.msra.mxu0 0
    %4978 = vmatprep.subr.bf16.mxu0 0
    %4979 = vmatpush1.bf16.msra.mxu0 0
    %4980 = vmatprep.subr.bf16.mxu0 0
    %4981 = vmatpush1.bf16.msra.mxu0 0
    %4982 = vmatprep.subr.bf16.mxu0 0
    %4983 = vmatpush1.bf16.msra.mxu0 0
    %4984 = vmatprep.subr.bf16.mxu0 0
    %4985 = vmatpush1.bf16.msra.mxu0 0
    %4986 = vmatprep.subr.bf16.mxu0 0
    %4987 = vmatpush1.bf16.msra.mxu0 0
    %4988 = vmatprep.subr.bf16.mxu0 0
    %4989 = vmatpush1.bf16.msra.mxu0 0
    %4990 = vmatprep.subr.bf16.mxu0 0
    %4991 = vmatpush1.bf16.msra.mxu0 0
    %4992 = vmatprep.subr.bf16.mxu0 0
    %4993 = vmatpush1.bf16.msra.mxu0 0
    %4994 = vmatprep.mubr.bf16.mxu0 0
    %4995 = vmatmul.mubr.bf16.gmra.mrb[0].mxu0 %v4912
    %v4996 = vpop.f32.mrb[0].mxu0
    %v4997 = vadd.f32 0.0, %v4996
    %v4998 = vpop.f32.mrb[0].mxu0
    %v4999 = vpop.f32.mrb[0].mxu0
    %v5000 = vpop.f32.mrb[0].mxu0
    %5001 = vdwg.mxu0
    %5002 = vrot.lane.b32.xlu0 %v365, 48
    %v5003 = vpop.permute.xlu0 %5002
    %v5005 = vsel %vm3870, %v5003, 0
    %5007 = vmatprep.subr.bf16.mxu0 0
    %5008 = vmatpush1.bf16.msra.mxu0 %v5005
    %5009 = vmatprep.subr.bf16.mxu0 0
    %5010 = vmatpush1.bf16.msra.mxu0 0
    %5011 = vmatprep.subr.bf16.mxu0 0
    %5012 = vmatpush1.bf16.msra.mxu0 0
    %5013 = vmatprep.subr.bf16.mxu0 0
    %5014 = vmatpush1.bf16.msra.mxu0 0
    %5015 = vmatprep.subr.bf16.mxu0 0
    %5016 = vmatpush1.bf16.msra.mxu0 0
    %5017 = vmatprep.subr.bf16.mxu0 0
    %5018 = vmatpush1.bf16.msra.mxu0 0
    %5019 = vmatprep.subr.bf16.mxu0 0
    %5020 = vmatpush1.bf16.msra.mxu0 0
    %5021 = vmatprep.subr.bf16.mxu0 0
    %5022 = vmatpush1.bf16.msra.mxu0 0
    %5023 = vmatprep.subr.bf16.mxu0 0
    %5024 = vmatpush1.bf16.msra.mxu0 0
    %5025 = vmatprep.subr.bf16.mxu0 0
    %5026 = vmatpush1.bf16.msra.mxu0 0
    %5027 = vmatprep.subr.bf16.mxu0 0
    %5028 = vmatpush1.bf16.msra.mxu0 0
    %5029 = vmatprep.subr.bf16.mxu0 0
    %5030 = vmatpush1.bf16.msra.mxu0 0
    %5031 = vmatprep.subr.bf16.mxu0 0
    %5032 = vmatpush1.bf16.msra.mxu0 0
    %5033 = vmatprep.subr.bf16.mxu0 0
    %5034 = vmatpush1.bf16.msra.mxu0 0
    %5035 = vmatprep.subr.bf16.mxu0 0
    %5036 = vmatpush1.bf16.msra.mxu0 0
    %5037 = vmatprep.subr.bf16.mxu0 0
    %5038 = vmatpush1.bf16.msra.mxu0 0
    %5039 = vmatprep.mubr.bf16.mxu0 0
    %5040 = vmatmul.mubr.bf16.gmra.mrb[0].mxu0 %v4912
    %v5041 = vpop.f32.mrb[0].mxu0
    %v5042 = vadd.f32 0.0, %v5041
    %v5043 = vpop.f32.mrb[0].mxu0
    %v5044 = vpop.f32.mrb[0].mxu0
    %v5045 = vpop.f32.mrb[0].mxu0
    %5046 = vdwg.mxu0
    %5047 = vrot.lane.b32.xlu0 %v366, 48
    %v5048 = vpop.permute.xlu0 %5047
    %v5050 = vsel %vm3870, %v5048, 0
    %5052 = vmatprep.subr.bf16.mxu0 0
    %5053 = vmatpush1.bf16.msra.mxu0 %v5050
    %5054 = vmatprep.subr.bf16.mxu0 0
    %5055 = vmatpush1.bf16.msra.mxu0 0
    %5056 = vmatprep.subr.bf16.mxu0 0
    %5057 = vmatpush1.bf16.msra.mxu0 0
    %5058 = vmatprep.subr.bf16.mxu0 0
    %5059 = vmatpush1.bf16.msra.mxu0 0
    %5060 = vmatprep.subr.bf16.mxu0 0
    %5061 = vmatpush1.bf16.msra.mxu0 0
    %5062 = vmatprep.subr.bf16.mxu0 0
    %5063 = vmatpush1.bf16.msra.mxu0 0
    %5064 = vmatprep.subr.bf16.mxu0 0
    %5065 = vmatpush1.bf16.msra.mxu0 0
    %5066 = vmatprep.subr.bf16.mxu0 0
    %5067 = vmatpush1.bf16.msra.mxu0 0
    %5068 = vmatprep.subr.bf16.mxu0 0
    %5069 = vmatpush1.bf16.msra.mxu0 0
    %5070 = vmatprep.subr.bf16.mxu0 0
    %5071 = vmatpush1.bf16.msra.mxu0 0
    %5072 = vmatprep.subr.bf16.mxu0 0
    %5073 = vmatpush1.bf16.msra.mxu0 0
    %5074 = vmatprep.subr.bf16.mxu0 0
    %5075 = vmatpush1.bf16.msra.mxu0 0
    %5076 = vmatprep.subr.bf16.mxu0 0
    %5077 = vmatpush1.bf16.msra.mxu0 0
    %5078 = vmatprep.subr.bf16.mxu0 0
    %5079 = vmatpush1.bf16.msra.mxu0 0
    %5080 = vmatprep.subr.bf16.mxu0 0
    %5081 = vmatpush1.bf16.msra.mxu0 0
    %5082 = vmatprep.subr.bf16.mxu0 0
    %5083 = vmatpush1.bf16.msra.mxu0 0
    %5084 = vmatprep.mubr.bf16.mxu0 0
    %5085 = vmatmul.mubr.bf16.gmra.mrb[0].mxu0 %v4912
    %v5086 = vpop.f32.mrb[0].mxu0
    %v5087 = vadd.f32 0.0, %v5086
    %v5088 = vpop.f32.mrb[0].mxu0
    %v5089 = vpop.f32.mrb[0].mxu0
    %v5090 = vpop.f32.mrb[0].mxu0
    %5091 = vdwg.mxu0
    %5092 = vrot.lane.b32.xlu0 %v367, 48
    %v5093 = vpop.permute.xlu0 %5092
    %v5095 = vsel %vm3870, %v5093, 0
    %5097 = vmatprep.subr.bf16.mxu0 0
    %5098 = vmatpush1.bf16.msra.mxu0 %v5095
    %5099 = vmatprep.subr.bf16.mxu0 0
    %5100 = vmatpush1.bf16.msra.mxu0 0
    %5101 = vmatprep.subr.bf16.mxu0 0
    %5102 = vmatpush1.bf16.msra.mxu0 0
    %5103 = vmatprep.subr.bf16.mxu0 0
    %5104 = vmatpush1.bf16.msra.mxu0 0
    %5105 = vmatprep.subr.bf16.mxu0 0
    %5106 = vmatpush1.bf16.msra.mxu0 0
    %5107 = vmatprep.subr.bf16.mxu0 0
    %5108 = vmatpush1.bf16.msra.mxu0 0
    %5109 = vmatprep.subr.bf16.mxu0 0
    %5110 = vmatpush1.bf16.msra.mxu0 0
    %5111 = vmatprep.subr.bf16.mxu0 0
    %5112 = vmatpush1.bf16.msra.mxu0 0
    %5113 = vmatprep.subr.bf16.mxu0 0
    %5114 = vmatpush1.bf16.msra.mxu0 0
    %5115 = vmatprep.subr.bf16.mxu0 0
    %5116 = vmatpush1.bf16.msra.mxu0 0
    %5117 = vmatprep.subr.bf16.mxu0 0
    %5118 = vmatpush1.bf16.msra.mxu0 0
    %5119 = vmatprep.subr.bf16.mxu0 0
    %5120 = vmatpush1.bf16.msra.mxu0 0
    %5121 = vmatprep.subr.bf16.mxu0 0
    %5122 = vmatpush1.bf16.msra.mxu0 0
    %5123 = vmatprep.subr.bf16.mxu0 0
    %5124 = vmatpush1.bf16.msra.mxu0 0
    %5125 = vmatprep.subr.bf16.mxu0 0
    %5126 = vmatpush1.bf16.msra.mxu0 0
    %5127 = vmatprep.subr.bf16.mxu0 0
    %5128 = vmatpush1.bf16.msra.mxu0 0
    %5129 = vmatprep.mubr.bf16.mxu0 0
    %5130 = vmatmul.mubr.bf16.gmra.mrb[0].mxu0 %v4912
    %v5131 = vpop.f32.mrb[0].mxu0
    %v5132 = vadd.f32 0.0, %v5131
    %v5133 = vpop.f32.mrb[0].mxu0
    %v5134 = vpop.f32.mrb[0].mxu0
    %v5135 = vpop.f32.mrb[0].mxu0
    %5136 = vdwg.mxu0
    %5137 = vrot.lane.b32.xlu0 %v368, 48
    %v5138 = vpop.permute.xlu0 %5137
    %v5140 = vsel %vm3870, %v5138, 0
    %5142 = vmatprep.subr.bf16.mxu0 0
    %5143 = vmatpush1.bf16.msra.mxu0 %v5140
    %5144 = vmatprep.subr.bf16.mxu0 0
    %5145 = vmatpush1.bf16.msra.mxu0 0
    %5146 = vmatprep.subr.bf16.mxu0 0
    %5147 = vmatpush1.bf16.msra.mxu0 0
    %5148 = vmatprep.subr.bf16.mxu0 0
    %5149 = vmatpush1.bf16.msra.mxu0 0
    %5150 = vmatprep.subr.bf16.mxu0 0
    %5151 = vmatpush1.bf16.msra.mxu0 0
    %5152 = vmatprep.subr.bf16.mxu0 0
    %5153 = vmatpush1.bf16.msra.mxu0 0
    %5154 = vmatprep.subr.bf16.mxu0 0
    %5155 = vmatpush1.bf16.msra.mxu0 0
    %5156 = vmatprep.subr.bf16.mxu0 0
    %5157 = vmatpush1.bf16.msra.mxu0 0
    %5158 = vmatprep.subr.bf16.mxu0 0
    %5159 = vmatpush1.bf16.msra.mxu0 0
    %5160 = vmatprep.subr.bf16.mxu0 0
    %5161 = vmatpush1.bf16.msra.mxu0 0
    %5162 = vmatprep.subr.bf16.mxu0 0
    %5163 = vmatpush1.bf16.msra.mxu0 0
    %5164 = vmatprep.subr.bf16.mxu0 0
    %5165 = vmatpush1.bf16.msra.mxu0 0
    %5166 = vmatprep.subr.bf16.mxu0 0
    %5167 = vmatpush1.bf16.msra.mxu0 0
    %5168 = vmatprep.subr.bf16.mxu0 0
    %5169 = vmatpush1.bf16.msra.mxu0 0
    %5170 = vmatprep.subr.bf16.mxu0 0
    %5171 = vmatpush1.bf16.msra.mxu0 0
    %5172 = vmatprep.subr.bf16.mxu0 0
    %5173 = vmatpush1.bf16.msra.mxu0 0
    %5174 = vmatprep.mubr.bf16.mxu0 0
    %5175 = vmatmul.mubr.bf16.gmra.mrb[0].mxu0 %v4912
    %v5176 = vpop.f32.mrb[0].mxu0
    %v5177 = vadd.f32 0.0, %v5176
    %v5178 = vpop.f32.mrb[0].mxu0
    %v5179 = vpop.f32.mrb[0].mxu0
    %v5180 = vpop.f32.mrb[0].mxu0
    %5181 = vdwg.mxu0
    %5182 = vrot.lane.b32.xlu0 %v369, 48
    %v5183 = vpop.permute.xlu0 %5182
    %v5185 = vsel %vm3870, %v5183, 0
    %5187 = vmatprep.subr.bf16.mxu0 0
    %5188 = vmatpush1.bf16.msra.mxu0 %v5185
    %5189 = vmatprep.subr.bf16.mxu0 0
    %5190 = vmatpush1.bf16.msra.mxu0 0
    %5191 = vmatprep.subr.bf16.mxu0 0
    %5192 = vmatpush1.bf16.msra.mxu0 0
    %5193 = vmatprep.subr.bf16.mxu0 0
    %5194 = vmatpush1.bf16.msra.mxu0 0
    %5195 = vmatprep.subr.bf16.mxu0 0
    %5196 = vmatpush1.bf16.msra.mxu0 0
    %5197 = vmatprep.subr.bf16.mxu0 0
    %5198 = vmatpush1.bf16.msra.mxu0 0
    %5199 = vmatprep.subr.bf16.mxu0 0
    %5200 = vmatpush1.bf16.msra.mxu0 0
    %5201 = vmatprep.subr.bf16.mxu0 0
    %5202 = vmatpush1.bf16.msra.mxu0 0
    %5203 = vmatprep.subr.bf16.mxu0 0
    %5204 = vmatpush1.bf16.msra.mxu0 0
    %5205 = vmatprep.subr.bf16.mxu0 0
    %5206 = vmatpush1.bf16.msra.mxu0 0
    %5207 = vmatprep.subr.bf16.mxu0 0
    %5208 = vmatpush1.bf16.msra.mxu0 0
    %5209 = vmatprep.subr.bf16.mxu0 0
    %5210 = vmatpush1.bf16.msra.mxu0 0
    %5211 = vmatprep.subr.bf16.mxu0 0
    %5212 = vmatpush1.bf16.msra.mxu0 0
    %5213 = vmatprep.subr.bf16.mxu0 0
    %5214 = vmatpush1.bf16.msra.mxu0 0
    %5215 = vmatprep.subr.bf16.mxu0 0
    %5216 = vmatpush1.bf16.msra.mxu0 0
    %5217 = vmatprep.subr.bf16.mxu0 0
    %5218 = vmatpush1.bf16.msra.mxu0 0
    %5219 = vmatprep.mubr.bf16.mxu0 0
    %5220 = vmatmul.mubr.bf16.gmra.mrb[0].mxu0 %v4912
    %v5221 = vpop.f32.mrb[0].mxu0
    %v5222 = vadd.f32 0.0, %v5221
    %v5223 = vpop.f32.mrb[0].mxu0
    %v5224 = vpop.f32.mrb[0].mxu0
    %v5225 = vpop.f32.mrb[0].mxu0
    %5226 = vdwg.mxu0
    %5227 = vrot.lane.b32.xlu0 %v370, 48
    %v5228 = vpop.permute.xlu0 %5227
    %v5230 = vsel %vm3870, %v5228, 0
    %5232 = vmatprep.subr.bf16.mxu0 0
    %5233 = vmatpush1.bf16.msra.mxu0 %v5230
    %5234 = vmatprep.subr.bf16.mxu0 0
    %5235 = vmatpush1.bf16.msra.mxu0 0
    %5236 = vmatprep.subr.bf16.mxu0 0
    %5237 = vmatpush1.bf16.msra.mxu0 0
    %5238 = vmatprep.subr.bf16.mxu0 0
    %5239 = vmatpush1.bf16.msra.mxu0 0
    %5240 = vmatprep.subr.bf16.mxu0 0
    %5241 = vmatpush1.bf16.msra.mxu0 0
    %5242 = vmatprep.subr.bf16.mxu0 0
    %5243 = vmatpush1.bf16.msra.mxu0 0
    %5244 = vmatprep.subr.bf16.mxu0 0
    %5245 = vmatpush1.bf16.msra.mxu0 0
    %5246 = vmatprep.subr.bf16.mxu0 0
    %5247 = vmatpush1.bf16.msra.mxu0 0
    %5248 = vmatprep.subr.bf16.mxu0 0
    %5249 = vmatpush1.bf16.msra.mxu0 0
    %5250 = vmatprep.subr.bf16.mxu0 0
    %5251 = vmatpush1.bf16.msra.mxu0 0
    %5252 = vmatprep.subr.bf16.mxu0 0
    %5253 = vmatpush1.bf16.msra.mxu0 0
    %5254 = vmatprep.subr.bf16.mxu0 0
    %5255 = vmatpush1.bf16.msra.mxu0 0
    %5256 = vmatprep.subr.bf16.mxu0 0
    %5257 = vmatpush1.bf16.msra.mxu0 0
    %5258 = vmatprep.subr.bf16.mxu0 0
    %5259 = vmatpush1.bf16.msra.mxu0 0
    %5260 = vmatprep.subr.bf16.mxu0 0
    %5261 = vmatpush1.bf16.msra.mxu0 0
    %5262 = vmatprep.subr.bf16.mxu0 0
    %5263 = vmatpush1.bf16.msra.mxu0 0
    %5264 = vmatprep.mubr.bf16.mxu0 0
    %5265 = vmatmul.mubr.bf16.gmra.mrb[0].mxu0 %v4912
    %v5266 = vpop.f32.mrb[0].mxu0
    %v5267 = vadd.f32 0.0, %v5266
    %v5268 = vpop.f32.mrb[0].mxu0
    %v5269 = vpop.f32.mrb[0].mxu0
    %v5270 = vpop.f32.mrb[0].mxu0
    %5271 = vdwg.mxu0
    %v5272 = vpack.c.bf16 %v4997, %v4952
    %v5273 = vpack.c.bf16 %v5087, %v5042
    %v5274 = vpack.c.bf16 %v5177, %v5132
    %v5275 = vpack.c.bf16 %v5267, %v5222
    %s5276 = scalar_lea.vmem %s7, 8
    %v5277 = vld [vmem:[%s5276] sm:$0xf]
    %v5279 = vsel %vm374, %v5272, 0
    %v5282 = vsel %vm374, %v5273, 0
    %v5285 = vsel %vm374, %v5274, 0
    %v5288 = vsel %vm374, %v5275, 0
    %v5291 = vsel %vm3870, %v5277, 0
    %5293 = vmatprep.subr.bf16.mxu0 0
    %5294 = vmatpush1.bf16.msra.mxu0 %v5291
    %5295 = vmatprep.subr.bf16.mxu0 0
    %5296 = vmatpush1.bf16.msra.mxu0 0
    %5297 = vmatprep.subr.bf16.mxu0 0
    %5298 = vmatpush1.bf16.msra.mxu0 0
    %5299 = vmatprep.subr.bf16.mxu0 0
    %5300 = vmatpush1.bf16.msra.mxu0 0
    %5301 = vmatprep.subr.bf16.mxu0 0
    %5302 = vmatpush1.bf16.msra.mxu0 0
    %5303 = vmatprep.subr.bf16.mxu0 0
    %5304 = vmatpush1.bf16.msra.mxu0 0
    %5305 = vmatprep.subr.bf16.mxu0 0
    %5306 = vmatpush1.bf16.msra.mxu0 0
    %5307 = vmatprep.subr.bf16.mxu0 0
    %5308 = vmatpush1.bf16.msra.mxu0 0
    %5309 = vmatprep.subr.bf16.mxu0 0
    %5310 = vmatpush1.bf16.msra.mxu0 0
    %5311 = vmatprep.subr.bf16.mxu0 0
    %5312 = vmatpush1.bf16.msra.mxu0 0
    %5313 = vmatprep.subr.bf16.mxu0 0
    %5314 = vmatpush1.bf16.msra.mxu0 0
    %5315 = vmatprep.subr.bf16.mxu0 0
    %5316 = vmatpush1.bf16.msra.mxu0 0
    %5317 = vmatprep.subr.bf16.mxu0 0
    %5318 = vmatpush1.bf16.msra.mxu0 0
    %5319 = vmatprep.subr.bf16.mxu0 0
    %5320 = vmatpush1.bf16.msra.mxu0 0
    %5321 = vmatprep.subr.bf16.mxu0 0
    %5322 = vmatpush1.bf16.msra.mxu0 0
    %5323 = vmatprep.subr.bf16.mxu0 0
    %5324 = vmatpush1.bf16.msra.mxu0 0
    %5325 = vmatprep.mubr.bf16.mxu0 0
    %5326 = vmatmul.mubr.bf16.gmra.mrb[0].mxu0 %v5279
    %v5327 = vpop.f32.mrb[0].mxu0
    %v5328 = vadd.f32 0.0, %v5327
    %v5329 = vpop.f32.mrb[0].mxu0
    %v5330 = vpop.f32.mrb[0].mxu0
    %v5331 = vadd.f32 0.0, %v5330
    %v5332 = vpop.f32.mrb[0].mxu0
    %5333 = vmatprep.mubr.bf16.mxu0 0
    %5334 = vmatmul.mubr.bf16.gmra.mrb[0].mxu0 %v5282
    %v5335 = vpop.f32.mrb[0].mxu0
    %v5336 = vadd.f32 0.0, %v5335
    %v5337 = vpop.f32.mrb[0].mxu0
    %v5338 = vpop.f32.mrb[0].mxu0
    %v5339 = vadd.f32 0.0, %v5338
    %v5340 = vpop.f32.mrb[0].mxu0
    %5341 = vmatprep.mubr.bf16.mxu0 0
    %5342 = vmatmul.mubr.bf16.gmra.mrb[0].mxu0 %v5285
    %v5343 = vpop.f32.mrb[0].mxu0
    %v5344 = vadd.f32 0.0, %v5343
    %v5345 = vpop.f32.mrb[0].mxu0
    %v5346 = vpop.f32.mrb[0].mxu0
    %v5347 = vadd.f32 0.0, %v5346
    %v5348 = vpop.f32.mrb[0].mxu0
    %5349 = vmatprep.mubr.bf16.mxu0 0
    %5350 = vmatmul.mubr.bf16.gmra.mrb[0].mxu0 %v5288
    %v5351 = vpop.f32.mrb[0].mxu0
    %v5352 = vadd.f32 0.0, %v5351
    %v5353 = vpop.f32.mrb[0].mxu0
    %v5354 = vpop.f32.mrb[0].mxu0
    %v5355 = vadd.f32 0.0, %v5354
    %v5356 = vpop.f32.mrb[0].mxu0
    %5357 = vdwg.mxu0
    %v5358 = vadd.f32 %v4806, %v5328
    %v5359 = vadd.f32 %v4809, %v5331
    %v5360 = vadd.f32 %v4814, %v5336
    %v5361 = vadd.f32 %v4817, %v5339
    %v5362 = vadd.f32 %v4822, %v5344
    %v5363 = vadd.f32 %v4825, %v5347
    %v5364 = vadd.f32 %v4830, %v5352
    %v5365 = vadd.f32 %v4833, %v5355
    %s5366 = sld [smem:[#allocation2 + $0x3]]
    %v5367 = vstv %s5366
    %v5368 = vmul.f32 %v5367, %v3758
    %v5369 = vmul.f32 %v5367, %v3761
    %v5370 = vmul.f32 %v5367, %v3764
    %v5371 = vmul.f32 %v5367, %v3767
    %v5372 = vmul.f32 %v5367, %v3770
    %v5373 = vmul.f32 %v5367, %v3773
    %v5374 = vmul.f32 %v5367, %v3776
    %v5375 = vmul.f32 %v5367, %v3779
    %v5384 = vlaneseq
    %v5385 = vshrl.u32 %v5384, 7
    %v5386 = vsub.s32 %v3783, %v5385
    %v5387 = vrot.slane %v5368, %v5386
    %v5388 = vlaneseq
    %v5389 = vshrl.u32 %v5388, 7
    %v5390 = vsub.s32 %v3783, %v5389
    %v5391 = vrot.slane %v5369, %v5390
    %v5392 = vlaneseq
    %v5393 = vshrl.u32 %v5392, 7
    %v5394 = vsub.s32 %v3783, %v5393
    %v5395 = vrot.slane %v5370, %v5394
    %v5396 = vlaneseq
    %v5397 = vshrl.u32 %v5396, 7
    %v5398 = vsub.s32 %v3783, %v5397
    %v5399 = vrot.slane %v5371, %v5398
    %v5400 = vlaneseq
    %v5401 = vshrl.u32 %v5400, 7
    %v5402 = vsub.s32 %v3783, %v5401
    %v5403 = vrot.slane %v5372, %v5402
    %v5404 = vlaneseq
    %v5405 = vshrl.u32 %v5404, 7
    %v5406 = vsub.s32 %v3783, %v5405
    %v5407 = vrot.slane %v5373, %v5406
    %v5408 = vlaneseq
    %v5409 = vshrl.u32 %v5408, 7
    %v5410 = vsub.s32 %v3783, %v5409
    %v5411 = vrot.slane %v5374, %v5410
    %v5412 = vlaneseq
    %v5413 = vshrl.u32 %v5412, 7
    %v5414 = vsub.s32 %v3783, %v5413
    %v5415 = vrot.slane %v5375, %v5414
    %v5416 = vsel %vm3835, %v5391, %v5387
    %v5417 = vsel %vm3837, %v5395, %v5416
    %v5418 = vsel %vm3839, %v5399, %v5417
    %v5419 = vsel %vm3841, %v5403, %v5418
    %v5420 = vsel %vm3843, %v5407, %v5419
    %v5421 = vsel %vm3845, %v5411, %v5420
    %v5422 = vsel %vm3847, %v5415, %v5421
    %v5424 = vadd.f32 %v3297, %v5422
    %v5425 = vsel %vm3784, -1e+09, %v5424
    %v5426 = vsel %vm374, %v5425, -inf
    %5427 = vmax.xlane.f32.xlu0 %v5426
    %v5428 = vpop.xlane.xlu0 %5427
    %v5429 = vsub.f32 %v5425, %v5428
    %v5430 = vmul.f32 %v5429, 1.442695
    %v5431 = vpow.pop %v5430
    %v5432 = vsel %vm374, %v5431, 0.0
    %5433 = vadd.xlane.f32.xlu0 %v5432
    %v5434 = vpop.xlane.xlu0 %5433
    %v5435 = vrcp.pop %v5434
    %v5436 = vmul.f32 %v5431, %v5435
    %5437 = vst.msk [vmem:[#allocation5 + $0x18] sm:$0xff] %vm374, %v5436
    %v5438 = vpack.c.bf16 %v5436, %v5436
    %5439 = vrot.lane.b32.xlu0 %v363, 40
    %v5440 = vpop.permute.xlu0 %5439
    %v5442 = vsel %vm374, %v5438, 0
    %v5445 = vsel %vm3870, %v5440, 0
    %5447 = vmatprep.subr.bf16.mxu0 0
    %5448 = vmatpush1.bf16.msra.mxu0 %v5445
    %5449 = vmatprep.subr.bf16.mxu0 0
    %5450 = vmatpush1.bf16.msra.mxu0 0
    %5451 = vmatprep.subr.bf16.mxu0 0
    %5452 = vmatpush1.bf16.msra.mxu0 0
    %5453 = vmatprep.subr.bf16.mxu0 0
    %5454 = vmatpush1.bf16.msra.mxu0 0
    %5455 = vmatprep.subr.bf16.mxu0 0
    %5456 = vmatpush1.bf16.msra.mxu0 0
    %5457 = vmatprep.subr.bf16.mxu0 0
    %5458 = vmatpush1.bf16.msra.mxu0 0
    %5459 = vmatprep.subr.bf16.mxu0 0
    %5460 = vmatpush1.bf16.msra.mxu0 0
    %5461 = vmatprep.subr.bf16.mxu0 0
    %5462 = vmatpush1.bf16.msra.mxu0 0
    %5463 = vmatprep.subr.bf16.mxu0 0
    %5464 = vmatpush1.bf16.msra.mxu0 0
    %5465 = vmatprep.subr.bf16.mxu0 0
    %5466 = vmatpush1.bf16.msra.mxu0 0
    %5467 = vmatprep.subr.bf16.mxu0 0
    %5468 = vmatpush1.bf16.msra.mxu0 0
    %5469 = vmatprep.subr.bf16.mxu0 0
    %5470 = vmatpush1.bf16.msra.mxu0 0
    %5471 = vmatprep.subr.bf16.mxu0 0
    %5472 = vmatpush1.bf16.msra.mxu0 0
    %5473 = vmatprep.subr.bf16.mxu0 0
    %5474 = vmatpush1.bf16.msra.mxu0 0
    %5475 = vmatprep.subr.bf16.mxu0 0
    %5476 = vmatpush1.bf16.msra.mxu0 0
    %5477 = vmatprep.subr.bf16.mxu0 0
    %5478 = vmatpush1.bf16.msra.mxu0 0
    %5479 = vmatprep.mubr.bf16.mxu0 0
    %5480 = vmatmul.mubr.bf16.gmra.mrb[0].mxu0 %v5442
    %v5481 = vpop.f32.mrb[0].mxu0
    %v5482 = vadd.f32 0.0, %v5481
    %v5483 = vpop.f32.mrb[0].mxu0
    %v5484 = vpop.f32.mrb[0].mxu0
    %v5485 = vpop.f32.mrb[0].mxu0
    %5486 = vdwg.mxu0
    %5487 = vrot.lane.b32.xlu0 %v364, 40
    %v5488 = vpop.permute.xlu0 %5487
    %v5490 = vsel %vm3870, %v5488, 0
    %5492 = vmatprep.subr.bf16.mxu0 0
    %5493 = vmatpush1.bf16.msra.mxu0 %v5490
    %5494 = vmatprep.subr.bf16.mxu0 0
    %5495 = vmatpush1.bf16.msra.mxu0 0
    %5496 = vmatprep.subr.bf16.mxu0 0
    %5497 = vmatpush1.bf16.msra.mxu0 0
    %5498 = vmatprep.subr.bf16.mxu0 0
    %5499 = vmatpush1.bf16.msra.mxu0 0
    %5500 = vmatprep.subr.bf16.mxu0 0
    %5501 = vmatpush1.bf16.msra.mxu0 0
    %5502 = vmatprep.subr.bf16.mxu0 0
    %5503 = vmatpush1.bf16.msra.mxu0 0
    %5504 = vmatprep.subr.bf16.mxu0 0
    %5505 = vmatpush1.bf16.msra.mxu0 0
    %5506 = vmatprep.subr.bf16.mxu0 0
    %5507 = vmatpush1.bf16.msra.mxu0 0
    %5508 = vmatprep.subr.bf16.mxu0 0
    %5509 = vmatpush1.bf16.msra.mxu0 0
    %5510 = vmatprep.subr.bf16.mxu0 0
    %5511 = vmatpush1.bf16.msra.mxu0 0
    %5512 = vmatprep.subr.bf16.mxu0 0
    %5513 = vmatpush1.bf16.msra.mxu0 0
    %5514 = vmatprep.subr.bf16.mxu0 0
    %5515 = vmatpush1.bf16.msra.mxu0 0
    %5516 = vmatprep.subr.bf16.mxu0 0
    %5517 = vmatpush1.bf16.msra.mxu0 0
    %5518 = vmatprep.subr.bf16.mxu0 0
    %5519 = vmatpush1.bf16.msra.mxu0 0
    %5520 = vmatprep.subr.bf16.mxu0 0
    %5521 = vmatpush1.bf16.msra.mxu0 0
    %5522 = vmatprep.subr.bf16.mxu0 0
    %5523 = vmatpush1.bf16.msra.mxu0 0
    %5524 = vmatprep.mubr.bf16.mxu0 0
    %5525 = vmatmul.mubr.bf16.gmra.mrb[0].mxu0 %v5442
    %v5526 = vpop.f32.mrb[0].mxu0
    %v5527 = vadd.f32 0.0, %v5526
    %v5528 = vpop.f32.mrb[0].mxu0
    %v5529 = vpop.f32.mrb[0].mxu0
    %v5530 = vpop.f32.mrb[0].mxu0
    %5531 = vdwg.mxu0
    %5532 = vrot.lane.b32.xlu0 %v365, 40
    %v5533 = vpop.permute.xlu0 %5532
    %v5535 = vsel %vm3870, %v5533, 0
    %5537 = vmatprep.subr.bf16.mxu0 0
    %5538 = vmatpush1.bf16.msra.mxu0 %v5535
    %5539 = vmatprep.subr.bf16.mxu0 0
    %5540 = vmatpush1.bf16.msra.mxu0 0
    %5541 = vmatprep.subr.bf16.mxu0 0
    %5542 = vmatpush1.bf16.msra.mxu0 0
    %5543 = vmatprep.subr.bf16.mxu0 0
    %5544 = vmatpush1.bf16.msra.mxu0 0
    %5545 = vmatprep.subr.bf16.mxu0 0
    %5546 = vmatpush1.bf16.msra.mxu0 0
    %5547 = vmatprep.subr.bf16.mxu0 0
    %5548 = vmatpush1.bf16.msra.mxu0 0
    %5549 = vmatprep.subr.bf16.mxu0 0
    %5550 = vmatpush1.bf16.msra.mxu0 0
    %5551 = vmatprep.subr.bf16.mxu0 0
    %5552 = vmatpush1.bf16.msra.mxu0 0
    %5553 = vmatprep.subr.bf16.mxu0 0
    %5554 = vmatpush1.bf16.msra.mxu0 0
    %5555 = vmatprep.subr.bf16.mxu0 0
    %5556 = vmatpush1.bf16.msra.mxu0 0
    %5557 = vmatprep.subr.bf16.mxu0 0
    %5558 = vmatpush1.bf16.msra.mxu0 0
    %5559 = vmatprep.subr.bf16.mxu0 0
    %5560 = vmatpush1.bf16.msra.mxu0 0
    %5561 = vmatprep.subr.bf16.mxu0 0
    %5562 = vmatpush1.bf16.msra.mxu0 0
    %5563 = vmatprep.subr.bf16.mxu0 0
    %5564 = vmatpush1.bf16.msra.mxu0 0
    %5565 = vmatprep.subr.bf16.mxu0 0
    %5566 = vmatpush1.bf16.msra.mxu0 0
    %5567 = vmatprep.subr.bf16.mxu0 0
    %5568 = vmatpush1.bf16.msra.mxu0 0
    %5569 = vmatprep.mubr.bf16.mxu0 0
    %5570 = vmatmul.mubr.bf16.gmra.mrb[0].mxu0 %v5442
    %v5571 = vpop.f32.mrb[0].mxu0
    %v5572 = vadd.f32 0.0, %v5571
    %v5573 = vpop.f32.mrb[0].mxu0
    %v5574 = vpop.f32.mrb[0].mxu0
    %v5575 = vpop.f32.mrb[0].mxu0
    %5576 = vdwg.mxu0
    %5577 = vrot.lane.b32.xlu0 %v366, 40
    %v5578 = vpop.permute.xlu0 %5577
    %v5580 = vsel %vm3870, %v5578, 0
    %5582 = vmatprep.subr.bf16.mxu0 0
    %5583 = vmatpush1.bf16.msra.mxu0 %v5580
    %5584 = vmatprep.subr.bf16.mxu0 0
    %5585 = vmatpush1.bf16.msra.mxu0 0
    %5586 = vmatprep.subr.bf16.mxu0 0
    %5587 = vmatpush1.bf16.msra.mxu0 0
    %5588 = vmatprep.subr.bf16.mxu0 0
    %5589 = vmatpush1.bf16.msra.mxu0 0
    %5590 = vmatprep.subr.bf16.mxu0 0
    %5591 = vmatpush1.bf16.msra.mxu0 0
    %5592 = vmatprep.subr.bf16.mxu0 0
    %5593 = vmatpush1.bf16.msra.mxu0 0
    %5594 = vmatprep.subr.bf16.mxu0 0
    %5595 = vmatpush1.bf16.msra.mxu0 0
    %5596 = vmatprep.subr.bf16.mxu0 0
    %5597 = vmatpush1.bf16.msra.mxu0 0
    %5598 = vmatprep.subr.bf16.mxu0 0
    %5599 = vmatpush1.bf16.msra.mxu0 0
    %5600 = vmatprep.subr.bf16.mxu0 0
    %5601 = vmatpush1.bf16.msra.mxu0 0
    %5602 = vmatprep.subr.bf16.mxu0 0
    %5603 = vmatpush1.bf16.msra.mxu0 0
    %5604 = vmatprep.subr.bf16.mxu0 0
    %5605 = vmatpush1.bf16.msra.mxu0 0
    %5606 = vmatprep.subr.bf16.mxu0 0
    %5607 = vmatpush1.bf16.msra.mxu0 0
    %5608 = vmatprep.subr.bf16.mxu0 0
    %5609 = vmatpush1.bf16.msra.mxu0 0
    %5610 = vmatprep.subr.bf16.mxu0 0
    %5611 = vmatpush1.bf16.msra.mxu0 0
    %5612 = vmatprep.subr.bf16.mxu0 0
    %5613 = vmatpush1.bf16.msra.mxu0 0
    %5614 = vmatprep.mubr.bf16.mxu0 0
    %5615 = vmatmul.mubr.bf16.gmra.mrb[0].mxu0 %v5442
    %v5616 = vpop.f32.mrb[0].mxu0
    %v5617 = vadd.f32 0.0, %v5616
    %v5618 = vpop.f32.mrb[0].mxu0
    %v5619 = vpop.f32.mrb[0].mxu0
    %v5620 = vpop.f32.mrb[0].mxu0
    %5621 = vdwg.mxu0
    %5622 = vrot.lane.b32.xlu0 %v367, 40
    %v5623 = vpop.permute.xlu0 %5622
    %v5625 = vsel %vm3870, %v5623, 0
    %5627 = vmatprep.subr.bf16.mxu0 0
    %5628 = vmatpush1.bf16.msra.mxu0 %v5625
    %5629 = vmatprep.subr.bf16.mxu0 0
    %5630 = vmatpush1.bf16.msra.mxu0 0
    %5631 = vmatprep.subr.bf16.mxu0 0
    %5632 = vmatpush1.bf16.msra.mxu0 0
    %5633 = vmatprep.subr.bf16.mxu0 0
    %5634 = vmatpush1.bf16.msra.mxu0 0
    %5635 = vmatprep.subr.bf16.mxu0 0
    %5636 = vmatpush1.bf16.msra.mxu0 0
    %5637 = vmatprep.subr.bf16.mxu0 0
    %5638 = vmatpush1.bf16.msra.mxu0 0
    %5639 = vmatprep.subr.bf16.mxu0 0
    %5640 = vmatpush1.bf16.msra.mxu0 0
    %5641 = vmatprep.subr.bf16.mxu0 0
    %5642 = vmatpush1.bf16.msra.mxu0 0
    %5643 = vmatprep.subr.bf16.mxu0 0
    %5644 = vmatpush1.bf16.msra.mxu0 0
    %5645 = vmatprep.subr.bf16.mxu0 0
    %5646 = vmatpush1.bf16.msra.mxu0 0
    %5647 = vmatprep.subr.bf16.mxu0 0
    %5648 = vmatpush1.bf16.msra.mxu0 0
    %5649 = vmatprep.subr.bf16.mxu0 0
    %5650 = vmatpush1.bf16.msra.mxu0 0
    %5651 = vmatprep.subr.bf16.mxu0 0
    %5652 = vmatpush1.bf16.msra.mxu0 0
    %5653 = vmatprep.subr.bf16.mxu0 0
    %5654 = vmatpush1.bf16.msra.mxu0 0
    %5655 = vmatprep.subr.bf16.mxu0 0
    %5656 = vmatpush1.bf16.msra.mxu0 0
    %5657 = vmatprep.subr.bf16.mxu0 0
    %5658 = vmatpush1.bf16.msra.mxu0 0
    %5659 = vmatprep.mubr.bf16.mxu0 0
    %5660 = vmatmul.mubr.bf16.gmra.mrb[0].mxu0 %v5442
    %v5661 = vpop.f32.mrb[0].mxu0
    %v5662 = vadd.f32 0.0, %v5661
    %v5663 = vpop.f32.mrb[0].mxu0
    %v5664 = vpop.f32.mrb[0].mxu0
    %v5665 = vpop.f32.mrb[0].mxu0
    %5666 = vdwg.mxu0
    %5667 = vrot.lane.b32.xlu0 %v368, 40
    %v5668 = vpop.permute.xlu0 %5667
    %v5670 = vsel %vm3870, %v5668, 0
    %5672 = vmatprep.subr.bf16.mxu0 0
    %5673 = vmatpush1.bf16.msra.mxu0 %v5670
    %5674 = vmatprep.subr.bf16.mxu0 0
    %5675 = vmatpush1.bf16.msra.mxu0 0
    %5676 = vmatprep.subr.bf16.mxu0 0
    %5677 = vmatpush1.bf16.msra.mxu0 0
    %5678 = vmatprep.subr.bf16.mxu0 0
    %5679 = vmatpush1.bf16.msra.mxu0 0
    %5680 = vmatprep.subr.bf16.mxu0 0
    %5681 = vmatpush1.bf16.msra.mxu0 0
    %5682 = vmatprep.subr.bf16.mxu0 0
    %5683 = vmatpush1.bf16.msra.mxu0 0
    %5684 = vmatprep.subr.bf16.mxu0 0
    %5685 = vmatpush1.bf16.msra.mxu0 0
    %5686 = vmatprep.subr.bf16.mxu0 0
    %5687 = vmatpush1.bf16.msra.mxu0 0
    %5688 = vmatprep.subr.bf16.mxu0 0
    %5689 = vmatpush1.bf16.msra.mxu0 0
    %5690 = vmatprep.subr.bf16.mxu0 0
    %5691 = vmatpush1.bf16.msra.mxu0 0
    %5692 = vmatprep.subr.bf16.mxu0 0
    %5693 = vmatpush1.bf16.msra.mxu0 0
    %5694 = vmatprep.subr.bf16.mxu0 0
    %5695 = vmatpush1.bf16.msra.mxu0 0
    %5696 = vmatprep.subr.bf16.mxu0 0
    %5697 = vmatpush1.bf16.msra.mxu0 0
    %5698 = vmatprep.subr.bf16.mxu0 0
    %5699 = vmatpush1.bf16.msra.mxu0 0
    %5700 = vmatprep.subr.bf16.mxu0 0
    %5701 = vmatpush1.bf16.msra.mxu0 0
    %5702 = vmatprep.subr.bf16.mxu0 0
    %5703 = vmatpush1.bf16.msra.mxu0 0
    %5704 = vmatprep.mubr.bf16.mxu0 0
    %5705 = vmatmul.mubr.bf16.gmra.mrb[0].mxu0 %v5442
    %v5706 = vpop.f32.mrb[0].mxu0
    %v5707 = vadd.f32 0.0, %v5706
    %v5708 = vpop.f32.mrb[0].mxu0
    %v5709 = vpop.f32.mrb[0].mxu0
    %v5710 = vpop.f32.mrb[0].mxu0
    %5711 = vdwg.mxu0
    %5712 = vrot.lane.b32.xlu0 %v369, 40
    %v5713 = vpop.permute.xlu0 %5712
    %v5715 = vsel %vm3870, %v5713, 0
    %5717 = vmatprep.subr.bf16.mxu0 0
    %5718 = vmatpush1.bf16.msra.mxu0 %v5715
    %5719 = vmatprep.subr.bf16.mxu0 0
    %5720 = vmatpush1.bf16.msra.mxu0 0
    %5721 = vmatprep.subr.bf16.mxu0 0
    %5722 = vmatpush1.bf16.msra.mxu0 0
    %5723 = vmatprep.subr.bf16.mxu0 0
    %5724 = vmatpush1.bf16.msra.mxu0 0
    %5725 = vmatprep.subr.bf16.mxu0 0
    %5726 = vmatpush1.bf16.msra.mxu0 0
    %5727 = vmatprep.subr.bf16.mxu0 0
    %5728 = vmatpush1.bf16.msra.mxu0 0
    %5729 = vmatprep.subr.bf16.mxu0 0
    %5730 = vmatpush1.bf16.msra.mxu0 0
    %5731 = vmatprep.subr.bf16.mxu0 0
    %5732 = vmatpush1.bf16.msra.mxu0 0
    %5733 = vmatprep.subr.bf16.mxu0 0
    %5734 = vmatpush1.bf16.msra.mxu0 0
    %5735 = vmatprep.subr.bf16.mxu0 0
    %5736 = vmatpush1.bf16.msra.mxu0 0
    %5737 = vmatprep.subr.bf16.mxu0 0
    %5738 = vmatpush1.bf16.msra.mxu0 0
    %5739 = vmatprep.subr.bf16.mxu0 0
    %5740 = vmatpush1.bf16.msra.mxu0 0
    %5741 = vmatprep.subr.bf16.mxu0 0
    %5742 = vmatpush1.bf16.msra.mxu0 0
    %5743 = vmatprep.subr.bf16.mxu0 0
    %5744 = vmatpush1.bf16.msra.mxu0 0
    %5745 = vmatprep.subr.bf16.mxu0 0
    %5746 = vmatpush1.bf16.msra.mxu0 0
    %5747 = vmatprep.subr.bf16.mxu0 0
    %5748 = vmatpush1.bf16.msra.mxu0 0
    %5749 = vmatprep.mubr.bf16.mxu0 0
    %5750 = vmatmul.mubr.bf16.gmra.mrb[0].mxu0 %v5442
    %v5751 = vpop.f32.mrb[0].mxu0
    %v5752 = vadd.f32 0.0, %v5751
    %v5753 = vpop.f32.mrb[0].mxu0
    %v5754 = vpop.f32.mrb[0].mxu0
    %v5755 = vpop.f32.mrb[0].mxu0
    %5756 = vdwg.mxu0
    %5757 = vrot.lane.b32.xlu0 %v370, 40
    %v5758 = vpop.permute.xlu0 %5757
    %v5760 = vsel %vm3870, %v5758, 0
    %5762 = vmatprep.subr.bf16.mxu0 0
    %5763 = vmatpush1.bf16.msra.mxu0 %v5760
    %5764 = vmatprep.subr.bf16.mxu0 0
    %5765 = vmatpush1.bf16.msra.mxu0 0
    %5766 = vmatprep.subr.bf16.mxu0 0
    %5767 = vmatpush1.bf16.msra.mxu0 0
    %5768 = vmatprep.subr.bf16.mxu0 0
    %5769 = vmatpush1.bf16.msra.mxu0 0
    %5770 = vmatprep.subr.bf16.mxu0 0
    %5771 = vmatpush1.bf16.msra.mxu0 0
    %5772 = vmatprep.subr.bf16.mxu0 0
    %5773 = vmatpush1.bf16.msra.mxu0 0
    %5774 = vmatprep.subr.bf16.mxu0 0
    %5775 = vmatpush1.bf16.msra.mxu0 0
    %5776 = vmatprep.subr.bf16.mxu0 0
    %5777 = vmatpush1.bf16.msra.mxu0 0
    %5778 = vmatprep.subr.bf16.mxu0 0
    %5779 = vmatpush1.bf16.msra.mxu0 0
    %5780 = vmatprep.subr.bf16.mxu0 0
    %5781 = vmatpush1.bf16.msra.mxu0 0
    %5782 = vmatprep.subr.bf16.mxu0 0
    %5783 = vmatpush1.bf16.msra.mxu0 0
    %5784 = vmatprep.subr.bf16.mxu0 0
    %5785 = vmatpush1.bf16.msra.mxu0 0
    %5786 = vmatprep.subr.bf16.mxu0 0
    %5787 = vmatpush1.bf16.msra.mxu0 0
    %5788 = vmatprep.subr.bf16.mxu0 0
    %5789 = vmatpush1.bf16.msra.mxu0 0
    %5790 = vmatprep.subr.bf16.mxu0 0
    %5791 = vmatpush1.bf16.msra.mxu0 0
    %5792 = vmatprep.subr.bf16.mxu0 0
    %5793 = vmatpush1.bf16.msra.mxu0 0
    %5794 = vmatprep.mubr.bf16.mxu0 0
    %5795 = vmatmul.mubr.bf16.gmra.mrb[0].mxu0 %v5442
    %v5796 = vpop.f32.mrb[0].mxu0
    %v5797 = vadd.f32 0.0, %v5796
    %v5798 = vpop.f32.mrb[0].mxu0
    %v5799 = vpop.f32.mrb[0].mxu0
    %v5800 = vpop.f32.mrb[0].mxu0
    %5801 = vdwg.mxu0
    %v5802 = vpack.c.bf16 %v5527, %v5482
    %v5803 = vpack.c.bf16 %v5617, %v5572
    %v5804 = vpack.c.bf16 %v5707, %v5662
    %v5805 = vpack.c.bf16 %v5797, %v5752
    %s5806 = scalar_lea.vmem %s7, 12
    %v5807 = vld [vmem:[%s5806] sm:$0xf]
    %v5809 = vsel %vm374, %v5802, 0
    %v5812 = vsel %vm374, %v5803, 0
    %v5815 = vsel %vm374, %v5804, 0
    %v5818 = vsel %vm374, %v5805, 0
    %v5821 = vsel %vm3870, %v5807, 0
    %5823 = vmatprep.subr.bf16.mxu0 0
    %5824 = vmatpush1.bf16.msra.mxu0 %v5821
    %5825 = vmatprep.subr.bf16.mxu0 0
    %5826 = vmatpush1.bf16.msra.mxu0 0
    %5827 = vmatprep.subr.bf16.mxu0 0
    %5828 = vmatpush1.bf16.msra.mxu0 0
    %5829 = vmatprep.subr.bf16.mxu0 0
    %5830 = vmatpush1.bf16.msra.mxu0 0
    %5831 = vmatprep.subr.bf16.mxu0 0
    %5832 = vmatpush1.bf16.msra.mxu0 0
    %5833 = vmatprep.subr.bf16.mxu0 0
    %5834 = vmatpush1.bf16.msra.mxu0 0
    %5835 = vmatprep.subr.bf16.mxu0 0
    %5836 = vmatpush1.bf16.msra.mxu0 0
    %5837 = vmatprep.subr.bf16.mxu0 0
    %5838 = vmatpush1.bf16.msra.mxu0 0
    %5839 = vmatprep.subr.bf16.mxu0 0
    %5840 = vmatpush1.bf16.msra.mxu0 0
    %5841 = vmatprep.subr.bf16.mxu0 0
    %5842 = vmatpush1.bf16.msra.mxu0 0
    %5843 = vmatprep.subr.bf16.mxu0 0
    %5844 = vmatpush1.bf16.msra.mxu0 0
    %5845 = vmatprep.subr.bf16.mxu0 0
    %5846 = vmatpush1.bf16.msra.mxu0 0
    %5847 = vmatprep.subr.bf16.mxu0 0
    %5848 = vmatpush1.bf16.msra.mxu0 0
    %5849 = vmatprep.subr.bf16.mxu0 0
    %5850 = vmatpush1.bf16.msra.mxu0 0
    %5851 = vmatprep.subr.bf16.mxu0 0
    %5852 = vmatpush1.bf16.msra.mxu0 0
    %5853 = vmatprep.subr.bf16.mxu0 0
    %5854 = vmatpush1.bf16.msra.mxu0 0
    %5855 = vmatprep.mubr.bf16.mxu0 0
    %5856 = vmatmul.mubr.bf16.gmra.mrb[0].mxu0 %v5809
    %v5857 = vpop.f32.mrb[0].mxu0
    %v5858 = vadd.f32 0.0, %v5857
    %v5859 = vpop.f32.mrb[0].mxu0
    %v5860 = vpop.f32.mrb[0].mxu0
    %v5861 = vadd.f32 0.0, %v5860
    %v5862 = vpop.f32.mrb[0].mxu0
    %5863 = vmatprep.mubr.bf16.mxu0 0
    %5864 = vmatmul.mubr.bf16.gmra.mrb[0].mxu0 %v5812
    %v5865 = vpop.f32.mrb[0].mxu0
    %v5866 = vadd.f32 0.0, %v5865
    %v5867 = vpop.f32.mrb[0].mxu0
    %v5868 = vpop.f32.mrb[0].mxu0
    %v5869 = vadd.f32 0.0, %v5868
    %v5870 = vpop.f32.mrb[0].mxu0
    %5871 = vmatprep.mubr.bf16.mxu0 0
    %5872 = vmatmul.mubr.bf16.gmra.mrb[0].mxu0 %v5815
    %v5873 = vpop.f32.mrb[0].mxu0
    %v5874 = vadd.f32 0.0, %v5873
    %v5875 = vpop.f32.mrb[0].mxu0
    %v5876 = vpop.f32.mrb[0].mxu0
    %v5877 = vadd.f32 0.0, %v5876
    %v5878 = vpop.f32.mrb[0].mxu0
    %5879 = vmatprep.mubr.bf16.mxu0 0
    %5880 = vmatmul.mubr.bf16.gmra.mrb[0].mxu0 %v5818
    %v5881 = vpop.f32.mrb[0].mxu0
    %v5882 = vadd.f32 0.0, %v5881
    %v5883 = vpop.f32.mrb[0].mxu0
    %v5884 = vpop.f32.mrb[0].mxu0
    %v5885 = vadd.f32 0.0, %v5884
    %v5886 = vpop.f32.mrb[0].mxu0
    %5887 = vdwg.mxu0
    %v5888 = vadd.f32 %v5358, %v5858
    %v5889 = vadd.f32 %v5359, %v5861
    %v5890 = vadd.f32 %v5360, %v5866
    %v5891 = vadd.f32 %v5361, %v5869
    %v5892 = vadd.f32 %v5362, %v5874
    %v5893 = vadd.f32 %v5363, %v5877
    %v5894 = vadd.f32 %v5364, %v5882
    %v5895 = vadd.f32 %v5365, %v5885
    %v5896 = vadd.f32 %v99, %v5888
    %v5897 = vadd.f32 %v100, %v5889
    %v5898 = vadd.f32 %v101, %v5890
    %v5899 = vadd.f32 %v102, %v5891
    %v5900 = vadd.f32 %v103, %v5892
    %v5901 = vadd.f32 %v104, %v5893
    %v5902 = vadd.f32 %v105, %v5894
    %v5903 = vadd.f32 %v106, %v5895
    %v5904 = vld [vmem:[%s8] sm:$0x1]
    %v5906 = vlaneseq
    %v5907 = vshrl.u32 %v5906, 7
    %v5908 = vsub.s32 0, %v5907
    %v5909 = vrot.slane %v5904, %v5908
    %v5911 = vadd.f32 %v5896, %v5909
    %v5912 = vadd.f32 %v5897, %v5909
    %v5913 = vadd.f32 %v5898, %v5909
    %v5914 = vadd.f32 %v5899, %v5909
    %v5915 = vadd.f32 %v5900, %v5909
    %v5916 = vadd.f32 %v5901, %v5909
    %v5917 = vadd.f32 %v5902, %v5909
    %v5918 = vadd.f32 %v5903, %v5909
    %v5919 = vld [vmem:[%s2] sm:$0xff]
    %v5920 = vld [vmem:[%s2 + $0x8] sm:$0xff]
    %v5921 = vld [vmem:[%s2 + $0x10] sm:$0xff]
    %v5922 = vld [vmem:[%s2 + $0x18] sm:$0xff]
    %v5923 = vld [vmem:[%s2 + $0x20] sm:$0xff]
    %v5924 = vld [vmem:[%s2 + $0x28] sm:$0xff]
    %v5925 = vld [vmem:[%s2 + $0x30] sm:$0xff]
    %v5926 = vld [vmem:[%s2 + $0x38] sm:$0xff]
    %vm5927 = vcmask 523264
    %v5929 = vsel %vm5927, %v5919, 0
    %v5932 = vsel %vm5927, %v5920, 0
    %v5935 = vsel %vm5927, %v5921, 0
    %v5938 = vsel %vm5927, %v5922, 0
    %v5941 = vsel %vm5927, %v5923, 0
    %v5944 = vsel %vm5927, %v5924, 0
    %v5947 = vsel %vm5927, %v5925, 0
    %v5950 = vsel %vm5927, %v5926, 0
    %5952 = vmatprep.subr.mxu0 0.0
    %5953 = vmatpush1.msra.mxu0 %v5911
    %5954 = vmatprep.subr.mxu0 0.0
    %5955 = vmatpush1.msra.mxu0 %v5912
    %5956 = vmatprep.subr.mxu0 0.0
    %5957 = vmatpush1.msra.mxu0 %v5913
    %5958 = vmatprep.subr.mxu0 0.0
    %5959 = vmatpush1.msra.mxu0 %v5914
    %5960 = vmatprep.subr.mxu0 0.0
    %5961 = vmatpush1.msra.mxu0 %v5915
    %5962 = vmatprep.subr.mxu0 0.0
    %5963 = vmatpush1.msra.mxu0 %v5916
    %5964 = vmatprep.subr.mxu0 0.0
    %5965 = vmatpush1.msra.mxu0 %v5917
    %5966 = vmatprep.subr.mxu0 0.0
    %5967 = vmatpush1.msra.mxu0 %v5918
    %5968 = vmatprep.subr.mxu0 0.0
    %5969 = vmatpush1.msra.mxu0 0.0
    %5970 = vmatprep.subr.mxu0 0.0
    %5971 = vmatpush1.msra.mxu0 0.0
    %5972 = vmatprep.subr.mxu0 0.0
    %5973 = vmatpush1.msra.mxu0 0.0
    %5974 = vmatprep.subr.mxu0 0.0
    %5975 = vmatpush1.msra.mxu0 0.0
    %5976 = vmatprep.subr.mxu0 0.0
    %5977 = vmatpush1.msra.mxu0 0.0
    %5978 = vmatprep.subr.mxu0 0.0
    %5979 = vmatpush1.msra.mxu0 0.0
    %5980 = vmatprep.subr.mxu0 0.0
    %5981 = vmatpush1.msra.mxu0 0.0
    %5982 = vmatprep.subr.mxu0 0.0
    %5983 = vmatpush1.msra.mxu0 0.0
    %5984 = vmatprep.subr.mxu0 0.0
    %5985 = vmatpush1.msra.mxu0 0.0
    %5986 = vmatprep.subr.mxu0 0.0
    %5987 = vmatpush1.msra.mxu0 0.0
    %5988 = vmatprep.subr.mxu0 0.0
    %5989 = vmatpush1.msra.mxu0 0.0
    %5990 = vmatprep.subr.mxu0 0.0
    %5991 = vmatpush1.msra.mxu0 0.0
    %5992 = vmatprep.subr.mxu0 0.0
    %5993 = vmatpush1.msra.mxu0 0.0
    %5994 = vmatprep.subr.mxu0 0.0
    %5995 = vmatpush1.msra.mxu0 0.0
    %5996 = vmatprep.subr.mxu0 0.0
    %5997 = vmatpush1.msra.mxu0 0.0
    %5998 = vmatprep.subr.mxu0 0.0
    %5999 = vmatpush1.msra.mxu0 0.0
    %6000 = vmatprep.subr.mxu0 0.0
    %6001 = vmatpush1.msra.mxu0 0.0
    %6002 = vmatprep.subr.mxu0 0.0
    %6003 = vmatpush1.msra.mxu0 0.0
    %6004 = vmatprep.subr.mxu0 0.0
    %6005 = vmatpush1.msra.mxu0 0.0
    %6006 = vmatprep.subr.mxu0 0.0
    %6007 = vmatpush1.msra.mxu0 0.0
    %6008 = vmatprep.subr.mxu0 0.0
    %6009 = vmatpush1.msra.mxu0 0.0
    %6010 = vmatprep.subr.mxu0 0.0
    %6011 = vmatpush1.msra.mxu0 0.0
    %6012 = vmatprep.subr.mxu0 0.0
    %6013 = vmatpush1.msra.mxu0 0.0
    %6014 = vmatprep.subr.mxu0 0.0
    %6015 = vmatpush1.msra.mxu0 0.0
    %6016 = vmatprep.mubr.f32.mxu0 0.0
    %6017 = vmatmul.mubr.f32.gmra.mrb[0].mxu0 %v5929
    %v6018 = vpop.f32.mrb[0].mxu0
    %v6019 = vadd.f32 0.0, %v6018
    %v6020 = vpop.f32.mrb[0].mxu0
    %6021 = vmatprep.mubr.f32.mxu0 0.0
    %6022 = vmatmul.mubr.f32.gmra.mrb[0].mxu0 %v5932
    %v6023 = vpop.f32.mrb[0].mxu0
    %v6024 = vadd.f32 0.0, %v6023
    %v6025 = vpop.f32.mrb[0].mxu0
    %6026 = vmatprep.mubr.f32.mxu0 0.0
    %6027 = vmatmul.mubr.f32.gmra.mrb[0].mxu0 %v5935
    %v6028 = vpop.f32.mrb[0].mxu0
    %v6029 = vadd.f32 0.0, %v6028
    %v6030 = vpop.f32.mrb[0].mxu0
    %6031 = vmatprep.mubr.f32.mxu0 0.0
    %6032 = vmatmul.mubr.f32.gmra.mrb[0].mxu0 %v5938
    %v6033 = vpop.f32.mrb[0].mxu0
    %v6034 = vadd.f32 0.0, %v6033
    %v6035 = vpop.f32.mrb[0].mxu0
    %6036 = vmatprep.mubr.f32.mxu0 0.0
    %6037 = vmatmul.mubr.f32.gmra.mrb[0].mxu0 %v5941
    %v6038 = vpop.f32.mrb[0].mxu0
    %v6039 = vadd.f32 0.0, %v6038
    %v6040 = vpop.f32.mrb[0].mxu0
    %6041 = vmatprep.mubr.f32.mxu0 0.0
    %6042 = vmatmul.mubr.f32.gmra.mrb[0].mxu0 %v5944
    %v6043 = vpop.f32.mrb[0].mxu0
    %v6044 = vadd.f32 0.0, %v6043
    %v6045 = vpop.f32.mrb[0].mxu0
    %6046 = vmatprep.mubr.f32.mxu0 0.0
    %6047 = vmatmul.mubr.f32.gmra.mrb[0].mxu0 %v5947
    %v6048 = vpop.f32.mrb[0].mxu0
    %v6049 = vadd.f32 0.0, %v6048
    %v6050 = vpop.f32.mrb[0].mxu0
    %6051 = vmatprep.mubr.f32.mxu0 0.0
    %6052 = vmatmul.mubr.f32.gmra.mrb[0].mxu0 %v5950
    %v6053 = vpop.f32.mrb[0].mxu0
    %v6054 = vadd.f32 0.0, %v6053
    %v6055 = vpop.f32.mrb[0].mxu0
    %6056 = vdwg.mxu0
    %v6057 = vld [vmem:[%s13] sm:$0x1]
    %v6058 = vld [vmem:[%s14] sm:$0x1]
    %v6059 = vsel %vm109, %v6019, 0.0
    %6060 = vadd.xlane.f32.xlu0 %v6059
    %v6061 = vpop.xlane.xlu0 %6060
    %v6062 = vsel %vm109, %v6024, 0.0
    %6063 = vadd.xlane.f32.xlu0 %v6062
    %v6064 = vpop.xlane.xlu0 %6063
    %v6065 = vsel %vm109, %v6029, 0.0
    %6066 = vadd.xlane.f32.xlu0 %v6065
    %v6067 = vpop.xlane.xlu0 %6066
    %v6068 = vsel %vm109, %v6034, 0.0
    %6069 = vadd.xlane.f32.xlu0 %v6068
    %v6070 = vpop.xlane.xlu0 %6069
    %v6071 = vsel %vm109, %v6039, 0.0
    %6072 = vadd.xlane.f32.xlu0 %v6071
    %v6073 = vpop.xlane.xlu0 %6072
    %v6074 = vsel %vm109, %v6044, 0.0
    %6075 = vadd.xlane.f32.xlu0 %v6074
    %v6076 = vpop.xlane.xlu0 %6075
    %v6077 = vsel %vm109, %v6049, 0.0
    %6078 = vadd.xlane.f32.xlu0 %v6077
    %v6079 = vpop.xlane.xlu0 %6078
    %v6080 = vsel %vm109, %v6054, 0.0
    %6081 = vadd.xlane.f32.xlu0 %v6080
    %v6082 = vpop.xlane.xlu0 %6081
    %v6083 = vmul.f32 %v6061, %v134
    %v6084 = vmul.f32 %v6064, %v134
    %v6085 = vmul.f32 %v6067, %v134
    %v6086 = vmul.f32 %v6070, %v134
    %v6087 = vmul.f32 %v6073, %v134
    %v6088 = vmul.f32 %v6076, %v134
    %v6089 = vmul.f32 %v6079, %v134
    %v6090 = vmul.f32 %v6082, %v134
    %v6091 = vsub.f32 %v6019, %v6083
    %v6092 = vsub.f32 %v6024, %v6084
    %v6093 = vsub.f32 %v6029, %v6085
    %v6094 = vsub.f32 %v6034, %v6086
    %v6095 = vsub.f32 %v6039, %v6087
    %v6096 = vsub.f32 %v6044, %v6088
    %v6097 = vsub.f32 %v6049, %v6089
    %v6098 = vsub.f32 %v6054, %v6090
    %v6099 = vmul.f32 %v6091, %v6091
    %v6100 = vmul.f32 %v6092, %v6092
    %v6101 = vmul.f32 %v6093, %v6093
    %v6102 = vmul.f32 %v6094, %v6094
    %v6103 = vmul.f32 %v6095, %v6095
    %v6104 = vmul.f32 %v6096, %v6096
    %v6105 = vmul.f32 %v6097, %v6097
    %v6106 = vmul.f32 %v6098, %v6098
    %v6107 = vsel %vm109, %v6099, 0.0
    %6108 = vadd.xlane.f32.xlu0 %v6107
    %v6109 = vpop.xlane.xlu0 %6108
    %v6110 = vsel %vm109, %v6100, 0.0
    %6111 = vadd.xlane.f32.xlu0 %v6110
    %v6112 = vpop.xlane.xlu0 %6111
    %v6113 = vsel %vm109, %v6101, 0.0
    %6114 = vadd.xlane.f32.xlu0 %v6113
    %v6115 = vpop.xlane.xlu0 %6114
    %v6116 = vsel %vm109, %v6102, 0.0
    %6117 = vadd.xlane.f32.xlu0 %v6116
    %v6118 = vpop.xlane.xlu0 %6117
    %v6119 = vsel %vm109, %v6103, 0.0
    %6120 = vadd.xlane.f32.xlu0 %v6119
    %v6121 = vpop.xlane.xlu0 %6120
    %v6122 = vsel %vm109, %v6104, 0.0
    %6123 = vadd.xlane.f32.xlu0 %v6122
    %v6124 = vpop.xlane.xlu0 %6123
    %v6125 = vsel %vm109, %v6105, 0.0
    %6126 = vadd.xlane.f32.xlu0 %v6125
    %v6127 = vpop.xlane.xlu0 %6126
    %v6128 = vsel %vm109, %v6106, 0.0
    %6129 = vadd.xlane.f32.xlu0 %v6128
    %v6130 = vpop.xlane.xlu0 %6129
    %v6131 = vmul.f32 %v6109, %v134
    %v6132 = vmul.f32 %v6112, %v134
    %v6133 = vmul.f32 %v6115, %v134
    %v6134 = vmul.f32 %v6118, %v134
    %v6135 = vmul.f32 %v6121, %v134
    %v6136 = vmul.f32 %v6124, %v134
    %v6137 = vmul.f32 %v6127, %v134
    %v6138 = vmul.f32 %v6130, %v134
    %v6139 = vadd.f32 %v6131, 1e-05
    %v6140 = vadd.f32 %v6132, 1e-05
    %v6141 = vadd.f32 %v6133, 1e-05
    %v6142 = vadd.f32 %v6134, 1e-05
    %v6143 = vadd.f32 %v6135, 1e-05
    %v6144 = vadd.f32 %v6136, 1e-05
    %v6145 = vadd.f32 %v6137, 1e-05
    %v6146 = vadd.f32 %v6138, 1e-05
    %v6147 = vrsqrt.pop %v6139
    %v6148 = vrsqrt.pop %v6140
    %v6149 = vrsqrt.pop %v6141
    %v6150 = vrsqrt.pop %v6142
    %v6151 = vrsqrt.pop %v6143
    %v6152 = vrsqrt.pop %v6144
    %v6153 = vrsqrt.pop %v6145
    %v6154 = vrsqrt.pop %v6146
    %v6155 = vmul.f32 %v6091, %v6147
    %v6156 = vmul.f32 %v6092, %v6148
    %v6157 = vmul.f32 %v6093, %v6149
    %v6158 = vmul.f32 %v6094, %v6150
    %v6159 = vmul.f32 %v6095, %v6151
    %v6160 = vmul.f32 %v6096, %v6152
    %v6161 = vmul.f32 %v6097, %v6153
    %v6162 = vmul.f32 %v6098, %v6154
    %v6164 = vlaneseq
    %v6165 = vshrl.u32 %v6164, 7
    %v6166 = vsub.s32 0, %v6165
    %v6167 = vrot.slane %v6057, %v6166
    %v6169 = vmul.f32 %v6155, %v6167
    %v6170 = vmul.f32 %v6156, %v6167
    %v6171 = vmul.f32 %v6157, %v6167
    %v6172 = vmul.f32 %v6158, %v6167
    %v6173 = vmul.f32 %v6159, %v6167
    %v6174 = vmul.f32 %v6160, %v6167
    %v6175 = vmul.f32 %v6161, %v6167
    %v6176 = vmul.f32 %v6162, %v6167
    %v6178 = vlaneseq
    %v6179 = vshrl.u32 %v6178, 7
    %v6180 = vsub.s32 0, %v6179
    %v6181 = vrot.slane %v6058, %v6180
    %v6183 = vadd.f32 %v6169, %v6181
    %v6184 = vadd.f32 %v6170, %v6181
    %v6185 = vadd.f32 %v6171, %v6181
    %v6186 = vadd.f32 %v6172, %v6181
    %v6187 = vadd.f32 %v6173, %v6181
    %v6188 = vadd.f32 %v6174, %v6181
    %v6189 = vadd.f32 %v6175, %v6181
    %v6190 = vadd.f32 %v6176, %v6181
    %v6191 = vpack.c.bf16 %v6184, %v6183
    %v6192 = vpack.c.bf16 %v6186, %v6185
    %v6193 = vpack.c.bf16 %v6188, %v6187
    %v6194 = vpack.c.bf16 %v6190, %v6189
    %v6195 = vld [vmem:[%s15] sm:$0xf]
    %v6196 = vld [vmem:[%s15 + $0x4] sm:$0xf]
    %v6197 = vld [vmem:[%s15 + $0x8] sm:$0xf]
    %v6198 = vld [vmem:[%s15 + $0xc] sm:$0xf]
    %v6199 = vld [vmem:[%s16] sm:$0x1]
    %v6201 = vlaneseq
    %v6202 = vshrl.u32 %v6201, 7
    %v6203 = vsub.s32 0, %v6202
    %v6204 = vrot.slane %v6199, %v6203
    %v6210 = vunpack.c.l.b16 %v6195
    %v6211 = vunpack.c.l.b16 %v6196
    %v6212 = vunpack.c.l.b16 %v6197
    %v6213 = vunpack.c.l.b16 %v6198
    %v6214 = vpack.c.b16 %v6211, %v6210
    %v6215 = vpack.c.b16 %v6213, %v6212
    %v6219 = vsel %vm109, %v6191, 0
    %v6222 = vsel %vm109, %v6192, 0
    %v6225 = vsel %vm109, %v6193, 0
    %v6228 = vsel %vm109, %v6194, 0
    %6230 = vmatprep.subr.bf16.mxu0 0
    %6231 = vmatpush1.bf16.msra.mxu0 %v6214
    %6232 = vmatprep.subr.bf16.mxu0 0
    %6233 = vmatpush1.bf16.msra.mxu0 %v6215
    %6234 = vmatprep.subr.bf16.mxu0 0
    %6235 = vmatpush1.bf16.msra.mxu0 0
    %6236 = vmatprep.subr.bf16.mxu0 0
    %6237 = vmatpush1.bf16.msra.mxu0 0
    %6238 = vmatprep.subr.bf16.mxu0 0
    %6239 = vmatpush1.bf16.msra.mxu0 0
    %6240 = vmatprep.subr.bf16.mxu0 0
    %6241 = vmatpush1.bf16.msra.mxu0 0
    %6242 = vmatprep.subr.bf16.mxu0 0
    %6243 = vmatpush1.bf16.msra.mxu0 0
    %6244 = vmatprep.subr.bf16.mxu0 0
    %6245 = vmatpush1.bf16.msra.mxu0 0
    %6246 = vmatprep.subr.bf16.mxu0 0
    %6247 = vmatpush1.bf16.msra.mxu0 0
    %6248 = vmatprep.subr.bf16.mxu0 0
    %6249 = vmatpush1.bf16.msra.mxu0 0
    %6250 = vmatprep.subr.bf16.mxu0 0
    %6251 = vmatpush1.bf16.msra.mxu0 0
    %6252 = vmatprep.subr.bf16.mxu0 0
    %6253 = vmatpush1.bf16.msra.mxu0 0
    %6254 = vmatprep.subr.bf16.mxu0 0
    %6255 = vmatpush1.bf16.msra.mxu0 0
    %6256 = vmatprep.subr.bf16.mxu0 0
    %6257 = vmatpush1.bf16.msra.mxu0 0
    %6258 = vmatprep.subr.bf16.mxu0 0
    %6259 = vmatpush1.bf16.msra.mxu0 0
    %6260 = vmatprep.subr.bf16.mxu0 0
    %6261 = vmatpush1.bf16.msra.mxu0 0
    %6262 = vmatprep.mubr.bf16.mxu0 0
    %6263 = vmatmul.mubr.bf16.gmra.mrb[0].mxu0 %v6219
    %v6264 = vpop.f32.mrb[0].mxu0
    %v6265 = vadd.f32 %v6204, %v6264
    %v6266 = vpop.f32.mrb[0].mxu0
    %v6267 = vpop.f32.mrb[0].mxu0
    %v6268 = vadd.f32 %v6204, %v6267
    %v6269 = vpop.f32.mrb[0].mxu0
    %6270 = vmatprep.mubr.bf16.mxu0 0
    %6271 = vmatmul.mubr.bf16.gmra.mrb[0].mxu0 %v6222
    %v6272 = vpop.f32.mrb[0].mxu0
    %v6273 = vadd.f32 %v6204, %v6272
    %v6274 = vpop.f32.mrb[0].mxu0
    %v6275 = vpop.f32.mrb[0].mxu0
    %v6276 = vadd.f32 %v6204, %v6275
    %v6277 = vpop.f32.mrb[0].mxu0
    %6278 = vmatprep.mubr.bf16.mxu0 0
    %6279 = vmatmul.mubr.bf16.gmra.mrb[0].mxu0 %v6225
    %v6280 = vpop.f32.mrb[0].mxu0
    %v6281 = vadd.f32 %v6204, %v6280
    %v6282 = vpop.f32.mrb[0].mxu0
    %v6283 = vpop.f32.mrb[0].mxu0
    %v6284 = vadd.f32 %v6204, %v6283
    %v6285 = vpop.f32.mrb[0].mxu0
    %6286 = vmatprep.mubr.bf16.mxu0 0
    %6287 = vmatmul.mubr.bf16.gmra.mrb[0].mxu0 %v6228
    %v6288 = vpop.f32.mrb[0].mxu0
    %v6289 = vadd.f32 %v6204, %v6288
    %v6290 = vpop.f32.mrb[0].mxu0
    %v6291 = vpop.f32.mrb[0].mxu0
    %v6292 = vadd.f32 %v6204, %v6291
    %v6293 = vpop.f32.mrb[0].mxu0
    %6294 = vdwg.mxu0
    %v6295 = vmul.f32 %v6265, 0.125
    %v6296 = vmul.f32 %v6268, 0.125
    %v6297 = vmul.f32 %v6273, 0.125
    %v6298 = vmul.f32 %v6276, 0.125
    %v6299 = vmul.f32 %v6281, 0.125
    %v6300 = vmul.f32 %v6284, 0.125
    %v6301 = vmul.f32 %v6289, 0.125
    %v6302 = vmul.f32 %v6292, 0.125
    %v6303 = vpack.c.bf16 %v6295, %v6295
    %v6304 = vpack.c.bf16 %v6296, %v6296
    %v6305 = vpack.c.bf16 %v6297, %v6297
    %v6306 = vpack.c.bf16 %v6298, %v6298
    %v6307 = vpack.c.bf16 %v6299, %v6299
    %v6308 = vpack.c.bf16 %v6300, %v6300
    %v6309 = vpack.c.bf16 %v6301, %v6301
    %v6310 = vpack.c.bf16 %v6302, %v6302
    %v6311 = vpack.c.bf16 %v6265, %v6265
    %v6312 = vpack.c.bf16 %v6268, %v6268
    %v6313 = vpack.c.bf16 %v6273, %v6273
    %v6314 = vpack.c.bf16 %v6276, %v6276
    %v6315 = vpack.c.bf16 %v6281, %v6281
    %v6316 = vpack.c.bf16 %v6284, %v6284
    %v6317 = vpack.c.bf16 %v6289, %v6289
    %v6318 = vpack.c.bf16 %v6292, %v6292
    %6320 = vrot.lane.b32.xlu0 %v6311, 96
    %v6321 = vpop.permute.xlu0 %6320
    %v6323 = vsel %vm374, %v6303, 0
    %v6326 = vsel %vm374, %v6321, 0
    %6328 = vmatprep.subr.bf16.mxu0 0
    %6329 = vmatpush1.bf16.xpose.msra.mxu0 %v6326
    %6330 = vmatprep.subr.bf16.mxu0 0
    %6331 = vmatpush1.bf16.xpose.msra.mxu0 0
    %6332 = vmatprep.subr.bf16.mxu0 0
    %6333 = vmatpush1.bf16.xpose.msra.mxu0 0
    %6334 = vmatprep.subr.bf16.mxu0 0
    %6335 = vmatpush1.bf16.xpose.msra.mxu0 0
    %6336 = vmatprep.subr.bf16.mxu0 0
    %6337 = vmatpush1.bf16.xpose.msra.mxu0 0
    %6338 = vmatprep.subr.bf16.mxu0 0
    %6339 = vmatpush1.bf16.xpose.msra.mxu0 0
    %6340 = vmatprep.subr.bf16.mxu0 0
    %6341 = vmatpush1.bf16.xpose.msra.mxu0 0
    %6342 = vmatprep.subr.bf16.mxu0 0
    %6343 = vmatpush1.bf16.xpose.msra.mxu0 0
    %6344 = vmatprep.subr.bf16.mxu0 0
    %6345 = vmatpush1.bf16.xpose.msra.mxu0 0
    %6346 = vmatprep.subr.bf16.mxu0 0
    %6347 = vmatpush1.bf16.xpose.msra.mxu0 0
    %6348 = vmatprep.subr.bf16.mxu0 0
    %6349 = vmatpush1.bf16.xpose.msra.mxu0 0
    %6350 = vmatprep.subr.bf16.mxu0 0
    %6351 = vmatpush1.bf16.xpose.msra.mxu0 0
    %6352 = vmatprep.subr.bf16.mxu0 0
    %6353 = vmatpush1.bf16.xpose.msra.mxu0 0
    %6354 = vmatprep.subr.bf16.mxu0 0
    %6355 = vmatpush1.bf16.xpose.msra.mxu0 0
    %6356 = vmatprep.subr.bf16.mxu0 0
    %6357 = vmatpush1.bf16.xpose.msra.mxu0 0
    %6358 = vmatprep.subr.bf16.mxu0 0
    %6359 = vmatpush1.bf16.xpose.msra.mxu0 0
    %6360 = vmatprep.mubr.bf16.mxu0 0
    %6361 = vmatmul.mubr.bf16.gmra.mrb[0].mxu0 %v6323
    %v6362 = vpop.f32.mrb[0].mxu0
    %v6363 = vadd.f32 0.0, %v6362
    %v6364 = vpop.f32.mrb[0].mxu0
    %v6365 = vpop.f32.mrb[0].mxu0
    %v6366 = vpop.f32.mrb[0].mxu0
    %6367 = vdwg.mxu0
    %6369 = vrot.lane.b32.xlu0 %v6312, 96
    %v6370 = vpop.permute.xlu0 %6369
    %v6372 = vsel %vm374, %v6304, 0
    %v6375 = vsel %vm374, %v6370, 0
    %6377 = vmatprep.subr.bf16.mxu0 0
    %6378 = vmatpush1.bf16.xpose.msra.mxu0 %v6375
    %6379 = vmatprep.subr.bf16.mxu0 0
    %6380 = vmatpush1.bf16.xpose.msra.mxu0 0
    %6381 = vmatprep.subr.bf16.mxu0 0
    %6382 = vmatpush1.bf16.xpose.msra.mxu0 0
    %6383 = vmatprep.subr.bf16.mxu0 0
    %6384 = vmatpush1.bf16.xpose.msra.mxu0 0
    %6385 = vmatprep.subr.bf16.mxu0 0
    %6386 = vmatpush1.bf16.xpose.msra.mxu0 0
    %6387 = vmatprep.subr.bf16.mxu0 0
    %6388 = vmatpush1.bf16.xpose.msra.mxu0 0
    %6389 = vmatprep.subr.bf16.mxu0 0
    %6390 = vmatpush1.bf16.xpose.msra.mxu0 0
    %6391 = vmatprep.subr.bf16.mxu0 0
    %6392 = vmatpush1.bf16.xpose.msra.mxu0 0
    %6393 = vmatprep.subr.bf16.mxu0 0
    %6394 = vmatpush1.bf16.xpose.msra.mxu0 0
    %6395 = vmatprep.subr.bf16.mxu0 0
    %6396 = vmatpush1.bf16.xpose.msra.mxu0 0
    %6397 = vmatprep.subr.bf16.mxu0 0
    %6398 = vmatpush1.bf16.xpose.msra.mxu0 0
    %6399 = vmatprep.subr.bf16.mxu0 0
    %6400 = vmatpush1.bf16.xpose.msra.mxu0 0
    %6401 = vmatprep.subr.bf16.mxu0 0
    %6402 = vmatpush1.bf16.xpose.msra.mxu0 0
    %6403 = vmatprep.subr.bf16.mxu0 0
    %6404 = vmatpush1.bf16.xpose.msra.mxu0 0
    %6405 = vmatprep.subr.bf16.mxu0 0
    %6406 = vmatpush1.bf16.xpose.msra.mxu0 0
    %6407 = vmatprep.subr.bf16.mxu0 0
    %6408 = vmatpush1.bf16.xpose.msra.mxu0 0
    %6409 = vmatprep.mubr.bf16.mxu0 0
    %6410 = vmatmul.mubr.bf16.gmra.mrb[0].mxu0 %v6372
    %v6411 = vpop.f32.mrb[0].mxu0
    %v6412 = vadd.f32 0.0, %v6411
    %v6413 = vpop.f32.mrb[0].mxu0
    %v6414 = vpop.f32.mrb[0].mxu0
    %v6415 = vpop.f32.mrb[0].mxu0
    %6416 = vdwg.mxu0
    %6418 = vrot.lane.b32.xlu0 %v6313, 96
    %v6419 = vpop.permute.xlu0 %6418
    %v6421 = vsel %vm374, %v6305, 0
    %v6424 = vsel %vm374, %v6419, 0
    %6426 = vmatprep.subr.bf16.mxu0 0
    %6427 = vmatpush1.bf16.xpose.msra.mxu0 %v6424
    %6428 = vmatprep.subr.bf16.mxu0 0
    %6429 = vmatpush1.bf16.xpose.msra.mxu0 0
    %6430 = vmatprep.subr.bf16.mxu0 0
    %6431 = vmatpush1.bf16.xpose.msra.mxu0 0
    %6432 = vmatprep.subr.bf16.mxu0 0
    %6433 = vmatpush1.bf16.xpose.msra.mxu0 0
    %6434 = vmatprep.subr.bf16.mxu0 0
    %6435 = vmatpush1.bf16.xpose.msra.mxu0 0
    %6436 = vmatprep.subr.bf16.mxu0 0
    %6437 = vmatpush1.bf16.xpose.msra.mxu0 0
    %6438 = vmatprep.subr.bf16.mxu0 0
    %6439 = vmatpush1.bf16.xpose.msra.mxu0 0
    %6440 = vmatprep.subr.bf16.mxu0 0
    %6441 = vmatpush1.bf16.xpose.msra.mxu0 0
    %6442 = vmatprep.subr.bf16.mxu0 0
    %6443 = vmatpush1.bf16.xpose.msra.mxu0 0
    %6444 = vmatprep.subr.bf16.mxu0 0
    %6445 = vmatpush1.bf16.xpose.msra.mxu0 0
    %6446 = vmatprep.subr.bf16.mxu0 0
    %6447 = vmatpush1.bf16.xpose.msra.mxu0 0
    %6448 = vmatprep.subr.bf16.mxu0 0
    %6449 = vmatpush1.bf16.xpose.msra.mxu0 0
    %6450 = vmatprep.subr.bf16.mxu0 0
    %6451 = vmatpush1.bf16.xpose.msra.mxu0 0
    %6452 = vmatprep.subr.bf16.mxu0 0
    %6453 = vmatpush1.bf16.xpose.msra.mxu0 0
    %6454 = vmatprep.subr.bf16.mxu0 0
    %6455 = vmatpush1.bf16.xpose.msra.mxu0 0
    %6456 = vmatprep.subr.bf16.mxu0 0
    %6457 = vmatpush1.bf16.xpose.msra.mxu0 0
    %6458 = vmatprep.mubr.bf16.mxu0 0
    %6459 = vmatmul.mubr.bf16.gmra.mrb[0].mxu0 %v6421
    %v6460 = vpop.f32.mrb[0].mxu0
    %v6461 = vadd.f32 0.0, %v6460
    %v6462 = vpop.f32.mrb[0].mxu0
    %v6463 = vpop.f32.mrb[0].mxu0
    %v6464 = vpop.f32.mrb[0].mxu0
    %6465 = vdwg.mxu0
    %6467 = vrot.lane.b32.xlu0 %v6314, 96
    %v6468 = vpop.permute.xlu0 %6467
    %v6470 = vsel %vm374, %v6306, 0
    %v6473 = vsel %vm374, %v6468, 0
    %6475 = vmatprep.subr.bf16.mxu0 0
    %6476 = vmatpush1.bf16.xpose.msra.mxu0 %v6473
    %6477 = vmatprep.subr.bf16.mxu0 0
    %6478 = vmatpush1.bf16.xpose.msra.mxu0 0
    %6479 = vmatprep.subr.bf16.mxu0 0
    %6480 = vmatpush1.bf16.xpose.msra.mxu0 0
    %6481 = vmatprep.subr.bf16.mxu0 0
    %6482 = vmatpush1.bf16.xpose.msra.mxu0 0
    %6483 = vmatprep.subr.bf16.mxu0 0
    %6484 = vmatpush1.bf16.xpose.msra.mxu0 0
    %6485 = vmatprep.subr.bf16.mxu0 0
    %6486 = vmatpush1.bf16.xpose.msra.mxu0 0
    %6487 = vmatprep.subr.bf16.mxu0 0
    %6488 = vmatpush1.bf16.xpose.msra.mxu0 0
    %6489 = vmatprep.subr.bf16.mxu0 0
    %6490 = vmatpush1.bf16.xpose.msra.mxu0 0
    %6491 = vmatprep.subr.bf16.mxu0 0
    %6492 = vmatpush1.bf16.xpose.msra.mxu0 0
    %6493 = vmatprep.subr.bf16.mxu0 0
    %6494 = vmatpush1.bf16.xpose.msra.mxu0 0
    %6495 = vmatprep.subr.bf16.mxu0 0
    %6496 = vmatpush1.bf16.xpose.msra.mxu0 0
    %6497 = vmatprep.subr.bf16.mxu0 0
    %6498 = vmatpush1.bf16.xpose.msra.mxu0 0
    %6499 = vmatprep.subr.bf16.mxu0 0
    %6500 = vmatpush1.bf16.xpose.msra.mxu0 0
    %6501 = vmatprep.subr.bf16.mxu0 0
    %6502 = vmatpush1.bf16.xpose.msra.mxu0 0
    %6503 = vmatprep.subr.bf16.mxu0 0
    %6504 = vmatpush1.bf16.xpose.msra.mxu0 0
    %6505 = vmatprep.subr.bf16.mxu0 0
    %6506 = vmatpush1.bf16.xpose.msra.mxu0 0
    %6507 = vmatprep.mubr.bf16.mxu0 0
    %6508 = vmatmul.mubr.bf16.gmra.mrb[0].mxu0 %v6470
    %v6509 = vpop.f32.mrb[0].mxu0
    %v6510 = vadd.f32 0.0, %v6509
    %v6511 = vpop.f32.mrb[0].mxu0
    %v6512 = vpop.f32.mrb[0].mxu0
    %v6513 = vpop.f32.mrb[0].mxu0
    %6514 = vdwg.mxu0
    %6516 = vrot.lane.b32.xlu0 %v6315, 96
    %v6517 = vpop.permute.xlu0 %6516
    %v6519 = vsel %vm374, %v6307, 0
    %v6522 = vsel %vm374, %v6517, 0
    %6524 = vmatprep.subr.bf16.mxu0 0
    %6525 = vmatpush1.bf16.xpose.msra.mxu0 %v6522
    %6526 = vmatprep.subr.bf16.mxu0 0
    %6527 = vmatpush1.bf16.xpose.msra.mxu0 0
    %6528 = vmatprep.subr.bf16.mxu0 0
    %6529 = vmatpush1.bf16.xpose.msra.mxu0 0
    %6530 = vmatprep.subr.bf16.mxu0 0
    %6531 = vmatpush1.bf16.xpose.msra.mxu0 0
    %6532 = vmatprep.subr.bf16.mxu0 0
    %6533 = vmatpush1.bf16.xpose.msra.mxu0 0
    %6534 = vmatprep.subr.bf16.mxu0 0
    %6535 = vmatpush1.bf16.xpose.msra.mxu0 0
    %6536 = vmatprep.subr.bf16.mxu0 0
    %6537 = vmatpush1.bf16.xpose.msra.mxu0 0
    %6538 = vmatprep.subr.bf16.mxu0 0
    %6539 = vmatpush1.bf16.xpose.msra.mxu0 0
    %6540 = vmatprep.subr.bf16.mxu0 0
    %6541 = vmatpush1.bf16.xpose.msra.mxu0 0
    %6542 = vmatprep.subr.bf16.mxu0 0
    %6543 = vmatpush1.bf16.xpose.msra.mxu0 0
    %6544 = vmatprep.subr.bf16.mxu0 0
    %6545 = vmatpush1.bf16.xpose.msra.mxu0 0
    %6546 = vmatprep.subr.bf16.mxu0 0
    %6547 = vmatpush1.bf16.xpose.msra.mxu0 0
    %6548 = vmatprep.subr.bf16.mxu0 0
    %6549 = vmatpush1.bf16.xpose.msra.mxu0 0
    %6550 = vmatprep.subr.bf16.mxu0 0
    %6551 = vmatpush1.bf16.xpose.msra.mxu0 0
    %6552 = vmatprep.subr.bf16.mxu0 0
    %6553 = vmatpush1.bf16.xpose.msra.mxu0 0
    %6554 = vmatprep.subr.bf16.mxu0 0
    %6555 = vmatpush1.bf16.xpose.msra.mxu0 0
    %6556 = vmatprep.mubr.bf16.mxu0 0
    %6557 = vmatmul.mubr.bf16.gmra.mrb[0].mxu0 %v6519
    %v6558 = vpop.f32.mrb[0].mxu0
    %v6559 = vadd.f32 0.0, %v6558
    %v6560 = vpop.f32.mrb[0].mxu0
    %v6561 = vpop.f32.mrb[0].mxu0
    %v6562 = vpop.f32.mrb[0].mxu0
    %6563 = vdwg.mxu0
    %6565 = vrot.lane.b32.xlu0 %v6316, 96
    %v6566 = vpop.permute.xlu0 %6565
    %v6568 = vsel %vm374, %v6308, 0
    %v6571 = vsel %vm374, %v6566, 0
    %6573 = vmatprep.subr.bf16.mxu0 0
    %6574 = vmatpush1.bf16.xpose.msra.mxu0 %v6571
    %6575 = vmatprep.subr.bf16.mxu0 0
    %6576 = vmatpush1.bf16.xpose.msra.mxu0 0
    %6577 = vmatprep.subr.bf16.mxu0 0
    %6578 = vmatpush1.bf16.xpose.msra.mxu0 0
    %6579 = vmatprep.subr.bf16.mxu0 0
    %6580 = vmatpush1.bf16.xpose.msra.mxu0 0
    %6581 = vmatprep.subr.bf16.mxu0 0
    %6582 = vmatpush1.bf16.xpose.msra.mxu0 0
    %6583 = vmatprep.subr.bf16.mxu0 0
    %6584 = vmatpush1.bf16.xpose.msra.mxu0 0
    %6585 = vmatprep.subr.bf16.mxu0 0
    %6586 = vmatpush1.bf16.xpose.msra.mxu0 0
    %6587 = vmatprep.subr.bf16.mxu0 0
    %6588 = vmatpush1.bf16.xpose.msra.mxu0 0
    %6589 = vmatprep.subr.bf16.mxu0 0
    %6590 = vmatpush1.bf16.xpose.msra.mxu0 0
    %6591 = vmatprep.subr.bf16.mxu0 0
    %6592 = vmatpush1.bf16.xpose.msra.mxu0 0
    %6593 = vmatprep.subr.bf16.mxu0 0
    %6594 = vmatpush1.bf16.xpose.msra.mxu0 0
    %6595 = vmatprep.subr.bf16.mxu0 0
    %6596 = vmatpush1.bf16.xpose.msra.mxu0 0
    %6597 = vmatprep.subr.bf16.mxu0 0
    %6598 = vmatpush1.bf16.xpose.msra.mxu0 0
    %6599 = vmatprep.subr.bf16.mxu0 0
    %6600 = vmatpush1.bf16.xpose.msra.mxu0 0
    %6601 = vmatprep.subr.bf16.mxu0 0
    %6602 = vmatpush1.bf16.xpose.msra.mxu0 0
    %6603 = vmatprep.subr.bf16.mxu0 0
    %6604 = vmatpush1.bf16.xpose.msra.mxu0 0
    %6605 = vmatprep.mubr.bf16.mxu0 0
    %6606 = vmatmul.mubr.bf16.gmra.mrb[0].mxu0 %v6568
    %v6607 = vpop.f32.mrb[0].mxu0
    %v6608 = vadd.f32 0.0, %v6607
    %v6609 = vpop.f32.mrb[0].mxu0
    %v6610 = vpop.f32.mrb[0].mxu0
    %v6611 = vpop.f32.mrb[0].mxu0
    %6612 = vdwg.mxu0
    %6614 = vrot.lane.b32.xlu0 %v6317, 96
    %v6615 = vpop.permute.xlu0 %6614
    %v6617 = vsel %vm374, %v6309, 0
    %v6620 = vsel %vm374, %v6615, 0
    %6622 = vmatprep.subr.bf16.mxu0 0
    %6623 = vmatpush1.bf16.xpose.msra.mxu0 %v6620
    %6624 = vmatprep.subr.bf16.mxu0 0
    %6625 = vmatpush1.bf16.xpose.msra.mxu0 0
    %6626 = vmatprep.subr.bf16.mxu0 0
    %6627 = vmatpush1.bf16.xpose.msra.mxu0 0
    %6628 = vmatprep.subr.bf16.mxu0 0
    %6629 = vmatpush1.bf16.xpose.msra.mxu0 0
    %6630 = vmatprep.subr.bf16.mxu0 0
    %6631 = vmatpush1.bf16.xpose.msra.mxu0 0
    %6632 = vmatprep.subr.bf16.mxu0 0
    %6633 = vmatpush1.bf16.xpose.msra.mxu0 0
    %6634 = vmatprep.subr.bf16.mxu0 0
    %6635 = vmatpush1.bf16.xpose.msra.mxu0 0
    %6636 = vmatprep.subr.bf16.mxu0 0
    %6637 = vmatpush1.bf16.xpose.msra.mxu0 0
    %6638 = vmatprep.subr.bf16.mxu0 0
    %6639 = vmatpush1.bf16.xpose.msra.mxu0 0
    %6640 = vmatprep.subr.bf16.mxu0 0
    %6641 = vmatpush1.bf16.xpose.msra.mxu0 0
    %6642 = vmatprep.subr.bf16.mxu0 0
    %6643 = vmatpush1.bf16.xpose.msra.mxu0 0
    %6644 = vmatprep.subr.bf16.mxu0 0
    %6645 = vmatpush1.bf16.xpose.msra.mxu0 0
    %6646 = vmatprep.subr.bf16.mxu0 0
    %6647 = vmatpush1.bf16.xpose.msra.mxu0 0
    %6648 = vmatprep.subr.bf16.mxu0 0
    %6649 = vmatpush1.bf16.xpose.msra.mxu0 0
    %6650 = vmatprep.subr.bf16.mxu0 0
    %6651 = vmatpush1.bf16.xpose.msra.mxu0 0
    %6652 = vmatprep.subr.bf16.mxu0 0
    %6653 = vmatpush1.bf16.xpose.msra.mxu0 0
    %6654 = vmatprep.mubr.bf16.mxu0 0
    %6655 = vmatmul.mubr.bf16.gmra.mrb[0].mxu0 %v6617
    %v6656 = vpop.f32.mrb[0].mxu0
    %v6657 = vadd.f32 0.0, %v6656
    %v6658 = vpop.f32.mrb[0].mxu0
    %v6659 = vpop.f32.mrb[0].mxu0
    %v6660 = vpop.f32.mrb[0].mxu0
    %6661 = vdwg.mxu0
    %6663 = vrot.lane.b32.xlu0 %v6318, 96
    %v6664 = vpop.permute.xlu0 %6663
    %v6666 = vsel %vm374, %v6310, 0
    %v6669 = vsel %vm374, %v6664, 0
    %6671 = vmatprep.subr.bf16.mxu0 0
    %6672 = vmatpush1.bf16.xpose.msra.mxu0 %v6669
    %6673 = vmatprep.subr.bf16.mxu0 0
    %6674 = vmatpush1.bf16.xpose.msra.mxu0 0
    %6675 = vmatprep.subr.bf16.mxu0 0
    %6676 = vmatpush1.bf16.xpose.msra.mxu0 0
    %6677 = vmatprep.subr.bf16.mxu0 0
    %6678 = vmatpush1.bf16.xpose.msra.mxu0 0
    %6679 = vmatprep.subr.bf16.mxu0 0
    %6680 = vmatpush1.bf16.xpose.msra.mxu0 0
    %6681 = vmatprep.subr.bf16.mxu0 0
    %6682 = vmatpush1.bf16.xpose.msra.mxu0 0
    %6683 = vmatprep.subr.bf16.mxu0 0
    %6684 = vmatpush1.bf16.xpose.msra.mxu0 0
    %6685 = vmatprep.subr.bf16.mxu0 0
    %6686 = vmatpush1.bf16.xpose.msra.mxu0 0
    %6687 = vmatprep.subr.bf16.mxu0 0
    %6688 = vmatpush1.bf16.xpose.msra.mxu0 0
    %6689 = vmatprep.subr.bf16.mxu0 0
    %6690 = vmatpush1.bf16.xpose.msra.mxu0 0
    %6691 = vmatprep.subr.bf16.mxu0 0
    %6692 = vmatpush1.bf16.xpose.msra.mxu0 0
    %6693 = vmatprep.subr.bf16.mxu0 0
    %6694 = vmatpush1.bf16.xpose.msra.mxu0 0
    %6695 = vmatprep.subr.bf16.mxu0 0
    %6696 = vmatpush1.bf16.xpose.msra.mxu0 0
    %6697 = vmatprep.subr.bf16.mxu0 0
    %6698 = vmatpush1.bf16.xpose.msra.mxu0 0
    %6699 = vmatprep.subr.bf16.mxu0 0
    %6700 = vmatpush1.bf16.xpose.msra.mxu0 0
    %6701 = vmatprep.subr.bf16.mxu0 0
    %6702 = vmatpush1.bf16.xpose.msra.mxu0 0
    %6703 = vmatprep.mubr.bf16.mxu0 0
    %6704 = vmatmul.mubr.bf16.gmra.mrb[0].mxu0 %v6666
    %v6705 = vpop.f32.mrb[0].mxu0
    %v6706 = vadd.f32 0.0, %v6705
    %v6707 = vpop.f32.mrb[0].mxu0
    %v6708 = vpop.f32.mrb[0].mxu0
    %v6709 = vpop.f32.mrb[0].mxu0
    %6710 = vdwg.mxu0
    %v6711 = vsel %vm374, %v6363, 0.0
    %v6712 = vsel %vm374, %v6412, 0.0
    %v6713 = vadd.f32 %v6711, %v6712
    %v6714 = vsel %vm374, %v6461, 0.0
    %v6715 = vadd.f32 %v6713, %v6714
    %v6716 = vsel %vm374, %v6510, 0.0
    %v6717 = vadd.f32 %v6715, %v6716
    %v6718 = vsel %vm374, %v6559, 0.0
    %v6719 = vadd.f32 %v6717, %v6718
    %v6720 = vsel %vm374, %v6608, 0.0
    %v6721 = vadd.f32 %v6719, %v6720
    %v6722 = vsel %vm374, %v6657, 0.0
    %v6723 = vadd.f32 %v6721, %v6722
    %v6724 = vsel %vm374, %v6706, 0.0
    %v6725 = vadd.f32 %v6723, %v6724
    %v6726 = vsel %vm374, %v6725, -inf
    %6727 = vmax.xlane.f32.xlu0 %v6726
    %v6728 = vpop.xlane.xlu0 %6727
    %v6729 = vsub.f32 %v6725, %v6728
    %v6730 = vmul.f32 %v6729, 1.442695
    %v6731 = vpow.pop %v6730
    %v6732 = vsel %vm374, %v6731, 0.0
    %6733 = vadd.xlane.f32.xlu0 %v6732
    %v6734 = vpop.xlane.xlu0 %6733
    %v6735 = vrcp.pop %v6734
    %v6736 = vmul.f32 %v6731, %v6735
    %6737 = vst.msk [vmem:[#allocation6] sm:$0xff] %vm374, %v6736
    %v6738 = vpack.c.bf16 %v6736, %v6736
    %6739 = vrot.lane.b32.xlu0 %v6311, 64
    %v6740 = vpop.permute.xlu0 %6739
    %v6742 = vsel %vm374, %v6738, 0
    %v6745 = vsel %vm3870, %v6740, 0
    %6747 = vmatprep.subr.bf16.mxu0 0
    %6748 = vmatpush1.bf16.msra.mxu0 %v6745
    %6749 = vmatprep.subr.bf16.mxu0 0
    %6750 = vmatpush1.bf16.msra.mxu0 0
    %6751 = vmatprep.subr.bf16.mxu0 0
    %6752 = vmatpush1.bf16.msra.mxu0 0
    %6753 = vmatprep.subr.bf16.mxu0 0
    %6754 = vmatpush1.bf16.msra.mxu0 0
    %6755 = vmatprep.subr.bf16.mxu0 0
    %6756 = vmatpush1.bf16.msra.mxu0 0
    %6757 = vmatprep.subr.bf16.mxu0 0
    %6758 = vmatpush1.bf16.msra.mxu0 0
    %6759 = vmatprep.subr.bf16.mxu0 0
    %6760 = vmatpush1.bf16.msra.mxu0 0
    %6761 = vmatprep.subr.bf16.mxu0 0
    %6762 = vmatpush1.bf16.msra.mxu0 0
    %6763 = vmatprep.subr.bf16.mxu0 0
    %6764 = vmatpush1.bf16.msra.mxu0 0
    %6765 = vmatprep.subr.bf16.mxu0 0
    %6766 = vmatpush1.bf16.msra.mxu0 0
    %6767 = vmatprep.subr.bf16.mxu0 0
    %6768 = vmatpush1.bf16.msra.mxu0 0
    %6769 = vmatprep.subr.bf16.mxu0 0
    %6770 = vmatpush1.bf16.msra.mxu0 0
    %6771 = vmatprep.subr.bf16.mxu0 0
    %6772 = vmatpush1.bf16.msra.mxu0 0
    %6773 = vmatprep.subr.bf16.mxu0 0
    %6774 = vmatpush1.bf16.msra.mxu0 0
    %6775 = vmatprep.subr.bf16.mxu0 0
    %6776 = vmatpush1.bf16.msra.mxu0 0
    %6777 = vmatprep.subr.bf16.mxu0 0
    %6778 = vmatpush1.bf16.msra.mxu0 0
    %6779 = vmatprep.mubr.bf16.mxu0 0
    %6780 = vmatmul.mubr.bf16.gmra.mrb[0].mxu0 %v6742
    %v6781 = vpop.f32.mrb[0].mxu0
    %v6782 = vadd.f32 0.0, %v6781
    %v6783 = vpop.f32.mrb[0].mxu0
    %v6784 = vpop.f32.mrb[0].mxu0
    %v6785 = vpop.f32.mrb[0].mxu0
    %6786 = vdwg.mxu0
    %6787 = vrot.lane.b32.xlu0 %v6312, 64
    %v6788 = vpop.permute.xlu0 %6787
    %v6790 = vsel %vm3870, %v6788, 0
    %6792 = vmatprep.subr.bf16.mxu0 0
    %6793 = vmatpush1.bf16.msra.mxu0 %v6790
    %6794 = vmatprep.subr.bf16.mxu0 0
    %6795 = vmatpush1.bf16.msra.mxu0 0
    %6796 = vmatprep.subr.bf16.mxu0 0
    %6797 = vmatpush1.bf16.msra.mxu0 0
    %6798 = vmatprep.subr.bf16.mxu0 0
    %6799 = vmatpush1.bf16.msra.mxu0 0
    %6800 = vmatprep.subr.bf16.mxu0 0
    %6801 = vmatpush1.bf16.msra.mxu0 0
    %6802 = vmatprep.subr.bf16.mxu0 0
    %6803 = vmatpush1.bf16.msra.mxu0 0
    %6804 = vmatprep.subr.bf16.mxu0 0
    %6805 = vmatpush1.bf16.msra.mxu0 0
    %6806 = vmatprep.subr.bf16.mxu0 0
    %6807 = vmatpush1.bf16.msra.mxu0 0
    %6808 = vmatprep.subr.bf16.mxu0 0
    %6809 = vmatpush1.bf16.msra.mxu0 0
    %6810 = vmatprep.subr.bf16.mxu0 0
    %6811 = vmatpush1.bf16.msra.mxu0 0
    %6812 = vmatprep.subr.bf16.mxu0 0
    %6813 = vmatpush1.bf16.msra.mxu0 0
    %6814 = vmatprep.subr.bf16.mxu0 0
    %6815 = vmatpush1.bf16.msra.mxu0 0
    %6816 = vmatprep.subr.bf16.mxu0 0
    %6817 = vmatpush1.bf16.msra.mxu0 0
    %6818 = vmatprep.subr.bf16.mxu0 0
    %6819 = vmatpush1.bf16.msra.mxu0 0
    %6820 = vmatprep.subr.bf16.mxu0 0
    %6821 = vmatpush1.bf16.msra.mxu0 0
    %6822 = vmatprep.subr.bf16.mxu0 0
    %6823 = vmatpush1.bf16.msra.mxu0 0
    %6824 = vmatprep.mubr.bf16.mxu0 0
    %6825 = vmatmul.mubr.bf16.gmra.mrb[0].mxu0 %v6742
    %v6826 = vpop.f32.mrb[0].mxu0
    %v6827 = vadd.f32 0.0, %v6826
    %v6828 = vpop.f32.mrb[0].mxu0
    %v6829 = vpop.f32.mrb[0].mxu0
    %v6830 = vpop.f32.mrb[0].mxu0
    %6831 = vdwg.mxu0
    %6832 = vrot.lane.b32.xlu0 %v6313, 64
    %v6833 = vpop.permute.xlu0 %6832
    %v6835 = vsel %vm3870, %v6833, 0
    %6837 = vmatprep.subr.bf16.mxu0 0
    %6838 = vmatpush1.bf16.msra.mxu0 %v6835
    %6839 = vmatprep.subr.bf16.mxu0 0
    %6840 = vmatpush1.bf16.msra.mxu0 0
    %6841 = vmatprep.subr.bf16.mxu0 0
    %6842 = vmatpush1.bf16.msra.mxu0 0
    %6843 = vmatprep.subr.bf16.mxu0 0
    %6844 = vmatpush1.bf16.msra.mxu0 0
    %6845 = vmatprep.subr.bf16.mxu0 0
    %6846 = vmatpush1.bf16.msra.mxu0 0
    %6847 = vmatprep.subr.bf16.mxu0 0
    %6848 = vmatpush1.bf16.msra.mxu0 0
    %6849 = vmatprep.subr.bf16.mxu0 0
    %6850 = vmatpush1.bf16.msra.mxu0 0
    %6851 = vmatprep.subr.bf16.mxu0 0
    %6852 = vmatpush1.bf16.msra.mxu0 0
    %6853 = vmatprep.subr.bf16.mxu0 0
    %6854 = vmatpush1.bf16.msra.mxu0 0
    %6855 = vmatprep.subr.bf16.mxu0 0
    %6856 = vmatpush1.bf16.msra.mxu0 0
    %6857 = vmatprep.subr.bf16.mxu0 0
    %6858 = vmatpush1.bf16.msra.mxu0 0
    %6859 = vmatprep.subr.bf16.mxu0 0
    %6860 = vmatpush1.bf16.msra.mxu0 0
    %6861 = vmatprep.subr.bf16.mxu0 0
    %6862 = vmatpush1.bf16.msra.mxu0 0
    %6863 = vmatprep.subr.bf16.mxu0 0
    %6864 = vmatpush1.bf16.msra.mxu0 0
    %6865 = vmatprep.subr.bf16.mxu0 0
    %6866 = vmatpush1.bf16.msra.mxu0 0
    %6867 = vmatprep.subr.bf16.mxu0 0
    %6868 = vmatpush1.bf16.msra.mxu0 0
    %6869 = vmatprep.mubr.bf16.mxu0 0
    %6870 = vmatmul.mubr.bf16.gmra.mrb[0].mxu0 %v6742
    %v6871 = vpop.f32.mrb[0].mxu0
    %v6872 = vadd.f32 0.0, %v6871
    %v6873 = vpop.f32.mrb[0].mxu0
    %v6874 = vpop.f32.mrb[0].mxu0
    %v6875 = vpop.f32.mrb[0].mxu0
    %6876 = vdwg.mxu0
    %6877 = vrot.lane.b32.xlu0 %v6314, 64
    %v6878 = vpop.permute.xlu0 %6877
    %v6880 = vsel %vm3870, %v6878, 0
    %6882 = vmatprep.subr.bf16.mxu0 0
    %6883 = vmatpush1.bf16.msra.mxu0 %v6880
    %6884 = vmatprep.subr.bf16.mxu0 0
    %6885 = vmatpush1.bf16.msra.mxu0 0
    %6886 = vmatprep.subr.bf16.mxu0 0
    %6887 = vmatpush1.bf16.msra.mxu0 0
    %6888 = vmatprep.subr.bf16.mxu0 0
    %6889 = vmatpush1.bf16.msra.mxu0 0
    %6890 = vmatprep.subr.bf16.mxu0 0
    %6891 = vmatpush1.bf16.msra.mxu0 0
    %6892 = vmatprep.subr.bf16.mxu0 0
    %6893 = vmatpush1.bf16.msra.mxu0 0
    %6894 = vmatprep.subr.bf16.mxu0 0
    %6895 = vmatpush1.bf16.msra.mxu0 0
    %6896 = vmatprep.subr.bf16.mxu0 0
    %6897 = vmatpush1.bf16.msra.mxu0 0
    %6898 = vmatprep.subr.bf16.mxu0 0
    %6899 = vmatpush1.bf16.msra.mxu0 0
    %6900 = vmatprep.subr.bf16.mxu0 0
    %6901 = vmatpush1.bf16.msra.mxu0 0
    %6902 = vmatprep.subr.bf16.mxu0 0
    %6903 = vmatpush1.bf16.msra.mxu0 0
    %6904 = vmatprep.subr.bf16.mxu0 0
    %6905 = vmatpush1.bf16.msra.mxu0 0
    %6906 = vmatprep.subr.bf16.mxu0 0
    %6907 = vmatpush1.bf16.msra.mxu0 0
    %6908 = vmatprep.subr.bf16.mxu0 0
    %6909 = vmatpush1.bf16.msra.mxu0 0
    %6910 = vmatprep.subr.bf16.mxu0 0
    %6911 = vmatpush1.bf16.msra.mxu0 0
    %6912 = vmatprep.subr.bf16.mxu0 0
    %6913 = vmatpush1.bf16.msra.mxu0 0
    %6914 = vmatprep.mubr.bf16.mxu0 0
    %6915 = vmatmul.mubr.bf16.gmra.mrb[0].mxu0 %v6742
    %v6916 = vpop.f32.mrb[0].mxu0
    %v6917 = vadd.f32 0.0, %v6916
    %v6918 = vpop.f32.mrb[0].mxu0
    %v6919 = vpop.f32.mrb[0].mxu0
    %v6920 = vpop.f32.mrb[0].mxu0
    %6921 = vdwg.mxu0
    %6922 = vrot.lane.b32.xlu0 %v6315, 64
    %v6923 = vpop.permute.xlu0 %6922
    %v6925 = vsel %vm3870, %v6923, 0
    %6927 = vmatprep.subr.bf16.mxu0 0
    %6928 = vmatpush1.bf16.msra.mxu0 %v6925
    %6929 = vmatprep.subr.bf16.mxu0 0
    %6930 = vmatpush1.bf16.msra.mxu0 0
    %6931 = vmatprep.subr.bf16.mxu0 0
    %6932 = vmatpush1.bf16.msra.mxu0 0
    %6933 = vmatprep.subr.bf16.mxu0 0
    %6934 = vmatpush1.bf16.msra.mxu0 0
    %6935 = vmatprep.subr.bf16.mxu0 0
    %6936 = vmatpush1.bf16.msra.mxu0 0
    %6937 = vmatprep.subr.bf16.mxu0 0
    %6938 = vmatpush1.bf16.msra.mxu0 0
    %6939 = vmatprep.subr.bf16.mxu0 0
    %6940 = vmatpush1.bf16.msra.mxu0 0
    %6941 = vmatprep.subr.bf16.mxu0 0
    %6942 = vmatpush1.bf16.msra.mxu0 0
    %6943 = vmatprep.subr.bf16.mxu0 0
    %6944 = vmatpush1.bf16.msra.mxu0 0
    %6945 = vmatprep.subr.bf16.mxu0 0
    %6946 = vmatpush1.bf16.msra.mxu0 0
    %6947 = vmatprep.subr.bf16.mxu0 0
    %6948 = vmatpush1.bf16.msra.mxu0 0
    %6949 = vmatprep.subr.bf16.mxu0 0
    %6950 = vmatpush1.bf16.msra.mxu0 0
    %6951 = vmatprep.subr.bf16.mxu0 0
    %6952 = vmatpush1.bf16.msra.mxu0 0
    %6953 = vmatprep.subr.bf16.mxu0 0
    %6954 = vmatpush1.bf16.msra.mxu0 0
    %6955 = vmatprep.subr.bf16.mxu0 0
    %6956 = vmatpush1.bf16.msra.mxu0 0
    %6957 = vmatprep.subr.bf16.mxu0 0
    %6958 = vmatpush1.bf16.msra.mxu0 0
    %6959 = vmatprep.mubr.bf16.mxu0 0
    %6960 = vmatmul.mubr.bf16.gmra.mrb[0].mxu0 %v6742
    %v6961 = vpop.f32.mrb[0].mxu0
    %v6962 = vadd.f32 0.0, %v6961
    %v6963 = vpop.f32.mrb[0].mxu0
    %v6964 = vpop.f32.mrb[0].mxu0
    %v6965 = vpop.f32.mrb[0].mxu0
    %6966 = vdwg.mxu0
    %6967 = vrot.lane.b32.xlu0 %v6316, 64
    %v6968 = vpop.permute.xlu0 %6967
    %v6970 = vsel %vm3870, %v6968, 0
    %6972 = vmatprep.subr.bf16.mxu0 0
    %6973 = vmatpush1.bf16.msra.mxu0 %v6970
    %6974 = vmatprep.subr.bf16.mxu0 0
    %6975 = vmatpush1.bf16.msra.mxu0 0
    %6976 = vmatprep.subr.bf16.mxu0 0
    %6977 = vmatpush1.bf16.msra.mxu0 0
    %6978 = vmatprep.subr.bf16.mxu0 0
    %6979 = vmatpush1.bf16.msra.mxu0 0
    %6980 = vmatprep.subr.bf16.mxu0 0
    %6981 = vmatpush1.bf16.msra.mxu0 0
    %6982 = vmatprep.subr.bf16.mxu0 0
    %6983 = vmatpush1.bf16.msra.mxu0 0
    %6984 = vmatprep.subr.bf16.mxu0 0
    %6985 = vmatpush1.bf16.msra.mxu0 0
    %6986 = vmatprep.subr.bf16.mxu0 0
    %6987 = vmatpush1.bf16.msra.mxu0 0
    %6988 = vmatprep.subr.bf16.mxu0 0
    %6989 = vmatpush1.bf16.msra.mxu0 0
    %6990 = vmatprep.subr.bf16.mxu0 0
    %6991 = vmatpush1.bf16.msra.mxu0 0
    %6992 = vmatprep.subr.bf16.mxu0 0
    %6993 = vmatpush1.bf16.msra.mxu0 0
    %6994 = vmatprep.subr.bf16.mxu0 0
    %6995 = vmatpush1.bf16.msra.mxu0 0
    %6996 = vmatprep.subr.bf16.mxu0 0
    %6997 = vmatpush1.bf16.msra.mxu0 0
    %6998 = vmatprep.subr.bf16.mxu0 0
    %6999 = vmatpush1.bf16.msra.mxu0 0
    %7000 = vmatprep.subr.bf16.mxu0 0
    %7001 = vmatpush1.bf16.msra.mxu0 0
    %7002 = vmatprep.subr.bf16.mxu0 0
    %7003 = vmatpush1.bf16.msra.mxu0 0
    %7004 = vmatprep.mubr.bf16.mxu0 0
    %7005 = vmatmul.mubr.bf16.gmra.mrb[0].mxu0 %v6742
    %v7006 = vpop.f32.mrb[0].mxu0
    %v7007 = vadd.f32 0.0, %v7006
    %v7008 = vpop.f32.mrb[0].mxu0
    %v7009 = vpop.f32.mrb[0].mxu0
    %v7010 = vpop.f32.mrb[0].mxu0
    %7011 = vdwg.mxu0
    %7012 = vrot.lane.b32.xlu0 %v6317, 64
    %v7013 = vpop.permute.xlu0 %7012
    %v7015 = vsel %vm3870, %v7013, 0
    %7017 = vmatprep.subr.bf16.mxu0 0
    %7018 = vmatpush1.bf16.msra.mxu0 %v7015
    %7019 = vmatprep.subr.bf16.mxu0 0
    %7020 = vmatpush1.bf16.msra.mxu0 0
    %7021 = vmatprep.subr.bf16.mxu0 0
    %7022 = vmatpush1.bf16.msra.mxu0 0
    %7023 = vmatprep.subr.bf16.mxu0 0
    %7024 = vmatpush1.bf16.msra.mxu0 0
    %7025 = vmatprep.subr.bf16.mxu0 0
    %7026 = vmatpush1.bf16.msra.mxu0 0
    %7027 = vmatprep.subr.bf16.mxu0 0
    %7028 = vmatpush1.bf16.msra.mxu0 0
    %7029 = vmatprep.subr.bf16.mxu0 0
    %7030 = vmatpush1.bf16.msra.mxu0 0
    %7031 = vmatprep.subr.bf16.mxu0 0
    %7032 = vmatpush1.bf16.msra.mxu0 0
    %7033 = vmatprep.subr.bf16.mxu0 0
    %7034 = vmatpush1.bf16.msra.mxu0 0
    %7035 = vmatprep.subr.bf16.mxu0 0
    %7036 = vmatpush1.bf16.msra.mxu0 0
    %7037 = vmatprep.subr.bf16.mxu0 0
    %7038 = vmatpush1.bf16.msra.mxu0 0
    %7039 = vmatprep.subr.bf16.mxu0 0
    %7040 = vmatpush1.bf16.msra.mxu0 0
    %7041 = vmatprep.subr.bf16.mxu0 0
    %7042 = vmatpush1.bf16.msra.mxu0 0
    %7043 = vmatprep.subr.bf16.mxu0 0
    %7044 = vmatpush1.bf16.msra.mxu0 0
    %7045 = vmatprep.subr.bf16.mxu0 0
    %7046 = vmatpush1.bf16.msra.mxu0 0
    %7047 = vmatprep.subr.bf16.mxu0 0
    %7048 = vmatpush1.bf16.msra.mxu0 0
    %7049 = vmatprep.mubr.bf16.mxu0 0
    %7050 = vmatmul.mubr.bf16.gmra.mrb[0].mxu0 %v6742
    %v7051 = vpop.f32.mrb[0].mxu0
    %v7052 = vadd.f32 0.0, %v7051
    %v7053 = vpop.f32.mrb[0].mxu0
    %v7054 = vpop.f32.mrb[0].mxu0
    %v7055 = vpop.f32.mrb[0].mxu0
    %7056 = vdwg.mxu0
    %7057 = vrot.lane.b32.xlu0 %v6318, 64
    %v7058 = vpop.permute.xlu0 %7057
    %v7060 = vsel %vm3870, %v7058, 0
    %7062 = vmatprep.subr.bf16.mxu0 0
    %7063 = vmatpush1.bf16.msra.mxu0 %v7060
    %7064 = vmatprep.subr.bf16.mxu0 0
    %7065 = vmatpush1.bf16.msra.mxu0 0
    %7066 = vmatprep.subr.bf16.mxu0 0
    %7067 = vmatpush1.bf16.msra.mxu0 0
    %7068 = vmatprep.subr.bf16.mxu0 0
    %7069 = vmatpush1.bf16.msra.mxu0 0
    %7070 = vmatprep.subr.bf16.mxu0 0
    %7071 = vmatpush1.bf16.msra.mxu0 0
    %7072 = vmatprep.subr.bf16.mxu0 0
    %7073 = vmatpush1.bf16.msra.mxu0 0
    %7074 = vmatprep.subr.bf16.mxu0 0
    %7075 = vmatpush1.bf16.msra.mxu0 0
    %7076 = vmatprep.subr.bf16.mxu0 0
    %7077 = vmatpush1.bf16.msra.mxu0 0
    %7078 = vmatprep.subr.bf16.mxu0 0
    %7079 = vmatpush1.bf16.msra.mxu0 0
    %7080 = vmatprep.subr.bf16.mxu0 0
    %7081 = vmatpush1.bf16.msra.mxu0 0
    %7082 = vmatprep.subr.bf16.mxu0 0
    %7083 = vmatpush1.bf16.msra.mxu0 0
    %7084 = vmatprep.subr.bf16.mxu0 0
    %7085 = vmatpush1.bf16.msra.mxu0 0
    %7086 = vmatprep.subr.bf16.mxu0 0
    %7087 = vmatpush1.bf16.msra.mxu0 0
    %7088 = vmatprep.subr.bf16.mxu0 0
    %7089 = vmatpush1.bf16.msra.mxu0 0
    %7090 = vmatprep.subr.bf16.mxu0 0
    %7091 = vmatpush1.bf16.msra.mxu0 0
    %7092 = vmatprep.subr.bf16.mxu0 0
    %7093 = vmatpush1.bf16.msra.mxu0 0
    %7094 = vmatprep.mubr.bf16.mxu0 0
    %7095 = vmatmul.mubr.bf16.gmra.mrb[0].mxu0 %v6742
    %v7096 = vpop.f32.mrb[0].mxu0
    %v7097 = vadd.f32 0.0, %v7096
    %v7098 = vpop.f32.mrb[0].mxu0
    %v7099 = vpop.f32.mrb[0].mxu0
    %v7100 = vpop.f32.mrb[0].mxu0
    %7101 = vdwg.mxu0
    %v7102 = vpack.c.bf16 %v6827, %v6782
    %v7103 = vpack.c.bf16 %v6917, %v6872
    %v7104 = vpack.c.bf16 %v7007, %v6962
    %v7105 = vpack.c.bf16 %v7097, %v7052
    %v7106 = vld [vmem:[%s17] sm:$0xf]
    %7108 = vrot.lane.b32.xlu0 %v6303, 120
    %v7109 = vpop.permute.xlu0 %7108
    %7110 = vrot.lane.b32.xlu0 %v6311, 88
    %v7111 = vpop.permute.xlu0 %7110
    %v7113 = vsel %vm374, %v7109, 0
    %v7116 = vsel %vm374, %v7111, 0
    %7118 = vmatprep.subr.bf16.mxu0 0
    %7119 = vmatpush1.bf16.xpose.msra.mxu0 %v7116
    %7120 = vmatprep.subr.bf16.mxu0 0
    %7121 = vmatpush1.bf16.xpose.msra.mxu0 0
    %7122 = vmatprep.subr.bf16.mxu0 0
    %7123 = vmatpush1.bf16.xpose.msra.mxu0 0
    %7124 = vmatprep.subr.bf16.mxu0 0
    %7125 = vmatpush1.bf16.xpose.msra.mxu0 0
    %7126 = vmatprep.subr.bf16.mxu0 0
    %7127 = vmatpush1.bf16.xpose.msra.mxu0 0
    %7128 = vmatprep.subr.bf16.mxu0 0
    %7129 = vmatpush1.bf16.xpose.msra.mxu0 0
    %7130 = vmatprep.subr.bf16.mxu0 0
    %7131 = vmatpush1.bf16.xpose.msra.mxu0 0
    %7132 = vmatprep.subr.bf16.mxu0 0
    %7133 = vmatpush1.bf16.xpose.msra.mxu0 0
    %7134 = vmatprep.subr.bf16.mxu0 0
    %7135 = vmatpush1.bf16.xpose.msra.mxu0 0
    %7136 = vmatprep.subr.bf16.mxu0 0
    %7137 = vmatpush1.bf16.xpose.msra.mxu0 0
    %7138 = vmatprep.subr.bf16.mxu0 0
    %7139 = vmatpush1.bf16.xpose.msra.mxu0 0
    %7140 = vmatprep.subr.bf16.mxu0 0
    %7141 = vmatpush1.bf16.xpose.msra.mxu0 0
    %7142 = vmatprep.subr.bf16.mxu0 0
    %7143 = vmatpush1.bf16.xpose.msra.mxu0 0
    %7144 = vmatprep.subr.bf16.mxu0 0
    %7145 = vmatpush1.bf16.xpose.msra.mxu0 0
    %7146 = vmatprep.subr.bf16.mxu0 0
    %7147 = vmatpush1.bf16.xpose.msra.mxu0 0
    %7148 = vmatprep.subr.bf16.mxu0 0
    %7149 = vmatpush1.bf16.xpose.msra.mxu0 0
    %7150 = vmatprep.mubr.bf16.mxu0 0
    %7151 = vmatmul.mubr.bf16.gmra.mrb[0].mxu0 %v7113
    %v7152 = vpop.f32.mrb[0].mxu0
    %v7153 = vadd.f32 0.0, %v7152
    %v7154 = vpop.f32.mrb[0].mxu0
    %v7155 = vpop.f32.mrb[0].mxu0
    %v7156 = vpop.f32.mrb[0].mxu0
    %7157 = vdwg.mxu0
    %7159 = vrot.lane.b32.xlu0 %v6304, 120
    %v7160 = vpop.permute.xlu0 %7159
    %7161 = vrot.lane.b32.xlu0 %v6312, 88
    %v7162 = vpop.permute.xlu0 %7161
    %v7164 = vsel %vm374, %v7160, 0
    %v7167 = vsel %vm374, %v7162, 0
    %7169 = vmatprep.subr.bf16.mxu0 0
    %7170 = vmatpush1.bf16.xpose.msra.mxu0 %v7167
    %7171 = vmatprep.subr.bf16.mxu0 0
    %7172 = vmatpush1.bf16.xpose.msra.mxu0 0
    %7173 = vmatprep.subr.bf16.mxu0 0
    %7174 = vmatpush1.bf16.xpose.msra.mxu0 0
    %7175 = vmatprep.subr.bf16.mxu0 0
    %7176 = vmatpush1.bf16.xpose.msra.mxu0 0
    %7177 = vmatprep.subr.bf16.mxu0 0
    %7178 = vmatpush1.bf16.xpose.msra.mxu0 0
    %7179 = vmatprep.subr.bf16.mxu0 0
    %7180 = vmatpush1.bf16.xpose.msra.mxu0 0
    %7181 = vmatprep.subr.bf16.mxu0 0
    %7182 = vmatpush1.bf16.xpose.msra.mxu0 0
    %7183 = vmatprep.subr.bf16.mxu0 0
    %7184 = vmatpush1.bf16.xpose.msra.mxu0 0
    %7185 = vmatprep.subr.bf16.mxu0 0
    %7186 = vmatpush1.bf16.xpose.msra.mxu0 0
    %7187 = vmatprep.subr.bf16.mxu0 0
    %7188 = vmatpush1.bf16.xpose.msra.mxu0 0
    %7189 = vmatprep.subr.bf16.mxu0 0
    %7190 = vmatpush1.bf16.xpose.msra.mxu0 0
    %7191 = vmatprep.subr.bf16.mxu0 0
    %7192 = vmatpush1.bf16.xpose.msra.mxu0 0
    %7193 = vmatprep.subr.bf16.mxu0 0
    %7194 = vmatpush1.bf16.xpose.msra.mxu0 0
    %7195 = vmatprep.subr.bf16.mxu0 0
    %7196 = vmatpush1.bf16.xpose.msra.mxu0 0
    %7197 = vmatprep.subr.bf16.mxu0 0
    %7198 = vmatpush1.bf16.xpose.msra.mxu0 0
    %7199 = vmatprep.subr.bf16.mxu0 0
    %7200 = vmatpush1.bf16.xpose.msra.mxu0 0
    %7201 = vmatprep.mubr.bf16.mxu0 0
    %7202 = vmatmul.mubr.bf16.gmra.mrb[0].mxu0 %v7164
    %v7203 = vpop.f32.mrb[0].mxu0
    %v7204 = vadd.f32 0.0, %v7203
    %v7205 = vpop.f32.mrb[0].mxu0
    %v7206 = vpop.f32.mrb[0].mxu0
    %v7207 = vpop.f32.mrb[0].mxu0
    %7208 = vdwg.mxu0
    %7210 = vrot.lane.b32.xlu0 %v6305, 120
    %v7211 = vpop.permute.xlu0 %7210
    %7212 = vrot.lane.b32.xlu0 %v6313, 88
    %v7213 = vpop.permute.xlu0 %7212
    %v7215 = vsel %vm374, %v7211, 0
    %v7218 = vsel %vm374, %v7213, 0
    %7220 = vmatprep.subr.bf16.mxu0 0
    %7221 = vmatpush1.bf16.xpose.msra.mxu0 %v7218
    %7222 = vmatprep.subr.bf16.mxu0 0
    %7223 = vmatpush1.bf16.xpose.msra.mxu0 0
    %7224 = vmatprep.subr.bf16.mxu0 0
    %7225 = vmatpush1.bf16.xpose.msra.mxu0 0
    %7226 = vmatprep.subr.bf16.mxu0 0
    %7227 = vmatpush1.bf16.xpose.msra.mxu0 0
    %7228 = vmatprep.subr.bf16.mxu0 0
    %7229 = vmatpush1.bf16.xpose.msra.mxu0 0
    %7230 = vmatprep.subr.bf16.mxu0 0
    %7231 = vmatpush1.bf16.xpose.msra.mxu0 0
    %7232 = vmatprep.subr.bf16.mxu0 0
    %7233 = vmatpush1.bf16.xpose.msra.mxu0 0
    %7234 = vmatprep.subr.bf16.mxu0 0
    %7235 = vmatpush1.bf16.xpose.msra.mxu0 0
    %7236 = vmatprep.subr.bf16.mxu0 0
    %7237 = vmatpush1.bf16.xpose.msra.mxu0 0
    %7238 = vmatprep.subr.bf16.mxu0 0
    %7239 = vmatpush1.bf16.xpose.msra.mxu0 0
    %7240 = vmatprep.subr.bf16.mxu0 0
    %7241 = vmatpush1.bf16.xpose.msra.mxu0 0
    %7242 = vmatprep.subr.bf16.mxu0 0
    %7243 = vmatpush1.bf16.xpose.msra.mxu0 0
    %7244 = vmatprep.subr.bf16.mxu0 0
    %7245 = vmatpush1.bf16.xpose.msra.mxu0 0
    %7246 = vmatprep.subr.bf16.mxu0 0
    %7247 = vmatpush1.bf16.xpose.msra.mxu0 0
    %7248 = vmatprep.subr.bf16.mxu0 0
    %7249 = vmatpush1.bf16.xpose.msra.mxu0 0
    %7250 = vmatprep.subr.bf16.mxu0 0
    %7251 = vmatpush1.bf16.xpose.msra.mxu0 0
    %7252 = vmatprep.mubr.bf16.mxu0 0
    %7253 = vmatmul.mubr.bf16.gmra.mrb[0].mxu0 %v7215
    %v7254 = vpop.f32.mrb[0].mxu0
    %v7255 = vadd.f32 0.0, %v7254
    %v7256 = vpop.f32.mrb[0].mxu0
    %v7257 = vpop.f32.mrb[0].mxu0
    %v7258 = vpop.f32.mrb[0].mxu0
    %7259 = vdwg.mxu0
    %7261 = vrot.lane.b32.xlu0 %v6306, 120
    %v7262 = vpop.permute.xlu0 %7261
    %7263 = vrot.lane.b32.xlu0 %v6314, 88
    %v7264 = vpop.permute.xlu0 %7263
    %v7266 = vsel %vm374, %v7262, 0
    %v7269 = vsel %vm374, %v7264, 0
    %7271 = vmatprep.subr.bf16.mxu0 0
    %7272 = vmatpush1.bf16.xpose.msra.mxu0 %v7269
    %7273 = vmatprep.subr.bf16.mxu0 0
    %7274 = vmatpush1.bf16.xpose.msra.mxu0 0
    %7275 = vmatprep.subr.bf16.mxu0 0
    %7276 = vmatpush1.bf16.xpose.msra.mxu0 0
    %7277 = vmatprep.subr.bf16.mxu0 0
    %7278 = vmatpush1.bf16.xpose.msra.mxu0 0
    %7279 = vmatprep.subr.bf16.mxu0 0
    %7280 = vmatpush1.bf16.xpose.msra.mxu0 0
    %7281 = vmatprep.subr.bf16.mxu0 0
    %7282 = vmatpush1.bf16.xpose.msra.mxu0 0
    %7283 = vmatprep.subr.bf16.mxu0 0
    %7284 = vmatpush1.bf16.xpose.msra.mxu0 0
    %7285 = vmatprep.subr.bf16.mxu0 0
    %7286 = vmatpush1.bf16.xpose.msra.mxu0 0
    %7287 = vmatprep.subr.bf16.mxu0 0
    %7288 = vmatpush1.bf16.xpose.msra.mxu0 0
    %7289 = vmatprep.subr.bf16.mxu0 0
    %7290 = vmatpush1.bf16.xpose.msra.mxu0 0
    %7291 = vmatprep.subr.bf16.mxu0 0
    %7292 = vmatpush1.bf16.xpose.msra.mxu0 0
    %7293 = vmatprep.subr.bf16.mxu0 0
    %7294 = vmatpush1.bf16.xpose.msra.mxu0 0
    %7295 = vmatprep.subr.bf16.mxu0 0
    %7296 = vmatpush1.bf16.xpose.msra.mxu0 0
    %7297 = vmatprep.subr.bf16.mxu0 0
    %7298 = vmatpush1.bf16.xpose.msra.mxu0 0
    %7299 = vmatprep.subr.bf16.mxu0 0
    %7300 = vmatpush1.bf16.xpose.msra.mxu0 0
    %7301 = vmatprep.subr.bf16.mxu0 0
    %7302 = vmatpush1.bf16.xpose.msra.mxu0 0
    %7303 = vmatprep.mubr.bf16.mxu0 0
    %7304 = vmatmul.mubr.bf16.gmra.mrb[0].mxu0 %v7266
    %v7305 = vpop.f32.mrb[0].mxu0
    %v7306 = vadd.f32 0.0, %v7305
    %v7307 = vpop.f32.mrb[0].mxu0
    %v7308 = vpop.f32.mrb[0].mxu0
    %v7309 = vpop.f32.mrb[0].mxu0
    %7310 = vdwg.mxu0
    %7312 = vrot.lane.b32.xlu0 %v6307, 120
    %v7313 = vpop.permute.xlu0 %7312
    %7314 = vrot.lane.b32.xlu0 %v6315, 88
    %v7315 = vpop.permute.xlu0 %7314
    %v7317 = vsel %vm374, %v7313, 0
    %v7320 = vsel %vm374, %v7315, 0
    %7322 = vmatprep.subr.bf16.mxu0 0
    %7323 = vmatpush1.bf16.xpose.msra.mxu0 %v7320
    %7324 = vmatprep.subr.bf16.mxu0 0
    %7325 = vmatpush1.bf16.xpose.msra.mxu0 0
    %7326 = vmatprep.subr.bf16.mxu0 0
    %7327 = vmatpush1.bf16.xpose.msra.mxu0 0
    %7328 = vmatprep.subr.bf16.mxu0 0
    %7329 = vmatpush1.bf16.xpose.msra.mxu0 0
    %7330 = vmatprep.subr.bf16.mxu0 0
    %7331 = vmatpush1.bf16.xpose.msra.mxu0 0
    %7332 = vmatprep.subr.bf16.mxu0 0
    %7333 = vmatpush1.bf16.xpose.msra.mxu0 0
    %7334 = vmatprep.subr.bf16.mxu0 0
    %7335 = vmatpush1.bf16.xpose.msra.mxu0 0
    %7336 = vmatprep.subr.bf16.mxu0 0
    %7337 = vmatpush1.bf16.xpose.msra.mxu0 0
    %7338 = vmatprep.subr.bf16.mxu0 0
    %7339 = vmatpush1.bf16.xpose.msra.mxu0 0
    %7340 = vmatprep.subr.bf16.mxu0 0
    %7341 = vmatpush1.bf16.xpose.msra.mxu0 0
    %7342 = vmatprep.subr.bf16.mxu0 0
    %7343 = vmatpush1.bf16.xpose.msra.mxu0 0
    %7344 = vmatprep.subr.bf16.mxu0 0
    %7345 = vmatpush1.bf16.xpose.msra.mxu0 0
    %7346 = vmatprep.subr.bf16.mxu0 0
    %7347 = vmatpush1.bf16.xpose.msra.mxu0 0
    %7348 = vmatprep.subr.bf16.mxu0 0
    %7349 = vmatpush1.bf16.xpose.msra.mxu0 0
    %7350 = vmatprep.subr.bf16.mxu0 0
    %7351 = vmatpush1.bf16.xpose.msra.mxu0 0
    %7352 = vmatprep.subr.bf16.mxu0 0
    %7353 = vmatpush1.bf16.xpose.msra.mxu0 0
    %7354 = vmatprep.mubr.bf16.mxu0 0
    %7355 = vmatmul.mubr.bf16.gmra.mrb[0].mxu0 %v7317
    %v7356 = vpop.f32.mrb[0].mxu0
    %v7357 = vadd.f32 0.0, %v7356
    %v7358 = vpop.f32.mrb[0].mxu0
    %v7359 = vpop.f32.mrb[0].mxu0
    %v7360 = vpop.f32.mrb[0].mxu0
    %7361 = vdwg.mxu0
    %7363 = vrot.lane.b32.xlu0 %v6308, 120
    %v7364 = vpop.permute.xlu0 %7363
    %7365 = vrot.lane.b32.xlu0 %v6316, 88
    %v7366 = vpop.permute.xlu0 %7365
    %v7368 = vsel %vm374, %v7364, 0
    %v7371 = vsel %vm374, %v7366, 0
    %7373 = vmatprep.subr.bf16.mxu0 0
    %7374 = vmatpush1.bf16.xpose.msra.mxu0 %v7371
    %7375 = vmatprep.subr.bf16.mxu0 0
    %7376 = vmatpush1.bf16.xpose.msra.mxu0 0
    %7377 = vmatprep.subr.bf16.mxu0 0
    %7378 = vmatpush1.bf16.xpose.msra.mxu0 0
    %7379 = vmatprep.subr.bf16.mxu0 0
    %7380 = vmatpush1.bf16.xpose.msra.mxu0 0
    %7381 = vmatprep.subr.bf16.mxu0 0
    %7382 = vmatpush1.bf16.xpose.msra.mxu0 0
    %7383 = vmatprep.subr.bf16.mxu0 0
    %7384 = vmatpush1.bf16.xpose.msra.mxu0 0
    %7385 = vmatprep.subr.bf16.mxu0 0
    %7386 = vmatpush1.bf16.xpose.msra.mxu0 0
    %7387 = vmatprep.subr.bf16.mxu0 0
    %7388 = vmatpush1.bf16.xpose.msra.mxu0 0
    %7389 = vmatprep.subr.bf16.mxu0 0
    %7390 = vmatpush1.bf16.xpose.msra.mxu0 0
    %7391 = vmatprep.subr.bf16.mxu0 0
    %7392 = vmatpush1.bf16.xpose.msra.mxu0 0
    %7393 = vmatprep.subr.bf16.mxu0 0
    %7394 = vmatpush1.bf16.xpose.msra.mxu0 0
    %7395 = vmatprep.subr.bf16.mxu0 0
    %7396 = vmatpush1.bf16.xpose.msra.mxu0 0
    %7397 = vmatprep.subr.bf16.mxu0 0
    %7398 = vmatpush1.bf16.xpose.msra.mxu0 0
    %7399 = vmatprep.subr.bf16.mxu0 0
    %7400 = vmatpush1.bf16.xpose.msra.mxu0 0
    %7401 = vmatprep.subr.bf16.mxu0 0
    %7402 = vmatpush1.bf16.xpose.msra.mxu0 0
    %7403 = vmatprep.subr.bf16.mxu0 0
    %7404 = vmatpush1.bf16.xpose.msra.mxu0 0
    %7405 = vmatprep.mubr.bf16.mxu0 0
    %7406 = vmatmul.mubr.bf16.gmra.mrb[0].mxu0 %v7368
    %v7407 = vpop.f32.mrb[0].mxu0
    %v7408 = vadd.f32 0.0, %v7407
    %v7409 = vpop.f32.mrb[0].mxu0
    %v7410 = vpop.f32.mrb[0].mxu0
    %v7411 = vpop.f32.mrb[0].mxu0
    %7412 = vdwg.mxu0
    %7414 = vrot.lane.b32.xlu0 %v6309, 120
    %v7415 = vpop.permute.xlu0 %7414
    %7416 = vrot.lane.b32.xlu0 %v6317, 88
    %v7417 = vpop.permute.xlu0 %7416
    %v7419 = vsel %vm374, %v7415, 0
    %v7422 = vsel %vm374, %v7417, 0
    %7424 = vmatprep.subr.bf16.mxu0 0
    %7425 = vmatpush1.bf16.xpose.msra.mxu0 %v7422
    %7426 = vmatprep.subr.bf16.mxu0 0
    %7427 = vmatpush1.bf16.xpose.msra.mxu0 0
    %7428 = vmatprep.subr.bf16.mxu0 0
    %7429 = vmatpush1.bf16.xpose.msra.mxu0 0
    %7430 = vmatprep.subr.bf16.mxu0 0
    %7431 = vmatpush1.bf16.xpose.msra.mxu0 0
    %7432 = vmatprep.subr.bf16.mxu0 0
    %7433 = vmatpush1.bf16.xpose.msra.mxu0 0
    %7434 = vmatprep.subr.bf16.mxu0 0
    %7435 = vmatpush1.bf16.xpose.msra.mxu0 0
    %7436 = vmatprep.subr.bf16.mxu0 0
    %7437 = vmatpush1.bf16.xpose.msra.mxu0 0
    %7438 = vmatprep.subr.bf16.mxu0 0
    %7439 = vmatpush1.bf16.xpose.msra.mxu0 0
    %7440 = vmatprep.subr.bf16.mxu0 0
    %7441 = vmatpush1.bf16.xpose.msra.mxu0 0
    %7442 = vmatprep.subr.bf16.mxu0 0
    %7443 = vmatpush1.bf16.xpose.msra.mxu0 0
    %7444 = vmatprep.subr.bf16.mxu0 0
    %7445 = vmatpush1.bf16.xpose.msra.mxu0 0
    %7446 = vmatprep.subr.bf16.mxu0 0
    %7447 = vmatpush1.bf16.xpose.msra.mxu0 0
    %7448 = vmatprep.subr.bf16.mxu0 0
    %7449 = vmatpush1.bf16.xpose.msra.mxu0 0
    %7450 = vmatprep.subr.bf16.mxu0 0
    %7451 = vmatpush1.bf16.xpose.msra.mxu0 0
    %7452 = vmatprep.subr.bf16.mxu0 0
    %7453 = vmatpush1.bf16.xpose.msra.mxu0 0
    %7454 = vmatprep.subr.bf16.mxu0 0
    %7455 = vmatpush1.bf16.xpose.msra.mxu0 0
    %7456 = vmatprep.mubr.bf16.mxu0 0
    %7457 = vmatmul.mubr.bf16.gmra.mrb[0].mxu0 %v7419
    %v7458 = vpop.f32.mrb[0].mxu0
    %v7459 = vadd.f32 0.0, %v7458
    %v7460 = vpop.f32.mrb[0].mxu0
    %v7461 = vpop.f32.mrb[0].mxu0
    %v7462 = vpop.f32.mrb[0].mxu0
    %7463 = vdwg.mxu0
    %7465 = vrot.lane.b32.xlu0 %v6310, 120
    %v7466 = vpop.permute.xlu0 %7465
    %7467 = vrot.lane.b32.xlu0 %v6318, 88
    %v7468 = vpop.permute.xlu0 %7467
    %v7470 = vsel %vm374, %v7466, 0
    %v7473 = vsel %vm374, %v7468, 0
    %7475 = vmatprep.subr.bf16.mxu0 0
    %7476 = vmatpush1.bf16.xpose.msra.mxu0 %v7473
    %7477 = vmatprep.subr.bf16.mxu0 0
    %7478 = vmatpush1.bf16.xpose.msra.mxu0 0
    %7479 = vmatprep.subr.bf16.mxu0 0
    %7480 = vmatpush1.bf16.xpose.msra.mxu0 0
    %7481 = vmatprep.subr.bf16.mxu0 0
    %7482 = vmatpush1.bf16.xpose.msra.mxu0 0
    %7483 = vmatprep.subr.bf16.mxu0 0
    %7484 = vmatpush1.bf16.xpose.msra.mxu0 0
    %7485 = vmatprep.subr.bf16.mxu0 0
    %7486 = vmatpush1.bf16.xpose.msra.mxu0 0
    %7487 = vmatprep.subr.bf16.mxu0 0
    %7488 = vmatpush1.bf16.xpose.msra.mxu0 0
    %7489 = vmatprep.subr.bf16.mxu0 0
    %7490 = vmatpush1.bf16.xpose.msra.mxu0 0
    %7491 = vmatprep.subr.bf16.mxu0 0
    %7492 = vmatpush1.bf16.xpose.msra.mxu0 0
    %7493 = vmatprep.subr.bf16.mxu0 0
    %7494 = vmatpush1.bf16.xpose.msra.mxu0 0
    %7495 = vmatprep.subr.bf16.mxu0 0
    %7496 = vmatpush1.bf16.xpose.msra.mxu0 0
    %7497 = vmatprep.subr.bf16.mxu0 0
    %7498 = vmatpush1.bf16.xpose.msra.mxu0 0
    %7499 = vmatprep.subr.bf16.mxu0 0
    %7500 = vmatpush1.bf16.xpose.msra.mxu0 0
    %7501 = vmatprep.subr.bf16.mxu0 0
    %7502 = vmatpush1.bf16.xpose.msra.mxu0 0
    %7503 = vmatprep.subr.bf16.mxu0 0
    %7504 = vmatpush1.bf16.xpose.msra.mxu0 0
    %7505 = vmatprep.subr.bf16.mxu0 0
    %7506 = vmatpush1.bf16.xpose.msra.mxu0 0
    %7507 = vmatprep.mubr.bf16.mxu0 0
    %7508 = vmatmul.mubr.bf16.gmra.mrb[0].mxu0 %v7470
    %v7509 = vpop.f32.mrb[0].mxu0
    %v7510 = vadd.f32 0.0, %v7509
    %v7511 = vpop.f32.mrb[0].mxu0
    %v7512 = vpop.f32.mrb[0].mxu0
    %v7513 = vpop.f32.mrb[0].mxu0
    %7514 = vdwg.mxu0
    %v7515 = vsel %vm374, %v7153, 0.0
    %v7516 = vsel %vm374, %v7204, 0.0
    %v7517 = vadd.f32 %v7515, %v7516
    %v7518 = vsel %vm374, %v7255, 0.0
    %v7519 = vadd.f32 %v7517, %v7518
    %v7520 = vsel %vm374, %v7306, 0.0
    %v7521 = vadd.f32 %v7519, %v7520
    %v7522 = vsel %vm374, %v7357, 0.0
    %v7523 = vadd.f32 %v7521, %v7522
    %v7524 = vsel %vm374, %v7408, 0.0
    %v7525 = vadd.f32 %v7523, %v7524
    %v7526 = vsel %vm374, %v7459, 0.0
    %v7527 = vadd.f32 %v7525, %v7526
    %v7528 = vsel %vm374, %v7510, 0.0
    %v7529 = vadd.f32 %v7527, %v7528
    %v7530 = vsel %vm374, %v7529, -inf
    %7531 = vmax.xlane.f32.xlu0 %v7530
    %v7532 = vpop.xlane.xlu0 %7531
    %v7533 = vsub.f32 %v7529, %v7532
    %v7534 = vmul.f32 %v7533, 1.442695
    %v7535 = vpow.pop %v7534
    %v7536 = vsel %vm374, %v7535, 0.0
    %7537 = vadd.xlane.f32.xlu0 %v7536
    %v7538 = vpop.xlane.xlu0 %7537
    %v7539 = vrcp.pop %v7538
    %v7540 = vmul.f32 %v7535, %v7539
    %7541 = vst.msk [vmem:[#allocation6 + $0x8] sm:$0xff] %vm374, %v7540
    %v7542 = vpack.c.bf16 %v7540, %v7540
    %7543 = vrot.lane.b32.xlu0 %v6311, 56
    %v7544 = vpop.permute.xlu0 %7543
    %v7546 = vsel %vm374, %v7542, 0
    %v7549 = vsel %vm3870, %v7544, 0
    %7551 = vmatprep.subr.bf16.mxu0 0
    %7552 = vmatpush1.bf16.msra.mxu0 %v7549
    %7553 = vmatprep.subr.bf16.mxu0 0
    %7554 = vmatpush1.bf16.msra.mxu0 0
    %7555 = vmatprep.subr.bf16.mxu0 0
    %7556 = vmatpush1.bf16.msra.mxu0 0
    %7557 = vmatprep.subr.bf16.mxu0 0
    %7558 = vmatpush1.bf16.msra.mxu0 0
    %7559 = vmatprep.subr.bf16.mxu0 0
    %7560 = vmatpush1.bf16.msra.mxu0 0
    %7561 = vmatprep.subr.bf16.mxu0 0
    %7562 = vmatpush1.bf16.msra.mxu0 0
    %7563 = vmatprep.subr.bf16.mxu0 0
    %7564 = vmatpush1.bf16.msra.mxu0 0
    %7565 = vmatprep.subr.bf16.mxu0 0
    %7566 = vmatpush1.bf16.msra.mxu0 0
    %7567 = vmatprep.subr.bf16.mxu0 0
    %7568 = vmatpush1.bf16.msra.mxu0 0
    %7569 = vmatprep.subr.bf16.mxu0 0
    %7570 = vmatpush1.bf16.msra.mxu0 0
    %7571 = vmatprep.subr.bf16.mxu0 0
    %7572 = vmatpush1.bf16.msra.mxu0 0
    %7573 = vmatprep.subr.bf16.mxu0 0
    %7574 = vmatpush1.bf16.msra.mxu0 0
    %7575 = vmatprep.subr.bf16.mxu0 0
    %7576 = vmatpush1.bf16.msra.mxu0 0
    %7577 = vmatprep.subr.bf16.mxu0 0
    %7578 = vmatpush1.bf16.msra.mxu0 0
    %7579 = vmatprep.subr.bf16.mxu0 0
    %7580 = vmatpush1.bf16.msra.mxu0 0
    %7581 = vmatprep.subr.bf16.mxu0 0
    %7582 = vmatpush1.bf16.msra.mxu0 0
    %7583 = vmatprep.mubr.bf16.mxu0 0
    %7584 = vmatmul.mubr.bf16.gmra.mrb[0].mxu0 %v7546
    %v7585 = vpop.f32.mrb[0].mxu0
    %v7586 = vadd.f32 0.0, %v7585
    %v7587 = vpop.f32.mrb[0].mxu0
    %v7588 = vpop.f32.mrb[0].mxu0
    %v7589 = vpop.f32.mrb[0].mxu0
    %7590 = vdwg.mxu0
    %7591 = vrot.lane.b32.xlu0 %v6312, 56
    %v7592 = vpop.permute.xlu0 %7591
    %v7594 = vsel %vm3870, %v7592, 0
    %7596 = vmatprep.subr.bf16.mxu0 0
    %7597 = vmatpush1.bf16.msra.mxu0 %v7594
    %7598 = vmatprep.subr.bf16.mxu0 0
    %7599 = vmatpush1.bf16.msra.mxu0 0
    %7600 = vmatprep.subr.bf16.mxu0 0
    %7601 = vmatpush1.bf16.msra.mxu0 0
    %7602 = vmatprep.subr.bf16.mxu0 0
    %7603 = vmatpush1.bf16.msra.mxu0 0
    %7604 = vmatprep.subr.bf16.mxu0 0
    %7605 = vmatpush1.bf16.msra.mxu0 0
    %7606 = vmatprep.subr.bf16.mxu0 0
    %7607 = vmatpush1.bf16.msra.mxu0 0
    %7608 = vmatprep.subr.bf16.mxu0 0
    %7609 = vmatpush1.bf16.msra.mxu0 0
    %7610 = vmatprep.subr.bf16.mxu0 0
    %7611 = vmatpush1.bf16.msra.mxu0 0
    %7612 = vmatprep.subr.bf16.mxu0 0
    %7613 = vmatpush1.bf16.msra.mxu0 0
    %7614 = vmatprep.subr.bf16.mxu0 0
    %7615 = vmatpush1.bf16.msra.mxu0 0
    %7616 = vmatprep.subr.bf16.mxu0 0
    %7617 = vmatpush1.bf16.msra.mxu0 0
    %7618 = vmatprep.subr.bf16.mxu0 0
    %7619 = vmatpush1.bf16.msra.mxu0 0
    %7620 = vmatprep.subr.bf16.mxu0 0
    %7621 = vmatpush1.bf16.msra.mxu0 0
    %7622 = vmatprep.subr.bf16.mxu0 0
    %7623 = vmatpush1.bf16.msra.mxu0 0
    %7624 = vmatprep.subr.bf16.mxu0 0
    %7625 = vmatpush1.bf16.msra.mxu0 0
    %7626 = vmatprep.subr.bf16.mxu0 0
    %7627 = vmatpush1.bf16.msra.mxu0 0
    %7628 = vmatprep.mubr.bf16.mxu0 0
    %7629 = vmatmul.mubr.bf16.gmra.mrb[0].mxu0 %v7546
    %v7630 = vpop.f32.mrb[0].mxu0
    %v7631 = vadd.f32 0.0, %v7630
    %v7632 = vpop.f32.mrb[0].mxu0
    %v7633 = vpop.f32.mrb[0].mxu0
    %v7634 = vpop.f32.mrb[0].mxu0
    %7635 = vdwg.mxu0
    %7636 = vrot.lane.b32.xlu0 %v6313, 56
    %v7637 = vpop.permute.xlu0 %7636
    %v7639 = vsel %vm3870, %v7637, 0
    %7641 = vmatprep.subr.bf16.mxu0 0
    %7642 = vmatpush1.bf16.msra.mxu0 %v7639
    %7643 = vmatprep.subr.bf16.mxu0 0
    %7644 = vmatpush1.bf16.msra.mxu0 0
    %7645 = vmatprep.subr.bf16.mxu0 0
    %7646 = vmatpush1.bf16.msra.mxu0 0
    %7647 = vmatprep.subr.bf16.mxu0 0
    %7648 = vmatpush1.bf16.msra.mxu0 0
    %7649 = vmatprep.subr.bf16.mxu0 0
    %7650 = vmatpush1.bf16.msra.mxu0 0
    %7651 = vmatprep.subr.bf16.mxu0 0
    %7652 = vmatpush1.bf16.msra.mxu0 0
    %7653 = vmatprep.subr.bf16.mxu0 0
    %7654 = vmatpush1.bf16.msra.mxu0 0
    %7655 = vmatprep.subr.bf16.mxu0 0
    %7656 = vmatpush1.bf16.msra.mxu0 0
    %7657 = vmatprep.subr.bf16.mxu0 0
    %7658 = vmatpush1.bf16.msra.mxu0 0
    %7659 = vmatprep.subr.bf16.mxu0 0
    %7660 = vmatpush1.bf16.msra.mxu0 0
    %7661 = vmatprep.subr.bf16.mxu0 0
    %7662 = vmatpush1.bf16.msra.mxu0 0
    %7663 = vmatprep.subr.bf16.mxu0 0
    %7664 = vmatpush1.bf16.msra.mxu0 0
    %7665 = vmatprep.subr.bf16.mxu0 0
    %7666 = vmatpush1.bf16.msra.mxu0 0
    %7667 = vmatprep.subr.bf16.mxu0 0
    %7668 = vmatpush1.bf16.msra.mxu0 0
    %7669 = vmatprep.subr.bf16.mxu0 0
    %7670 = vmatpush1.bf16.msra.mxu0 0
    %7671 = vmatprep.subr.bf16.mxu0 0
    %7672 = vmatpush1.bf16.msra.mxu0 0
    %7673 = vmatprep.mubr.bf16.mxu0 0
    %7674 = vmatmul.mubr.bf16.gmra.mrb[0].mxu0 %v7546
    %v7675 = vpop.f32.mrb[0].mxu0
    %v7676 = vadd.f32 0.0, %v7675
    %v7677 = vpop.f32.mrb[0].mxu0
    %v7678 = vpop.f32.mrb[0].mxu0
    %v7679 = vpop.f32.mrb[0].mxu0
    %7680 = vdwg.mxu0
    %7681 = vrot.lane.b32.xlu0 %v6314, 56
    %v7682 = vpop.permute.xlu0 %7681
    %v7684 = vsel %vm3870, %v7682, 0
    %7686 = vmatprep.subr.bf16.mxu0 0
    %7687 = vmatpush1.bf16.msra.mxu0 %v7684
    %7688 = vmatprep.subr.bf16.mxu0 0
    %7689 = vmatpush1.bf16.msra.mxu0 0
    %7690 = vmatprep.subr.bf16.mxu0 0
    %7691 = vmatpush1.bf16.msra.mxu0 0
    %7692 = vmatprep.subr.bf16.mxu0 0
    %7693 = vmatpush1.bf16.msra.mxu0 0
    %7694 = vmatprep.subr.bf16.mxu0 0
    %7695 = vmatpush1.bf16.msra.mxu0 0
    %7696 = vmatprep.subr.bf16.mxu0 0
    %7697 = vmatpush1.bf16.msra.mxu0 0
    %7698 = vmatprep.subr.bf16.mxu0 0
    %7699 = vmatpush1.bf16.msra.mxu0 0
    %7700 = vmatprep.subr.bf16.mxu0 0
    %7701 = vmatpush1.bf16.msra.mxu0 0
    %7702 = vmatprep.subr.bf16.mxu0 0
    %7703 = vmatpush1.bf16.msra.mxu0 0
    %7704 = vmatprep.subr.bf16.mxu0 0
    %7705 = vmatpush1.bf16.msra.mxu0 0
    %7706 = vmatprep.subr.bf16.mxu0 0
    %7707 = vmatpush1.bf16.msra.mxu0 0
    %7708 = vmatprep.subr.bf16.mxu0 0
    %7709 = vmatpush1.bf16.msra.mxu0 0
    %7710 = vmatprep.subr.bf16.mxu0 0
    %7711 = vmatpush1.bf16.msra.mxu0 0
    %7712 = vmatprep.subr.bf16.mxu0 0
    %7713 = vmatpush1.bf16.msra.mxu0 0
    %7714 = vmatprep.subr.bf16.mxu0 0
    %7715 = vmatpush1.bf16.msra.mxu0 0
    %7716 = vmatprep.subr.bf16.mxu0 0
    %7717 = vmatpush1.bf16.msra.mxu0 0
    %7718 = vmatprep.mubr.bf16.mxu0 0
    %7719 = vmatmul.mubr.bf16.gmra.mrb[0].mxu0 %v7546
    %v7720 = vpop.f32.mrb[0].mxu0
    %v7721 = vadd.f32 0.0, %v7720
    %v7722 = vpop.f32.mrb[0].mxu0
    %v7723 = vpop.f32.mrb[0].mxu0
    %v7724 = vpop.f32.mrb[0].mxu0
    %7725 = vdwg.mxu0
    %7726 = vrot.lane.b32.xlu0 %v6315, 56
    %v7727 = vpop.permute.xlu0 %7726
    %v7729 = vsel %vm3870, %v7727, 0
    %7731 = vmatprep.subr.bf16.mxu0 0
    %7732 = vmatpush1.bf16.msra.mxu0 %v7729
    %7733 = vmatprep.subr.bf16.mxu0 0
    %7734 = vmatpush1.bf16.msra.mxu0 0
    %7735 = vmatprep.subr.bf16.mxu0 0
    %7736 = vmatpush1.bf16.msra.mxu0 0
    %7737 = vmatprep.subr.bf16.mxu0 0
    %7738 = vmatpush1.bf16.msra.mxu0 0
    %7739 = vmatprep.subr.bf16.mxu0 0
    %7740 = vmatpush1.bf16.msra.mxu0 0
    %7741 = vmatprep.subr.bf16.mxu0 0
    %7742 = vmatpush1.bf16.msra.mxu0 0
    %7743 = vmatprep.subr.bf16.mxu0 0
    %7744 = vmatpush1.bf16.msra.mxu0 0
    %7745 = vmatprep.subr.bf16.mxu0 0
    %7746 = vmatpush1.bf16.msra.mxu0 0
    %7747 = vmatprep.subr.bf16.mxu0 0
    %7748 = vmatpush1.bf16.msra.mxu0 0
    %7749 = vmatprep.subr.bf16.mxu0 0
    %7750 = vmatpush1.bf16.msra.mxu0 0
    %7751 = vmatprep.subr.bf16.mxu0 0
    %7752 = vmatpush1.bf16.msra.mxu0 0
    %7753 = vmatprep.subr.bf16.mxu0 0
    %7754 = vmatpush1.bf16.msra.mxu0 0
    %7755 = vmatprep.subr.bf16.mxu0 0
    %7756 = vmatpush1.bf16.msra.mxu0 0
    %7757 = vmatprep.subr.bf16.mxu0 0
    %7758 = vmatpush1.bf16.msra.mxu0 0
    %7759 = vmatprep.subr.bf16.mxu0 0
    %7760 = vmatpush1.bf16.msra.mxu0 0
    %7761 = vmatprep.subr.bf16.mxu0 0
    %7762 = vmatpush1.bf16.msra.mxu0 0
    %7763 = vmatprep.mubr.bf16.mxu0 0
    %7764 = vmatmul.mubr.bf16.gmra.mrb[0].mxu0 %v7546
    %v7765 = vpop.f32.mrb[0].mxu0
    %v7766 = vadd.f32 0.0, %v7765
    %v7767 = vpop.f32.mrb[0].mxu0
    %v7768 = vpop.f32.mrb[0].mxu0
    %v7769 = vpop.f32.mrb[0].mxu0
    %7770 = vdwg.mxu0
    %7771 = vrot.lane.b32.xlu0 %v6316, 56
    %v7772 = vpop.permute.xlu0 %7771
    %v7774 = vsel %vm3870, %v7772, 0
    %7776 = vmatprep.subr.bf16.mxu0 0
    %7777 = vmatpush1.bf16.msra.mxu0 %v7774
    %7778 = vmatprep.subr.bf16.mxu0 0
    %7779 = vmatpush1.bf16.msra.mxu0 0
    %7780 = vmatprep.subr.bf16.mxu0 0
    %7781 = vmatpush1.bf16.msra.mxu0 0
    %7782 = vmatprep.subr.bf16.mxu0 0
    %7783 = vmatpush1.bf16.msra.mxu0 0
    %7784 = vmatprep.subr.bf16.mxu0 0
    %7785 = vmatpush1.bf16.msra.mxu0 0
    %7786 = vmatprep.subr.bf16.mxu0 0
    %7787 = vmatpush1.bf16.msra.mxu0 0
    %7788 = vmatprep.subr.bf16.mxu0 0
    %7789 = vmatpush1.bf16.msra.mxu0 0
    %7790 = vmatprep.subr.bf16.mxu0 0
    %7791 = vmatpush1.bf16.msra.mxu0 0
    %7792 = vmatprep.subr.bf16.mxu0 0
    %7793 = vmatpush1.bf16.msra.mxu0 0
    %7794 = vmatprep.subr.bf16.mxu0 0
    %7795 = vmatpush1.bf16.msra.mxu0 0
    %7796 = vmatprep.subr.bf16.mxu0 0
    %7797 = vmatpush1.bf16.msra.mxu0 0
    %7798 = vmatprep.subr.bf16.mxu0 0
    %7799 = vmatpush1.bf16.msra.mxu0 0
    %7800 = vmatprep.subr.bf16.mxu0 0
    %7801 = vmatpush1.bf16.msra.mxu0 0
    %7802 = vmatprep.subr.bf16.mxu0 0
    %7803 = vmatpush1.bf16.msra.mxu0 0
    %7804 = vmatprep.subr.bf16.mxu0 0
    %7805 = vmatpush1.bf16.msra.mxu0 0
    %7806 = vmatprep.subr.bf16.mxu0 0
    %7807 = vmatpush1.bf16.msra.mxu0 0
    %7808 = vmatprep.mubr.bf16.mxu0 0
    %7809 = vmatmul.mubr.bf16.gmra.mrb[0].mxu0 %v7546
    %v7810 = vpop.f32.mrb[0].mxu0
    %v7811 = vadd.f32 0.0, %v7810
    %v7812 = vpop.f32.mrb[0].mxu0
    %v7813 = vpop.f32.mrb[0].mxu0
    %v7814 = vpop.f32.mrb[0].mxu0
    %7815 = vdwg.mxu0
    %7816 = vrot.lane.b32.xlu0 %v6317, 56
    %v7817 = vpop.permute.xlu0 %7816
    %v7819 = vsel %vm3870, %v7817, 0
    %7821 = vmatprep.subr.bf16.mxu0 0
    %7822 = vmatpush1.bf16.msra.mxu0 %v7819
    %7823 = vmatprep.subr.bf16.mxu0 0
    %7824 = vmatpush1.bf16.msra.mxu0 0
    %7825 = vmatprep.subr.bf16.mxu0 0
    %7826 = vmatpush1.bf16.msra.mxu0 0
    %7827 = vmatprep.subr.bf16.mxu0 0
    %7828 = vmatpush1.bf16.msra.mxu0 0
    %7829 = vmatprep.subr.bf16.mxu0 0
    %7830 = vmatpush1.bf16.msra.mxu0 0
    %7831 = vmatprep.subr.bf16.mxu0 0
    %7832 = vmatpush1.bf16.msra.mxu0 0
    %7833 = vmatprep.subr.bf16.mxu0 0
    %7834 = vmatpush1.bf16.msra.mxu0 0
    %7835 = vmatprep.subr.bf16.mxu0 0
    %7836 = vmatpush1.bf16.msra.mxu0 0
    %7837 = vmatprep.subr.bf16.mxu0 0
    %7838 = vmatpush1.bf16.msra.mxu0 0
    %7839 = vmatprep.subr.bf16.mxu0 0
    %7840 = vmatpush1.bf16.msra.mxu0 0
    %7841 = vmatprep.subr.bf16.mxu0 0
    %7842 = vmatpush1.bf16.msra.mxu0 0
    %7843 = vmatprep.subr.bf16.mxu0 0
    %7844 = vmatpush1.bf16.msra.mxu0 0
    %7845 = vmatprep.subr.bf16.mxu0 0
    %7846 = vmatpush1.bf16.msra.mxu0 0
    %7847 = vmatprep.subr.bf16.mxu0 0
    %7848 = vmatpush1.bf16.msra.mxu0 0
    %7849 = vmatprep.subr.bf16.mxu0 0
    %7850 = vmatpush1.bf16.msra.mxu0 0
    %7851 = vmatprep.subr.bf16.mxu0 0
    %7852 = vmatpush1.bf16.msra.mxu0 0
    %7853 = vmatprep.mubr.bf16.mxu0 0
    %7854 = vmatmul.mubr.bf16.gmra.mrb[0].mxu0 %v7546
    %v7855 = vpop.f32.mrb[0].mxu0
    %v7856 = vadd.f32 0.0, %v7855
    %v7857 = vpop.f32.mrb[0].mxu0
    %v7858 = vpop.f32.mrb[0].mxu0
    %v7859 = vpop.f32.mrb[0].mxu0
    %7860 = vdwg.mxu0
    %7861 = vrot.lane.b32.xlu0 %v6318, 56
    %v7862 = vpop.permute.xlu0 %7861
    %v7864 = vsel %vm3870, %v7862, 0
    %7866 = vmatprep.subr.bf16.mxu0 0
    %7867 = vmatpush1.bf16.msra.mxu0 %v7864
    %7868 = vmatprep.subr.bf16.mxu0 0
    %7869 = vmatpush1.bf16.msra.mxu0 0
    %7870 = vmatprep.subr.bf16.mxu0 0
    %7871 = vmatpush1.bf16.msra.mxu0 0
    %7872 = vmatprep.subr.bf16.mxu0 0
    %7873 = vmatpush1.bf16.msra.mxu0 0
    %7874 = vmatprep.subr.bf16.mxu0 0
    %7875 = vmatpush1.bf16.msra.mxu0 0
    %7876 = vmatprep.subr.bf16.mxu0 0
    %7877 = vmatpush1.bf16.msra.mxu0 0
    %7878 = vmatprep.subr.bf16.mxu0 0
    %7879 = vmatpush1.bf16.msra.mxu0 0
    %7880 = vmatprep.subr.bf16.mxu0 0
    %7881 = vmatpush1.bf16.msra.mxu0 0
    %7882 = vmatprep.subr.bf16.mxu0 0
    %7883 = vmatpush1.bf16.msra.mxu0 0
    %7884 = vmatprep.subr.bf16.mxu0 0
    %7885 = vmatpush1.bf16.msra.mxu0 0
    %7886 = vmatprep.subr.bf16.mxu0 0
    %7887 = vmatpush1.bf16.msra.mxu0 0
    %7888 = vmatprep.subr.bf16.mxu0 0
    %7889 = vmatpush1.bf16.msra.mxu0 0
    %7890 = vmatprep.subr.bf16.mxu0 0
    %7891 = vmatpush1.bf16.msra.mxu0 0
    %7892 = vmatprep.subr.bf16.mxu0 0
    %7893 = vmatpush1.bf16.msra.mxu0 0
    %7894 = vmatprep.subr.bf16.mxu0 0
    %7895 = vmatpush1.bf16.msra.mxu0 0
    %7896 = vmatprep.subr.bf16.mxu0 0
    %7897 = vmatpush1.bf16.msra.mxu0 0
    %7898 = vmatprep.mubr.bf16.mxu0 0
    %7899 = vmatmul.mubr.bf16.gmra.mrb[0].mxu0 %v7546
    %v7900 = vpop.f32.mrb[0].mxu0
    %v7901 = vadd.f32 0.0, %v7900
    %v7902 = vpop.f32.mrb[0].mxu0
    %v7903 = vpop.f32.mrb[0].mxu0
    %v7904 = vpop.f32.mrb[0].mxu0
    %7905 = vdwg.mxu0
    %v7906 = vpack.c.bf16 %v7631, %v7586
    %v7907 = vpack.c.bf16 %v7721, %v7676
    %v7908 = vpack.c.bf16 %v7811, %v7766
    %v7909 = vpack.c.bf16 %v7901, %v7856
    %s7910 = scalar_lea.vmem %s17, 4
    %v7911 = vld [vmem:[%s7910] sm:$0xf]
    %v7913 = vsel %vm374, %v7906, 0
    %v7916 = vsel %vm374, %v7907, 0
    %v7919 = vsel %vm374, %v7908, 0
    %v7922 = vsel %vm374, %v7909, 0
    %v7925 = vsel %vm3870, %v7911, 0
    %7927 = vmatprep.subr.bf16.mxu0 0
    %7928 = vmatpush1.bf16.msra.mxu0 %v7925
    %7929 = vmatprep.subr.bf16.mxu0 0
    %7930 = vmatpush1.bf16.msra.mxu0 0
    %7931 = vmatprep.subr.bf16.mxu0 0
    %7932 = vmatpush1.bf16.msra.mxu0 0
    %7933 = vmatprep.subr.bf16.mxu0 0
    %7934 = vmatpush1.bf16.msra.mxu0 0
    %7935 = vmatprep.subr.bf16.mxu0 0
    %7936 = vmatpush1.bf16.msra.mxu0 0
    %7937 = vmatprep.subr.bf16.mxu0 0
    %7938 = vmatpush1.bf16.msra.mxu0 0
    %7939 = vmatprep.subr.bf16.mxu0 0
    %7940 = vmatpush1.bf16.msra.mxu0 0
    %7941 = vmatprep.subr.bf16.mxu0 0
    %7942 = vmatpush1.bf16.msra.mxu0 0
    %7943 = vmatprep.subr.bf16.mxu0 0
    %7944 = vmatpush1.bf16.msra.mxu0 0
    %7945 = vmatprep.subr.bf16.mxu0 0
    %7946 = vmatpush1.bf16.msra.mxu0 0
    %7947 = vmatprep.subr.bf16.mxu0 0
    %7948 = vmatpush1.bf16.msra.mxu0 0
    %7949 = vmatprep.subr.bf16.mxu0 0
    %7950 = vmatpush1.bf16.msra.mxu0 0
    %7951 = vmatprep.subr.bf16.mxu0 0
    %7952 = vmatpush1.bf16.msra.mxu0 0
    %7953 = vmatprep.subr.bf16.mxu0 0
    %7954 = vmatpush1.bf16.msra.mxu0 0
    %7955 = vmatprep.subr.bf16.mxu0 0
    %7956 = vmatpush1.bf16.msra.mxu0 0
    %7957 = vmatprep.subr.bf16.mxu0 0
    %7958 = vmatpush1.bf16.msra.mxu0 0
    %7959 = vmatprep.mubr.bf16.mxu0 0
    %7960 = vmatmul.mubr.bf16.gmra.mrb[0].mxu0 %v7913
    %v7961 = vpop.f32.mrb[0].mxu0
    %v7962 = vadd.f32 0.0, %v7961
    %v7963 = vpop.f32.mrb[0].mxu0
    %v7964 = vpop.f32.mrb[0].mxu0
    %v7965 = vadd.f32 0.0, %v7964
    %v7966 = vpop.f32.mrb[0].mxu0
    %7967 = vmatprep.mubr.bf16.mxu0 0
    %7968 = vmatmul.mubr.bf16.gmra.mrb[0].mxu0 %v7916
    %v7969 = vpop.f32.mrb[0].mxu0
    %v7970 = vadd.f32 0.0, %v7969
    %v7971 = vpop.f32.mrb[0].mxu0
    %v7972 = vpop.f32.mrb[0].mxu0
    %v7973 = vadd.f32 0.0, %v7972
    %v7974 = vpop.f32.mrb[0].mxu0
    %7975 = vmatprep.mubr.bf16.mxu0 0
    %7976 = vmatmul.mubr.bf16.gmra.mrb[0].mxu0 %v7919
    %v7977 = vpop.f32.mrb[0].mxu0
    %v7978 = vadd.f32 0.0, %v7977
    %v7979 = vpop.f32.mrb[0].mxu0
    %v7980 = vpop.f32.mrb[0].mxu0
    %v7981 = vadd.f32 0.0, %v7980
    %v7982 = vpop.f32.mrb[0].mxu0
    %7983 = vmatprep.mubr.bf16.mxu0 0
    %7984 = vmatmul.mubr.bf16.gmra.mrb[0].mxu0 %v7922
    %v7985 = vpop.f32.mrb[0].mxu0
    %v7986 = vadd.f32 0.0, %v7985
    %v7987 = vpop.f32.mrb[0].mxu0
    %v7988 = vpop.f32.mrb[0].mxu0
    %v7989 = vadd.f32 0.0, %v7988
    %v7990 = vpop.f32.mrb[0].mxu0
    %7991 = vdwg.mxu0
    %v7993 = vsel %vm374, %v7102, 0
    %v7996 = vsel %vm374, %v7103, 0
    %v7999 = vsel %vm374, %v7104, 0
    %v8002 = vsel %vm374, %v7105, 0
    %v8005 = vsel %vm3870, %v7106, 0
    %8007 = vmatprep.subr.bf16.mxu0 0
    %8008 = vmatpush1.bf16.msra.mxu0 %v8005
    %8009 = vmatprep.subr.bf16.mxu0 0
    %8010 = vmatpush1.bf16.msra.mxu0 0
    %8011 = vmatprep.subr.bf16.mxu0 0
    %8012 = vmatpush1.bf16.msra.mxu0 0
    %8013 = vmatprep.subr.bf16.mxu0 0
    %8014 = vmatpush1.bf16.msra.mxu0 0
    %8015 = vmatprep.subr.bf16.mxu0 0
    %8016 = vmatpush1.bf16.msra.mxu0 0
    %8017 = vmatprep.subr.bf16.mxu0 0
    %8018 = vmatpush1.bf16.msra.mxu0 0
    %8019 = vmatprep.subr.bf16.mxu0 0
    %8020 = vmatpush1.bf16.msra.mxu0 0
    %8021 = vmatprep.subr.bf16.mxu0 0
    %8022 = vmatpush1.bf16.msra.mxu0 0
    %8023 = vmatprep.subr.bf16.mxu0 0
    %8024 = vmatpush1.bf16.msra.mxu0 0
    %8025 = vmatprep.subr.bf16.mxu0 0
    %8026 = vmatpush1.bf16.msra.mxu0 0
    %8027 = vmatprep.subr.bf16.mxu0 0
    %8028 = vmatpush1.bf16.msra.mxu0 0
    %8029 = vmatprep.subr.bf16.mxu0 0
    %8030 = vmatpush1.bf16.msra.mxu0 0
    %8031 = vmatprep.subr.bf16.mxu0 0
    %8032 = vmatpush1.bf16.msra.mxu0 0
    %8033 = vmatprep.subr.bf16.mxu0 0
    %8034 = vmatpush1.bf16.msra.mxu0 0
    %8035 = vmatprep.subr.bf16.mxu0 0
    %8036 = vmatpush1.bf16.msra.mxu0 0
    %8037 = vmatprep.subr.bf16.mxu0 0
    %8038 = vmatpush1.bf16.msra.mxu0 0
    %8039 = vmatprep.mubr.bf16.mxu0 0
    %8040 = vmatmul.mubr.bf16.gmra.mrb[0].mxu0 %v7993
    %v8041 = vpop.f32.mrb[0].mxu0
    %v8042 = vadd.f32 %v7962, %v8041
    %v8043 = vpop.f32.mrb[0].mxu0
    %v8044 = vpop.f32.mrb[0].mxu0
    %v8045 = vadd.f32 %v7965, %v8044
    %v8046 = vpop.f32.mrb[0].mxu0
    %8047 = vmatprep.mubr.bf16.mxu0 0
    %8048 = vmatmul.mubr.bf16.gmra.mrb[0].mxu0 %v7996
    %v8049 = vpop.f32.mrb[0].mxu0
    %v8050 = vadd.f32 %v7970, %v8049
    %v8051 = vpop.f32.mrb[0].mxu0
    %v8052 = vpop.f32.mrb[0].mxu0
    %v8053 = vadd.f32 %v7973, %v8052
    %v8054 = vpop.f32.mrb[0].mxu0
    %8055 = vmatprep.mubr.bf16.mxu0 0
    %8056 = vmatmul.mubr.bf16.gmra.mrb[0].mxu0 %v7999
    %v8057 = vpop.f32.mrb[0].mxu0
    %v8058 = vadd.f32 %v7978, %v8057
    %v8059 = vpop.f32.mrb[0].mxu0
    %v8060 = vpop.f32.mrb[0].mxu0
    %v8061 = vadd.f32 %v7981, %v8060
    %v8062 = vpop.f32.mrb[0].mxu0
    %8063 = vmatprep.mubr.bf16.mxu0 0
    %8064 = vmatmul.mubr.bf16.gmra.mrb[0].mxu0 %v8002
    %v8065 = vpop.f32.mrb[0].mxu0
    %v8066 = vadd.f32 %v7986, %v8065
    %v8067 = vpop.f32.mrb[0].mxu0
    %v8068 = vpop.f32.mrb[0].mxu0
    %v8069 = vadd.f32 %v7989, %v8068
    %v8070 = vpop.f32.mrb[0].mxu0
    %8071 = vdwg.mxu0
    %8072 = vrot.lane.b32.xlu0 %v6303, 112
    %v8073 = vpop.permute.xlu0 %8072
    %8074 = vrot.lane.b32.xlu0 %v6311, 80
    %v8075 = vpop.permute.xlu0 %8074
    %v8077 = vsel %vm374, %v8073, 0
    %v8080 = vsel %vm374, %v8075, 0
    %8082 = vmatprep.subr.bf16.mxu0 0
    %8083 = vmatpush1.bf16.xpose.msra.mxu0 %v8080
    %8084 = vmatprep.subr.bf16.mxu0 0
    %8085 = vmatpush1.bf16.xpose.msra.mxu0 0
    %8086 = vmatprep.subr.bf16.mxu0 0
    %8087 = vmatpush1.bf16.xpose.msra.mxu0 0
    %8088 = vmatprep.subr.bf16.mxu0 0
    %8089 = vmatpush1.bf16.xpose.msra.mxu0 0
    %8090 = vmatprep.subr.bf16.mxu0 0
    %8091 = vmatpush1.bf16.xpose.msra.mxu0 0
    %8092 = vmatprep.subr.bf16.mxu0 0
    %8093 = vmatpush1.bf16.xpose.msra.mxu0 0
    %8094 = vmatprep.subr.bf16.mxu0 0
    %8095 = vmatpush1.bf16.xpose.msra.mxu0 0
    %8096 = vmatprep.subr.bf16.mxu0 0
    %8097 = vmatpush1.bf16.xpose.msra.mxu0 0
    %8098 = vmatprep.subr.bf16.mxu0 0
    %8099 = vmatpush1.bf16.xpose.msra.mxu0 0
    %8100 = vmatprep.subr.bf16.mxu0 0
    %8101 = vmatpush1.bf16.xpose.msra.mxu0 0
    %8102 = vmatprep.subr.bf16.mxu0 0
    %8103 = vmatpush1.bf16.xpose.msra.mxu0 0
    %8104 = vmatprep.subr.bf16.mxu0 0
    %8105 = vmatpush1.bf16.xpose.msra.mxu0 0
    %8106 = vmatprep.subr.bf16.mxu0 0
    %8107 = vmatpush1.bf16.xpose.msra.mxu0 0
    %8108 = vmatprep.subr.bf16.mxu0 0
    %8109 = vmatpush1.bf16.xpose.msra.mxu0 0
    %8110 = vmatprep.subr.bf16.mxu0 0
    %8111 = vmatpush1.bf16.xpose.msra.mxu0 0
    %8112 = vmatprep.subr.bf16.mxu0 0
    %8113 = vmatpush1.bf16.xpose.msra.mxu0 0
    %8114 = vmatprep.mubr.bf16.mxu0 0
    %8115 = vmatmul.mubr.bf16.gmra.mrb[0].mxu0 %v8077
    %v8116 = vpop.f32.mrb[0].mxu0
    %v8117 = vadd.f32 0.0, %v8116
    %v8118 = vpop.f32.mrb[0].mxu0
    %v8119 = vpop.f32.mrb[0].mxu0
    %v8120 = vpop.f32.mrb[0].mxu0
    %8121 = vdwg.mxu0
    %8122 = vrot.lane.b32.xlu0 %v6304, 112
    %v8123 = vpop.permute.xlu0 %8122
    %8124 = vrot.lane.b32.xlu0 %v6312, 80
    %v8125 = vpop.permute.xlu0 %8124
    %v8127 = vsel %vm374, %v8123, 0
    %v8130 = vsel %vm374, %v8125, 0
    %8132 = vmatprep.subr.bf16.mxu0 0
    %8133 = vmatpush1.bf16.xpose.msra.mxu0 %v8130
    %8134 = vmatprep.subr.bf16.mxu0 0
    %8135 = vmatpush1.bf16.xpose.msra.mxu0 0
    %8136 = vmatprep.subr.bf16.mxu0 0
    %8137 = vmatpush1.bf16.xpose.msra.mxu0 0
    %8138 = vmatprep.subr.bf16.mxu0 0
    %8139 = vmatpush1.bf16.xpose.msra.mxu0 0
    %8140 = vmatprep.subr.bf16.mxu0 0
    %8141 = vmatpush1.bf16.xpose.msra.mxu0 0
    %8142 = vmatprep.subr.bf16.mxu0 0
    %8143 = vmatpush1.bf16.xpose.msra.mxu0 0
    %8144 = vmatprep.subr.bf16.mxu0 0
    %8145 = vmatpush1.bf16.xpose.msra.mxu0 0
    %8146 = vmatprep.subr.bf16.mxu0 0
    %8147 = vmatpush1.bf16.xpose.msra.mxu0 0
    %8148 = vmatprep.subr.bf16.mxu0 0
    %8149 = vmatpush1.bf16.xpose.msra.mxu0 0
    %8150 = vmatprep.subr.bf16.mxu0 0
    %8151 = vmatpush1.bf16.xpose.msra.mxu0 0
    %8152 = vmatprep.subr.bf16.mxu0 0
    %8153 = vmatpush1.bf16.xpose.msra.mxu0 0
    %8154 = vmatprep.subr.bf16.mxu0 0
    %8155 = vmatpush1.bf16.xpose.msra.mxu0 0
    %8156 = vmatprep.subr.bf16.mxu0 0
    %8157 = vmatpush1.bf16.xpose.msra.mxu0 0
    %8158 = vmatprep.subr.bf16.mxu0 0
    %8159 = vmatpush1.bf16.xpose.msra.mxu0 0
    %8160 = vmatprep.subr.bf16.mxu0 0
    %8161 = vmatpush1.bf16.xpose.msra.mxu0 0
    %8162 = vmatprep.subr.bf16.mxu0 0
    %8163 = vmatpush1.bf16.xpose.msra.mxu0 0
    %8164 = vmatprep.mubr.bf16.mxu0 0
    %8165 = vmatmul.mubr.bf16.gmra.mrb[0].mxu0 %v8127
    %v8166 = vpop.f32.mrb[0].mxu0
    %v8167 = vadd.f32 0.0, %v8166
    %v8168 = vpop.f32.mrb[0].mxu0
    %v8169 = vpop.f32.mrb[0].mxu0
    %v8170 = vpop.f32.mrb[0].mxu0
    %8171 = vdwg.mxu0
    %8172 = vrot.lane.b32.xlu0 %v6305, 112
    %v8173 = vpop.permute.xlu0 %8172
    %8174 = vrot.lane.b32.xlu0 %v6313, 80
    %v8175 = vpop.permute.xlu0 %8174
    %v8177 = vsel %vm374, %v8173, 0
    %v8180 = vsel %vm374, %v8175, 0
    %8182 = vmatprep.subr.bf16.mxu0 0
    %8183 = vmatpush1.bf16.xpose.msra.mxu0 %v8180
    %8184 = vmatprep.subr.bf16.mxu0 0
    %8185 = vmatpush1.bf16.xpose.msra.mxu0 0
    %8186 = vmatprep.subr.bf16.mxu0 0
    %8187 = vmatpush1.bf16.xpose.msra.mxu0 0
    %8188 = vmatprep.subr.bf16.mxu0 0
    %8189 = vmatpush1.bf16.xpose.msra.mxu0 0
    %8190 = vmatprep.subr.bf16.mxu0 0
    %8191 = vmatpush1.bf16.xpose.msra.mxu0 0
    %8192 = vmatprep.subr.bf16.mxu0 0
    %8193 = vmatpush1.bf16.xpose.msra.mxu0 0
    %8194 = vmatprep.subr.bf16.mxu0 0
    %8195 = vmatpush1.bf16.xpose.msra.mxu0 0
    %8196 = vmatprep.subr.bf16.mxu0 0
    %8197 = vmatpush1.bf16.xpose.msra.mxu0 0
    %8198 = vmatprep.subr.bf16.mxu0 0
    %8199 = vmatpush1.bf16.xpose.msra.mxu0 0
    %8200 = vmatprep.subr.bf16.mxu0 0
    %8201 = vmatpush1.bf16.xpose.msra.mxu0 0
    %8202 = vmatprep.subr.bf16.mxu0 0
    %8203 = vmatpush1.bf16.xpose.msra.mxu0 0
    %8204 = vmatprep.subr.bf16.mxu0 0
    %8205 = vmatpush1.bf16.xpose.msra.mxu0 0
    %8206 = vmatprep.subr.bf16.mxu0 0
    %8207 = vmatpush1.bf16.xpose.msra.mxu0 0
    %8208 = vmatprep.subr.bf16.mxu0 0
    %8209 = vmatpush1.bf16.xpose.msra.mxu0 0
    %8210 = vmatprep.subr.bf16.mxu0 0
    %8211 = vmatpush1.bf16.xpose.msra.mxu0 0
    %8212 = vmatprep.subr.bf16.mxu0 0
    %8213 = vmatpush1.bf16.xpose.msra.mxu0 0
    %8214 = vmatprep.mubr.bf16.mxu0 0
    %8215 = vmatmul.mubr.bf16.gmra.mrb[0].mxu0 %v8177
    %v8216 = vpop.f32.mrb[0].mxu0
    %v8217 = vadd.f32 0.0, %v8216
    %v8218 = vpop.f32.mrb[0].mxu0
    %v8219 = vpop.f32.mrb[0].mxu0
    %v8220 = vpop.f32.mrb[0].mxu0
    %8221 = vdwg.mxu0
    %8222 = vrot.lane.b32.xlu0 %v6306, 112
    %v8223 = vpop.permute.xlu0 %8222
    %8224 = vrot.lane.b32.xlu0 %v6314, 80
    %v8225 = vpop.permute.xlu0 %8224
    %v8227 = vsel %vm374, %v8223, 0
    %v8230 = vsel %vm374, %v8225, 0
    %8232 = vmatprep.subr.bf16.mxu0 0
    %8233 = vmatpush1.bf16.xpose.msra.mxu0 %v8230
    %8234 = vmatprep.subr.bf16.mxu0 0
    %8235 = vmatpush1.bf16.xpose.msra.mxu0 0
    %8236 = vmatprep.subr.bf16.mxu0 0
    %8237 = vmatpush1.bf16.xpose.msra.mxu0 0
    %8238 = vmatprep.subr.bf16.mxu0 0
    %8239 = vmatpush1.bf16.xpose.msra.mxu0 0
    %8240 = vmatprep.subr.bf16.mxu0 0
    %8241 = vmatpush1.bf16.xpose.msra.mxu0 0
    %8242 = vmatprep.subr.bf16.mxu0 0
    %8243 = vmatpush1.bf16.xpose.msra.mxu0 0
    %8244 = vmatprep.subr.bf16.mxu0 0
    %8245 = vmatpush1.bf16.xpose.msra.mxu0 0
    %8246 = vmatprep.subr.bf16.mxu0 0
    %8247 = vmatpush1.bf16.xpose.msra.mxu0 0
    %8248 = vmatprep.subr.bf16.mxu0 0
    %8249 = vmatpush1.bf16.xpose.msra.mxu0 0
    %8250 = vmatprep.subr.bf16.mxu0 0
    %8251 = vmatpush1.bf16.xpose.msra.mxu0 0
    %8252 = vmatprep.subr.bf16.mxu0 0
    %8253 = vmatpush1.bf16.xpose.msra.mxu0 0
    %8254 = vmatprep.subr.bf16.mxu0 0
    %8255 = vmatpush1.bf16.xpose.msra.mxu0 0
    %8256 = vmatprep.subr.bf16.mxu0 0
    %8257 = vmatpush1.bf16.xpose.msra.mxu0 0
    %8258 = vmatprep.subr.bf16.mxu0 0
    %8259 = vmatpush1.bf16.xpose.msra.mxu0 0
    %8260 = vmatprep.subr.bf16.mxu0 0
    %8261 = vmatpush1.bf16.xpose.msra.mxu0 0
    %8262 = vmatprep.subr.bf16.mxu0 0
    %8263 = vmatpush1.bf16.xpose.msra.mxu0 0
    %8264 = vmatprep.mubr.bf16.mxu0 0
    %8265 = vmatmul.mubr.bf16.gmra.mrb[0].mxu0 %v8227
    %v8266 = vpop.f32.mrb[0].mxu0
    %v8267 = vadd.f32 0.0, %v8266
    %v8268 = vpop.f32.mrb[0].mxu0
    %v8269 = vpop.f32.mrb[0].mxu0
    %v8270 = vpop.f32.mrb[0].mxu0
    %8271 = vdwg.mxu0
    %8272 = vrot.lane.b32.xlu0 %v6307, 112
    %v8273 = vpop.permute.xlu0 %8272
    %8274 = vrot.lane.b32.xlu0 %v6315, 80
    %v8275 = vpop.permute.xlu0 %8274
    %v8277 = vsel %vm374, %v8273, 0
    %v8280 = vsel %vm374, %v8275, 0
    %8282 = vmatprep.subr.bf16.mxu0 0
    %8283 = vmatpush1.bf16.xpose.msra.mxu0 %v8280
    %8284 = vmatprep.subr.bf16.mxu0 0
    %8285 = vmatpush1.bf16.xpose.msra.mxu0 0
    %8286 = vmatprep.subr.bf16.mxu0 0
    %8287 = vmatpush1.bf16.xpose.msra.mxu0 0
    %8288 = vmatprep.subr.bf16.mxu0 0
    %8289 = vmatpush1.bf16.xpose.msra.mxu0 0
    %8290 = vmatprep.subr.bf16.mxu0 0
    %8291 = vmatpush1.bf16.xpose.msra.mxu0 0
    %8292 = vmatprep.subr.bf16.mxu0 0
    %8293 = vmatpush1.bf16.xpose.msra.mxu0 0
    %8294 = vmatprep.subr.bf16.mxu0 0
    %8295 = vmatpush1.bf16.xpose.msra.mxu0 0
    %8296 = vmatprep.subr.bf16.mxu0 0
    %8297 = vmatpush1.bf16.xpose.msra.mxu0 0
    %8298 = vmatprep.subr.bf16.mxu0 0
    %8299 = vmatpush1.bf16.xpose.msra.mxu0 0
    %8300 = vmatprep.subr.bf16.mxu0 0
    %8301 = vmatpush1.bf16.xpose.msra.mxu0 0
    %8302 = vmatprep.subr.bf16.mxu0 0
    %8303 = vmatpush1.bf16.xpose.msra.mxu0 0
    %8304 = vmatprep.subr.bf16.mxu0 0
    %8305 = vmatpush1.bf16.xpose.msra.mxu0 0
    %8306 = vmatprep.subr.bf16.mxu0 0
    %8307 = vmatpush1.bf16.xpose.msra.mxu0 0
    %8308 = vmatprep.subr.bf16.mxu0 0
    %8309 = vmatpush1.bf16.xpose.msra.mxu0 0
    %8310 = vmatprep.subr.bf16.mxu0 0
    %8311 = vmatpush1.bf16.xpose.msra.mxu0 0
    %8312 = vmatprep.subr.bf16.mxu0 0
    %8313 = vmatpush1.bf16.xpose.msra.mxu0 0
    %8314 = vmatprep.mubr.bf16.mxu0 0
    %8315 = vmatmul.mubr.bf16.gmra.mrb[0].mxu0 %v8277
    %v8316 = vpop.f32.mrb[0].mxu0
    %v8317 = vadd.f32 0.0, %v8316
    %v8318 = vpop.f32.mrb[0].mxu0
    %v8319 = vpop.f32.mrb[0].mxu0
    %v8320 = vpop.f32.mrb[0].mxu0
    %8321 = vdwg.mxu0
    %8322 = vrot.lane.b32.xlu0 %v6308, 112
    %v8323 = vpop.permute.xlu0 %8322
    %8324 = vrot.lane.b32.xlu0 %v6316, 80
    %v8325 = vpop.permute.xlu0 %8324
    %v8327 = vsel %vm374, %v8323, 0
    %v8330 = vsel %vm374, %v8325, 0
    %8332 = vmatprep.subr.bf16.mxu0 0
    %8333 = vmatpush1.bf16.xpose.msra.mxu0 %v8330
    %8334 = vmatprep.subr.bf16.mxu0 0
    %8335 = vmatpush1.bf16.xpose.msra.mxu0 0
    %8336 = vmatprep.subr.bf16.mxu0 0
    %8337 = vmatpush1.bf16.xpose.msra.mxu0 0
    %8338 = vmatprep.subr.bf16.mxu0 0
    %8339 = vmatpush1.bf16.xpose.msra.mxu0 0
    %8340 = vmatprep.subr.bf16.mxu0 0
    %8341 = vmatpush1.bf16.xpose.msra.mxu0 0
    %8342 = vmatprep.subr.bf16.mxu0 0
    %8343 = vmatpush1.bf16.xpose.msra.mxu0 0
    %8344 = vmatprep.subr.bf16.mxu0 0
    %8345 = vmatpush1.bf16.xpose.msra.mxu0 0
    %8346 = vmatprep.subr.bf16.mxu0 0
    %8347 = vmatpush1.bf16.xpose.msra.mxu0 0
    %8348 = vmatprep.subr.bf16.mxu0 0
    %8349 = vmatpush1.bf16.xpose.msra.mxu0 0
    %8350 = vmatprep.subr.bf16.mxu0 0
    %8351 = vmatpush1.bf16.xpose.msra.mxu0 0
    %8352 = vmatprep.subr.bf16.mxu0 0
    %8353 = vmatpush1.bf16.xpose.msra.mxu0 0
    %8354 = vmatprep.subr.bf16.mxu0 0
    %8355 = vmatpush1.bf16.xpose.msra.mxu0 0
    %8356 = vmatprep.subr.bf16.mxu0 0
    %8357 = vmatpush1.bf16.xpose.msra.mxu0 0
    %8358 = vmatprep.subr.bf16.mxu0 0
    %8359 = vmatpush1.bf16.xpose.msra.mxu0 0
    %8360 = vmatprep.subr.bf16.mxu0 0
    %8361 = vmatpush1.bf16.xpose.msra.mxu0 0
    %8362 = vmatprep.subr.bf16.mxu0 0
    %8363 = vmatpush1.bf16.xpose.msra.mxu0 0
    %8364 = vmatprep.mubr.bf16.mxu0 0
    %8365 = vmatmul.mubr.bf16.gmra.mrb[0].mxu0 %v8327
    %v8366 = vpop.f32.mrb[0].mxu0
    %v8367 = vadd.f32 0.0, %v8366
    %v8368 = vpop.f32.mrb[0].mxu0
    %v8369 = vpop.f32.mrb[0].mxu0
    %v8370 = vpop.f32.mrb[0].mxu0
    %8371 = vdwg.mxu0
    %8372 = vrot.lane.b32.xlu0 %v6309, 112
    %v8373 = vpop.permute.xlu0 %8372
    %8374 = vrot.lane.b32.xlu0 %v6317, 80
    %v8375 = vpop.permute.xlu0 %8374
    %v8377 = vsel %vm374, %v8373, 0
    %v8380 = vsel %vm374, %v8375, 0
    %8382 = vmatprep.subr.bf16.mxu0 0
    %8383 = vmatpush1.bf16.xpose.msra.mxu0 %v8380
    %8384 = vmatprep.subr.bf16.mxu0 0
    %8385 = vmatpush1.bf16.xpose.msra.mxu0 0
    %8386 = vmatprep.subr.bf16.mxu0 0
    %8387 = vmatpush1.bf16.xpose.msra.mxu0 0
    %8388 = vmatprep.subr.bf16.mxu0 0
    %8389 = vmatpush1.bf16.xpose.msra.mxu0 0
    %8390 = vmatprep.subr.bf16.mxu0 0
    %8391 = vmatpush1.bf16.xpose.msra.mxu0 0
    %8392 = vmatprep.subr.bf16.mxu0 0
    %8393 = vmatpush1.bf16.xpose.msra.mxu0 0
    %8394 = vmatprep.subr.bf16.mxu0 0
    %8395 = vmatpush1.bf16.xpose.msra.mxu0 0
    %8396 = vmatprep.subr.bf16.mxu0 0
    %8397 = vmatpush1.bf16.xpose.msra.mxu0 0
    %8398 = vmatprep.subr.bf16.mxu0 0
    %8399 = vmatpush1.bf16.xpose.msra.mxu0 0
    %8400 = vmatprep.subr.bf16.mxu0 0
    %8401 = vmatpush1.bf16.xpose.msra.mxu0 0
    %8402 = vmatprep.subr.bf16.mxu0 0
    %8403 = vmatpush1.bf16.xpose.msra.mxu0 0
    %8404 = vmatprep.subr.bf16.mxu0 0
    %8405 = vmatpush1.bf16.xpose.msra.mxu0 0
    %8406 = vmatprep.subr.bf16.mxu0 0
    %8407 = vmatpush1.bf16.xpose.msra.mxu0 0
    %8408 = vmatprep.subr.bf16.mxu0 0
    %8409 = vmatpush1.bf16.xpose.msra.mxu0 0
    %8410 = vmatprep.subr.bf16.mxu0 0
    %8411 = vmatpush1.bf16.xpose.msra.mxu0 0
    %8412 = vmatprep.subr.bf16.mxu0 0
    %8413 = vmatpush1.bf16.xpose.msra.mxu0 0
    %8414 = vmatprep.mubr.bf16.mxu0 0
    %8415 = vmatmul.mubr.bf16.gmra.mrb[0].mxu0 %v8377
    %v8416 = vpop.f32.mrb[0].mxu0
    %v8417 = vadd.f32 0.0, %v8416
    %v8418 = vpop.f32.mrb[0].mxu0
    %v8419 = vpop.f32.mrb[0].mxu0
    %v8420 = vpop.f32.mrb[0].mxu0
    %8421 = vdwg.mxu0
    %8422 = vrot.lane.b32.xlu0 %v6310, 112
    %v8423 = vpop.permute.xlu0 %8422
    %8424 = vrot.lane.b32.xlu0 %v6318, 80
    %v8425 = vpop.permute.xlu0 %8424
    %v8427 = vsel %vm374, %v8423, 0
    %v8430 = vsel %vm374, %v8425, 0
    %8432 = vmatprep.subr.bf16.mxu0 0
    %8433 = vmatpush1.bf16.xpose.msra.mxu0 %v8430
    %8434 = vmatprep.subr.bf16.mxu0 0
    %8435 = vmatpush1.bf16.xpose.msra.mxu0 0
    %8436 = vmatprep.subr.bf16.mxu0 0
    %8437 = vmatpush1.bf16.xpose.msra.mxu0 0
    %8438 = vmatprep.subr.bf16.mxu0 0
    %8439 = vmatpush1.bf16.xpose.msra.mxu0 0
    %8440 = vmatprep.subr.bf16.mxu0 0
    %8441 = vmatpush1.bf16.xpose.msra.mxu0 0
    %8442 = vmatprep.subr.bf16.mxu0 0
    %8443 = vmatpush1.bf16.xpose.msra.mxu0 0
    %8444 = vmatprep.subr.bf16.mxu0 0
    %8445 = vmatpush1.bf16.xpose.msra.mxu0 0
    %8446 = vmatprep.subr.bf16.mxu0 0
    %8447 = vmatpush1.bf16.xpose.msra.mxu0 0
    %8448 = vmatprep.subr.bf16.mxu0 0
    %8449 = vmatpush1.bf16.xpose.msra.mxu0 0
    %8450 = vmatprep.subr.bf16.mxu0 0
    %8451 = vmatpush1.bf16.xpose.msra.mxu0 0
    %8452 = vmatprep.subr.bf16.mxu0 0
    %8453 = vmatpush1.bf16.xpose.msra.mxu0 0
    %8454 = vmatprep.subr.bf16.mxu0 0
    %8455 = vmatpush1.bf16.xpose.msra.mxu0 0
    %8456 = vmatprep.subr.bf16.mxu0 0
    %8457 = vmatpush1.bf16.xpose.msra.mxu0 0
    %8458 = vmatprep.subr.bf16.mxu0 0
    %8459 = vmatpush1.bf16.xpose.msra.mxu0 0
    %8460 = vmatprep.subr.bf16.mxu0 0
    %8461 = vmatpush1.bf16.xpose.msra.mxu0 0
    %8462 = vmatprep.subr.bf16.mxu0 0
    %8463 = vmatpush1.bf16.xpose.msra.mxu0 0
    %8464 = vmatprep.mubr.bf16.mxu0 0
    %8465 = vmatmul.mubr.bf16.gmra.mrb[0].mxu0 %v8427
    %v8466 = vpop.f32.mrb[0].mxu0
    %v8467 = vadd.f32 0.0, %v8466
    %v8468 = vpop.f32.mrb[0].mxu0
    %v8469 = vpop.f32.mrb[0].mxu0
    %v8470 = vpop.f32.mrb[0].mxu0
    %8471 = vdwg.mxu0
    %v8472 = vsel %vm374, %v8117, 0.0
    %v8473 = vsel %vm374, %v8167, 0.0
    %v8474 = vadd.f32 %v8472, %v8473
    %v8475 = vsel %vm374, %v8217, 0.0
    %v8476 = vadd.f32 %v8474, %v8475
    %v8477 = vsel %vm374, %v8267, 0.0
    %v8478 = vadd.f32 %v8476, %v8477
    %v8479 = vsel %vm374, %v8317, 0.0
    %v8480 = vadd.f32 %v8478, %v8479
    %v8481 = vsel %vm374, %v8367, 0.0
    %v8482 = vadd.f32 %v8480, %v8481
    %v8483 = vsel %vm374, %v8417, 0.0
    %v8484 = vadd.f32 %v8482, %v8483
    %v8485 = vsel %vm374, %v8467, 0.0
    %v8486 = vadd.f32 %v8484, %v8485
    %v8487 = vsel %vm374, %v8486, -inf
    %8488 = vmax.xlane.f32.xlu0 %v8487
    %v8489 = vpop.xlane.xlu0 %8488
    %v8490 = vsub.f32 %v8486, %v8489
    %v8491 = vmul.f32 %v8490, 1.442695
    %v8492 = vpow.pop %v8491
    %v8493 = vsel %vm374, %v8492, 0.0
    %8494 = vadd.xlane.f32.xlu0 %v8493
    %v8495 = vpop.xlane.xlu0 %8494
    %v8496 = vrcp.pop %v8495
    %v8497 = vmul.f32 %v8492, %v8496
    %8498 = vst.msk [vmem:[#allocation6 + $0x10] sm:$0xff] %vm374, %v8497
    %v8499 = vpack.c.bf16 %v8497, %v8497
    %8500 = vrot.lane.b32.xlu0 %v6311, 48
    %v8501 = vpop.permute.xlu0 %8500
    %v8503 = vsel %vm374, %v8499, 0
    %v8506 = vsel %vm3870, %v8501, 0
    %8508 = vmatprep.subr.bf16.mxu0 0
    %8509 = vmatpush1.bf16.msra.mxu0 %v8506
    %8510 = vmatprep.subr.bf16.mxu0 0
    %8511 = vmatpush1.bf16.msra.mxu0 0
    %8512 = vmatprep.subr.bf16.mxu0 0
    %8513 = vmatpush1.bf16.msra.mxu0 0
    %8514 = vmatprep.subr.bf16.mxu0 0
    %8515 = vmatpush1.bf16.msra.mxu0 0
    %8516 = vmatprep.subr.bf16.mxu0 0
    %8517 = vmatpush1.bf16.msra.mxu0 0
    %8518 = vmatprep.subr.bf16.mxu0 0
    %8519 = vmatpush1.bf16.msra.mxu0 0
    %8520 = vmatprep.subr.bf16.mxu0 0
    %8521 = vmatpush1.bf16.msra.mxu0 0
    %8522 = vmatprep.subr.bf16.mxu0 0
    %8523 = vmatpush1.bf16.msra.mxu0 0
    %8524 = vmatprep.subr.bf16.mxu0 0
    %8525 = vmatpush1.bf16.msra.mxu0 0
    %8526 = vmatprep.subr.bf16.mxu0 0
    %8527 = vmatpush1.bf16.msra.mxu0 0
    %8528 = vmatprep.subr.bf16.mxu0 0
    %8529 = vmatpush1.bf16.msra.mxu0 0
    %8530 = vmatprep.subr.bf16.mxu0 0
    %8531 = vmatpush1.bf16.msra.mxu0 0
    %8532 = vmatprep.subr.bf16.mxu0 0
    %8533 = vmatpush1.bf16.msra.mxu0 0
    %8534 = vmatprep.subr.bf16.mxu0 0
    %8535 = vmatpush1.bf16.msra.mxu0 0
    %8536 = vmatprep.subr.bf16.mxu0 0
    %8537 = vmatpush1.bf16.msra.mxu0 0
    %8538 = vmatprep.subr.bf16.mxu0 0
    %8539 = vmatpush1.bf16.msra.mxu0 0
    %8540 = vmatprep.mubr.bf16.mxu0 0
    %8541 = vmatmul.mubr.bf16.gmra.mrb[0].mxu0 %v8503
    %v8542 = vpop.f32.mrb[0].mxu0
    %v8543 = vadd.f32 0.0, %v8542
    %v8544 = vpop.f32.mrb[0].mxu0
    %v8545 = vpop.f32.mrb[0].mxu0
    %v8546 = vpop.f32.mrb[0].mxu0
    %8547 = vdwg.mxu0
    %8548 = vrot.lane.b32.xlu0 %v6312, 48
    %v8549 = vpop.permute.xlu0 %8548
    %v8551 = vsel %vm3870, %v8549, 0
    %8553 = vmatprep.subr.bf16.mxu0 0
    %8554 = vmatpush1.bf16.msra.mxu0 %v8551
    %8555 = vmatprep.subr.bf16.mxu0 0
    %8556 = vmatpush1.bf16.msra.mxu0 0
    %8557 = vmatprep.subr.bf16.mxu0 0
    %8558 = vmatpush1.bf16.msra.mxu0 0
    %8559 = vmatprep.subr.bf16.mxu0 0
    %8560 = vmatpush1.bf16.msra.mxu0 0
    %8561 = vmatprep.subr.bf16.mxu0 0
    %8562 = vmatpush1.bf16.msra.mxu0 0
    %8563 = vmatprep.subr.bf16.mxu0 0
    %8564 = vmatpush1.bf16.msra.mxu0 0
    %8565 = vmatprep.subr.bf16.mxu0 0
    %8566 = vmatpush1.bf16.msra.mxu0 0
    %8567 = vmatprep.subr.bf16.mxu0 0
    %8568 = vmatpush1.bf16.msra.mxu0 0
    %8569 = vmatprep.subr.bf16.mxu0 0
    %8570 = vmatpush1.bf16.msra.mxu0 0
    %8571 = vmatprep.subr.bf16.mxu0 0
    %8572 = vmatpush1.bf16.msra.mxu0 0
    %8573 = vmatprep.subr.bf16.mxu0 0
    %8574 = vmatpush1.bf16.msra.mxu0 0
    %8575 = vmatprep.subr.bf16.mxu0 0
    %8576 = vmatpush1.bf16.msra.mxu0 0
    %8577 = vmatprep.subr.bf16.mxu0 0
    %8578 = vmatpush1.bf16.msra.mxu0 0
    %8579 = vmatprep.subr.bf16.mxu0 0
    %8580 = vmatpush1.bf16.msra.mxu0 0
    %8581 = vmatprep.subr.bf16.mxu0 0
    %8582 = vmatpush1.bf16.msra.mxu0 0
    %8583 = vmatprep.subr.bf16.mxu0 0
    %8584 = vmatpush1.bf16.msra.mxu0 0
    %8585 = vmatprep.mubr.bf16.mxu0 0
    %8586 = vmatmul.mubr.bf16.gmra.mrb[0].mxu0 %v8503
    %v8587 = vpop.f32.mrb[0].mxu0
    %v8588 = vadd.f32 0.0, %v8587
    %v8589 = vpop.f32.mrb[0].mxu0
    %v8590 = vpop.f32.mrb[0].mxu0
    %v8591 = vpop.f32.mrb[0].mxu0
    %8592 = vdwg.mxu0
    %8593 = vrot.lane.b32.xlu0 %v6313, 48
    %v8594 = vpop.permute.xlu0 %8593
    %v8596 = vsel %vm3870, %v8594, 0
    %8598 = vmatprep.subr.bf16.mxu0 0
    %8599 = vmatpush1.bf16.msra.mxu0 %v8596
    %8600 = vmatprep.subr.bf16.mxu0 0
    %8601 = vmatpush1.bf16.msra.mxu0 0
    %8602 = vmatprep.subr.bf16.mxu0 0
    %8603 = vmatpush1.bf16.msra.mxu0 0
    %8604 = vmatprep.subr.bf16.mxu0 0
    %8605 = vmatpush1.bf16.msra.mxu0 0
    %8606 = vmatprep.subr.bf16.mxu0 0
    %8607 = vmatpush1.bf16.msra.mxu0 0
    %8608 = vmatprep.subr.bf16.mxu0 0
    %8609 = vmatpush1.bf16.msra.mxu0 0
    %8610 = vmatprep.subr.bf16.mxu0 0
    %8611 = vmatpush1.bf16.msra.mxu0 0
    %8612 = vmatprep.subr.bf16.mxu0 0
    %8613 = vmatpush1.bf16.msra.mxu0 0
    %8614 = vmatprep.subr.bf16.mxu0 0
    %8615 = vmatpush1.bf16.msra.mxu0 0
    %8616 = vmatprep.subr.bf16.mxu0 0
    %8617 = vmatpush1.bf16.msra.mxu0 0
    %8618 = vmatprep.subr.bf16.mxu0 0
    %8619 = vmatpush1.bf16.msra.mxu0 0
    %8620 = vmatprep.subr.bf16.mxu0 0
    %8621 = vmatpush1.bf16.msra.mxu0 0
    %8622 = vmatprep.subr.bf16.mxu0 0
    %8623 = vmatpush1.bf16.msra.mxu0 0
    %8624 = vmatprep.subr.bf16.mxu0 0
    %8625 = vmatpush1.bf16.msra.mxu0 0
    %8626 = vmatprep.subr.bf16.mxu0 0
    %8627 = vmatpush1.bf16.msra.mxu0 0
    %8628 = vmatprep.subr.bf16.mxu0 0
    %8629 = vmatpush1.bf16.msra.mxu0 0
    %8630 = vmatprep.mubr.bf16.mxu0 0
    %8631 = vmatmul.mubr.bf16.gmra.mrb[0].mxu0 %v8503
    %v8632 = vpop.f32.mrb[0].mxu0
    %v8633 = vadd.f32 0.0, %v8632
    %v8634 = vpop.f32.mrb[0].mxu0
    %v8635 = vpop.f32.mrb[0].mxu0
    %v8636 = vpop.f32.mrb[0].mxu0
    %8637 = vdwg.mxu0
    %8638 = vrot.lane.b32.xlu0 %v6314, 48
    %v8639 = vpop.permute.xlu0 %8638
    %v8641 = vsel %vm3870, %v8639, 0
    %8643 = vmatprep.subr.bf16.mxu0 0
    %8644 = vmatpush1.bf16.msra.mxu0 %v8641
    %8645 = vmatprep.subr.bf16.mxu0 0
    %8646 = vmatpush1.bf16.msra.mxu0 0
    %8647 = vmatprep.subr.bf16.mxu0 0
    %8648 = vmatpush1.bf16.msra.mxu0 0
    %8649 = vmatprep.subr.bf16.mxu0 0
    %8650 = vmatpush1.bf16.msra.mxu0 0
    %8651 = vmatprep.subr.bf16.mxu0 0
    %8652 = vmatpush1.bf16.msra.mxu0 0
    %8653 = vmatprep.subr.bf16.mxu0 0
    %8654 = vmatpush1.bf16.msra.mxu0 0
    %8655 = vmatprep.subr.bf16.mxu0 0
    %8656 = vmatpush1.bf16.msra.mxu0 0
    %8657 = vmatprep.subr.bf16.mxu0 0
    %8658 = vmatpush1.bf16.msra.mxu0 0
    %8659 = vmatprep.subr.bf16.mxu0 0
    %8660 = vmatpush1.bf16.msra.mxu0 0
    %8661 = vmatprep.subr.bf16.mxu0 0
    %8662 = vmatpush1.bf16.msra.mxu0 0
    %8663 = vmatprep.subr.bf16.mxu0 0
    %8664 = vmatpush1.bf16.msra.mxu0 0
    %8665 = vmatprep.subr.bf16.mxu0 0
    %8666 = vmatpush1.bf16.msra.mxu0 0
    %8667 = vmatprep.subr.bf16.mxu0 0
    %8668 = vmatpush1.bf16.msra.mxu0 0
    %8669 = vmatprep.subr.bf16.mxu0 0
    %8670 = vmatpush1.bf16.msra.mxu0 0
    %8671 = vmatprep.subr.bf16.mxu0 0
    %8672 = vmatpush1.bf16.msra.mxu0 0
    %8673 = vmatprep.subr.bf16.mxu0 0
    %8674 = vmatpush1.bf16.msra.mxu0 0
    %8675 = vmatprep.mubr.bf16.mxu0 0
    %8676 = vmatmul.mubr.bf16.gmra.mrb[0].mxu0 %v8503
    %v8677 = vpop.f32.mrb[0].mxu0
    %v8678 = vadd.f32 0.0, %v8677
    %v8679 = vpop.f32.mrb[0].mxu0
    %v8680 = vpop.f32.mrb[0].mxu0
    %v8681 = vpop.f32.mrb[0].mxu0
    %8682 = vdwg.mxu0
    %8683 = vrot.lane.b32.xlu0 %v6315, 48
    %v8684 = vpop.permute.xlu0 %8683
    %v8686 = vsel %vm3870, %v8684, 0
    %8688 = vmatprep.subr.bf16.mxu0 0
    %8689 = vmatpush1.bf16.msra.mxu0 %v8686
    %8690 = vmatprep.subr.bf16.mxu0 0
    %8691 = vmatpush1.bf16.msra.mxu0 0
    %8692 = vmatprep.subr.bf16.mxu0 0
    %8693 = vmatpush1.bf16.msra.mxu0 0
    %8694 = vmatprep.subr.bf16.mxu0 0
    %8695 = vmatpush1.bf16.msra.mxu0 0
    %8696 = vmatprep.subr.bf16.mxu0 0
    %8697 = vmatpush1.bf16.msra.mxu0 0
    %8698 = vmatprep.subr.bf16.mxu0 0
    %8699 = vmatpush1.bf16.msra.mxu0 0
    %8700 = vmatprep.subr.bf16.mxu0 0
    %8701 = vmatpush1.bf16.msra.mxu0 0
    %8702 = vmatprep.subr.bf16.mxu0 0
    %8703 = vmatpush1.bf16.msra.mxu0 0
    %8704 = vmatprep.subr.bf16.mxu0 0
    %8705 = vmatpush1.bf16.msra.mxu0 0
    %8706 = vmatprep.subr.bf16.mxu0 0
    %8707 = vmatpush1.bf16.msra.mxu0 0
    %8708 = vmatprep.subr.bf16.mxu0 0
    %8709 = vmatpush1.bf16.msra.mxu0 0
    %8710 = vmatprep.subr.bf16.mxu0 0
    %8711 = vmatpush1.bf16.msra.mxu0 0
    %8712 = vmatprep.subr.bf16.mxu0 0
    %8713 = vmatpush1.bf16.msra.mxu0 0
    %8714 = vmatprep.subr.bf16.mxu0 0
    %8715 = vmatpush1.bf16.msra.mxu0 0
    %8716 = vmatprep.subr.bf16.mxu0 0
    %8717 = vmatpush1.bf16.msra.mxu0 0
    %8718 = vmatprep.subr.bf16.mxu0 0
    %8719 = vmatpush1.bf16.msra.mxu0 0
    %8720 = vmatprep.mubr.bf16.mxu0 0
    %8721 = vmatmul.mubr.bf16.gmra.mrb[0].mxu0 %v8503
    %v8722 = vpop.f32.mrb[0].mxu0
    %v8723 = vadd.f32 0.0, %v8722
    %v8724 = vpop.f32.mrb[0].mxu0
    %v8725 = vpop.f32.mrb[0].mxu0
    %v8726 = vpop.f32.mrb[0].mxu0
    %8727 = vdwg.mxu0
    %8728 = vrot.lane.b32.xlu0 %v6316, 48
    %v8729 = vpop.permute.xlu0 %8728
    %v8731 = vsel %vm3870, %v8729, 0
    %8733 = vmatprep.subr.bf16.mxu0 0
    %8734 = vmatpush1.bf16.msra.mxu0 %v8731
    %8735 = vmatprep.subr.bf16.mxu0 0
    %8736 = vmatpush1.bf16.msra.mxu0 0
    %8737 = vmatprep.subr.bf16.mxu0 0
    %8738 = vmatpush1.bf16.msra.mxu0 0
    %8739 = vmatprep.subr.bf16.mxu0 0
    %8740 = vmatpush1.bf16.msra.mxu0 0
    %8741 = vmatprep.subr.bf16.mxu0 0
    %8742 = vmatpush1.bf16.msra.mxu0 0
    %8743 = vmatprep.subr.bf16.mxu0 0
    %8744 = vmatpush1.bf16.msra.mxu0 0
    %8745 = vmatprep.subr.bf16.mxu0 0
    %8746 = vmatpush1.bf16.msra.mxu0 0
    %8747 = vmatprep.subr.bf16.mxu0 0
    %8748 = vmatpush1.bf16.msra.mxu0 0
    %8749 = vmatprep.subr.bf16.mxu0 0
    %8750 = vmatpush1.bf16.msra.mxu0 0
    %8751 = vmatprep.subr.bf16.mxu0 0
    %8752 = vmatpush1.bf16.msra.mxu0 0
    %8753 = vmatprep.subr.bf16.mxu0 0
    %8754 = vmatpush1.bf16.msra.mxu0 0
    %8755 = vmatprep.subr.bf16.mxu0 0
    %8756 = vmatpush1.bf16.msra.mxu0 0
    %8757 = vmatprep.subr.bf16.mxu0 0
    %8758 = vmatpush1.bf16.msra.mxu0 0
    %8759 = vmatprep.subr.bf16.mxu0 0
    %8760 = vmatpush1.bf16.msra.mxu0 0
    %8761 = vmatprep.subr.bf16.mxu0 0
    %8762 = vmatpush1.bf16.msra.mxu0 0
    %8763 = vmatprep.subr.bf16.mxu0 0
    %8764 = vmatpush1.bf16.msra.mxu0 0
    %8765 = vmatprep.mubr.bf16.mxu0 0
    %8766 = vmatmul.mubr.bf16.gmra.mrb[0].mxu0 %v8503
    %v8767 = vpop.f32.mrb[0].mxu0
    %v8768 = vadd.f32 0.0, %v8767
    %v8769 = vpop.f32.mrb[0].mxu0
    %v8770 = vpop.f32.mrb[0].mxu0
    %v8771 = vpop.f32.mrb[0].mxu0
    %8772 = vdwg.mxu0
    %8773 = vrot.lane.b32.xlu0 %v6317, 48
    %v8774 = vpop.permute.xlu0 %8773
    %v8776 = vsel %vm3870, %v8774, 0
    %8778 = vmatprep.subr.bf16.mxu0 0
    %8779 = vmatpush1.bf16.msra.mxu0 %v8776
    %8780 = vmatprep.subr.bf16.mxu0 0
    %8781 = vmatpush1.bf16.msra.mxu0 0
    %8782 = vmatprep.subr.bf16.mxu0 0
    %8783 = vmatpush1.bf16.msra.mxu0 0
    %8784 = vmatprep.subr.bf16.mxu0 0
    %8785 = vmatpush1.bf16.msra.mxu0 0
    %8786 = vmatprep.subr.bf16.mxu0 0
    %8787 = vmatpush1.bf16.msra.mxu0 0
    %8788 = vmatprep.subr.bf16.mxu0 0
    %8789 = vmatpush1.bf16.msra.mxu0 0
    %8790 = vmatprep.subr.bf16.mxu0 0
    %8791 = vmatpush1.bf16.msra.mxu0 0
    %8792 = vmatprep.subr.bf16.mxu0 0
    %8793 = vmatpush1.bf16.msra.mxu0 0
    %8794 = vmatprep.subr.bf16.mxu0 0
    %8795 = vmatpush1.bf16.msra.mxu0 0
    %8796 = vmatprep.subr.bf16.mxu0 0
    %8797 = vmatpush1.bf16.msra.mxu0 0
    %8798 = vmatprep.subr.bf16.mxu0 0
    %8799 = vmatpush1.bf16.msra.mxu0 0
    %8800 = vmatprep.subr.bf16.mxu0 0
    %8801 = vmatpush1.bf16.msra.mxu0 0
    %8802 = vmatprep.subr.bf16.mxu0 0
    %8803 = vmatpush1.bf16.msra.mxu0 0
    %8804 = vmatprep.subr.bf16.mxu0 0
    %8805 = vmatpush1.bf16.msra.mxu0 0
    %8806 = vmatprep.subr.bf16.mxu0 0
    %8807 = vmatpush1.bf16.msra.mxu0 0
    %8808 = vmatprep.subr.bf16.mxu0 0
    %8809 = vmatpush1.bf16.msra.mxu0 0
    %8810 = vmatprep.mubr.bf16.mxu0 0
    %8811 = vmatmul.mubr.bf16.gmra.mrb[0].mxu0 %v8503
    %v8812 = vpop.f32.mrb[0].mxu0
    %v8813 = vadd.f32 0.0, %v8812
    %v8814 = vpop.f32.mrb[0].mxu0
    %v8815 = vpop.f32.mrb[0].mxu0
    %v8816 = vpop.f32.mrb[0].mxu0
    %8817 = vdwg.mxu0
    %8818 = vrot.lane.b32.xlu0 %v6318, 48
    %v8819 = vpop.permute.xlu0 %8818
    %v8821 = vsel %vm3870, %v8819, 0
    %8823 = vmatprep.subr.bf16.mxu0 0
    %8824 = vmatpush1.bf16.msra.mxu0 %v8821
    %8825 = vmatprep.subr.bf16.mxu0 0
    %8826 = vmatpush1.bf16.msra.mxu0 0
    %8827 = vmatprep.subr.bf16.mxu0 0
    %8828 = vmatpush1.bf16.msra.mxu0 0
    %8829 = vmatprep.subr.bf16.mxu0 0
    %8830 = vmatpush1.bf16.msra.mxu0 0
    %8831 = vmatprep.subr.bf16.mxu0 0
    %8832 = vmatpush1.bf16.msra.mxu0 0
    %8833 = vmatprep.subr.bf16.mxu0 0
    %8834 = vmatpush1.bf16.msra.mxu0 0
    %8835 = vmatprep.subr.bf16.mxu0 0
    %8836 = vmatpush1.bf16.msra.mxu0 0
    %8837 = vmatprep.subr.bf16.mxu0 0
    %8838 = vmatpush1.bf16.msra.mxu0 0
    %8839 = vmatprep.subr.bf16.mxu0 0
    %8840 = vmatpush1.bf16.msra.mxu0 0
    %8841 = vmatprep.subr.bf16.mxu0 0
    %8842 = vmatpush1.bf16.msra.mxu0 0
    %8843 = vmatprep.subr.bf16.mxu0 0
    %8844 = vmatpush1.bf16.msra.mxu0 0
    %8845 = vmatprep.subr.bf16.mxu0 0
    %8846 = vmatpush1.bf16.msra.mxu0 0
    %8847 = vmatprep.subr.bf16.mxu0 0
    %8848 = vmatpush1.bf16.msra.mxu0 0
    %8849 = vmatprep.subr.bf16.mxu0 0
    %8850 = vmatpush1.bf16.msra.mxu0 0
    %8851 = vmatprep.subr.bf16.mxu0 0
    %8852 = vmatpush1.bf16.msra.mxu0 0
    %8853 = vmatprep.subr.bf16.mxu0 0
    %8854 = vmatpush1.bf16.msra.mxu0 0
    %8855 = vmatprep.mubr.bf16.mxu0 0
    %8856 = vmatmul.mubr.bf16.gmra.mrb[0].mxu0 %v8503
    %v8857 = vpop.f32.mrb[0].mxu0
    %v8858 = vadd.f32 0.0, %v8857
    %v8859 = vpop.f32.mrb[0].mxu0
    %v8860 = vpop.f32.mrb[0].mxu0
    %v8861 = vpop.f32.mrb[0].mxu0
    %8862 = vdwg.mxu0
    %v8863 = vpack.c.bf16 %v8588, %v8543
    %v8864 = vpack.c.bf16 %v8678, %v8633
    %v8865 = vpack.c.bf16 %v8768, %v8723
    %v8866 = vpack.c.bf16 %v8858, %v8813
    %s8867 = scalar_lea.vmem %s17, 8
    %v8868 = vld [vmem:[%s8867] sm:$0xf]
    %v8870 = vsel %vm374, %v8863, 0
    %v8873 = vsel %vm374, %v8864, 0
    %v8876 = vsel %vm374, %v8865, 0
    %v8879 = vsel %vm374, %v8866, 0
    %v8882 = vsel %vm3870, %v8868, 0
    %8884 = vmatprep.subr.bf16.mxu0 0
    %8885 = vmatpush1.bf16.msra.mxu0 %v8882
    %8886 = vmatprep.subr.bf16.mxu0 0
    %8887 = vmatpush1.bf16.msra.mxu0 0
    %8888 = vmatprep.subr.bf16.mxu0 0
    %8889 = vmatpush1.bf16.msra.mxu0 0
    %8890 = vmatprep.subr.bf16.mxu0 0
    %8891 = vmatpush1.bf16.msra.mxu0 0
    %8892 = vmatprep.subr.bf16.mxu0 0
    %8893 = vmatpush1.bf16.msra.mxu0 0
    %8894 = vmatprep.subr.bf16.mxu0 0
    %8895 = vmatpush1.bf16.msra.mxu0 0
    %8896 = vmatprep.subr.bf16.mxu0 0
    %8897 = vmatpush1.bf16.msra.mxu0 0
    %8898 = vmatprep.subr.bf16.mxu0 0
    %8899 = vmatpush1.bf16.msra.mxu0 0
    %8900 = vmatprep.subr.bf16.mxu0 0
    %8901 = vmatpush1.bf16.msra.mxu0 0
    %8902 = vmatprep.subr.bf16.mxu0 0
    %8903 = vmatpush1.bf16.msra.mxu0 0
    %8904 = vmatprep.subr.bf16.mxu0 0
    %8905 = vmatpush1.bf16.msra.mxu0 0
    %8906 = vmatprep.subr.bf16.mxu0 0
    %8907 = vmatpush1.bf16.msra.mxu0 0
    %8908 = vmatprep.subr.bf16.mxu0 0
    %8909 = vmatpush1.bf16.msra.mxu0 0
    %8910 = vmatprep.subr.bf16.mxu0 0
    %8911 = vmatpush1.bf16.msra.mxu0 0
    %8912 = vmatprep.subr.bf16.mxu0 0
    %8913 = vmatpush1.bf16.msra.mxu0 0
    %8914 = vmatprep.subr.bf16.mxu0 0
    %8915 = vmatpush1.bf16.msra.mxu0 0
    %8916 = vmatprep.mubr.bf16.mxu0 0
    %8917 = vmatmul.mubr.bf16.gmra.mrb[0].mxu0 %v8870
    %v8918 = vpop.f32.mrb[0].mxu0
    %v8919 = vadd.f32 0.0, %v8918
    %v8920 = vpop.f32.mrb[0].mxu0
    %v8921 = vpop.f32.mrb[0].mxu0
    %v8922 = vadd.f32 0.0, %v8921
    %v8923 = vpop.f32.mrb[0].mxu0
    %8924 = vmatprep.mubr.bf16.mxu0 0
    %8925 = vmatmul.mubr.bf16.gmra.mrb[0].mxu0 %v8873
    %v8926 = vpop.f32.mrb[0].mxu0
    %v8927 = vadd.f32 0.0, %v8926
    %v8928 = vpop.f32.mrb[0].mxu0
    %v8929 = vpop.f32.mrb[0].mxu0
    %v8930 = vadd.f32 0.0, %v8929
    %v8931 = vpop.f32.mrb[0].mxu0
    %8932 = vmatprep.mubr.bf16.mxu0 0
    %8933 = vmatmul.mubr.bf16.gmra.mrb[0].mxu0 %v8876
    %v8934 = vpop.f32.mrb[0].mxu0
    %v8935 = vadd.f32 0.0, %v8934
    %v8936 = vpop.f32.mrb[0].mxu0
    %v8937 = vpop.f32.mrb[0].mxu0
    %v8938 = vadd.f32 0.0, %v8937
    %v8939 = vpop.f32.mrb[0].mxu0
    %8940 = vmatprep.mubr.bf16.mxu0 0
    %8941 = vmatmul.mubr.bf16.gmra.mrb[0].mxu0 %v8879
    %v8942 = vpop.f32.mrb[0].mxu0
    %v8943 = vadd.f32 0.0, %v8942
    %v8944 = vpop.f32.mrb[0].mxu0
    %v8945 = vpop.f32.mrb[0].mxu0
    %v8946 = vadd.f32 0.0, %v8945
    %v8947 = vpop.f32.mrb[0].mxu0
    %8948 = vdwg.mxu0
    %v8949 = vadd.f32 %v8042, %v8919
    %v8950 = vadd.f32 %v8045, %v8922
    %v8951 = vadd.f32 %v8050, %v8927
    %v8952 = vadd.f32 %v8053, %v8930
    %v8953 = vadd.f32 %v8058, %v8935
    %v8954 = vadd.f32 %v8061, %v8938
    %v8955 = vadd.f32 %v8066, %v8943
    %v8956 = vadd.f32 %v8069, %v8946
    %8957 = vrot.lane.b32.xlu0 %v6303, 104
    %v8958 = vpop.permute.xlu0 %8957
    %8959 = vrot.lane.b32.xlu0 %v6311, 72
    %v8960 = vpop.permute.xlu0 %8959
    %v8962 = vsel %vm374, %v8958, 0
    %v8965 = vsel %vm374, %v8960, 0
    %8967 = vmatprep.subr.bf16.mxu0 0
    %8968 = vmatpush1.bf16.xpose.msra.mxu0 %v8965
    %8969 = vmatprep.subr.bf16.mxu0 0
    %8970 = vmatpush1.bf16.xpose.msra.mxu0 0
    %8971 = vmatprep.subr.bf16.mxu0 0
    %8972 = vmatpush1.bf16.xpose.msra.mxu0 0
    %8973 = vmatprep.subr.bf16.mxu0 0
    %8974 = vmatpush1.bf16.xpose.msra.mxu0 0
    %8975 = vmatprep.subr.bf16.mxu0 0
    %8976 = vmatpush1.bf16.xpose.msra.mxu0 0
    %8977 = vmatprep.subr.bf16.mxu0 0
    %8978 = vmatpush1.bf16.xpose.msra.mxu0 0
    %8979 = vmatprep.subr.bf16.mxu0 0
    %8980 = vmatpush1.bf16.xpose.msra.mxu0 0
    %8981 = vmatprep.subr.bf16.mxu0 0
    %8982 = vmatpush1.bf16.xpose.msra.mxu0 0
    %8983 = vmatprep.subr.bf16.mxu0 0
    %8984 = vmatpush1.bf16.xpose.msra.mxu0 0
    %8985 = vmatprep.subr.bf16.mxu0 0
    %8986 = vmatpush1.bf16.xpose.msra.mxu0 0
    %8987 = vmatprep.subr.bf16.mxu0 0
    %8988 = vmatpush1.bf16.xpose.msra.mxu0 0
    %8989 = vmatprep.subr.bf16.mxu0 0
    %8990 = vmatpush1.bf16.xpose.msra.mxu0 0
    %8991 = vmatprep.subr.bf16.mxu0 0
    %8992 = vmatpush1.bf16.xpose.msra.mxu0 0
    %8993 = vmatprep.subr.bf16.mxu0 0
    %8994 = vmatpush1.bf16.xpose.msra.mxu0 0
    %8995 = vmatprep.subr.bf16.mxu0 0
    %8996 = vmatpush1.bf16.xpose.msra.mxu0 0
    %8997 = vmatprep.subr.bf16.mxu0 0
    %8998 = vmatpush1.bf16.xpose.msra.mxu0 0
    %8999 = vmatprep.mubr.bf16.mxu0 0
    %9000 = vmatmul.mubr.bf16.gmra.mrb[0].mxu0 %v8962
    %v9001 = vpop.f32.mrb[0].mxu0
    %v9002 = vadd.f32 0.0, %v9001
    %v9003 = vpop.f32.mrb[0].mxu0
    %v9004 = vpop.f32.mrb[0].mxu0
    %v9005 = vpop.f32.mrb[0].mxu0
    %9006 = vdwg.mxu0
    %9007 = vrot.lane.b32.xlu0 %v6304, 104
    %v9008 = vpop.permute.xlu0 %9007
    %9009 = vrot.lane.b32.xlu0 %v6312, 72
    %v9010 = vpop.permute.xlu0 %9009
    %v9012 = vsel %vm374, %v9008, 0
    %v9015 = vsel %vm374, %v9010, 0
    %9017 = vmatprep.subr.bf16.mxu0 0
    %9018 = vmatpush1.bf16.xpose.msra.mxu0 %v9015
    %9019 = vmatprep.subr.bf16.mxu0 0
    %9020 = vmatpush1.bf16.xpose.msra.mxu0 0
    %9021 = vmatprep.subr.bf16.mxu0 0
    %9022 = vmatpush1.bf16.xpose.msra.mxu0 0
    %9023 = vmatprep.subr.bf16.mxu0 0
    %9024 = vmatpush1.bf16.xpose.msra.mxu0 0
    %9025 = vmatprep.subr.bf16.mxu0 0
    %9026 = vmatpush1.bf16.xpose.msra.mxu0 0
    %9027 = vmatprep.subr.bf16.mxu0 0
    %9028 = vmatpush1.bf16.xpose.msra.mxu0 0
    %9029 = vmatprep.subr.bf16.mxu0 0
    %9030 = vmatpush1.bf16.xpose.msra.mxu0 0
    %9031 = vmatprep.subr.bf16.mxu0 0
    %9032 = vmatpush1.bf16.xpose.msra.mxu0 0
    %9033 = vmatprep.subr.bf16.mxu0 0
    %9034 = vmatpush1.bf16.xpose.msra.mxu0 0
    %9035 = vmatprep.subr.bf16.mxu0 0
    %9036 = vmatpush1.bf16.xpose.msra.mxu0 0
    %9037 = vmatprep.subr.bf16.mxu0 0
    %9038 = vmatpush1.bf16.xpose.msra.mxu0 0
    %9039 = vmatprep.subr.bf16.mxu0 0
    %9040 = vmatpush1.bf16.xpose.msra.mxu0 0
    %9041 = vmatprep.subr.bf16.mxu0 0
    %9042 = vmatpush1.bf16.xpose.msra.mxu0 0
    %9043 = vmatprep.subr.bf16.mxu0 0
    %9044 = vmatpush1.bf16.xpose.msra.mxu0 0
    %9045 = vmatprep.subr.bf16.mxu0 0
    %9046 = vmatpush1.bf16.xpose.msra.mxu0 0
    %9047 = vmatprep.subr.bf16.mxu0 0
    %9048 = vmatpush1.bf16.xpose.msra.mxu0 0
    %9049 = vmatprep.mubr.bf16.mxu0 0
    %9050 = vmatmul.mubr.bf16.gmra.mrb[0].mxu0 %v9012
    %v9051 = vpop.f32.mrb[0].mxu0
    %v9052 = vadd.f32 0.0, %v9051
    %v9053 = vpop.f32.mrb[0].mxu0
    %v9054 = vpop.f32.mrb[0].mxu0
    %v9055 = vpop.f32.mrb[0].mxu0
    %9056 = vdwg.mxu0
    %9057 = vrot.lane.b32.xlu0 %v6305, 104
    %v9058 = vpop.permute.xlu0 %9057
    %9059 = vrot.lane.b32.xlu0 %v6313, 72
    %v9060 = vpop.permute.xlu0 %9059
    %v9062 = vsel %vm374, %v9058, 0
    %v9065 = vsel %vm374, %v9060, 0
    %9067 = vmatprep.subr.bf16.mxu0 0
    %9068 = vmatpush1.bf16.xpose.msra.mxu0 %v9065
    %9069 = vmatprep.subr.bf16.mxu0 0
    %9070 = vmatpush1.bf16.xpose.msra.mxu0 0
    %9071 = vmatprep.subr.bf16.mxu0 0
    %9072 = vmatpush1.bf16.xpose.msra.mxu0 0
    %9073 = vmatprep.subr.bf16.mxu0 0
    %9074 = vmatpush1.bf16.xpose.msra.mxu0 0
    %9075 = vmatprep.subr.bf16.mxu0 0
    %9076 = vmatpush1.bf16.xpose.msra.mxu0 0
    %9077 = vmatprep.subr.bf16.mxu0 0
    %9078 = vmatpush1.bf16.xpose.msra.mxu0 0
    %9079 = vmatprep.subr.bf16.mxu0 0
    %9080 = vmatpush1.bf16.xpose.msra.mxu0 0
    %9081 = vmatprep.subr.bf16.mxu0 0
    %9082 = vmatpush1.bf16.xpose.msra.mxu0 0
    %9083 = vmatprep.subr.bf16.mxu0 0
    %9084 = vmatpush1.bf16.xpose.msra.mxu0 0
    %9085 = vmatprep.subr.bf16.mxu0 0
    %9086 = vmatpush1.bf16.xpose.msra.mxu0 0
    %9087 = vmatprep.subr.bf16.mxu0 0
    %9088 = vmatpush1.bf16.xpose.msra.mxu0 0
    %9089 = vmatprep.subr.bf16.mxu0 0
    %9090 = vmatpush1.bf16.xpose.msra.mxu0 0
    %9091 = vmatprep.subr.bf16.mxu0 0
    %9092 = vmatpush1.bf16.xpose.msra.mxu0 0
    %9093 = vmatprep.subr.bf16.mxu0 0
    %9094 = vmatpush1.bf16.xpose.msra.mxu0 0
    %9095 = vmatprep.subr.bf16.mxu0 0
    %9096 = vmatpush1.bf16.xpose.msra.mxu0 0
    %9097 = vmatprep.subr.bf16.mxu0 0
    %9098 = vmatpush1.bf16.xpose.msra.mxu0 0
    %9099 = vmatprep.mubr.bf16.mxu0 0
    %9100 = vmatmul.mubr.bf16.gmra.mrb[0].mxu0 %v9062
    %v9101 = vpop.f32.mrb[0].mxu0
    %v9102 = vadd.f32 0.0, %v9101
    %v9103 = vpop.f32.mrb[0].mxu0
    %v9104 = vpop.f32.mrb[0].mxu0
    %v9105 = vpop.f32.mrb[0].mxu0
    %9106 = vdwg.mxu0
    %9107 = vrot.lane.b32.xlu0 %v6306, 104
    %v9108 = vpop.permute.xlu0 %9107
    %9109 = vrot.lane.b32.xlu0 %v6314, 72
    %v9110 = vpop.permute.xlu0 %9109
    %v9112 = vsel %vm374, %v9108, 0
    %v9115 = vsel %vm374, %v9110, 0
    %9117 = vmatprep.subr.bf16.mxu0 0
    %9118 = vmatpush1.bf16.xpose.msra.mxu0 %v9115
    %9119 = vmatprep.subr.bf16.mxu0 0
    %9120 = vmatpush1.bf16.xpose.msra.mxu0 0
    %9121 = vmatprep.subr.bf16.mxu0 0
    %9122 = vmatpush1.bf16.xpose.msra.mxu0 0
    %9123 = vmatprep.subr.bf16.mxu0 0
    %9124 = vmatpush1.bf16.xpose.msra.mxu0 0
    %9125 = vmatprep.subr.bf16.mxu0 0
    %9126 = vmatpush1.bf16.xpose.msra.mxu0 0
    %9127 = vmatprep.subr.bf16.mxu0 0
    %9128 = vmatpush1.bf16.xpose.msra.mxu0 0
    %9129 = vmatprep.subr.bf16.mxu0 0
    %9130 = vmatpush1.bf16.xpose.msra.mxu0 0
    %9131 = vmatprep.subr.bf16.mxu0 0
    %9132 = vmatpush1.bf16.xpose.msra.mxu0 0
    %9133 = vmatprep.subr.bf16.mxu0 0
    %9134 = vmatpush1.bf16.xpose.msra.mxu0 0
    %9135 = vmatprep.subr.bf16.mxu0 0
    %9136 = vmatpush1.bf16.xpose.msra.mxu0 0
    %9137 = vmatprep.subr.bf16.mxu0 0
    %9138 = vmatpush1.bf16.xpose.msra.mxu0 0
    %9139 = vmatprep.subr.bf16.mxu0 0
    %9140 = vmatpush1.bf16.xpose.msra.mxu0 0
    %9141 = vmatprep.subr.bf16.mxu0 0
    %9142 = vmatpush1.bf16.xpose.msra.mxu0 0
    %9143 = vmatprep.subr.bf16.mxu0 0
    %9144 = vmatpush1.bf16.xpose.msra.mxu0 0
    %9145 = vmatprep.subr.bf16.mxu0 0
    %9146 = vmatpush1.bf16.xpose.msra.mxu0 0
    %9147 = vmatprep.subr.bf16.mxu0 0
    %9148 = vmatpush1.bf16.xpose.msra.mxu0 0
    %9149 = vmatprep.mubr.bf16.mxu0 0
    %9150 = vmatmul.mubr.bf16.gmra.mrb[0].mxu0 %v9112
    %v9151 = vpop.f32.mrb[0].mxu0
    %v9152 = vadd.f32 0.0, %v9151
    %v9153 = vpop.f32.mrb[0].mxu0
    %v9154 = vpop.f32.mrb[0].mxu0
    %v9155 = vpop.f32.mrb[0].mxu0
    %9156 = vdwg.mxu0
    %9157 = vrot.lane.b32.xlu0 %v6307, 104
    %v9158 = vpop.permute.xlu0 %9157
    %9159 = vrot.lane.b32.xlu0 %v6315, 72
    %v9160 = vpop.permute.xlu0 %9159
    %v9162 = vsel %vm374, %v9158, 0
    %v9165 = vsel %vm374, %v9160, 0
    %9167 = vmatprep.subr.bf16.mxu0 0
    %9168 = vmatpush1.bf16.xpose.msra.mxu0 %v9165
    %9169 = vmatprep.subr.bf16.mxu0 0
    %9170 = vmatpush1.bf16.xpose.msra.mxu0 0
    %9171 = vmatprep.subr.bf16.mxu0 0
    %9172 = vmatpush1.bf16.xpose.msra.mxu0 0
    %9173 = vmatprep.subr.bf16.mxu0 0
    %9174 = vmatpush1.bf16.xpose.msra.mxu0 0
    %9175 = vmatprep.subr.bf16.mxu0 0
    %9176 = vmatpush1.bf16.xpose.msra.mxu0 0
    %9177 = vmatprep.subr.bf16.mxu0 0
    %9178 = vmatpush1.bf16.xpose.msra.mxu0 0
    %9179 = vmatprep.subr.bf16.mxu0 0
    %9180 = vmatpush1.bf16.xpose.msra.mxu0 0
    %9181 = vmatprep.subr.bf16.mxu0 0
    %9182 = vmatpush1.bf16.xpose.msra.mxu0 0
    %9183 = vmatprep.subr.bf16.mxu0 0
    %9184 = vmatpush1.bf16.xpose.msra.mxu0 0
    %9185 = vmatprep.subr.bf16.mxu0 0
    %9186 = vmatpush1.bf16.xpose.msra.mxu0 0
    %9187 = vmatprep.subr.bf16.mxu0 0
    %9188 = vmatpush1.bf16.xpose.msra.mxu0 0
    %9189 = vmatprep.subr.bf16.mxu0 0
    %9190 = vmatpush1.bf16.xpose.msra.mxu0 0
    %9191 = vmatprep.subr.bf16.mxu0 0
    %9192 = vmatpush1.bf16.xpose.msra.mxu0 0
    %9193 = vmatprep.subr.bf16.mxu0 0
    %9194 = vmatpush1.bf16.xpose.msra.mxu0 0
    %9195 = vmatprep.subr.bf16.mxu0 0
    %9196 = vmatpush1.bf16.xpose.msra.mxu0 0
    %9197 = vmatprep.subr.bf16.mxu0 0
    %9198 = vmatpush1.bf16.xpose.msra.mxu0 0
    %9199 = vmatprep.mubr.bf16.mxu0 0
    %9200 = vmatmul.mubr.bf16.gmra.mrb[0].mxu0 %v9162
    %v9201 = vpop.f32.mrb[0].mxu0
    %v9202 = vadd.f32 0.0, %v9201
    %v9203 = vpop.f32.mrb[0].mxu0
    %v9204 = vpop.f32.mrb[0].mxu0
    %v9205 = vpop.f32.mrb[0].mxu0
    %9206 = vdwg.mxu0
    %9207 = vrot.lane.b32.xlu0 %v6308, 104
    %v9208 = vpop.permute.xlu0 %9207
    %9209 = vrot.lane.b32.xlu0 %v6316, 72
    %v9210 = vpop.permute.xlu0 %9209
    %v9212 = vsel %vm374, %v9208, 0
    %v9215 = vsel %vm374, %v9210, 0
    %9217 = vmatprep.subr.bf16.mxu0 0
    %9218 = vmatpush1.bf16.xpose.msra.mxu0 %v9215
    %9219 = vmatprep.subr.bf16.mxu0 0
    %9220 = vmatpush1.bf16.xpose.msra.mxu0 0
    %9221 = vmatprep.subr.bf16.mxu0 0
    %9222 = vmatpush1.bf16.xpose.msra.mxu0 0
    %9223 = vmatprep.subr.bf16.mxu0 0
    %9224 = vmatpush1.bf16.xpose.msra.mxu0 0
    %9225 = vmatprep.subr.bf16.mxu0 0
    %9226 = vmatpush1.bf16.xpose.msra.mxu0 0
    %9227 = vmatprep.subr.bf16.mxu0 0
    %9228 = vmatpush1.bf16.xpose.msra.mxu0 0
    %9229 = vmatprep.subr.bf16.mxu0 0
    %9230 = vmatpush1.bf16.xpose.msra.mxu0 0
    %9231 = vmatprep.subr.bf16.mxu0 0
    %9232 = vmatpush1.bf16.xpose.msra.mxu0 0
    %9233 = vmatprep.subr.bf16.mxu0 0
    %9234 = vmatpush1.bf16.xpose.msra.mxu0 0
    %9235 = vmatprep.subr.bf16.mxu0 0
    %9236 = vmatpush1.bf16.xpose.msra.mxu0 0
    %9237 = vmatprep.subr.bf16.mxu0 0
    %9238 = vmatpush1.bf16.xpose.msra.mxu0 0
    %9239 = vmatprep.subr.bf16.mxu0 0
    %9240 = vmatpush1.bf16.xpose.msra.mxu0 0
    %9241 = vmatprep.subr.bf16.mxu0 0
    %9242 = vmatpush1.bf16.xpose.msra.mxu0 0
    %9243 = vmatprep.subr.bf16.mxu0 0
    %9244 = vmatpush1.bf16.xpose.msra.mxu0 0
    %9245 = vmatprep.subr.bf16.mxu0 0
    %9246 = vmatpush1.bf16.xpose.msra.mxu0 0
    %9247 = vmatprep.subr.bf16.mxu0 0
    %9248 = vmatpush1.bf16.xpose.msra.mxu0 0
    %9249 = vmatprep.mubr.bf16.mxu0 0
    %9250 = vmatmul.mubr.bf16.gmra.mrb[0].mxu0 %v9212
    %v9251 = vpop.f32.mrb[0].mxu0
    %v9252 = vadd.f32 0.0, %v9251
    %v9253 = vpop.f32.mrb[0].mxu0
    %v9254 = vpop.f32.mrb[0].mxu0
    %v9255 = vpop.f32.mrb[0].mxu0
    %9256 = vdwg.mxu0
    %9257 = vrot.lane.b32.xlu0 %v6309, 104
    %v9258 = vpop.permute.xlu0 %9257
    %9259 = vrot.lane.b32.xlu0 %v6317, 72
    %v9260 = vpop.permute.xlu0 %9259
    %v9262 = vsel %vm374, %v9258, 0
    %v9265 = vsel %vm374, %v9260, 0
    %9267 = vmatprep.subr.bf16.mxu0 0
    %9268 = vmatpush1.bf16.xpose.msra.mxu0 %v9265
    %9269 = vmatprep.subr.bf16.mxu0 0
    %9270 = vmatpush1.bf16.xpose.msra.mxu0 0
    %9271 = vmatprep.subr.bf16.mxu0 0
    %9272 = vmatpush1.bf16.xpose.msra.mxu0 0
    %9273 = vmatprep.subr.bf16.mxu0 0
    %9274 = vmatpush1.bf16.xpose.msra.mxu0 0
    %9275 = vmatprep.subr.bf16.mxu0 0
    %9276 = vmatpush1.bf16.xpose.msra.mxu0 0
    %9277 = vmatprep.subr.bf16.mxu0 0
    %9278 = vmatpush1.bf16.xpose.msra.mxu0 0
    %9279 = vmatprep.subr.bf16.mxu0 0
    %9280 = vmatpush1.bf16.xpose.msra.mxu0 0
    %9281 = vmatprep.subr.bf16.mxu0 0
    %9282 = vmatpush1.bf16.xpose.msra.mxu0 0
    %9283 = vmatprep.subr.bf16.mxu0 0
    %9284 = vmatpush1.bf16.xpose.msra.mxu0 0
    %9285 = vmatprep.subr.bf16.mxu0 0
    %9286 = vmatpush1.bf16.xpose.msra.mxu0 0
    %9287 = vmatprep.subr.bf16.mxu0 0
    %9288 = vmatpush1.bf16.xpose.msra.mxu0 0
    %9289 = vmatprep.subr.bf16.mxu0 0
    %9290 = vmatpush1.bf16.xpose.msra.mxu0 0
    %9291 = vmatprep.subr.bf16.mxu0 0
    %9292 = vmatpush1.bf16.xpose.msra.mxu0 0
    %9293 = vmatprep.subr.bf16.mxu0 0
    %9294 = vmatpush1.bf16.xpose.msra.mxu0 0
    %9295 = vmatprep.subr.bf16.mxu0 0
    %9296 = vmatpush1.bf16.xpose.msra.mxu0 0
    %9297 = vmatprep.subr.bf16.mxu0 0
    %9298 = vmatpush1.bf16.xpose.msra.mxu0 0
    %9299 = vmatprep.mubr.bf16.mxu0 0
    %9300 = vmatmul.mubr.bf16.gmra.mrb[0].mxu0 %v9262
    %v9301 = vpop.f32.mrb[0].mxu0
    %v9302 = vadd.f32 0.0, %v9301
    %v9303 = vpop.f32.mrb[0].mxu0
    %v9304 = vpop.f32.mrb[0].mxu0
    %v9305 = vpop.f32.mrb[0].mxu0
    %9306 = vdwg.mxu0
    %9307 = vrot.lane.b32.xlu0 %v6310, 104
    %v9308 = vpop.permute.xlu0 %9307
    %9309 = vrot.lane.b32.xlu0 %v6318, 72
    %v9310 = vpop.permute.xlu0 %9309
    %v9312 = vsel %vm374, %v9308, 0
    %v9315 = vsel %vm374, %v9310, 0
    %9317 = vmatprep.subr.bf16.mxu0 0
    %9318 = vmatpush1.bf16.xpose.msra.mxu0 %v9315
    %9319 = vmatprep.subr.bf16.mxu0 0
    %9320 = vmatpush1.bf16.xpose.msra.mxu0 0
    %9321 = vmatprep.subr.bf16.mxu0 0
    %9322 = vmatpush1.bf16.xpose.msra.mxu0 0
    %9323 = vmatprep.subr.bf16.mxu0 0
    %9324 = vmatpush1.bf16.xpose.msra.mxu0 0
    %9325 = vmatprep.subr.bf16.mxu0 0
    %9326 = vmatpush1.bf16.xpose.msra.mxu0 0
    %9327 = vmatprep.subr.bf16.mxu0 0
    %9328 = vmatpush1.bf16.xpose.msra.mxu0 0
    %9329 = vmatprep.subr.bf16.mxu0 0
    %9330 = vmatpush1.bf16.xpose.msra.mxu0 0
    %9331 = vmatprep.subr.bf16.mxu0 0
    %9332 = vmatpush1.bf16.xpose.msra.mxu0 0
    %9333 = vmatprep.subr.bf16.mxu0 0
    %9334 = vmatpush1.bf16.xpose.msra.mxu0 0
    %9335 = vmatprep.subr.bf16.mxu0 0
    %9336 = vmatpush1.bf16.xpose.msra.mxu0 0
    %9337 = vmatprep.subr.bf16.mxu0 0
    %9338 = vmatpush1.bf16.xpose.msra.mxu0 0
    %9339 = vmatprep.subr.bf16.mxu0 0
    %9340 = vmatpush1.bf16.xpose.msra.mxu0 0
    %9341 = vmatprep.subr.bf16.mxu0 0
    %9342 = vmatpush1.bf16.xpose.msra.mxu0 0
    %9343 = vmatprep.subr.bf16.mxu0 0
    %9344 = vmatpush1.bf16.xpose.msra.mxu0 0
    %9345 = vmatprep.subr.bf16.mxu0 0
    %9346 = vmatpush1.bf16.xpose.msra.mxu0 0
    %9347 = vmatprep.subr.bf16.mxu0 0
    %9348 = vmatpush1.bf16.xpose.msra.mxu0 0
    %9349 = vmatprep.mubr.bf16.mxu0 0
    %9350 = vmatmul.mubr.bf16.gmra.mrb[0].mxu0 %v9312
    %v9351 = vpop.f32.mrb[0].mxu0
    %v9352 = vadd.f32 0.0, %v9351
    %v9353 = vpop.f32.mrb[0].mxu0
    %v9354 = vpop.f32.mrb[0].mxu0
    %v9355 = vpop.f32.mrb[0].mxu0
    %9356 = vdwg.mxu0
    %v9357 = vsel %vm374, %v9002, 0.0
    %v9358 = vsel %vm374, %v9052, 0.0
    %v9359 = vadd.f32 %v9357, %v9358
    %v9360 = vsel %vm374, %v9102, 0.0
    %v9361 = vadd.f32 %v9359, %v9360
    %v9362 = vsel %vm374, %v9152, 0.0
    %v9363 = vadd.f32 %v9361, %v9362
    %v9364 = vsel %vm374, %v9202, 0.0
    %v9365 = vadd.f32 %v9363, %v9364
    %v9366 = vsel %vm374, %v9252, 0.0
    %v9367 = vadd.f32 %v9365, %v9366
    %v9368 = vsel %vm374, %v9302, 0.0
    %v9369 = vadd.f32 %v9367, %v9368
    %v9370 = vsel %vm374, %v9352, 0.0
    %v9371 = vadd.f32 %v9369, %v9370
    %v9372 = vsel %vm374, %v9371, -inf
    %9373 = vmax.xlane.f32.xlu0 %v9372
    %v9374 = vpop.xlane.xlu0 %9373
    %v9375 = vsub.f32 %v9371, %v9374
    %v9376 = vmul.f32 %v9375, 1.442695
    %v9377 = vpow.pop %v9376
    %v9378 = vsel %vm374, %v9377, 0.0
    %9379 = vadd.xlane.f32.xlu0 %v9378
    %v9380 = vpop.xlane.xlu0 %9379
    %v9381 = vrcp.pop %v9380
    %v9382 = vmul.f32 %v9377, %v9381
    %9383 = vst.msk [vmem:[#allocation6 + $0x18] sm:$0xff] %vm374, %v9382
    %v9384 = vpack.c.bf16 %v9382, %v9382
    %9385 = vrot.lane.b32.xlu0 %v6311, 40
    %v9386 = vpop.permute.xlu0 %9385
    %v9388 = vsel %vm374, %v9384, 0
    %v9391 = vsel %vm3870, %v9386, 0
    %9393 = vmatprep.subr.bf16.mxu0 0
    %9394 = vmatpush1.bf16.msra.mxu0 %v9391
    %9395 = vmatprep.subr.bf16.mxu0 0
    %9396 = vmatpush1.bf16.msra.mxu0 0
    %9397 = vmatprep.subr.bf16.mxu0 0
    %9398 = vmatpush1.bf16.msra.mxu0 0
    %9399 = vmatprep.subr.bf16.mxu0 0
    %9400 = vmatpush1.bf16.msra.mxu0 0
    %9401 = vmatprep.subr.bf16.mxu0 0
    %9402 = vmatpush1.bf16.msra.mxu0 0
    %9403 = vmatprep.subr.bf16.mxu0 0
    %9404 = vmatpush1.bf16.msra.mxu0 0
    %9405 = vmatprep.subr.bf16.mxu0 0
    %9406 = vmatpush1.bf16.msra.mxu0 0
    %9407 = vmatprep.subr.bf16.mxu0 0
    %9408 = vmatpush1.bf16.msra.mxu0 0
    %9409 = vmatprep.subr.bf16.mxu0 0
    %9410 = vmatpush1.bf16.msra.mxu0 0
    %9411 = vmatprep.subr.bf16.mxu0 0
    %9412 = vmatpush1.bf16.msra.mxu0 0
    %9413 = vmatprep.subr.bf16.mxu0 0
    %9414 = vmatpush1.bf16.msra.mxu0 0
    %9415 = vmatprep.subr.bf16.mxu0 0
    %9416 = vmatpush1.bf16.msra.mxu0 0
    %9417 = vmatprep.subr.bf16.mxu0 0
    %9418 = vmatpush1.bf16.msra.mxu0 0
    %9419 = vmatprep.subr.bf16.mxu0 0
    %9420 = vmatpush1.bf16.msra.mxu0 0
    %9421 = vmatprep.subr.bf16.mxu0 0
    %9422 = vmatpush1.bf16.msra.mxu0 0
    %9423 = vmatprep.subr.bf16.mxu0 0
    %9424 = vmatpush1.bf16.msra.mxu0 0
    %9425 = vmatprep.mubr.bf16.mxu0 0
    %9426 = vmatmul.mubr.bf16.gmra.mrb[0].mxu0 %v9388
    %v9427 = vpop.f32.mrb[0].mxu0
    %v9428 = vadd.f32 0.0, %v9427
    %v9429 = vpop.f32.mrb[0].mxu0
    %v9430 = vpop.f32.mrb[0].mxu0
    %v9431 = vpop.f32.mrb[0].mxu0
    %9432 = vdwg.mxu0
    %9433 = vrot.lane.b32.xlu0 %v6312, 40
    %v9434 = vpop.permute.xlu0 %9433
    %v9436 = vsel %vm3870, %v9434, 0
    %9438 = vmatprep.subr.bf16.mxu0 0
    %9439 = vmatpush1.bf16.msra.mxu0 %v9436
    %9440 = vmatprep.subr.bf16.mxu0 0
    %9441 = vmatpush1.bf16.msra.mxu0 0
    %9442 = vmatprep.subr.bf16.mxu0 0
    %9443 = vmatpush1.bf16.msra.mxu0 0
    %9444 = vmatprep.subr.bf16.mxu0 0
    %9445 = vmatpush1.bf16.msra.mxu0 0
    %9446 = vmatprep.subr.bf16.mxu0 0
    %9447 = vmatpush1.bf16.msra.mxu0 0
    %9448 = vmatprep.subr.bf16.mxu0 0
    %9449 = vmatpush1.bf16.msra.mxu0 0
    %9450 = vmatprep.subr.bf16.mxu0 0
    %9451 = vmatpush1.bf16.msra.mxu0 0
    %9452 = vmatprep.subr.bf16.mxu0 0
    %9453 = vmatpush1.bf16.msra.mxu0 0
    %9454 = vmatprep.subr.bf16.mxu0 0
    %9455 = vmatpush1.bf16.msra.mxu0 0
    %9456 = vmatprep.subr.bf16.mxu0 0
    %9457 = vmatpush1.bf16.msra.mxu0 0
    %9458 = vmatprep.subr.bf16.mxu0 0
    %9459 = vmatpush1.bf16.msra.mxu0 0
    %9460 = vmatprep.subr.bf16.mxu0 0
    %9461 = vmatpush1.bf16.msra.mxu0 0
    %9462 = vmatprep.subr.bf16.mxu0 0
    %9463 = vmatpush1.bf16.msra.mxu0 0
    %9464 = vmatprep.subr.bf16.mxu0 0
    %9465 = vmatpush1.bf16.msra.mxu0 0
    %9466 = vmatprep.subr.bf16.mxu0 0
    %9467 = vmatpush1.bf16.msra.mxu0 0
    %9468 = vmatprep.subr.bf16.mxu0 0
    %9469 = vmatpush1.bf16.msra.mxu0 0
    %9470 = vmatprep.mubr.bf16.mxu0 0
    %9471 = vmatmul.mubr.bf16.gmra.mrb[0].mxu0 %v9388
    %v9472 = vpop.f32.mrb[0].mxu0
    %v9473 = vadd.f32 0.0, %v9472
    %v9474 = vpop.f32.mrb[0].mxu0
    %v9475 = vpop.f32.mrb[0].mxu0
    %v9476 = vpop.f32.mrb[0].mxu0
    %9477 = vdwg.mxu0
    %9478 = vrot.lane.b32.xlu0 %v6313, 40
    %v9479 = vpop.permute.xlu0 %9478
    %v9481 = vsel %vm3870, %v9479, 0
    %9483 = vmatprep.subr.bf16.mxu0 0
    %9484 = vmatpush1.bf16.msra.mxu0 %v9481
    %9485 = vmatprep.subr.bf16.mxu0 0
    %9486 = vmatpush1.bf16.msra.mxu0 0
    %9487 = vmatprep.subr.bf16.mxu0 0
    %9488 = vmatpush1.bf16.msra.mxu0 0
    %9489 = vmatprep.subr.bf16.mxu0 0
    %9490 = vmatpush1.bf16.msra.mxu0 0
    %9491 = vmatprep.subr.bf16.mxu0 0
    %9492 = vmatpush1.bf16.msra.mxu0 0
    %9493 = vmatprep.subr.bf16.mxu0 0
    %9494 = vmatpush1.bf16.msra.mxu0 0
    %9495 = vmatprep.subr.bf16.mxu0 0
    %9496 = vmatpush1.bf16.msra.mxu0 0
    %9497 = vmatprep.subr.bf16.mxu0 0
    %9498 = vmatpush1.bf16.msra.mxu0 0
    %9499 = vmatprep.subr.bf16.mxu0 0
    %9500 = vmatpush1.bf16.msra.mxu0 0
    %9501 = vmatprep.subr.bf16.mxu0 0
    %9502 = vmatpush1.bf16.msra.mxu0 0
    %9503 = vmatprep.subr.bf16.mxu0 0
    %9504 = vmatpush1.bf16.msra.mxu0 0
    %9505 = vmatprep.subr.bf16.mxu0 0
    %9506 = vmatpush1.bf16.msra.mxu0 0
    %9507 = vmatprep.subr.bf16.mxu0 0
    %9508 = vmatpush1.bf16.msra.mxu0 0
    %9509 = vmatprep.subr.bf16.mxu0 0
    %9510 = vmatpush1.bf16.msra.mxu0 0
    %9511 = vmatprep.subr.bf16.mxu0 0
    %9512 = vmatpush1.bf16.msra.mxu0 0
    %9513 = vmatprep.subr.bf16.mxu0 0
    %9514 = vmatpush1.bf16.msra.mxu0 0
    %9515 = vmatprep.mubr.bf16.mxu0 0
    %9516 = vmatmul.mubr.bf16.gmra.mrb[0].mxu0 %v9388
    %v9517 = vpop.f32.mrb[0].mxu0
    %v9518 = vadd.f32 0.0, %v9517
    %v9519 = vpop.f32.mrb[0].mxu0
    %v9520 = vpop.f32.mrb[0].mxu0
    %v9521 = vpop.f32.mrb[0].mxu0
    %9522 = vdwg.mxu0
    %9523 = vrot.lane.b32.xlu0 %v6314, 40
    %v9524 = vpop.permute.xlu0 %9523
    %v9526 = vsel %vm3870, %v9524, 0
    %9528 = vmatprep.subr.bf16.mxu0 0
    %9529 = vmatpush1.bf16.msra.mxu0 %v9526
    %9530 = vmatprep.subr.bf16.mxu0 0
    %9531 = vmatpush1.bf16.msra.mxu0 0
    %9532 = vmatprep.subr.bf16.mxu0 0
    %9533 = vmatpush1.bf16.msra.mxu0 0
    %9534 = vmatprep.subr.bf16.mxu0 0
    %9535 = vmatpush1.bf16.msra.mxu0 0
    %9536 = vmatprep.subr.bf16.mxu0 0
    %9537 = vmatpush1.bf16.msra.mxu0 0
    %9538 = vmatprep.subr.bf16.mxu0 0
    %9539 = vmatpush1.bf16.msra.mxu0 0
    %9540 = vmatprep.subr.bf16.mxu0 0
    %9541 = vmatpush1.bf16.msra.mxu0 0
    %9542 = vmatprep.subr.bf16.mxu0 0
    %9543 = vmatpush1.bf16.msra.mxu0 0
    %9544 = vmatprep.subr.bf16.mxu0 0
    %9545 = vmatpush1.bf16.msra.mxu0 0
    %9546 = vmatprep.subr.bf16.mxu0 0
    %9547 = vmatpush1.bf16.msra.mxu0 0
    %9548 = vmatprep.subr.bf16.mxu0 0
    %9549 = vmatpush1.bf16.msra.mxu0 0
    %9550 = vmatprep.subr.bf16.mxu0 0
    %9551 = vmatpush1.bf16.msra.mxu0 0
    %9552 = vmatprep.subr.bf16.mxu0 0
    %9553 = vmatpush1.bf16.msra.mxu0 0
    %9554 = vmatprep.subr.bf16.mxu0 0
    %9555 = vmatpush1.bf16.msra.mxu0 0
    %9556 = vmatprep.subr.bf16.mxu0 0
    %9557 = vmatpush1.bf16.msra.mxu0 0
    %9558 = vmatprep.subr.bf16.mxu0 0
    %9559 = vmatpush1.bf16.msra.mxu0 0
    %9560 = vmatprep.mubr.bf16.mxu0 0
    %9561 = vmatmul.mubr.bf16.gmra.mrb[0].mxu0 %v9388
    %v9562 = vpop.f32.mrb[0].mxu0
    %v9563 = vadd.f32 0.0, %v9562
    %v9564 = vpop.f32.mrb[0].mxu0
    %v9565 = vpop.f32.mrb[0].mxu0
    %v9566 = vpop.f32.mrb[0].mxu0
    %9567 = vdwg.mxu0
    %9568 = vrot.lane.b32.xlu0 %v6315, 40
    %v9569 = vpop.permute.xlu0 %9568
    %v9571 = vsel %vm3870, %v9569, 0
    %9573 = vmatprep.subr.bf16.mxu0 0
    %9574 = vmatpush1.bf16.msra.mxu0 %v9571
    %9575 = vmatprep.subr.bf16.mxu0 0
    %9576 = vmatpush1.bf16.msra.mxu0 0
    %9577 = vmatprep.subr.bf16.mxu0 0
    %9578 = vmatpush1.bf16.msra.mxu0 0
    %9579 = vmatprep.subr.bf16.mxu0 0
    %9580 = vmatpush1.bf16.msra.mxu0 0
    %9581 = vmatprep.subr.bf16.mxu0 0
    %9582 = vmatpush1.bf16.msra.mxu0 0
    %9583 = vmatprep.subr.bf16.mxu0 0
    %9584 = vmatpush1.bf16.msra.mxu0 0
    %9585 = vmatprep.subr.bf16.mxu0 0
    %9586 = vmatpush1.bf16.msra.mxu0 0
    %9587 = vmatprep.subr.bf16.mxu0 0
    %9588 = vmatpush1.bf16.msra.mxu0 0
    %9589 = vmatprep.subr.bf16.mxu0 0
    %9590 = vmatpush1.bf16.msra.mxu0 0
    %9591 = vmatprep.subr.bf16.mxu0 0
    %9592 = vmatpush1.bf16.msra.mxu0 0
    %9593 = vmatprep.subr.bf16.mxu0 0
    %9594 = vmatpush1.bf16.msra.mxu0 0
    %9595 = vmatprep.subr.bf16.mxu0 0
    %9596 = vmatpush1.bf16.msra.mxu0 0
    %9597 = vmatprep.subr.bf16.mxu0 0
    %9598 = vmatpush1.bf16.msra.mxu0 0
    %9599 = vmatprep.subr.bf16.mxu0 0
    %9600 = vmatpush1.bf16.msra.mxu0 0
    %9601 = vmatprep.subr.bf16.mxu0 0
    %9602 = vmatpush1.bf16.msra.mxu0 0
    %9603 = vmatprep.subr.bf16.mxu0 0
    %9604 = vmatpush1.bf16.msra.mxu0 0
    %9605 = vmatprep.mubr.bf16.mxu0 0
    %9606 = vmatmul.mubr.bf16.gmra.mrb[0].mxu0 %v9388
    %v9607 = vpop.f32.mrb[0].mxu0
    %v9608 = vadd.f32 0.0, %v9607
    %v9609 = vpop.f32.mrb[0].mxu0
    %v9610 = vpop.f32.mrb[0].mxu0
    %v9611 = vpop.f32.mrb[0].mxu0
    %9612 = vdwg.mxu0
    %9613 = vrot.lane.b32.xlu0 %v6316, 40
    %v9614 = vpop.permute.xlu0 %9613
    %v9616 = vsel %vm3870, %v9614, 0
    %9618 = vmatprep.subr.bf16.mxu0 0
    %9619 = vmatpush1.bf16.msra.mxu0 %v9616
    %9620 = vmatprep.subr.bf16.mxu0 0
    %9621 = vmatpush1.bf16.msra.mxu0 0
    %9622 = vmatprep.subr.bf16.mxu0 0
    %9623 = vmatpush1.bf16.msra.mxu0 0
    %9624 = vmatprep.subr.bf16.mxu0 0
    %9625 = vmatpush1.bf16.msra.mxu0 0
    %9626 = vmatprep.subr.bf16.mxu0 0
    %9627 = vmatpush1.bf16.msra.mxu0 0
    %9628 = vmatprep.subr.bf16.mxu0 0
    %9629 = vmatpush1.bf16.msra.mxu0 0
    %9630 = vmatprep.subr.bf16.mxu0 0
    %9631 = vmatpush1.bf16.msra.mxu0 0
    %9632 = vmatprep.subr.bf16.mxu0 0
    %9633 = vmatpush1.bf16.msra.mxu0 0
    %9634 = vmatprep.subr.bf16.mxu0 0
    %9635 = vmatpush1.bf16.msra.mxu0 0
    %9636 = vmatprep.subr.bf16.mxu0 0
    %9637 = vmatpush1.bf16.msra.mxu0 0
    %9638 = vmatprep.subr.bf16.mxu0 0
    %9639 = vmatpush1.bf16.msra.mxu0 0
    %9640 = vmatprep.subr.bf16.mxu0 0
    %9641 = vmatpush1.bf16.msra.mxu0 0
    %9642 = vmatprep.subr.bf16.mxu0 0
    %9643 = vmatpush1.bf16.msra.mxu0 0
    %9644 = vmatprep.subr.bf16.mxu0 0
    %9645 = vmatpush1.bf16.msra.mxu0 0
    %9646 = vmatprep.subr.bf16.mxu0 0
    %9647 = vmatpush1.bf16.msra.mxu0 0
    %9648 = vmatprep.subr.bf16.mxu0 0
    %9649 = vmatpush1.bf16.msra.mxu0 0
    %9650 = vmatprep.mubr.bf16.mxu0 0
    %9651 = vmatmul.mubr.bf16.gmra.mrb[0].mxu0 %v9388
    %v9652 = vpop.f32.mrb[0].mxu0
    %v9653 = vadd.f32 0.0, %v9652
    %v9654 = vpop.f32.mrb[0].mxu0
    %v9655 = vpop.f32.mrb[0].mxu0
    %v9656 = vpop.f32.mrb[0].mxu0
    %9657 = vdwg.mxu0
    %9658 = vrot.lane.b32.xlu0 %v6317, 40
    %v9659 = vpop.permute.xlu0 %9658
    %v9661 = vsel %vm3870, %v9659, 0
    %9663 = vmatprep.subr.bf16.mxu0 0
    %9664 = vmatpush1.bf16.msra.mxu0 %v9661
    %9665 = vmatprep.subr.bf16.mxu0 0
    %9666 = vmatpush1.bf16.msra.mxu0 0
    %9667 = vmatprep.subr.bf16.mxu0 0
    %9668 = vmatpush1.bf16.msra.mxu0 0
    %9669 = vmatprep.subr.bf16.mxu0 0
    %9670 = vmatpush1.bf16.msra.mxu0 0
    %9671 = vmatprep.subr.bf16.mxu0 0
    %9672 = vmatpush1.bf16.msra.mxu0 0
    %9673 = vmatprep.subr.bf16.mxu0 0
    %9674 = vmatpush1.bf16.msra.mxu0 0
    %9675 = vmatprep.subr.bf16.mxu0 0
    %9676 = vmatpush1.bf16.msra.mxu0 0
    %9677 = vmatprep.subr.bf16.mxu0 0
    %9678 = vmatpush1.bf16.msra.mxu0 0
    %9679 = vmatprep.subr.bf16.mxu0 0
    %9680 = vmatpush1.bf16.msra.mxu0 0
    %9681 = vmatprep.subr.bf16.mxu0 0
    %9682 = vmatpush1.bf16.msra.mxu0 0
    %9683 = vmatprep.subr.bf16.mxu0 0
    %9684 = vmatpush1.bf16.msra.mxu0 0
    %9685 = vmatprep.subr.bf16.mxu0 0
    %9686 = vmatpush1.bf16.msra.mxu0 0
    %9687 = vmatprep.subr.bf16.mxu0 0
    %9688 = vmatpush1.bf16.msra.mxu0 0
    %9689 = vmatprep.subr.bf16.mxu0 0
    %9690 = vmatpush1.bf16.msra.mxu0 0
    %9691 = vmatprep.subr.bf16.mxu0 0
    %9692 = vmatpush1.bf16.msra.mxu0 0
    %9693 = vmatprep.subr.bf16.mxu0 0
    %9694 = vmatpush1.bf16.msra.mxu0 0
    %9695 = vmatprep.mubr.bf16.mxu0 0
    %9696 = vmatmul.mubr.bf16.gmra.mrb[0].mxu0 %v9388
    %v9697 = vpop.f32.mrb[0].mxu0
    %v9698 = vadd.f32 0.0, %v9697
    %v9699 = vpop.f32.mrb[0].mxu0
    %v9700 = vpop.f32.mrb[0].mxu0
    %v9701 = vpop.f32.mrb[0].mxu0
    %9702 = vdwg.mxu0
    %9703 = vrot.lane.b32.xlu0 %v6318, 40
    %v9704 = vpop.permute.xlu0 %9703
    %v9706 = vsel %vm3870, %v9704, 0
    %9708 = vmatprep.subr.bf16.mxu0 0
    %9709 = vmatpush1.bf16.msra.mxu0 %v9706
    %9710 = vmatprep.subr.bf16.mxu0 0
    %9711 = vmatpush1.bf16.msra.mxu0 0
    %9712 = vmatprep.subr.bf16.mxu0 0
    %9713 = vmatpush1.bf16.msra.mxu0 0
    %9714 = vmatprep.subr.bf16.mxu0 0
    %9715 = vmatpush1.bf16.msra.mxu0 0
    %9716 = vmatprep.subr.bf16.mxu0 0
    %9717 = vmatpush1.bf16.msra.mxu0 0
    %9718 = vmatprep.subr.bf16.mxu0 0
    %9719 = vmatpush1.bf16.msra.mxu0 0
    %9720 = vmatprep.subr.bf16.mxu0 0
    %9721 = vmatpush1.bf16.msra.mxu0 0
    %9722 = vmatprep.subr.bf16.mxu0 0
    %9723 = vmatpush1.bf16.msra.mxu0 0
    %9724 = vmatprep.subr.bf16.mxu0 0
    %9725 = vmatpush1.bf16.msra.mxu0 0
    %9726 = vmatprep.subr.bf16.mxu0 0
    %9727 = vmatpush1.bf16.msra.mxu0 0
    %9728 = vmatprep.subr.bf16.mxu0 0
    %9729 = vmatpush1.bf16.msra.mxu0 0
    %9730 = vmatprep.subr.bf16.mxu0 0
    %9731 = vmatpush1.bf16.msra.mxu0 0
    %9732 = vmatprep.subr.bf16.mxu0 0
    %9733 = vmatpush1.bf16.msra.mxu0 0
    %9734 = vmatprep.subr.bf16.mxu0 0
    %9735 = vmatpush1.bf16.msra.mxu0 0
    %9736 = vmatprep.subr.bf16.mxu0 0
    %9737 = vmatpush1.bf16.msra.mxu0 0
    %9738 = vmatprep.subr.bf16.mxu0 0
    %9739 = vmatpush1.bf16.msra.mxu0 0
    %9740 = vmatprep.mubr.bf16.mxu0 0
    %9741 = vmatmul.mubr.bf16.gmra.mrb[0].mxu0 %v9388
    %v9742 = vpop.f32.mrb[0].mxu0
    %v9743 = vadd.f32 0.0, %v9742
    %v9744 = vpop.f32.mrb[0].mxu0
    %v9745 = vpop.f32.mrb[0].mxu0
    %v9746 = vpop.f32.mrb[0].mxu0
    %9747 = vdwg.mxu0
    %v9748 = vpack.c.bf16 %v9473, %v9428
    %v9749 = vpack.c.bf16 %v9563, %v9518
    %v9750 = vpack.c.bf16 %v9653, %v9608
    %v9751 = vpack.c.bf16 %v9743, %v9698
    %s9752 = scalar_lea.vmem %s17, 12
    %v9753 = vld [vmem:[%s9752] sm:$0xf]
    %v9755 = vsel %vm374, %v9748, 0
    %v9758 = vsel %vm374, %v9749, 0
    %v9761 = vsel %vm374, %v9750, 0
    %v9764 = vsel %vm374, %v9751, 0
    %v9767 = vsel %vm3870, %v9753, 0
    %9769 = vmatprep.subr.bf16.mxu0 0
    %9770 = vmatpush1.bf16.msra.mxu0 %v9767
    %9771 = vmatprep.subr.bf16.mxu0 0
    %9772 = vmatpush1.bf16.msra.mxu0 0
    %9773 = vmatprep.subr.bf16.mxu0 0
    %9774 = vmatpush1.bf16.msra.mxu0 0
    %9775 = vmatprep.subr.bf16.mxu0 0
    %9776 = vmatpush1.bf16.msra.mxu0 0
    %9777 = vmatprep.subr.bf16.mxu0 0
    %9778 = vmatpush1.bf16.msra.mxu0 0
    %9779 = vmatprep.subr.bf16.mxu0 0
    %9780 = vmatpush1.bf16.msra.mxu0 0
    %9781 = vmatprep.subr.bf16.mxu0 0
    %9782 = vmatpush1.bf16.msra.mxu0 0
    %9783 = vmatprep.subr.bf16.mxu0 0
    %9784 = vmatpush1.bf16.msra.mxu0 0
    %9785 = vmatprep.subr.bf16.mxu0 0
    %9786 = vmatpush1.bf16.msra.mxu0 0
    %9787 = vmatprep.subr.bf16.mxu0 0
    %9788 = vmatpush1.bf16.msra.mxu0 0
    %9789 = vmatprep.subr.bf16.mxu0 0
    %9790 = vmatpush1.bf16.msra.mxu0 0
    %9791 = vmatprep.subr.bf16.mxu0 0
    %9792 = vmatpush1.bf16.msra.mxu0 0
    %9793 = vmatprep.subr.bf16.mxu0 0
    %9794 = vmatpush1.bf16.msra.mxu0 0
    %9795 = vmatprep.subr.bf16.mxu0 0
    %9796 = vmatpush1.bf16.msra.mxu0 0
    %9797 = vmatprep.subr.bf16.mxu0 0
    %9798 = vmatpush1.bf16.msra.mxu0 0
    %9799 = vmatprep.subr.bf16.mxu0 0
    %9800 = vmatpush1.bf16.msra.mxu0 0
    %9801 = vmatprep.mubr.bf16.mxu0 0
    %9802 = vmatmul.mubr.bf16.gmra.mrb[0].mxu0 %v9755
    %v9803 = vpop.f32.mrb[0].mxu0
    %v9804 = vadd.f32 0.0, %v9803
    %v9805 = vpop.f32.mrb[0].mxu0
    %v9806 = vpop.f32.mrb[0].mxu0
    %v9807 = vadd.f32 0.0, %v9806
    %v9808 = vpop.f32.mrb[0].mxu0
    %9809 = vmatprep.mubr.bf16.mxu0 0
    %9810 = vmatmul.mubr.bf16.gmra.mrb[0].mxu0 %v9758
    %v9811 = vpop.f32.mrb[0].mxu0
    %v9812 = vadd.f32 0.0, %v9811
    %v9813 = vpop.f32.mrb[0].mxu0
    %v9814 = vpop.f32.mrb[0].mxu0
    %v9815 = vadd.f32 0.0, %v9814
    %v9816 = vpop.f32.mrb[0].mxu0
    %9817 = vmatprep.mubr.bf16.mxu0 0
    %9818 = vmatmul.mubr.bf16.gmra.mrb[0].mxu0 %v9761
    %v9819 = vpop.f32.mrb[0].mxu0
    %v9820 = vadd.f32 0.0, %v9819
    %v9821 = vpop.f32.mrb[0].mxu0
    %v9822 = vpop.f32.mrb[0].mxu0
    %v9823 = vadd.f32 0.0, %v9822
    %v9824 = vpop.f32.mrb[0].mxu0
    %9825 = vmatprep.mubr.bf16.mxu0 0
    %9826 = vmatmul.mubr.bf16.gmra.mrb[0].mxu0 %v9764
    %v9827 = vpop.f32.mrb[0].mxu0
    %v9828 = vadd.f32 0.0, %v9827
    %v9829 = vpop.f32.mrb[0].mxu0
    %v9830 = vpop.f32.mrb[0].mxu0
    %v9831 = vadd.f32 0.0, %v9830
    %v9832 = vpop.f32.mrb[0].mxu0
    %9833 = vdwg.mxu0
    %v9834 = vadd.f32 %v8949, %v9804
    %v9835 = vadd.f32 %v8950, %v9807
    %v9836 = vadd.f32 %v8951, %v9812
    %v9837 = vadd.f32 %v8952, %v9815
    %v9838 = vadd.f32 %v8953, %v9820
    %v9839 = vadd.f32 %v8954, %v9823
    %v9840 = vadd.f32 %v8955, %v9828
    %v9841 = vadd.f32 %v8956, %v9831
    %v9842 = vadd.f32 %v6019, %v9834
    %v9843 = vadd.f32 %v6024, %v9835
    %v9844 = vadd.f32 %v6029, %v9836
    %v9845 = vadd.f32 %v6034, %v9837
    %v9846 = vadd.f32 %v6039, %v9838
    %v9847 = vadd.f32 %v6044, %v9839
    %v9848 = vadd.f32 %v6049, %v9840
    %v9849 = vadd.f32 %v6054, %v9841
    %v9850 = vld [vmem:[%s18] sm:$0x1]
    %v9852 = vlaneseq
    %v9853 = vshrl.u32 %v9852, 7
    %v9854 = vsub.s32 0, %v9853
    %v9855 = vrot.slane %v9850, %v9854
    %v9857 = vadd.f32 %v9842, %v9855
    %v9858 = vadd.f32 %v9843, %v9855
    %v9859 = vadd.f32 %v9844, %v9855
    %v9860 = vadd.f32 %v9845, %v9855
    %v9861 = vadd.f32 %v9846, %v9855
    %v9862 = vadd.f32 %v9847, %v9855
    %v9863 = vadd.f32 %v9848, %v9855
    %v9864 = vadd.f32 %v9849, %v9855
    %v9865 = vld [vmem:[%s19] sm:$0x1]
    %v9866 = vld [vmem:[%s20] sm:$0x1]
    %v9867 = vsel %vm109, %v9857, 0.0
    %9868 = vadd.xlane.f32.xlu0 %v9867
    %v9869 = vpop.xlane.xlu0 %9868
    %v9870 = vsel %vm109, %v9858, 0.0
    %9871 = vadd.xlane.f32.xlu0 %v9870
    %v9872 = vpop.xlane.xlu0 %9871
    %v9873 = vsel %vm109, %v9859, 0.0
    %9874 = vadd.xlane.f32.xlu0 %v9873
    %v9875 = vpop.xlane.xlu0 %9874
    %v9876 = vsel %vm109, %v9860, 0.0
    %9877 = vadd.xlane.f32.xlu0 %v9876
    %v9878 = vpop.xlane.xlu0 %9877
    %v9879 = vsel %vm109, %v9861, 0.0
    %9880 = vadd.xlane.f32.xlu0 %v9879
    %v9881 = vpop.xlane.xlu0 %9880
    %v9882 = vsel %vm109, %v9862, 0.0
    %9883 = vadd.xlane.f32.xlu0 %v9882
    %v9884 = vpop.xlane.xlu0 %9883
    %v9885 = vsel %vm109, %v9863, 0.0
    %9886 = vadd.xlane.f32.xlu0 %v9885
    %v9887 = vpop.xlane.xlu0 %9886
    %v9888 = vsel %vm109, %v9864, 0.0
    %9889 = vadd.xlane.f32.xlu0 %v9888
    %v9890 = vpop.xlane.xlu0 %9889
    %v9891 = vmul.f32 %v9869, %v134
    %v9892 = vmul.f32 %v9872, %v134
    %v9893 = vmul.f32 %v9875, %v134
    %v9894 = vmul.f32 %v9878, %v134
    %v9895 = vmul.f32 %v9881, %v134
    %v9896 = vmul.f32 %v9884, %v134
    %v9897 = vmul.f32 %v9887, %v134
    %v9898 = vmul.f32 %v9890, %v134
    %v9899 = vsub.f32 %v9857, %v9891
    %v9900 = vsub.f32 %v9858, %v9892
    %v9901 = vsub.f32 %v9859, %v9893
    %v9902 = vsub.f32 %v9860, %v9894
    %v9903 = vsub.f32 %v9861, %v9895
    %v9904 = vsub.f32 %v9862, %v9896
    %v9905 = vsub.f32 %v9863, %v9897
    %v9906 = vsub.f32 %v9864, %v9898
    %v9907 = vmul.f32 %v9899, %v9899
    %v9908 = vmul.f32 %v9900, %v9900
    %v9909 = vmul.f32 %v9901, %v9901
    %v9910 = vmul.f32 %v9902, %v9902
    %v9911 = vmul.f32 %v9903, %v9903
    %v9912 = vmul.f32 %v9904, %v9904
    %v9913 = vmul.f32 %v9905, %v9905
    %v9914 = vmul.f32 %v9906, %v9906
    %v9915 = vsel %vm109, %v9907, 0.0
    %9916 = vadd.xlane.f32.xlu0 %v9915
    %v9917 = vpop.xlane.xlu0 %9916
    %v9918 = vsel %vm109, %v9908, 0.0
    %9919 = vadd.xlane.f32.xlu0 %v9918
    %v9920 = vpop.xlane.xlu0 %9919
    %v9921 = vsel %vm109, %v9909, 0.0
    %9922 = vadd.xlane.f32.xlu0 %v9921
    %v9923 = vpop.xlane.xlu0 %9922
    %v9924 = vsel %vm109, %v9910, 0.0
    %9925 = vadd.xlane.f32.xlu0 %v9924
    %v9926 = vpop.xlane.xlu0 %9925
    %v9927 = vsel %vm109, %v9911, 0.0
    %9928 = vadd.xlane.f32.xlu0 %v9927
    %v9929 = vpop.xlane.xlu0 %9928
    %v9930 = vsel %vm109, %v9912, 0.0
    %9931 = vadd.xlane.f32.xlu0 %v9930
    %v9932 = vpop.xlane.xlu0 %9931
    %v9933 = vsel %vm109, %v9913, 0.0
    %9934 = vadd.xlane.f32.xlu0 %v9933
    %v9935 = vpop.xlane.xlu0 %9934
    %v9936 = vsel %vm109, %v9914, 0.0
    %9937 = vadd.xlane.f32.xlu0 %v9936
    %v9938 = vpop.xlane.xlu0 %9937
    %v9939 = vmul.f32 %v9917, %v134
    %v9940 = vmul.f32 %v9920, %v134
    %v9941 = vmul.f32 %v9923, %v134
    %v9942 = vmul.f32 %v9926, %v134
    %v9943 = vmul.f32 %v9929, %v134
    %v9944 = vmul.f32 %v9932, %v134
    %v9945 = vmul.f32 %v9935, %v134
    %v9946 = vmul.f32 %v9938, %v134
    %v9947 = vadd.f32 %v9939, 1e-05
    %v9948 = vadd.f32 %v9940, 1e-05
    %v9949 = vadd.f32 %v9941, 1e-05
    %v9950 = vadd.f32 %v9942, 1e-05
    %v9951 = vadd.f32 %v9943, 1e-05
    %v9952 = vadd.f32 %v9944, 1e-05
    %v9953 = vadd.f32 %v9945, 1e-05
    %v9954 = vadd.f32 %v9946, 1e-05
    %v9955 = vrsqrt.pop %v9947
    %v9956 = vrsqrt.pop %v9948
    %v9957 = vrsqrt.pop %v9949
    %v9958 = vrsqrt.pop %v9950
    %v9959 = vrsqrt.pop %v9951
    %v9960 = vrsqrt.pop %v9952
    %v9961 = vrsqrt.pop %v9953
    %v9962 = vrsqrt.pop %v9954
    %v9963 = vmul.f32 %v9899, %v9955
    %v9964 = vmul.f32 %v9900, %v9956
    %v9965 = vmul.f32 %v9901, %v9957
    %v9966 = vmul.f32 %v9902, %v9958
    %v9967 = vmul.f32 %v9903, %v9959
    %v9968 = vmul.f32 %v9904, %v9960
    %v9969 = vmul.f32 %v9905, %v9961
    %v9970 = vmul.f32 %v9906, %v9962
    %v9972 = vlaneseq
    %v9973 = vshrl.u32 %v9972, 7
    %v9974 = vsub.s32 0, %v9973
    %v9975 = vrot.slane %v9865, %v9974
    %v9977 = vmul.f32 %v9963, %v9975
    %v9978 = vmul.f32 %v9964, %v9975
    %v9979 = vmul.f32 %v9965, %v9975
    %v9980 = vmul.f32 %v9966, %v9975
    %v9981 = vmul.f32 %v9967, %v9975
    %v9982 = vmul.f32 %v9968, %v9975
    %v9983 = vmul.f32 %v9969, %v9975
    %v9984 = vmul.f32 %v9970, %v9975
    %v9986 = vlaneseq
    %v9987 = vshrl.u32 %v9986, 7
    %v9988 = vsub.s32 0, %v9987
    %v9989 = vrot.slane %v9866, %v9988
    %v9991 = vadd.f32 %v9977, %v9989
    %v9992 = vadd.f32 %v9978, %v9989
    %v9993 = vadd.f32 %v9979, %v9989
    %v9994 = vadd.f32 %v9980, %v9989
    %v9995 = vadd.f32 %v9981, %v9989
    %v9996 = vadd.f32 %v9982, %v9989
    %v9997 = vadd.f32 %v9983, %v9989
    %v9998 = vadd.f32 %v9984, %v9989
    %v9999 = vpack.c.bf16 %v9992, %v9991
    %v10000 = vpack.c.bf16 %v9994, %v9993
    %v10001 = vpack.c.bf16 %v9996, %v9995
    %v10002 = vpack.c.bf16 %v9998, %v9997
    %v10003 = vld [vmem:[%s21] sm:$0xf]
    %v10004 = vld [vmem:[%s21 + $0x4] sm:$0xf]
    %v10005 = vld [vmem:[%s21 + $0x8] sm:$0xf]
    %v10006 = vld [vmem:[%s21 + $0xc] sm:$0xf]
    %v10007 = vld [vmem:[%s22] sm:$0x1]
    %v10009 = vlaneseq
    %v10010 = vshrl.u32 %v10009, 7
    %v10011 = vsub.s32 0, %v10010
    %v10012 = vrot.slane %v10007, %v10011
    %v10018 = vunpack.c.l.b16 %v10003
    %v10019 = vunpack.c.l.b16 %v10004
    %v10020 = vunpack.c.l.b16 %v10005
    %v10021 = vunpack.c.l.b16 %v10006
    %v10022 = vpack.c.b16 %v10019, %v10018
    %v10023 = vpack.c.b16 %v10021, %v10020
    %v10027 = vsel %vm109, %v9999, 0
    %v10030 = vsel %vm109, %v10000, 0
    %v10033 = vsel %vm109, %v10001, 0
    %v10036 = vsel %vm109, %v10002, 0
    %10038 = vmatprep.subr.bf16.mxu0 0
    %10039 = vmatpush1.bf16.msra.mxu0 %v10022
    %10040 = vmatprep.subr.bf16.mxu0 0
    %10041 = vmatpush1.bf16.msra.mxu0 %v10023
    %10042 = vmatprep.subr.bf16.mxu0 0
    %10043 = vmatpush1.bf16.msra.mxu0 0
    %10044 = vmatprep.subr.bf16.mxu0 0
    %10045 = vmatpush1.bf16.msra.mxu0 0
    %10046 = vmatprep.subr.bf16.mxu0 0
    %10047 = vmatpush1.bf16.msra.mxu0 0
    %10048 = vmatprep.subr.bf16.mxu0 0
    %10049 = vmatpush1.bf16.msra.mxu0 0
    %10050 = vmatprep.subr.bf16.mxu0 0
    %10051 = vmatpush1.bf16.msra.mxu0 0
    %10052 = vmatprep.subr.bf16.mxu0 0
    %10053 = vmatpush1.bf16.msra.mxu0 0
    %10054 = vmatprep.subr.bf16.mxu0 0
    %10055 = vmatpush1.bf16.msra.mxu0 0
    %10056 = vmatprep.subr.bf16.mxu0 0
    %10057 = vmatpush1.bf16.msra.mxu0 0
    %10058 = vmatprep.subr.bf16.mxu0 0
    %10059 = vmatpush1.bf16.msra.mxu0 0
    %10060 = vmatprep.subr.bf16.mxu0 0
    %10061 = vmatpush1.bf16.msra.mxu0 0
    %10062 = vmatprep.subr.bf16.mxu0 0
    %10063 = vmatpush1.bf16.msra.mxu0 0
    %10064 = vmatprep.subr.bf16.mxu0 0
    %10065 = vmatpush1.bf16.msra.mxu0 0
    %10066 = vmatprep.subr.bf16.mxu0 0
    %10067 = vmatpush1.bf16.msra.mxu0 0
    %10068 = vmatprep.subr.bf16.mxu0 0
    %10069 = vmatpush1.bf16.msra.mxu0 0
    %10070 = vmatprep.mubr.bf16.mxu0 0
    %10071 = vmatmul.mubr.bf16.gmra.mrb[0].mxu0 %v10027
    %v10072 = vpop.f32.mrb[0].mxu0
    %v10073 = vadd.f32 %v10012, %v10072
    %v10074 = vpop.f32.mrb[0].mxu0
    %v10075 = vpop.f32.mrb[0].mxu0
    %v10076 = vadd.f32 %v10012, %v10075
    %v10077 = vpop.f32.mrb[0].mxu0
    %10078 = vmatprep.mubr.bf16.mxu0 0
    %10079 = vmatmul.mubr.bf16.gmra.mrb[0].mxu0 %v10030
    %v10080 = vpop.f32.mrb[0].mxu0
    %v10081 = vadd.f32 %v10012, %v10080
    %v10082 = vpop.f32.mrb[0].mxu0
    %v10083 = vpop.f32.mrb[0].mxu0
    %v10084 = vadd.f32 %v10012, %v10083
    %v10085 = vpop.f32.mrb[0].mxu0
    %10086 = vmatprep.mubr.bf16.mxu0 0
    %10087 = vmatmul.mubr.bf16.gmra.mrb[0].mxu0 %v10033
    %v10088 = vpop.f32.mrb[0].mxu0
    %v10089 = vadd.f32 %v10012, %v10088
    %v10090 = vpop.f32.mrb[0].mxu0
    %v10091 = vpop.f32.mrb[0].mxu0
    %v10092 = vadd.f32 %v10012, %v10091
    %v10093 = vpop.f32.mrb[0].mxu0
    %10094 = vmatprep.mubr.bf16.mxu0 0
    %10095 = vmatmul.mubr.bf16.gmra.mrb[0].mxu0 %v10036
    %v10096 = vpop.f32.mrb[0].mxu0
    %v10097 = vadd.f32 %v10012, %v10096
    %v10098 = vpop.f32.mrb[0].mxu0
    %v10099 = vpop.f32.mrb[0].mxu0
    %v10100 = vadd.f32 %v10012, %v10099
    %v10101 = vpop.f32.mrb[0].mxu0
    %10102 = vdwg.mxu0
    %v10103 = vmul.f32 %v10073, 0.5
    %v10104 = vmul.f32 %v10076, 0.5
    %v10105 = vmul.f32 %v10081, 0.5
    %v10106 = vmul.f32 %v10084, 0.5
    %v10107 = vmul.f32 %v10089, 0.5
    %v10108 = vmul.f32 %v10092, 0.5
    %v10109 = vmul.f32 %v10097, 0.5
    %v10110 = vmul.f32 %v10100, 0.5
    %v10111 = vmul.f32 %v10073, 0.044715
    %v10112 = vmul.f32 %v10076, 0.044715
    %v10113 = vmul.f32 %v10081, 0.044715
    %v10114 = vmul.f32 %v10084, 0.044715
    %v10115 = vmul.f32 %v10089, 0.044715
    %v10116 = vmul.f32 %v10092, 0.044715
    %v10117 = vmul.f32 %v10097, 0.044715
    %v10118 = vmul.f32 %v10100, 0.044715
    %v10119 = vmul.f32 %v10111, %v10073
    %v10120 = vmul.f32 %v10112, %v10076
    %v10121 = vmul.f32 %v10113, %v10081
    %v10122 = vmul.f32 %v10114, %v10084
    %v10123 = vmul.f32 %v10115, %v10089
    %v10124 = vmul.f32 %v10116, %v10092
    %v10125 = vmul.f32 %v10117, %v10097
    %v10126 = vmul.f32 %v10118, %v10100
    %v10127 = vmul.f32 %v10119, %v10073
    %v10128 = vmul.f32 %v10120, %v10076
    %v10129 = vmul.f32 %v10121, %v10081
    %v10130 = vmul.f32 %v10122, %v10084
    %v10131 = vmul.f32 %v10123, %v10089
    %v10132 = vmul.f32 %v10124, %v10092
    %v10133 = vmul.f32 %v10125, %v10097
    %v10134 = vmul.f32 %v10126, %v10100
    %v10135 = vadd.f32 %v10073, %v10127
    %v10136 = vadd.f32 %v10076, %v10128
    %v10137 = vadd.f32 %v10081, %v10129
    %v10138 = vadd.f32 %v10084, %v10130
    %v10139 = vadd.f32 %v10089, %v10131
    %v10140 = vadd.f32 %v10092, %v10132
    %v10141 = vadd.f32 %v10097, %v10133
    %v10142 = vadd.f32 %v10100, %v10134
    %v10143 = vmul.f32 %v10135, 0.7978846
    %v10144 = vmul.f32 %v10136, 0.7978846
    %v10145 = vmul.f32 %v10137, 0.7978846
    %v10146 = vmul.f32 %v10138, 0.7978846
    %v10147 = vmul.f32 %v10139, 0.7978846
    %v10148 = vmul.f32 %v10140, 0.7978846
    %v10149 = vmul.f32 %v10141, 0.7978846
    %v10150 = vmul.f32 %v10142, 0.7978846
    %v10151 = vtanh.pop %v10143
    %v10152 = vtanh.pop %v10144
    %v10153 = vtanh.pop %v10145
    %v10154 = vtanh.pop %v10146
    %v10155 = vtanh.pop %v10147
    %v10156 = vtanh.pop %v10148
    %v10157 = vtanh.pop %v10149
    %v10158 = vtanh.pop %v10150
    %v10159 = vadd.f32 %v10151, 1.0
    %v10160 = vadd.f32 %v10152, 1.0
    %v10161 = vadd.f32 %v10153, 1.0
    %v10162 = vadd.f32 %v10154, 1.0
    %v10163 = vadd.f32 %v10155, 1.0
    %v10164 = vadd.f32 %v10156, 1.0
    %v10165 = vadd.f32 %v10157, 1.0
    %v10166 = vadd.f32 %v10158, 1.0
    %v10167 = vmul.f32 %v10103, %v10159
    %v10168 = vmul.f32 %v10104, %v10160
    %v10169 = vmul.f32 %v10105, %v10161
    %v10170 = vmul.f32 %v10106, %v10162
    %v10171 = vmul.f32 %v10107, %v10163
    %v10172 = vmul.f32 %v10108, %v10164
    %v10173 = vmul.f32 %v10109, %v10165
    %v10174 = vmul.f32 %v10110, %v10166
    %v10175 = vpack.c.bf16 %v10168, %v10167
    %v10176 = vpack.c.bf16 %v10170, %v10169
    %v10177 = vpack.c.bf16 %v10172, %v10171
    %v10178 = vpack.c.bf16 %v10174, %v10173
    %v10179 = vld [vmem:[%s23] sm:$0xf]
    %v10180 = vld [vmem:[%s23 + $0x4] sm:$0xf]
    %v10181 = vld [vmem:[%s23 + $0x8] sm:$0xf]
    %v10182 = vld [vmem:[%s23 + $0xc] sm:$0xf]
    %v10183 = vld [vmem:[%s24] sm:$0x1]
    %v10185 = vlaneseq
    %v10186 = vshrl.u32 %v10185, 7
    %v10187 = vsub.s32 0, %v10186
    %v10188 = vrot.slane %v10183, %v10187
    %v10194 = vunpack.c.l.b16 %v10179
    %v10195 = vunpack.c.l.b16 %v10180
    %v10196 = vunpack.c.l.b16 %v10181
    %v10197 = vunpack.c.l.b16 %v10182
    %v10198 = vpack.c.b16 %v10195, %v10194
    %v10199 = vpack.c.b16 %v10197, %v10196
    %v10203 = vsel %vm109, %v10175, 0
    %v10206 = vsel %vm109, %v10176, 0
    %v10209 = vsel %vm109, %v10177, 0
    %v10212 = vsel %vm109, %v10178, 0
    %10214 = vmatprep.subr.bf16.mxu0 0
    %10215 = vmatpush1.bf16.msra.mxu0 %v10198
    %10216 = vmatprep.subr.bf16.mxu0 0
    %10217 = vmatpush1.bf16.msra.mxu0 %v10199
    %10218 = vmatprep.subr.bf16.mxu0 0
    %10219 = vmatpush1.bf16.msra.mxu0 0
    %10220 = vmatprep.subr.bf16.mxu0 0
    %10221 = vmatpush1.bf16.msra.mxu0 0
    %10222 = vmatprep.subr.bf16.mxu0 0
    %10223 = vmatpush1.bf16.msra.mxu0 0
    %10224 = vmatprep.subr.bf16.mxu0 0
    %10225 = vmatpush1.bf16.msra.mxu0 0
    %10226 = vmatprep.subr.bf16.mxu0 0
    %10227 = vmatpush1.bf16.msra.mxu0 0
    %10228 = vmatprep.subr.bf16.mxu0 0
    %10229 = vmatpush1.bf16.msra.mxu0 0
    %10230 = vmatprep.subr.bf16.mxu0 0
    %10231 = vmatpush1.bf16.msra.mxu0 0
    %10232 = vmatprep.subr.bf16.mxu0 0
    %10233 = vmatpush1.bf16.msra.mxu0 0
    %10234 = vmatprep.subr.bf16.mxu0 0
    %10235 = vmatpush1.bf16.msra.mxu0 0
    %10236 = vmatprep.subr.bf16.mxu0 0
    %10237 = vmatpush1.bf16.msra.mxu0 0
    %10238 = vmatprep.subr.bf16.mxu0 0
    %10239 = vmatpush1.bf16.msra.mxu0 0
    %10240 = vmatprep.subr.bf16.mxu0 0
    %10241 = vmatpush1.bf16.msra.mxu0 0
    %10242 = vmatprep.subr.bf16.mxu0 0
    %10243 = vmatpush1.bf16.msra.mxu0 0
    %10244 = vmatprep.subr.bf16.mxu0 0
    %10245 = vmatpush1.bf16.msra.mxu0 0
    %10246 = vmatprep.mubr.bf16.mxu0 0
    %10247 = vmatmul.mubr.bf16.gmra.mrb[0].mxu0 %v10203
    %v10248 = vpop.f32.mrb[0].mxu0
    %v10249 = vadd.f32 %v10188, %v10248
    %v10250 = vpop.f32.mrb[0].mxu0
    %v10251 = vpop.f32.mrb[0].mxu0
    %v10252 = vadd.f32 %v10188, %v10251
    %v10253 = vpop.f32.mrb[0].mxu0
    %10254 = vmatprep.mubr.bf16.mxu0 0
    %10255 = vmatmul.mubr.bf16.gmra.mrb[0].mxu0 %v10206
    %v10256 = vpop.f32.mrb[0].mxu0
    %v10257 = vadd.f32 %v10188, %v10256
    %v10258 = vpop.f32.mrb[0].mxu0
    %v10259 = vpop.f32.mrb[0].mxu0
    %v10260 = vadd.f32 %v10188, %v10259
    %v10261 = vpop.f32.mrb[0].mxu0
    %10262 = vmatprep.mubr.bf16.mxu0 0
    %10263 = vmatmul.mubr.bf16.gmra.mrb[0].mxu0 %v10209
    %v10264 = vpop.f32.mrb[0].mxu0
    %v10265 = vadd.f32 %v10188, %v10264
    %v10266 = vpop.f32.mrb[0].mxu0
    %v10267 = vpop.f32.mrb[0].mxu0
    %v10268 = vadd.f32 %v10188, %v10267
    %v10269 = vpop.f32.mrb[0].mxu0
    %10270 = vmatprep.mubr.bf16.mxu0 0
    %10271 = vmatmul.mubr.bf16.gmra.mrb[0].mxu0 %v10212
    %v10272 = vpop.f32.mrb[0].mxu0
    %v10273 = vadd.f32 %v10188, %v10272
    %v10274 = vpop.f32.mrb[0].mxu0
    %v10275 = vpop.f32.mrb[0].mxu0
    %v10276 = vadd.f32 %v10188, %v10275
    %v10277 = vpop.f32.mrb[0].mxu0
    %10278 = vdwg.mxu0
    %v10279 = vadd.f32 %v9857, %v10249
    %v10280 = vadd.f32 %v9858, %v10252
    %v10281 = vadd.f32 %v9859, %v10257
    %v10282 = vadd.f32 %v9860, %v10260
    %v10283 = vadd.f32 %v9861, %v10265
    %v10284 = vadd.f32 %v9862, %v10268
    %v10285 = vadd.f32 %v9863, %v10273
    %v10286 = vadd.f32 %v9864, %v10276
    %10287 = vst.msk [vmem:[%s25] sm:$0xff] %vm109, %v10279
    %10288 = vst.msk [vmem:[%s25 + $0x8] sm:$0xff] %vm109, %v10280
    %10289 = vst.msk [vmem:[%s25 + $0x10] sm:$0xff] %vm109, %v10281
    %10290 = vst.msk [vmem:[%s25 + $0x18] sm:$0xff] %vm109, %v10282
    %10291 = vst.msk [vmem:[%s25 + $0x20] sm:$0xff] %vm109, %v10283
    %10292 = vst.msk [vmem:[%s25 + $0x28] sm:$0xff] %vm109, %v10284
    %10293 = vst.msk [vmem:[%s25 + $0x30] sm:$0xff] %vm109, %v10285
    %10294 = vst.msk [vmem:[%s25 + $0x38] sm:$0xff] %vm109, %v10286
    // Predicated region
    $region106: #{grn_transformer_forward.1} parent=1 // pred_check
      _
    $region107: #{grn_transformer_forward.1} parent=1 // pred_check_branch
      %10296 = sbr.rel (0) target = $region109
    $region108: #{grn_transformer_forward.1} parent=1 // pred_region
      _
    $region109: #{grn_transformer_forward.1} parent=1 // pred_fallthru
      _
    // Predicated region
    $region110: #{grn_transformer_forward.1} parent=1 // pred_check
      _
    $region111: #{grn_transformer_forward.1} parent=1 // pred_check_branch
      %10298 = sbr.rel (0) target = $region113
    $region112: #{grn_transformer_forward.1} parent=1 // pred_region
      %s10300 = ssub.s32 512, 512
      %10301 = vsyncadd [#allocation3], %s10300
      %s10302 = sshll.u32 [#allocation5], 4
      %s10303 = int_to_ptr.vmem [resolvable:$true] %s10302
      %10308 = dma.vmem_to_hbm [thread:$0]  %s10303, 512, %s26, [#allocation3], 128, 128, 8
    $region113: #{grn_transformer_forward.1} parent=1 // pred_fallthru
      _
    // Predicated region
    $region114: #{grn_transformer_forward.1} parent=1 // pred_check
      _
    $region115: #{grn_transformer_forward.1} parent=1 // pred_check_branch
      %10310 = sbr.rel (0) target = $region117
    $region116: #{grn_transformer_forward.1} parent=1 // pred_region
      %s10312 = ssub.s32 512, 512
      %10313 = vsyncadd [#allocation7], %s10312
      %s10314 = sshll.u32 [#allocation6], 4
      %s10315 = int_to_ptr.vmem [resolvable:$true] %s10314
      %10320 = dma.vmem_to_hbm [thread:$0]  %s10315, 512, %s27, [#allocation7], 128, 128, 8
    $region117: #{grn_transformer_forward.1} parent=1 // pred_fallthru
      _
    // Predicated region
    $region118: #{grn_transformer_forward.1} parent=1 // pred_check
      _
    $region119: #{grn_transformer_forward.1} parent=1 // pred_check_branch
      %10322 = sbr.rel (0) target = $region121
    $region120: #{grn_transformer_forward.1} parent=1 // pred_region
      _
    $region121: #{grn_transformer_forward.1} parent=1 // pred_fallthru
      _
    // Predicated region
    $region122: #{grn_transformer_forward.1} parent=1 // pred_check
      _
    $region123: #{grn_transformer_forward.1} parent=1 // pred_check_branch
      %10324 = sbr.rel (0) target = $region125
    $region124: #{grn_transformer_forward.1} parent=1 // pred_region
      %10325 = dma.done [#allocation3], 512
    $region125: #{grn_transformer_forward.1} parent=1 // pred_fallthru
      _
    // Predicated region
    $region126: #{grn_transformer_forward.1} parent=1 // pred_check
      _
    $region127: #{grn_transformer_forward.1} parent=1 // pred_check_branch
      %10327 = sbr.rel (0) target = $region129
    $region128: #{grn_transformer_forward.1} parent=1 // pred_region
      %10328 = dma.done [#allocation7], 512
    $region129: #{grn_transformer_forward.1} parent=1 // pred_fallthru
      _
    %10329 = vsyncpa [#allocation3], 1
    %10330 = vsyncpa [#allocation7], 1
    %10331 = vsyncpa [#allocation4], 1

</llo_original>
